<compile_context>
chip_gen: v7x
topology: tpu7x:2x2x1
jax: 0.10.0
libtpu: 0.0.40
codegen_flags: <defaults>
</compile_context>

<pallas_src>
import functools

import jax
import jax.numpy as jnp
from jax import lax
from jax.experimental import pallas as pl
from jax.experimental.pallas import tpu as pltpu

BT_LAMBDA = 0.0051
BN_EPS = 1e-5
LANE = 128


def _full_spec(shape):
    # whole (small) array resident in VMEM, no grid tiling
    return pl.BlockSpec(shape, lambda: (0,) * len(shape))


def _pad_axis(x, axis, mult=LANE):
    size = x.shape[axis]
    pad = (-size) % mult
    if pad == 0:
        return x
    widths = [(0, 0)] * x.ndim
    widths[axis] = (0, pad)
    return jnp.pad(x, widths)


def _pick_s_tile(s):
    # output block is (s_tile, F_pad): its second-minor dim must be a multiple of 8
    # (full sublanes) or the full sample dim.  8 samples/step amortizes per-step cost and
    # keeps >=2 sample blocks (v7x megacore) whenever S >= 16.
    if s % 8 == 0:
        return 8
    return s


# --------------------------------------------------------------------------------------
# Encoder kernel: halo-aware 3x3 conv via 9 shifted slices of the flat zero-padded image,
# one bf16 MXU matmul per sample (K = 9*C), fused bias + ReLU + masked global-average pool.
# Grid = (sample_blocks,), each step handles s_tile samples over the full spatial extent.
# --------------------------------------------------------------------------------------
def _encoder_kernel(x_ref, w_ref, b_ref, m_ref, h_ref, *, s_tile, wp, h_sp, w_sp):
    # x_ref: (s_tile, C, Hp*Wp) bf16  spatially zero-padded, flattened per sample
    # w_ref: (F_pad, 9*C)       bf16  conv weight, columns ordered (kh, kw, c)
    # b_ref: (F_pad, 1)         f32   conv bias (zero in padded rows)
    # m_ref: (1, VS)            f32   1.0 on real pixels, 0.0 on border positions
    # h_ref: (s_tile, F_pad)    bf16  pooled encoder features (lane-dense store)
    vs = (h_sp - 1) * wp + w_sp          # contiguous flat span covering every valid output
    start = wp + 1                       # flat index of output pixel (0, 0) in padded coords
    inv_hw = 1.0 / float(h_sp * w_sp)
    mask = m_ref[...]                    # (1, VS)

    pooled_cols = []
    for s in range(s_tile):              # static small loop; each sample is one MXU matmul
        x_s = x_ref[s]                   # (C, Hp*Wp) bf16
        parts = []
        for kh in range(3):
            for kw in range(3):
                off = start + (kh - 1) * wp + (kw - 1)
                parts.append(x_s[:, off:off + vs])            # shifted view, (C, VS)
        xs = jnp.concatenate(parts, axis=0)                   # in-VMEM "im2col", (9C, VS)
        y = jnp.dot(w_ref[...], xs, preferred_element_type=jnp.float32)  # (F_pad, VS)
        y = jnp.maximum(y + b_ref[...], 0.0) * mask           # bias + ReLU + border mask
        pooled_cols.append(jnp.sum(y, axis=1, keepdims=True) * inv_hw)   # (F_pad, 1)
    pooled = jnp.concatenate(pooled_cols, axis=1)             # (F_pad, s_tile)
    h_ref[...] = pooled.T.astype(h_ref.dtype)                 # bf16 out, no extra XLA cast


def encoder_forward(xp, conv_w, conv_b, mask, h_sp, w_sp):
    # xp: (S, C, Hp*Wp) bf16, conv_w: (F_pad, 9C) bf16, conv_b: (F_pad, 1) f32, mask: (1, VS)
    s, c_in, hpwp = xp.shape
    f_pad = conv_w.shape[0]
    wp = w_sp + 2
    s_tile = _pick_s_tile(s)
    kernel = functools.partial(_encoder_kernel, s_tile=s_tile, wp=wp, h_sp=h_sp, w_sp=w_sp)

    vs = mask.shape[1]
    flops = 2 * s * vs * (9 * c_in) * f_pad
    bytes_accessed = (xp.size * 2 + conv_w.size * 2 + conv_b.size * 4
                      + mask.size * 4 + s * f_pad * 2)

    # TODO(synk): for large images the (F_pad, VS) activation map no longer fits VMEM; add a
    # spatial-chunk grid axis with a (wp+1)-element halo on each chunk and a pooled accumulator.
    return pl.pallas_call(
        kernel,
        out_shape=jax.ShapeDtypeStruct((s, f_pad), jnp.bfloat16),
        grid_spec=pltpu.PrefetchScalarGridSpec(
            num_scalar_prefetch=0,
            grid=(s // s_tile,),
            in_specs=[
                pl.BlockSpec((s_tile, c_in, hpwp), lambda i: (i, 0, 0)),
                pl.BlockSpec(conv_w.shape, lambda i: (0, 0)),
                pl.BlockSpec(conv_b.shape, lambda i: (0, 0)),
                pl.BlockSpec(mask.shape, lambda i: (0, 0)),
            ],
            out_specs=pl.BlockSpec((s_tile, f_pad), lambda i: (i, 0)),
        ),
        compiler_params=pltpu.CompilerParams(
            dimension_semantics=("parallel",),
            vmem_limit_bytes=32 * 1024 * 1024,
        ),
        cost_estimate=pl.CostEstimate(
            flops=flops, transcendentals=0, bytes_accessed=bytes_accessed),
    )(xp, conv_w, conv_b, mask)


# --------------------------------------------------------------------------------------
# Fused projector (Linear->BN->ReLU x2 -> Linear) + Barlow-Twins loss kernel.
# BN statistics are computed per view (matches projector(h1) / projector(h2) in PyTorch).
# --------------------------------------------------------------------------------------
def _proj_loss_kernel(h1_ref, h2_ref, w1_ref, g1_ref, b1_ref, w2_ref, g2_ref, b2_ref,
                      w3_ref, z1_ref, z2_ref, loss_ref, *, d_real):
    def bn_relu(y, g, be):       # BatchNorm1d training mode (biased var + eps) + affine + ReLU
        mu = jnp.mean(y, axis=0, keepdims=True)
        var = jnp.mean((y - mu) ** 2, axis=0, keepdims=True)
        yn = (y - mu) * lax.rsqrt(var + BN_EPS)
        return jnp.maximum(yn * g + be, 0.0)

    def project(h_bf16):
        y = jnp.dot(h_bf16, w1_ref[...], preferred_element_type=jnp.float32)
        y = bn_relu(y, g1_ref[...], b1_ref[...])
        y = jnp.dot(y.astype(jnp.bfloat16), w2_ref[...], preferred_element_type=jnp.float32)
        y = bn_relu(y, g2_ref[...], b2_ref[...])
        return jnp.dot(y.astype(jnp.bfloat16), w3_ref[...], preferred_element_type=jnp.float32)

    z1 = project(h1_ref[...])
    z2 = project(h2_ref[...])
    z1_ref[...] = z1
    z2_ref[...] = z2

    n = z1.shape[0]
    inv_n = 1.0 / float(n)

    # Feature BN (affine=False) fused into the cross-correlation as a rank-1 row/col scaling:
    #   c_ij = invstd1_i * invstd2_j * (G_ij / n - mu1_i * mu2_j),   G = z1^T z2.
    # G is a bf16 MXU matmul (f32 acc) on the raw projections; z1n/z2n are never materialized.
    mu1 = jnp.mean(z1, axis=0, keepdims=True)                        # (1, D)
    mu2 = jnp.mean(z2, axis=0, keepdims=True)
    inv1 = lax.rsqrt(jnp.mean((z1 - mu1) ** 2, axis=0, keepdims=True) + BN_EPS)
    inv2 = lax.rsqrt(jnp.mean((z2 - mu2) ** 2, axis=0, keepdims=True) + BN_EPS)

    # tiny (n, D) bf16 transpose (XLU slot, essentially free) feeding a standard NN matmul
    g_mat = jnp.dot(z1.astype(jnp.bfloat16).T, z2.astype(jnp.bfloat16),
                    preferred_element_type=jnp.float32)              # (D, D)
    c = (g_mat * inv_n - mu1.T * mu2) * (inv1.T * inv2)

    c2 = c * c
    row = lax.broadcasted_iota(jnp.int32, c.shape, 0)
    col = lax.broadcasted_iota(jnp.int32, c.shape, 1)
    # diagonal restricted to the real (unpadded) feature columns
    diag_mask = jnp.logical_and(row == col, row < d_real).astype(jnp.float32)
    # off-diag: lam*c^2 ; real diag: (c-1)^2 = lam*c^2 + ((1-lam)*c^2 - 2c + 1) ; padded diag: 0
    per_elem = BT_LAMBDA * c2 + diag_mask * ((1.0 - BT_LAMBDA) * c2 - 2.0 * c + 1.0)
    srow = jnp.sum(per_elem, axis=1, keepdims=True)
    loss_ref[...] = jnp.sum(srow, axis=0, keepdims=True)


def projector_loss_forward(h1, h2, w1, g1, b1, w2, g2, b2, w3, d_real):
    # TODO(synk): at the real BarlowTwins projector width (8192) each bf16 weight is ~128 MiB
    # and cannot stay whole-resident (v7x VMEM is 64 MiB total); the three matmuls then need an
    # (M,N,K)-tiled grid with f32 scratch accumulators and HBM staging between layers.
    n = h1.shape[0]
    d_pad = w3.shape[1]
    args = (h1, h2, w1, g1, b1, w2, g2, b2, w3)
    kernel = functools.partial(_proj_loss_kernel, d_real=d_real)
    return pl.pallas_call(
        kernel,
        out_shape=(
            jax.ShapeDtypeStruct((n, d_pad), jnp.float32),
            jax.ShapeDtypeStruct((n, d_pad), jnp.float32),
            jax.ShapeDtypeStruct((1, 1), jnp.float32),
        ),
        in_specs=[_full_spec(a.shape) for a in args],
        out_specs=(
            _full_spec((n, d_pad)),
            _full_spec((n, d_pad)),
            _full_spec((1, 1)),
        ),
        compiler_params=pltpu.CompilerParams(vmem_limit_bytes=48 * 1024 * 1024),
    )(*args)


# --------------------------------------------------------------------------------------
# JAX glue: parameter init, weight/layout prep, full forward.
# --------------------------------------------------------------------------------------
def init_params(key, in_ch, feat_dim, proj_dim):
    ks = jax.random.split(key, 4)
    fan_in = in_ch * 9
    return {
        # conv stored in PyTorch Conv2d layout (F, C, kh, kw)
        "conv_w": jax.random.normal(ks[0], (feat_dim, in_ch, 3, 3), jnp.float32)
                  / jnp.sqrt(fan_in),
        "conv_b": jnp.zeros((feat_dim,), jnp.float32),
        "w1": jax.random.normal(ks[1], (feat_dim, proj_dim), jnp.float32) / jnp.sqrt(feat_dim),
        "g1": jnp.ones((1, proj_dim), jnp.float32),
        "b1": jnp.zeros((1, proj_dim), jnp.float32),
        "w2": jax.random.normal(ks[2], (proj_dim, proj_dim), jnp.float32) / jnp.sqrt(proj_dim),
        "g2": jnp.ones((1, proj_dim), jnp.float32),
        "b2": jnp.zeros((1, proj_dim), jnp.float32),
        "w3": jax.random.normal(ks[3], (proj_dim, proj_dim), jnp.float32) / jnp.sqrt(proj_dim),
    }


def _prep_conv(params):
    # (F, C, 3, 3) -> (F_pad, 9*C) bf16 with column order (kh, kw, c); padded F rows are zero
    w = params["conv_w"]
    f, c = w.shape[0], w.shape[1]
    w2d = jnp.transpose(w, (0, 2, 3, 1)).reshape(f, 9 * c)
    w2d = _pad_axis(w2d, 0).astype(jnp.bfloat16)
    b = _pad_axis(params["conv_b"].reshape(-1, 1), 0)        # (F_pad, 1) f32
    return w2d, b


def barlow_twins_forward(params, x1, x2, _=None):
    n = x1.shape[0]
    assert n > 1, "projector/loss BatchNorm needs a per-view batch > 1"
    d_real = params["w3"].shape[1]

    # the encoder has no batch-stat layer -> both views share one encoder launch
    x = jnp.concatenate([x1, x2], axis=0)                    # (2N, C, H, W)
    s, c_in, h_sp, w_sp = x.shape
    hp, wp = h_sp + 2, w_sp + 2

    # raw input, zero-padded spatially and flattened: ~1.3x the input bytes instead of the
    # 9x (im2col) * ~3.5x (K pad 36->128) blow-up of the previous version
    xp = jnp.pad(x, ((0, 0), (0, 0), (1, 1), (1, 1)))
    xp = xp.reshape(s, c_in, hp * wp).astype(jnp.bfloat16)

    conv_w, conv_b = _prep_conv(params)

    # border mask over the contiguous flat window of conv outputs (built once on the host)
    vs = (h_sp - 1) * wp + w_sp
    colidx = (wp + 1 + jnp.arange(vs)) % wp
    mask = ((colidx >= 1) & (colidx <= w_sp)).astype(jnp.float32).reshape(1, vs)

    h = encoder_forward(xp, conv_w, conv_b, mask, h_sp, w_sp)   # (2N, F_pad) bf16

    # zero padding of weights/gamma/beta keeps all padded lanes exactly zero downstream
    w1 = _pad_axis(_pad_axis(params["w1"], 0), 1).astype(jnp.bfloat16)
    g1 = _pad_axis(params["g1"], 1)
    b1 = _pad_axis(params["b1"], 1)
    w2 = _pad_axis(_pad_axis(params["w2"], 0), 1).astype(jnp.bfloat16)
    g2 = _pad_axis(params["g2"], 1)
    b2 = _pad_axis(params["b2"], 1)
    w3 = _pad_axis(_pad_axis(params["w3"], 0), 1).astype(jnp.bfloat16)

    z1p, z2p, loss = projector_loss_forward(
        h[:n], h[n:], w1, g1, b1, w2, g2, b2, w3, d_real)

    return [loss[0, 0], z1p[:, :d_real], z2p[:, :d_real]]


if __name__ == "__main__":
    key = jax.random.PRNGKey(0)
    k_param, k_x1, k_x2 = jax.random.split(key, 3)

    # batch of 8 per view -> 16 encoder samples: one full-sublane 8-sample block per grid step,
    # 2 sample blocks for v7x megacore, and BatchNorm statistics are well-defined (batch > 1).
    batch, in_ch, hw_dim = 8, 4, 16
    feat_dim, proj_dim = 32, 64

    params = init_params(k_param, in_ch, feat_dim, proj_dim)
    x1 = jax.random.normal(k_x1, (batch, in_ch, hw_dim, hw_dim), jnp.float32)
    x2 = jax.random.normal(k_x2, (batch, in_ch, hw_dim, hw_dim), jnp.float32)

    fwd = jax.jit(barlow_twins_forward)
    loss, z1, z2 = fwd(params, x1, x2, None)
    jax.block_until_ready((loss, z1, z2))

    assert z1.shape == (batch, proj_dim) and z2.shape == (batch, proj_dim)
    assert loss.shape == () and bool(jnp.isfinite(loss))
    print("KERNEL_OK")
</pallas_src>

<mosaic_0001>
module attributes {stable_mosaic.version = 11 : i64} {
  func.func @_encoder_kernel(%arg0: i32, %arg1: memref<8x4x324xbf16, #tpu.memory_space<vmem>>, %arg2: memref<128x36xbf16, #tpu.memory_space<vmem>>, %arg3: memref<128x1xf32, #tpu.memory_space<vmem>>, %arg4: memref<1x286xf32, #tpu.memory_space<vmem>>, %arg5: memref<8x128xbf16, #tpu.memory_space<vmem>>) attributes {dimension_semantics = [#tpu.dimension_semantics<parallel>], iteration_bounds = array<i64: 2>, scalar_prefetch = 0 : i64, scratch_operands = 0 : i64, tpu.core_type = #tpu.core_type<tc>, window_params = [{transform_indices = @transform_0, window_bounds = array<i64: 8, 4, 324>}, {pipeline_mode = #tpu.pipeline_mode<synchronous>, transform_indices = @transform_1, window_bounds = array<i64: 128, 36>}, {pipeline_mode = #tpu.pipeline_mode<synchronous>, transform_indices = @transform_2, window_bounds = array<i64: 128, 1>}, {pipeline_mode = #tpu.pipeline_mode<synchronous>, transform_indices = @transform_3, window_bounds = array<i64: 1, 286>}, {transform_indices = @transform_4, window_bounds = array<i64: 8, 128>}]} {
    %c0 = arith.constant 0 : index
    %c0_0 = arith.constant 0 : index
    %0 = vector.load %arg4[%c0, %c0_0] : memref<1x286xf32, #tpu.memory_space<vmem>>, vector<1x286xf32>
    %c0_1 = arith.constant 0 : index
    %c0_2 = arith.constant 0 : index
    %c0_3 = arith.constant 0 : index
    %1 = vector.load %arg1[%c0_1, %c0_2, %c0_3] : memref<8x4x324xbf16, #tpu.memory_space<vmem>>, vector<1x4x324xbf16>
    %2 = vector.shape_cast %1 : vector<1x4x324xbf16> to vector<4x324xbf16>
    %3 = vector.extract_strided_slice %2 {offsets = [0, 0], sizes = [4, 286], strides = [1, 1]} : vector<4x324xbf16> to vector<4x286xbf16>
    %4 = vector.extract_strided_slice %2 {offsets = [0, 1], sizes = [4, 286], strides = [1, 1]} : vector<4x324xbf16> to vector<4x286xbf16>
    %5 = vector.extract_strided_slice %2 {offsets = [0, 2], sizes = [4, 286], strides = [1, 1]} : vector<4x324xbf16> to vector<4x286xbf16>
    %6 = vector.extract_strided_slice %2 {offsets = [0, 18], sizes = [4, 286], strides = [1, 1]} : vector<4x324xbf16> to vector<4x286xbf16>
    %7 = vector.extract_strided_slice %2 {offsets = [0, 19], sizes = [4, 286], strides = [1, 1]} : vector<4x324xbf16> to vector<4x286xbf16>
    %8 = vector.extract_strided_slice %2 {offsets = [0, 20], sizes = [4, 286], strides = [1, 1]} : vector<4x324xbf16> to vector<4x286xbf16>
    %9 = vector.extract_strided_slice %2 {offsets = [0, 36], sizes = [4, 286], strides = [1, 1]} : vector<4x324xbf16> to vector<4x286xbf16>
    %10 = vector.extract_strided_slice %2 {offsets = [0, 37], sizes = [4, 286], strides = [1, 1]} : vector<4x324xbf16> to vector<4x286xbf16>
    %11 = vector.extract_strided_slice %2 {offsets = [0, 38], sizes = [4, 286], strides = [1, 1]} : vector<4x324xbf16> to vector<4x286xbf16>
    %12 = tpu.concatenate %3, %4, %5, %6, %7, %8, %9, %10, %11 in 0 : vector<4x286xbf16>, vector<4x286xbf16>, vector<4x286xbf16>, vector<4x286xbf16>, vector<4x286xbf16>, vector<4x286xbf16>, vector<4x286xbf16>, vector<4x286xbf16>, vector<4x286xbf16> -> vector<36x286xbf16>
    %c0_4 = arith.constant 0 : index
    %c0_5 = arith.constant 0 : index
    %13 = vector.load %arg2[%c0_4, %c0_5] : memref<128x36xbf16, #tpu.memory_space<vmem>>, vector<128x36xbf16>
    %cst = arith.constant dense<0.000000e+00> : vector<128x286xf32>
    %14 = tpu.matmul %13, %12, %cst {dimension_numbers = #tpu.dot_dimension_numbers<[1], [0], [0], [1], [0, 0, 1, 1], [], []>} : vector<128x36xbf16>, vector<36x286xbf16>, vector<128x286xf32> -> vector<128x286xf32>
    %c0_6 = arith.constant 0 : index
    %c0_7 = arith.constant 0 : index
    %15 = vector.load %arg3[%c0_6, %c0_7] : memref<128x1xf32, #tpu.memory_space<vmem>>, vector<128x1xf32>
    %16 = vector.broadcast %15 : vector<128x1xf32> to vector<128x286xf32>
    %17 = arith.addf %14, %16 : vector<128x286xf32>
    %cst_8 = arith.constant 0.000000e+00 : f32
    %18 = vector.broadcast %cst_8 : f32 to vector<128x286xf32>
    %19 = arith.maximumf %17, %18 : vector<128x286xf32>
    %20 = vector.broadcast %0 : vector<1x286xf32> to vector<128x286xf32>
    %21 = arith.mulf %19, %20 : vector<128x286xf32>
    %cst_9 = arith.constant dense<0.000000e+00> : vector<128xf32>
    %22 = vector.multi_reduction <add>, %21, %cst_9 [1] : vector<128x286xf32> to vector<128xf32>
    %23 = vector.shape_cast %22 : vector<128xf32> to vector<128x1xf32>
    %cst_10 = arith.constant 3.906250e-03 : f32
    %24 = vector.broadcast %cst_10 : f32 to vector<128x1xf32>
    %25 = arith.mulf %23, %24 : vector<128x1xf32>
    %c1 = arith.constant 1 : index
    %c0_11 = arith.constant 0 : index
    %c0_12 = arith.constant 0 : index
    %26 = vector.load %arg1[%c1, %c0_11, %c0_12] : memref<8x4x324xbf16, #tpu.memory_space<vmem>>, vector<1x4x324xbf16>
    %27 = vector.shape_cast %26 : vector<1x4x324xbf16> to vector<4x324xbf16>
    %28 = vector.extract_strided_slice %27 {offsets = [0, 0], sizes = [4, 286], strides = [1, 1]} : vector<4x324xbf16> to vector<4x286xbf16>
    %29 = vector.extract_strided_slice %27 {offsets = [0, 1], sizes = [4, 286], strides = [1, 1]} : vector<4x324xbf16> to vector<4x286xbf16>
    %30 = vector.extract_strided_slice %27 {offsets = [0, 2], sizes = [4, 286], strides = [1, 1]} : vector<4x324xbf16> to vector<4x286xbf16>
    %31 = vector.extract_strided_slice %27 {offsets = [0, 18], sizes = [4, 286], strides = [1, 1]} : vector<4x324xbf16> to vector<4x286xbf16>
    %32 = vector.extract_strided_slice %27 {offsets = [0, 19], sizes = [4, 286], strides = [1, 1]} : vector<4x324xbf16> to vector<4x286xbf16>
    %33 = vector.extract_strided_slice %27 {offsets = [0, 20], sizes = [4, 286], strides = [1, 1]} : vector<4x324xbf16> to vector<4x286xbf16>
    %34 = vector.extract_strided_slice %27 {offsets = [0, 36], sizes = [4, 286], strides = [1, 1]} : vector<4x324xbf16> to vector<4x286xbf16>
    %35 = vector.extract_strided_slice %27 {offsets = [0, 37], sizes = [4, 286], strides = [1, 1]} : vector<4x324xbf16> to vector<4x286xbf16>
    %36 = vector.extract_strided_slice %27 {offsets = [0, 38], sizes = [4, 286], strides = [1, 1]} : vector<4x324xbf16> to vector<4x286xbf16>
    %37 = tpu.concatenate %28, %29, %30, %31, %32, %33, %34, %35, %36 in 0 : vector<4x286xbf16>, vector<4x286xbf16>, vector<4x286xbf16>, vector<4x286xbf16>, vector<4x286xbf16>, vector<4x286xbf16>, vector<4x286xbf16>, vector<4x286xbf16>, vector<4x286xbf16> -> vector<36x286xbf16>
    %c0_13 = arith.constant 0 : index
    %c0_14 = arith.constant 0 : index
    %38 = vector.load %arg2[%c0_13, %c0_14] : memref<128x36xbf16, #tpu.memory_space<vmem>>, vector<128x36xbf16>
    %cst_15 = arith.constant dense<0.000000e+00> : vector<128x286xf32>
    %39 = tpu.matmul %38, %37, %cst_15 {dimension_numbers = #tpu.dot_dimension_numbers<[1], [0], [0], [1], [0, 0, 1, 1], [], []>} : vector<128x36xbf16>, vector<36x286xbf16>, vector<128x286xf32> -> vector<128x286xf32>
    %c0_16 = arith.constant 0 : index
    %c0_17 = arith.constant 0 : index
    %40 = vector.load %arg3[%c0_16, %c0_17] : memref<128x1xf32, #tpu.memory_space<vmem>>, vector<128x1xf32>
    %41 = vector.broadcast %40 : vector<128x1xf32> to vector<128x286xf32>
    %42 = arith.addf %39, %41 : vector<128x286xf32>
    %cst_18 = arith.constant 0.000000e+00 : f32
    %43 = vector.broadcast %cst_18 : f32 to vector<128x286xf32>
    %44 = arith.maximumf %42, %43 : vector<128x286xf32>
    %45 = vector.broadcast %0 : vector<1x286xf32> to vector<128x286xf32>
    %46 = arith.mulf %44, %45 : vector<128x286xf32>
    %cst_19 = arith.constant dense<0.000000e+00> : vector<128xf32>
    %47 = vector.multi_reduction <add>, %46, %cst_19 [1] : vector<128x286xf32> to vector<128xf32>
    %48 = vector.shape_cast %47 : vector<128xf32> to vector<128x1xf32>
    %cst_20 = arith.constant 3.906250e-03 : f32
    %49 = vector.broadcast %cst_20 : f32 to vector<128x1xf32>
    %50 = arith.mulf %48, %49 : vector<128x1xf32>
    %c2 = arith.constant 2 : index
    %c0_21 = arith.constant 0 : index
    %c0_22 = arith.constant 0 : index
    %51 = vector.load %arg1[%c2, %c0_21, %c0_22] : memref<8x4x324xbf16, #tpu.memory_space<vmem>>, vector<1x4x324xbf16>
    %52 = vector.shape_cast %51 : vector<1x4x324xbf16> to vector<4x324xbf16>
    %53 = vector.extract_strided_slice %52 {offsets = [0, 0], sizes = [4, 286], strides = [1, 1]} : vector<4x324xbf16> to vector<4x286xbf16>
    %54 = vector.extract_strided_slice %52 {offsets = [0, 1], sizes = [4, 286], strides = [1, 1]} : vector<4x324xbf16> to vector<4x286xbf16>
    %55 = vector.extract_strided_slice %52 {offsets = [0, 2], sizes = [4, 286], strides = [1, 1]} : vector<4x324xbf16> to vector<4x286xbf16>
    %56 = vector.extract_strided_slice %52 {offsets = [0, 18], sizes = [4, 286], strides = [1, 1]} : vector<4x324xbf16> to vector<4x286xbf16>
    %57 = vector.extract_strided_slice %52 {offsets = [0, 19], sizes = [4, 286], strides = [1, 1]} : vector<4x324xbf16> to vector<4x286xbf16>
    %58 = vector.extract_strided_slice %52 {offsets = [0, 20], sizes = [4, 286], strides = [1, 1]} : vector<4x324xbf16> to vector<4x286xbf16>
    %59 = vector.extract_strided_slice %52 {offsets = [0, 36], sizes = [4, 286], strides = [1, 1]} : vector<4x324xbf16> to vector<4x286xbf16>
    %60 = vector.extract_strided_slice %52 {offsets = [0, 37], sizes = [4, 286], strides = [1, 1]} : vector<4x324xbf16> to vector<4x286xbf16>
    %61 = vector.extract_strided_slice %52 {offsets = [0, 38], sizes = [4, 286], strides = [1, 1]} : vector<4x324xbf16> to vector<4x286xbf16>
    %62 = tpu.concatenate %53, %54, %55, %56, %57, %58, %59, %60, %61 in 0 : vector<4x286xbf16>, vector<4x286xbf16>, vector<4x286xbf16>, vector<4x286xbf16>, vector<4x286xbf16>, vector<4x286xbf16>, vector<4x286xbf16>, vector<4x286xbf16>, vector<4x286xbf16> -> vector<36x286xbf16>
    %c0_23 = arith.constant 0 : index
    %c0_24 = arith.constant 0 : index
    %63 = vector.load %arg2[%c0_23, %c0_24] : memref<128x36xbf16, #tpu.memory_space<vmem>>, vector<128x36xbf16>
    %cst_25 = arith.constant dense<0.000000e+00> : vector<128x286xf32>
    %64 = tpu.matmul %63, %62, %cst_25 {dimension_numbers = #tpu.dot_dimension_numbers<[1], [0], [0], [1], [0, 0, 1, 1], [], []>} : vector<128x36xbf16>, vector<36x286xbf16>, vector<128x286xf32> -> vector<128x286xf32>
    %c0_26 = arith.constant 0 : index
    %c0_27 = arith.constant 0 : index
    %65 = vector.load %arg3[%c0_26, %c0_27] : memref<128x1xf32, #tpu.memory_space<vmem>>, vector<128x1xf32>
    %66 = vector.broadcast %65 : vector<128x1xf32> to vector<128x286xf32>
    %67 = arith.addf %64, %66 : vector<128x286xf32>
    %cst_28 = arith.constant 0.000000e+00 : f32
    %68 = vector.broadcast %cst_28 : f32 to vector<128x286xf32>
    %69 = arith.maximumf %67, %68 : vector<128x286xf32>
    %70 = vector.broadcast %0 : vector<1x286xf32> to vector<128x286xf32>
    %71 = arith.mulf %69, %70 : vector<128x286xf32>
    %cst_29 = arith.constant dense<0.000000e+00> : vector<128xf32>
    %72 = vector.multi_reduction <add>, %71, %cst_29 [1] : vector<128x286xf32> to vector<128xf32>
    %73 = vector.shape_cast %72 : vector<128xf32> to vector<128x1xf32>
    %cst_30 = arith.constant 3.906250e-03 : f32
    %74 = vector.broadcast %cst_30 : f32 to vector<128x1xf32>
    %75 = arith.mulf %73, %74 : vector<128x1xf32>
    %c3 = arith.constant 3 : index
    %c0_31 = arith.constant 0 : index
    %c0_32 = arith.constant 0 : index
    %76 = vector.load %arg1[%c3, %c0_31, %c0_32] : memref<8x4x324xbf16, #tpu.memory_space<vmem>>, vector<1x4x324xbf16>
    %77 = vector.shape_cast %76 : vector<1x4x324xbf16> to vector<4x324xbf16>
    %78 = vector.extract_strided_slice %77 {offsets = [0, 0], sizes = [4, 286], strides = [1, 1]} : vector<4x324xbf16> to vector<4x286xbf16>
    %79 = vector.extract_strided_slice %77 {offsets = [0, 1], sizes = [4, 286], strides = [1, 1]} : vector<4x324xbf16> to vector<4x286xbf16>
    %80 = vector.extract_strided_slice %77 {offsets = [0, 2], sizes = [4, 286], strides = [1, 1]} : vector<4x324xbf16> to vector<4x286xbf16>
    %81 = vector.extract_strided_slice %77 {offsets = [0, 18], sizes = [4, 286], strides = [1, 1]} : vector<4x324xbf16> to vector<4x286xbf16>
    %82 = vector.extract_strided_slice %77 {offsets = [0, 19], sizes = [4, 286], strides = [1, 1]} : vector<4x324xbf16> to vector<4x286xbf16>
    %83 = vector.extract_strided_slice %77 {offsets = [0, 20], sizes = [4, 286], strides = [1, 1]} : vector<4x324xbf16> to vector<4x286xbf16>
    %84 = vector.extract_strided_slice %77 {offsets = [0, 36], sizes = [4, 286], strides = [1, 1]} : vector<4x324xbf16> to vector<4x286xbf16>
    %85 = vector.extract_strided_slice %77 {offsets = [0, 37], sizes = [4, 286], strides = [1, 1]} : vector<4x324xbf16> to vector<4x286xbf16>
    %86 = vector.extract_strided_slice %77 {offsets = [0, 38], sizes = [4, 286], strides = [1, 1]} : vector<4x324xbf16> to vector<4x286xbf16>
    %87 = tpu.concatenate %78, %79, %80, %81, %82, %83, %84, %85, %86 in 0 : vector<4x286xbf16>, vector<4x286xbf16>, vector<4x286xbf16>, vector<4x286xbf16>, vector<4x286xbf16>, vector<4x286xbf16>, vector<4x286xbf16>, vector<4x286xbf16>, vector<4x286xbf16> -> vector<36x286xbf16>
    %c0_33 = arith.constant 0 : index
    %c0_34 = arith.constant 0 : index
    %88 = vector.load %arg2[%c0_33, %c0_34] : memref<128x36xbf16, #tpu.memory_space<vmem>>, vector<128x36xbf16>
    %cst_35 = arith.constant dense<0.000000e+00> : vector<128x286xf32>
    %89 = tpu.matmul %88, %87, %cst_35 {dimension_numbers = #tpu.dot_dimension_numbers<[1], [0], [0], [1], [0, 0, 1, 1], [], []>} : vector<128x36xbf16>, vector<36x286xbf16>, vector<128x286xf32> -> vector<128x286xf32>
    %c0_36 = arith.constant 0 : index
    %c0_37 = arith.constant 0 : index
    %90 = vector.load %arg3[%c0_36, %c0_37] : memref<128x1xf32, #tpu.memory_space<vmem>>, vector<128x1xf32>
    %91 = vector.broadcast %90 : vector<128x1xf32> to vector<128x286xf32>
    %92 = arith.addf %89, %91 : vector<128x286xf32>
    %cst_38 = arith.constant 0.000000e+00 : f32
    %93 = vector.broadcast %cst_38 : f32 to vector<128x286xf32>
    %94 = arith.maximumf %92, %93 : vector<128x286xf32>
    %95 = vector.broadcast %0 : vector<1x286xf32> to vector<128x286xf32>
    %96 = arith.mulf %94, %95 : vector<128x286xf32>
    %cst_39 = arith.constant dense<0.000000e+00> : vector<128xf32>
    %97 = vector.multi_reduction <add>, %96, %cst_39 [1] : vector<128x286xf32> to vector<128xf32>
    %98 = vector.shape_cast %97 : vector<128xf32> to vector<128x1xf32>
    %cst_40 = arith.constant 3.906250e-03 : f32
    %99 = vector.broadcast %cst_40 : f32 to vector<128x1xf32>
    %100 = arith.mulf %98, %99 : vector<128x1xf32>
    %c4 = arith.constant 4 : index
    %c0_41 = arith.constant 0 : index
    %c0_42 = arith.constant 0 : index
    %101 = vector.load %arg1[%c4, %c0_41, %c0_42] : memref<8x4x324xbf16, #tpu.memory_space<vmem>>, vector<1x4x324xbf16>
    %102 = vector.shape_cast %101 : vector<1x4x324xbf16> to vector<4x324xbf16>
    %103 = vector.extract_strided_slice %102 {offsets = [0, 0], sizes = [4, 286], strides = [1, 1]} : vector<4x324xbf16> to vector<4x286xbf16>
    %104 = vector.extract_strided_slice %102 {offsets = [0, 1], sizes = [4, 286], strides = [1, 1]} : vector<4x324xbf16> to vector<4x286xbf16>
    %105 = vector.extract_strided_slice %102 {offsets = [0, 2], sizes = [4, 286], strides = [1, 1]} : vector<4x324xbf16> to vector<4x286xbf16>
    %106 = vector.extract_strided_slice %102 {offsets = [0, 18], sizes = [4, 286], strides = [1, 1]} : vector<4x324xbf16> to vector<4x286xbf16>
    %107 = vector.extract_strided_slice %102 {offsets = [0, 19], sizes = [4, 286], strides = [1, 1]} : vector<4x324xbf16> to vector<4x286xbf16>
    %108 = vector.extract_strided_slice %102 {offsets = [0, 20], sizes = [4, 286], strides = [1, 1]} : vector<4x324xbf16> to vector<4x286xbf16>
    %109 = vector.extract_strided_slice %102 {offsets = [0, 36], sizes = [4, 286], strides = [1, 1]} : vector<4x324xbf16> to vector<4x286xbf16>
    %110 = vector.extract_strided_slice %102 {offsets = [0, 37], sizes = [4, 286], strides = [1, 1]} : vector<4x324xbf16> to vector<4x286xbf16>
    %111 = vector.extract_strided_slice %102 {offsets = [0, 38], sizes = [4, 286], strides = [1, 1]} : vector<4x324xbf16> to vector<4x286xbf16>
    %112 = tpu.concatenate %103, %104, %105, %106, %107, %108, %109, %110, %111 in 0 : vector<4x286xbf16>, vector<4x286xbf16>, vector<4x286xbf16>, vector<4x286xbf16>, vector<4x286xbf16>, vector<4x286xbf16>, vector<4x286xbf16>, vector<4x286xbf16>, vector<4x286xbf16> -> vector<36x286xbf16>
    %c0_43 = arith.constant 0 : index
    %c0_44 = arith.constant 0 : index
    %113 = vector.load %arg2[%c0_43, %c0_44] : memref<128x36xbf16, #tpu.memory_space<vmem>>, vector<128x36xbf16>
    %cst_45 = arith.constant dense<0.000000e+00> : vector<128x286xf32>
    %114 = tpu.matmul %113, %112, %cst_45 {dimension_numbers = #tpu.dot_dimension_numbers<[1], [0], [0], [1], [0, 0, 1, 1], [], []>} : vector<128x36xbf16>, vector<36x286xbf16>, vector<128x286xf32> -> vector<128x286xf32>
    %c0_46 = arith.constant 0 : index
    %c0_47 = arith.constant 0 : index
    %115 = vector.load %arg3[%c0_46, %c0_47] : memref<128x1xf32, #tpu.memory_space<vmem>>, vector<128x1xf32>
    %116 = vector.broadcast %115 : vector<128x1xf32> to vector<128x286xf32>
    %117 = arith.addf %114, %116 : vector<128x286xf32>
    %cst_48 = arith.constant 0.000000e+00 : f32
    %118 = vector.broadcast %cst_48 : f32 to vector<128x286xf32>
    %119 = arith.maximumf %117, %118 : vector<128x286xf32>
    %120 = vector.broadcast %0 : vector<1x286xf32> to vector<128x286xf32>
    %121 = arith.mulf %119, %120 : vector<128x286xf32>
    %cst_49 = arith.constant dense<0.000000e+00> : vector<128xf32>
    %122 = vector.multi_reduction <add>, %121, %cst_49 [1] : vector<128x286xf32> to vector<128xf32>
    %123 = vector.shape_cast %122 : vector<128xf32> to vector<128x1xf32>
    %cst_50 = arith.constant 3.906250e-03 : f32
    %124 = vector.broadcast %cst_50 : f32 to vector<128x1xf32>
    %125 = arith.mulf %123, %124 : vector<128x1xf32>
    %c5 = arith.constant 5 : index
    %c0_51 = arith.constant 0 : index
    %c0_52 = arith.constant 0 : index
    %126 = vector.load %arg1[%c5, %c0_51, %c0_52] : memref<8x4x324xbf16, #tpu.memory_space<vmem>>, vector<1x4x324xbf16>
    %127 = vector.shape_cast %126 : vector<1x4x324xbf16> to vector<4x324xbf16>
    %128 = vector.extract_strided_slice %127 {offsets = [0, 0], sizes = [4, 286], strides = [1, 1]} : vector<4x324xbf16> to vector<4x286xbf16>
    %129 = vector.extract_strided_slice %127 {offsets = [0, 1], sizes = [4, 286], strides = [1, 1]} : vector<4x324xbf16> to vector<4x286xbf16>
    %130 = vector.extract_strided_slice %127 {offsets = [0, 2], sizes = [4, 286], strides = [1, 1]} : vector<4x324xbf16> to vector<4x286xbf16>
    %131 = vector.extract_strided_slice %127 {offsets = [0, 18], sizes = [4, 286], strides = [1, 1]} : vector<4x324xbf16> to vector<4x286xbf16>
    %132 = vector.extract_strided_slice %127 {offsets = [0, 19], sizes = [4, 286], strides = [1, 1]} : vector<4x324xbf16> to vector<4x286xbf16>
    %133 = vector.extract_strided_slice %127 {offsets = [0, 20], sizes = [4, 286], strides = [1, 1]} : vector<4x324xbf16> to vector<4x286xbf16>
    %134 = vector.extract_strided_slice %127 {offsets = [0, 36], sizes = [4, 286], strides = [1, 1]} : vector<4x324xbf16> to vector<4x286xbf16>
    %135 = vector.extract_strided_slice %127 {offsets = [0, 37], sizes = [4, 286], strides = [1, 1]} : vector<4x324xbf16> to vector<4x286xbf16>
    %136 = vector.extract_strided_slice %127 {offsets = [0, 38], sizes = [4, 286], strides = [1, 1]} : vector<4x324xbf16> to vector<4x286xbf16>
    %137 = tpu.concatenate %128, %129, %130, %131, %132, %133, %134, %135, %136 in 0 : vector<4x286xbf16>, vector<4x286xbf16>, vector<4x286xbf16>, vector<4x286xbf16>, vector<4x286xbf16>, vector<4x286xbf16>, vector<4x286xbf16>, vector<4x286xbf16>, vector<4x286xbf16> -> vector<36x286xbf16>
    %c0_53 = arith.constant 0 : index
    %c0_54 = arith.constant 0 : index
    %138 = vector.load %arg2[%c0_53, %c0_54] : memref<128x36xbf16, #tpu.memory_space<vmem>>, vector<128x36xbf16>
    %cst_55 = arith.constant dense<0.000000e+00> : vector<128x286xf32>
    %139 = tpu.matmul %138, %137, %cst_55 {dimension_numbers = #tpu.dot_dimension_numbers<[1], [0], [0], [1], [0, 0, 1, 1], [], []>} : vector<128x36xbf16>, vector<36x286xbf16>, vector<128x286xf32> -> vector<128x286xf32>
    %c0_56 = arith.constant 0 : index
    %c0_57 = arith.constant 0 : index
    %140 = vector.load %arg3[%c0_56, %c0_57] : memref<128x1xf32, #tpu.memory_space<vmem>>, vector<128x1xf32>
    %141 = vector.broadcast %140 : vector<128x1xf32> to vector<128x286xf32>
    %142 = arith.addf %139, %141 : vector<128x286xf32>
    %cst_58 = arith.constant 0.000000e+00 : f32
    %143 = vector.broadcast %cst_58 : f32 to vector<128x286xf32>
    %144 = arith.maximumf %142, %143 : vector<128x286xf32>
    %145 = vector.broadcast %0 : vector<1x286xf32> to vector<128x286xf32>
    %146 = arith.mulf %144, %145 : vector<128x286xf32>
    %cst_59 = arith.constant dense<0.000000e+00> : vector<128xf32>
    %147 = vector.multi_reduction <add>, %146, %cst_59 [1] : vector<128x286xf32> to vector<128xf32>
    %148 = vector.shape_cast %147 : vector<128xf32> to vector<128x1xf32>
    %cst_60 = arith.constant 3.906250e-03 : f32
    %149 = vector.broadcast %cst_60 : f32 to vector<128x1xf32>
    %150 = arith.mulf %148, %149 : vector<128x1xf32>
    %c6 = arith.constant 6 : index
    %c0_61 = arith.constant 0 : index
    %c0_62 = arith.constant 0 : index
    %151 = vector.load %arg1[%c6, %c0_61, %c0_62] : memref<8x4x324xbf16, #tpu.memory_space<vmem>>, vector<1x4x324xbf16>
    %152 = vector.shape_cast %151 : vector<1x4x324xbf16> to vector<4x324xbf16>
    %153 = vector.extract_strided_slice %152 {offsets = [0, 0], sizes = [4, 286], strides = [1, 1]} : vector<4x324xbf16> to vector<4x286xbf16>
    %154 = vector.extract_strided_slice %152 {offsets = [0, 1], sizes = [4, 286], strides = [1, 1]} : vector<4x324xbf16> to vector<4x286xbf16>
    %155 = vector.extract_strided_slice %152 {offsets = [0, 2], sizes = [4, 286], strides = [1, 1]} : vector<4x324xbf16> to vector<4x286xbf16>
    %156 = vector.extract_strided_slice %152 {offsets = [0, 18], sizes = [4, 286], strides = [1, 1]} : vector<4x324xbf16> to vector<4x286xbf16>
    %157 = vector.extract_strided_slice %152 {offsets = [0, 19], sizes = [4, 286], strides = [1, 1]} : vector<4x324xbf16> to vector<4x286xbf16>
    %158 = vector.extract_strided_slice %152 {offsets = [0, 20], sizes = [4, 286], strides = [1, 1]} : vector<4x324xbf16> to vector<4x286xbf16>
    %159 = vector.extract_strided_slice %152 {offsets = [0, 36], sizes = [4, 286], strides = [1, 1]} : vector<4x324xbf16> to vector<4x286xbf16>
    %160 = vector.extract_strided_slice %152 {offsets = [0, 37], sizes = [4, 286], strides = [1, 1]} : vector<4x324xbf16> to vector<4x286xbf16>
    %161 = vector.extract_strided_slice %152 {offsets = [0, 38], sizes = [4, 286], strides = [1, 1]} : vector<4x324xbf16> to vector<4x286xbf16>
    %162 = tpu.concatenate %153, %154, %155, %156, %157, %158, %159, %160, %161 in 0 : vector<4x286xbf16>, vector<4x286xbf16>, vector<4x286xbf16>, vector<4x286xbf16>, vector<4x286xbf16>, vector<4x286xbf16>, vector<4x286xbf16>, vector<4x286xbf16>, vector<4x286xbf16> -> vector<36x286xbf16>
    %c0_63 = arith.constant 0 : index
    %c0_64 = arith.constant 0 : index
    %163 = vector.load %arg2[%c0_63, %c0_64] : memref<128x36xbf16, #tpu.memory_space<vmem>>, vector<128x36xbf16>
    %cst_65 = arith.constant dense<0.000000e+00> : vector<128x286xf32>
    %164 = tpu.matmul %163, %162, %cst_65 {dimension_numbers = #tpu.dot_dimension_numbers<[1], [0], [0], [1], [0, 0, 1, 1], [], []>} : vector<128x36xbf16>, vector<36x286xbf16>, vector<128x286xf32> -> vector<128x286xf32>
    %c0_66 = arith.constant 0 : index
    %c0_67 = arith.constant 0 : index
    %165 = vector.load %arg3[%c0_66, %c0_67] : memref<128x1xf32, #tpu.memory_space<vmem>>, vector<128x1xf32>
    %166 = vector.broadcast %165 : vector<128x1xf32> to vector<128x286xf32>
    %167 = arith.addf %164, %166 : vector<128x286xf32>
    %cst_68 = arith.constant 0.000000e+00 : f32
    %168 = vector.broadcast %cst_68 : f32 to vector<128x286xf32>
    %169 = arith.maximumf %167, %168 : vector<128x286xf32>
    %170 = vector.broadcast %0 : vector<1x286xf32> to vector<128x286xf32>
    %171 = arith.mulf %169, %170 : vector<128x286xf32>
    %cst_69 = arith.constant dense<0.000000e+00> : vector<128xf32>
    %172 = vector.multi_reduction <add>, %171, %cst_69 [1] : vector<128x286xf32> to vector<128xf32>
    %173 = vector.shape_cast %172 : vector<128xf32> to vector<128x1xf32>
    %cst_70 = arith.constant 3.906250e-03 : f32
    %174 = vector.broadcast %cst_70 : f32 to vector<128x1xf32>
    %175 = arith.mulf %173, %174 : vector<128x1xf32>
    %c7 = arith.constant 7 : index
    %c0_71 = arith.constant 0 : index
    %c0_72 = arith.constant 0 : index
    %176 = vector.load %arg1[%c7, %c0_71, %c0_72] : memref<8x4x324xbf16, #tpu.memory_space<vmem>>, vector<1x4x324xbf16>
    %177 = vector.shape_cast %176 : vector<1x4x324xbf16> to vector<4x324xbf16>
    %178 = vector.extract_strided_slice %177 {offsets = [0, 0], sizes = [4, 286], strides = [1, 1]} : vector<4x324xbf16> to vector<4x286xbf16>
    %179 = vector.extract_strided_slice %177 {offsets = [0, 1], sizes = [4, 286], strides = [1, 1]} : vector<4x324xbf16> to vector<4x286xbf16>
    %180 = vector.extract_strided_slice %177 {offsets = [0, 2], sizes = [4, 286], strides = [1, 1]} : vector<4x324xbf16> to vector<4x286xbf16>
    %181 = vector.extract_strided_slice %177 {offsets = [0, 18], sizes = [4, 286], strides = [1, 1]} : vector<4x324xbf16> to vector<4x286xbf16>
    %182 = vector.extract_strided_slice %177 {offsets = [0, 19], sizes = [4, 286], strides = [1, 1]} : vector<4x324xbf16> to vector<4x286xbf16>
    %183 = vector.extract_strided_slice %177 {offsets = [0, 20], sizes = [4, 286], strides = [1, 1]} : vector<4x324xbf16> to vector<4x286xbf16>
    %184 = vector.extract_strided_slice %177 {offsets = [0, 36], sizes = [4, 286], strides = [1, 1]} : vector<4x324xbf16> to vector<4x286xbf16>
    %185 = vector.extract_strided_slice %177 {offsets = [0, 37], sizes = [4, 286], strides = [1, 1]} : vector<4x324xbf16> to vector<4x286xbf16>
    %186 = vector.extract_strided_slice %177 {offsets = [0, 38], sizes = [4, 286], strides = [1, 1]} : vector<4x324xbf16> to vector<4x286xbf16>
    %187 = tpu.concatenate %178, %179, %180, %181, %182, %183, %184, %185, %186 in 0 : vector<4x286xbf16>, vector<4x286xbf16>, vector<4x286xbf16>, vector<4x286xbf16>, vector<4x286xbf16>, vector<4x286xbf16>, vector<4x286xbf16>, vector<4x286xbf16>, vector<4x286xbf16> -> vector<36x286xbf16>
    %c0_73 = arith.constant 0 : index
    %c0_74 = arith.constant 0 : index
    %188 = vector.load %arg2[%c0_73, %c0_74] : memref<128x36xbf16, #tpu.memory_space<vmem>>, vector<128x36xbf16>
    %cst_75 = arith.constant dense<0.000000e+00> : vector<128x286xf32>
    %189 = tpu.matmul %188, %187, %cst_75 {dimension_numbers = #tpu.dot_dimension_numbers<[1], [0], [0], [1], [0, 0, 1, 1], [], []>} : vector<128x36xbf16>, vector<36x286xbf16>, vector<128x286xf32> -> vector<128x286xf32>
    %c0_76 = arith.constant 0 : index
    %c0_77 = arith.constant 0 : index
    %190 = vector.load %arg3[%c0_76, %c0_77] : memref<128x1xf32, #tpu.memory_space<vmem>>, vector<128x1xf32>
    %191 = vector.broadcast %190 : vector<128x1xf32> to vector<128x286xf32>
    %192 = arith.addf %189, %191 : vector<128x286xf32>
    %cst_78 = arith.constant 0.000000e+00 : f32
    %193 = vector.broadcast %cst_78 : f32 to vector<128x286xf32>
    %194 = arith.maximumf %192, %193 : vector<128x286xf32>
    %195 = vector.broadcast %0 : vector<1x286xf32> to vector<128x286xf32>
    %196 = arith.mulf %194, %195 : vector<128x286xf32>
    %cst_79 = arith.constant dense<0.000000e+00> : vector<128xf32>
    %197 = vector.multi_reduction <add>, %196, %cst_79 [1] : vector<128x286xf32> to vector<128xf32>
    %198 = vector.shape_cast %197 : vector<128xf32> to vector<128x1xf32>
    %cst_80 = arith.constant 3.906250e-03 : f32
    %199 = vector.broadcast %cst_80 : f32 to vector<128x1xf32>
    %200 = arith.mulf %198, %199 : vector<128x1xf32>
    %201 = tpu.concatenate %25, %50, %75, %100, %125, %150, %175, %200 in 1 : vector<128x1xf32>, vector<128x1xf32>, vector<128x1xf32>, vector<128x1xf32>, vector<128x1xf32>, vector<128x1xf32>, vector<128x1xf32>, vector<128x1xf32> -> vector<128x8xf32>
    %202 = tpu.transpose %201, [1, 0] : vector<128x8xf32> -> vector<8x128xf32>
    %203 = arith.truncf %202 : vector<8x128xf32> to vector<8x128xbf16>
    %c0_81 = arith.constant 0 : index
    %c0_82 = arith.constant 0 : index
    %204 = vector.load %arg5[%c0_81, %c0_82] : memref<8x128xbf16, #tpu.memory_space<vmem>>, vector<8x128xbf16>
    tpu.vector_store %arg5[%c0_81, %c0_82], %203 {strides = array<i32>} : memref<8x128xbf16, #tpu.memory_space<vmem>>, vector<8x128xbf16>,
    return
  }
  func.func @transform_0(%arg0: i32) -> (i32, i32, i32) {
    %c0_i32 = arith.constant 0 : i32
    %c0_i32_0 = arith.constant 0 : i32
    %c0_i32_1 = arith.constant 0 : i32
    return %arg0, %c0_i32, %c0_i32_0 : i32, i32, i32
  }
  func.func @transform_1(%arg0: i32) -> (i32, i32) {
    %c0_i32 = arith.constant 0 : i32
    %c0_i32_0 = arith.constant 0 : i32
    %c0_i32_1 = arith.constant 0 : i32
    return %c0_i32, %c0_i32_0 : i32, i32
  }
  func.func @transform_2(%arg0: i32) -> (i32, i32) {
    %c0_i32 = arith.constant 0 : i32
    %c0_i32_0 = arith.constant 0 : i32
    %c0_i32_1 = arith.constant 0 : i32
    return %c0_i32, %c0_i32_0 : i32, i32
  }
  func.func @transform_3(%arg0: i32) -> (i32, i32) {
    %c0_i32 = arith.constant 0 : i32
    %c0_i32_0 = arith.constant 0 : i32
    %c0_i32_1 = arith.constant 0 : i32
    return %c0_i32, %c0_i32_0 : i32, i32
  }
  func.func @transform_4(%arg0: i32) -> (i32, i32) {
    %c0_i32 = arith.constant 0 : i32
    %c0_i32_0 = arith.constant 0 : i32
    return %arg0, %c0_i32 : i32, i32
  }
}

module attributes {stable_mosaic.version = 11 : i64} {
  func.func @_proj_loss_kernel(%arg0: memref<8x128xbf16, #tpu.memory_space<vmem>>, %arg1: memref<8x128xbf16, #tpu.memory_space<vmem>>, %arg2: memref<128x128xbf16, #tpu.memory_space<vmem>>, %arg3: memref<1x128xf32, #tpu.memory_space<vmem>>, %arg4: memref<1x128xf32, #tpu.memory_space<vmem>>, %arg5: memref<128x128xbf16, #tpu.memory_space<vmem>>, %arg6: memref<1x128xf32, #tpu.memory_space<vmem>>, %arg7: memref<1x128xf32, #tpu.memory_space<vmem>>, %arg8: memref<128x128xbf16, #tpu.memory_space<vmem>>, %arg9: memref<8x128xf32, #tpu.memory_space<vmem>>, %arg10: memref<8x128xf32, #tpu.memory_space<vmem>>, %arg11: memref<1x1xf32, #tpu.memory_space<vmem>>) attributes {dimension_semantics = [], scalar_prefetch = 0 : i64, scratch_operands = 0 : i64, tpu.core_type = #tpu.core_type<tc>} {
    %c0 = arith.constant 0 : index
    %c0_0 = arith.constant 0 : index
    %0 = vector.load %arg0[%c0, %c0_0] : memref<8x128xbf16, #tpu.memory_space<vmem>>, vector<8x128xbf16>
    %c0_1 = arith.constant 0 : index
    %c0_2 = arith.constant 0 : index
    %1 = vector.load %arg2[%c0_1, %c0_2] : memref<128x128xbf16, #tpu.memory_space<vmem>>, vector<128x128xbf16>
    %cst = arith.constant dense<0.000000e+00> : vector<8x128xf32>
    %2 = tpu.matmul %0, %1, %cst {dimension_numbers = #tpu.dot_dimension_numbers<[1], [0], [0], [1], [0, 0, 1, 1], [], []>} : vector<8x128xbf16>, vector<128x128xbf16>, vector<8x128xf32> -> vector<8x128xf32>
    %c0_3 = arith.constant 0 : index
    %c0_4 = arith.constant 0 : index
    %3 = vector.load %arg3[%c0_3, %c0_4] : memref<1x128xf32, #tpu.memory_space<vmem>>, vector<1x128xf32>
    %c0_5 = arith.constant 0 : index
    %c0_6 = arith.constant 0 : index
    %4 = vector.load %arg4[%c0_5, %c0_6] : memref<1x128xf32, #tpu.memory_space<vmem>>, vector<1x128xf32>
    %cst_7 = arith.constant dense<0.000000e+00> : vector<128xf32>
    %5 = vector.multi_reduction <add>, %2, %cst_7 [0] : vector<8x128xf32> to vector<128xf32>
    %6 = vector.shape_cast %5 : vector<128xf32> to vector<1x128xf32>
    %cst_8 = arith.constant 8.000000e+00 : f32
    %7 = vector.broadcast %cst_8 : f32 to vector<1x128xf32>
    %8 = arith.divf %6, %7 : vector<1x128xf32>
    %9 = vector.broadcast %8 : vector<1x128xf32> to vector<8x128xf32>
    %10 = arith.subf %2, %9 : vector<8x128xf32>
    %11 = arith.mulf %10, %10 : vector<8x128xf32>
    %cst_9 = arith.constant dense<0.000000e+00> : vector<128xf32>
    %12 = vector.multi_reduction <add>, %11, %cst_9 [0] : vector<8x128xf32> to vector<128xf32>
    %13 = vector.shape_cast %12 : vector<128xf32> to vector<1x128xf32>
    %cst_10 = arith.constant 8.000000e+00 : f32
    %14 = vector.broadcast %cst_10 : f32 to vector<1x128xf32>
    %15 = arith.divf %13, %14 : vector<1x128xf32>
    %16 = vector.broadcast %8 : vector<1x128xf32> to vector<8x128xf32>
    %17 = arith.subf %2, %16 : vector<8x128xf32>
    %cst_11 = arith.constant 9.99999974E-6 : f32
    %18 = vector.broadcast %cst_11 : f32 to vector<1x128xf32>
    %19 = arith.addf %15, %18 : vector<1x128xf32>
    %20 = math.rsqrt %19 : vector<1x128xf32>
    %21 = vector.broadcast %20 : vector<1x128xf32> to vector<8x128xf32>
    %22 = arith.mulf %17, %21 : vector<8x128xf32>
    %23 = vector.broadcast %3 : vector<1x128xf32> to vector<8x128xf32>
    %24 = arith.mulf %22, %23 : vector<8x128xf32>
    %25 = vector.broadcast %4 : vector<1x128xf32> to vector<8x128xf32>
    %26 = arith.addf %24, %25 : vector<8x128xf32>
    %cst_12 = arith.constant 0.000000e+00 : f32
    %27 = vector.broadcast %cst_12 : f32 to vector<8x128xf32>
    %28 = arith.maximumf %26, %27 : vector<8x128xf32>
    %29 = arith.truncf %28 : vector<8x128xf32> to vector<8x128xbf16>
    %c0_13 = arith.constant 0 : index
    %c0_14 = arith.constant 0 : index
    %30 = vector.load %arg5[%c0_13, %c0_14] : memref<128x128xbf16, #tpu.memory_space<vmem>>, vector<128x128xbf16>
    %cst_15 = arith.constant dense<0.000000e+00> : vector<8x128xf32>
    %31 = tpu.matmul %29, %30, %cst_15 {dimension_numbers = #tpu.dot_dimension_numbers<[1], [0], [0], [1], [0, 0, 1, 1], [], []>} : vector<8x128xbf16>, vector<128x128xbf16>, vector<8x128xf32> -> vector<8x128xf32>
    %c0_16 = arith.constant 0 : index
    %c0_17 = arith.constant 0 : index
    %32 = vector.load %arg6[%c0_16, %c0_17] : memref<1x128xf32, #tpu.memory_space<vmem>>, vector<1x128xf32>
    %c0_18 = arith.constant 0 : index
    %c0_19 = arith.constant 0 : index
    %33 = vector.load %arg7[%c0_18, %c0_19] : memref<1x128xf32, #tpu.memory_space<vmem>>, vector<1x128xf32>
    %cst_20 = arith.constant dense<0.000000e+00> : vector<128xf32>
    %34 = vector.multi_reduction <add>, %31, %cst_20 [0] : vector<8x128xf32> to vector<128xf32>
    %35 = vector.shape_cast %34 : vector<128xf32> to vector<1x128xf32>
    %cst_21 = arith.constant 8.000000e+00 : f32
    %36 = vector.broadcast %cst_21 : f32 to vector<1x128xf32>
    %37 = arith.divf %35, %36 : vector<1x128xf32>
    %38 = vector.broadcast %37 : vector<1x128xf32> to vector<8x128xf32>
    %39 = arith.subf %31, %38 : vector<8x128xf32>
    %40 = arith.mulf %39, %39 : vector<8x128xf32>
    %cst_22 = arith.constant dense<0.000000e+00> : vector<128xf32>
    %41 = vector.multi_reduction <add>, %40, %cst_22 [0] : vector<8x128xf32> to vector<128xf32>
    %42 = vector.shape_cast %41 : vector<128xf32> to vector<1x128xf32>
    %cst_23 = arith.constant 8.000000e+00 : f32
    %43 = vector.broadcast %cst_23 : f32 to vector<1x128xf32>
    %44 = arith.divf %42, %43 : vector<1x128xf32>
    %45 = vector.broadcast %37 : vector<1x128xf32> to vector<8x128xf32>
    %46 = arith.subf %31, %45 : vector<8x128xf32>
    %cst_24 = arith.constant 9.99999974E-6 : f32
    %47 = vector.broadcast %cst_24 : f32 to vector<1x128xf32>
    %48 = arith.addf %44, %47 : vector<1x128xf32>
    %49 = math.rsqrt %48 : vector<1x128xf32>
    %50 = vector.broadcast %49 : vector<1x128xf32> to vector<8x128xf32>
    %51 = arith.mulf %46, %50 : vector<8x128xf32>
    %52 = vector.broadcast %32 : vector<1x128xf32> to vector<8x128xf32>
    %53 = arith.mulf %51, %52 : vector<8x128xf32>
    %54 = vector.broadcast %33 : vector<1x128xf32> to vector<8x128xf32>
    %55 = arith.addf %53, %54 : vector<8x128xf32>
    %cst_25 = arith.constant 0.000000e+00 : f32
    %56 = vector.broadcast %cst_25 : f32 to vector<8x128xf32>
    %57 = arith.maximumf %55, %56 : vector<8x128xf32>
    %58 = arith.truncf %57 : vector<8x128xf32> to vector<8x128xbf16>
    %c0_26 = arith.constant 0 : index
    %c0_27 = arith.constant 0 : index
    %59 = vector.load %arg8[%c0_26, %c0_27] : memref<128x128xbf16, #tpu.memory_space<vmem>>, vector<128x128xbf16>
    %cst_28 = arith.constant dense<0.000000e+00> : vector<8x128xf32>
    %60 = tpu.matmul %58, %59, %cst_28 {dimension_numbers = #tpu.dot_dimension_numbers<[1], [0], [0], [1], [0, 0, 1, 1], [], []>} : vector<8x128xbf16>, vector<128x128xbf16>, vector<8x128xf32> -> vector<8x128xf32>
    %c0_29 = arith.constant 0 : index
    %c0_30 = arith.constant 0 : index
    %61 = vector.load %arg1[%c0_29, %c0_30] : memref<8x128xbf16, #tpu.memory_space<vmem>>, vector<8x128xbf16>
    %c0_31 = arith.constant 0 : index
    %c0_32 = arith.constant 0 : index
    %62 = vector.load %arg2[%c0_31, %c0_32] : memref<128x128xbf16, #tpu.memory_space<vmem>>, vector<128x128xbf16>
    %cst_33 = arith.constant dense<0.000000e+00> : vector<8x128xf32>
    %63 = tpu.matmul %61, %62, %cst_33 {dimension_numbers = #tpu.dot_dimension_numbers<[1], [0], [0], [1], [0, 0, 1, 1], [], []>} : vector<8x128xbf16>, vector<128x128xbf16>, vector<8x128xf32> -> vector<8x128xf32>
    %c0_34 = arith.constant 0 : index
    %c0_35 = arith.constant 0 : index
    %64 = vector.load %arg3[%c0_34, %c0_35] : memref<1x128xf32, #tpu.memory_space<vmem>>, vector<1x128xf32>
    %c0_36 = arith.constant 0 : index
    %c0_37 = arith.constant 0 : index
    %65 = vector.load %arg4[%c0_36, %c0_37] : memref<1x128xf32, #tpu.memory_space<vmem>>, vector<1x128xf32>
    %cst_38 = arith.constant dense<0.000000e+00> : vector<128xf32>
    %66 = vector.multi_reduction <add>, %63, %cst_38 [0] : vector<8x128xf32> to vector<128xf32>
    %67 = vector.shape_cast %66 : vector<128xf32> to vector<1x128xf32>
    %cst_39 = arith.constant 8.000000e+00 : f32
    %68 = vector.broadcast %cst_39 : f32 to vector<1x128xf32>
    %69 = arith.divf %67, %68 : vector<1x128xf32>
    %70 = vector.broadcast %69 : vector<1x128xf32> to vector<8x128xf32>
    %71 = arith.subf %63, %70 : vector<8x128xf32>
    %72 = arith.mulf %71, %71 : vector<8x128xf32>
    %cst_40 = arith.constant dense<0.000000e+00> : vector<128xf32>
    %73 = vector.multi_reduction <add>, %72, %cst_40 [0] : vector<8x128xf32> to vector<128xf32>
    %74 = vector.shape_cast %73 : vector<128xf32> to vector<1x128xf32>
    %cst_41 = arith.constant 8.000000e+00 : f32
    %75 = vector.broadcast %cst_41 : f32 to vector<1x128xf32>
    %76 = arith.divf %74, %75 : vector<1x128xf32>
    %77 = vector.broadcast %69 : vector<1x128xf32> to vector<8x128xf32>
    %78 = arith.subf %63, %77 : vector<8x128xf32>
    %cst_42 = arith.constant 9.99999974E-6 : f32
    %79 = vector.broadcast %cst_42 : f32 to vector<1x128xf32>
    %80 = arith.addf %76, %79 : vector<1x128xf32>
    %81 = math.rsqrt %80 : vector<1x128xf32>
    %82 = vector.broadcast %81 : vector<1x128xf32> to vector<8x128xf32>
    %83 = arith.mulf %78, %82 : vector<8x128xf32>
    %84 = vector.broadcast %64 : vector<1x128xf32> to vector<8x128xf32>
    %85 = arith.mulf %83, %84 : vector<8x128xf32>
    %86 = vector.broadcast %65 : vector<1x128xf32> to vector<8x128xf32>
    %87 = arith.addf %85, %86 : vector<8x128xf32>
    %cst_43 = arith.constant 0.000000e+00 : f32
    %88 = vector.broadcast %cst_43 : f32 to vector<8x128xf32>
    %89 = arith.maximumf %87, %88 : vector<8x128xf32>
    %90 = arith.truncf %89 : vector<8x128xf32> to vector<8x128xbf16>
    %c0_44 = arith.constant 0 : index
    %c0_45 = arith.constant 0 : index
    %91 = vector.load %arg5[%c0_44, %c0_45] : memref<128x128xbf16, #tpu.memory_space<vmem>>, vector<128x128xbf16>
    %cst_46 = arith.constant dense<0.000000e+00> : vector<8x128xf32>
    %92 = tpu.matmul %90, %91, %cst_46 {dimension_numbers = #tpu.dot_dimension_numbers<[1], [0], [0], [1], [0, 0, 1, 1], [], []>} : vector<8x128xbf16>, vector<128x128xbf16>, vector<8x128xf32> -> vector<8x128xf32>
    %c0_47 = arith.constant 0 : index
    %c0_48 = arith.constant 0 : index
    %93 = vector.load %arg6[%c0_47, %c0_48] : memref<1x128xf32, #tpu.memory_space<vmem>>, vector<1x128xf32>
    %c0_49 = arith.constant 0 : index
    %c0_50 = arith.constant 0 : index
    %94 = vector.load %arg7[%c0_49, %c0_50] : memref<1x128xf32, #tpu.memory_space<vmem>>, vector<1x128xf32>
    %cst_51 = arith.constant dense<0.000000e+00> : vector<128xf32>
    %95 = vector.multi_reduction <add>, %92, %cst_51 [0] : vector<8x128xf32> to vector<128xf32>
    %96 = vector.shape_cast %95 : vector<128xf32> to vector<1x128xf32>
    %cst_52 = arith.constant 8.000000e+00 : f32
    %97 = vector.broadcast %cst_52 : f32 to vector<1x128xf32>
    %98 = arith.divf %96, %97 : vector<1x128xf32>
    %99 = vector.broadcast %98 : vector<1x128xf32> to vector<8x128xf32>
    %100 = arith.subf %92, %99 : vector<8x128xf32>
    %101 = arith.mulf %100, %100 : vector<8x128xf32>
    %cst_53 = arith.constant dense<0.000000e+00> : vector<128xf32>
    %102 = vector.multi_reduction <add>, %101, %cst_53 [0] : vector<8x128xf32> to vector<128xf32>
    %103 = vector.shape_cast %102 : vector<128xf32> to vector<1x128xf32>
    %cst_54 = arith.constant 8.000000e+00 : f32
    %104 = vector.broadcast %cst_54 : f32 to vector<1x128xf32>
    %105 = arith.divf %103, %104 : vector<1x128xf32>
    %106 = vector.broadcast %98 : vector<1x128xf32> to vector<8x128xf32>
    %107 = arith.subf %92, %106 : vector<8x128xf32>
    %cst_55 = arith.constant 9.99999974E-6 : f32
    %108 = vector.broadcast %cst_55 : f32 to vector<1x128xf32>
    %109 = arith.addf %105, %108 : vector<1x128xf32>
    %110 = math.rsqrt %109 : vector<1x128xf32>
    %111 = vector.broadcast %110 : vector<1x128xf32> to vector<8x128xf32>
    %112 = arith.mulf %107, %111 : vector<8x128xf32>
    %113 = vector.broadcast %93 : vector<1x128xf32> to vector<8x128xf32>
    %114 = arith.mulf %112, %113 : vector<8x128xf32>
    %115 = vector.broadcast %94 : vector<1x128xf32> to vector<8x128xf32>
    %116 = arith.addf %114, %115 : vector<8x128xf32>
    %cst_56 = arith.constant 0.000000e+00 : f32
    %117 = vector.broadcast %cst_56 : f32 to vector<8x128xf32>
    %118 = arith.maximumf %116, %117 : vector<8x128xf32>
    %119 = arith.truncf %118 : vector<8x128xf32> to vector<8x128xbf16>
    %c0_57 = arith.constant 0 : index
    %c0_58 = arith.constant 0 : index
    %120 = vector.load %arg8[%c0_57, %c0_58] : memref<128x128xbf16, #tpu.memory_space<vmem>>, vector<128x128xbf16>
    %cst_59 = arith.constant dense<0.000000e+00> : vector<8x128xf32>
    %121 = tpu.matmul %119, %120, %cst_59 {dimension_numbers = #tpu.dot_dimension_numbers<[1], [0], [0], [1], [0, 0, 1, 1], [], []>} : vector<8x128xbf16>, vector<128x128xbf16>, vector<8x128xf32> -> vector<8x128xf32>
    %c0_60 = arith.constant 0 : index
    %c0_61 = arith.constant 0 : index
    %122 = vector.load %arg9[%c0_60, %c0_61] : memref<8x128xf32, #tpu.memory_space<vmem>>, vector<8x128xf32>
    tpu.vector_store %arg9[%c0_60, %c0_61], %60 {strides = array<i32>} : memref<8x128xf32, #tpu.memory_space<vmem>>, vector<8x128xf32>,
    %c0_62 = arith.constant 0 : index
    %c0_63 = arith.constant 0 : index
    %123 = vector.load %arg10[%c0_62, %c0_63] : memref<8x128xf32, #tpu.memory_space<vmem>>, vector<8x128xf32>
    tpu.vector_store %arg10[%c0_62, %c0_63], %121 {strides = array<i32>} : memref<8x128xf32, #tpu.memory_space<vmem>>, vector<8x128xf32>,
    %cst_64 = arith.constant dense<0.000000e+00> : vector<128xf32>
    %124 = vector.multi_reduction <add>, %60, %cst_64 [0] : vector<8x128xf32> to vector<128xf32>
    %125 = vector.shape_cast %124 : vector<128xf32> to vector<1x128xf32>
    %cst_65 = arith.constant 8.000000e+00 : f32
    %126 = vector.broadcast %cst_65 : f32 to vector<1x128xf32>
    %127 = arith.divf %125, %126 : vector<1x128xf32>
    %cst_66 = arith.constant dense<0.000000e+00> : vector<128xf32>
    %128 = vector.multi_reduction <add>, %121, %cst_66 [0] : vector<8x128xf32> to vector<128xf32>
    %129 = vector.shape_cast %128 : vector<128xf32> to vector<1x128xf32>
    %cst_67 = arith.constant 8.000000e+00 : f32
    %130 = vector.broadcast %cst_67 : f32 to vector<1x128xf32>
    %131 = arith.divf %129, %130 : vector<1x128xf32>
    %132 = vector.broadcast %127 : vector<1x128xf32> to vector<8x128xf32>
    %133 = arith.subf %60, %132 : vector<8x128xf32>
    %134 = arith.mulf %133, %133 : vector<8x128xf32>
    %cst_68 = arith.constant dense<0.000000e+00> : vector<128xf32>
    %135 = vector.multi_reduction <add>, %134, %cst_68 [0] : vector<8x128xf32> to vector<128xf32>
    %136 = vector.shape_cast %135 : vector<128xf32> to vector<1x128xf32>
    %cst_69 = arith.constant 8.000000e+00 : f32
    %137 = vector.broadcast %cst_69 : f32 to vector<1x128xf32>
    %138 = arith.divf %136, %137 : vector<1x128xf32>
    %cst_70 = arith.constant 9.99999974E-6 : f32
    %139 = vector.broadcast %cst_70 : f32 to vector<1x128xf32>
    %140 = arith.addf %138, %139 : vector<1x128xf32>
    %141 = math.rsqrt %140 : vector<1x128xf32>
    %142 = vector.broadcast %131 : vector<1x128xf32> to vector<8x128xf32>
    %143 = arith.subf %121, %142 : vector<8x128xf32>
    %144 = arith.mulf %143, %143 : vector<8x128xf32>
    %cst_71 = arith.constant dense<0.000000e+00> : vector<128xf32>
    %145 = vector.multi_reduction <add>, %144, %cst_71 [0] : vector<8x128xf32> to vector<128xf32>
    %146 = vector.shape_cast %145 : vector<128xf32> to vector<1x128xf32>
    %cst_72 = arith.constant 8.000000e+00 : f32
    %147 = vector.broadcast %cst_72 : f32 to vector<1x128xf32>
    %148 = arith.divf %146, %147 : vector<1x128xf32>
    %cst_73 = arith.constant 9.99999974E-6 : f32
    %149 = vector.broadcast %cst_73 : f32 to vector<1x128xf32>
    %150 = arith.addf %148, %149 : vector<1x128xf32>
    %151 = math.rsqrt %150 : vector<1x128xf32>
    %152 = arith.truncf %60 : vector<8x128xf32> to vector<8x128xbf16>
    %153 = tpu.transpose %152, [1, 0] : vector<8x128xbf16> -> vector<128x8xbf16>
    %154 = arith.truncf %121 : vector<8x128xf32> to vector<8x128xbf16>
    %cst_74 = arith.constant dense<0.000000e+00> : vector<128x128xf32>
    %155 = tpu.matmul %153, %154, %cst_74 {dimension_numbers = #tpu.dot_dimension_numbers<[1], [0], [0], [1], [0, 0, 1, 1], [], []>} : vector<128x8xbf16>, vector<8x128xbf16>, vector<128x128xf32> -> vector<128x128xf32>
    %cst_75 = arith.constant 1.250000e-01 : f32
    %156 = vector.broadcast %cst_75 : f32 to vector<128x128xf32>
    %157 = arith.mulf %155, %156 : vector<128x128xf32>
    %158 = tpu.transpose %127, [1, 0] : vector<1x128xf32> -> vector<128x1xf32>
    %159 = vector.broadcast %158 : vector<128x1xf32> to vector<128x128xf32>
    %160 = vector.broadcast %131 : vector<1x128xf32> to vector<128x128xf32>
    %161 = arith.mulf %159, %160 : vector<128x128xf32>
    %162 = arith.subf %157, %161 : vector<128x128xf32>
    %163 = tpu.transpose %141, [1, 0] : vector<1x128xf32> -> vector<128x1xf32>
    %164 = vector.broadcast %163 : vector<128x1xf32> to vector<128x128xf32>
    %165 = vector.broadcast %151 : vector<1x128xf32> to vector<128x128xf32>
    %166 = arith.mulf %164, %165 : vector<128x128xf32>
    %167 = arith.mulf %162, %166 : vector<128x128xf32>
    %168 = arith.mulf %167, %167 : vector<128x128xf32>
    %169 = tpu.iota {dimensions = array<i32: 0>} : vector<128x128xi32>
    %170 = tpu.iota {dimensions = array<i32: 1>} : vector<128x128xi32>
    %171 = arith.cmpi eq, %169, %170 : vector<128x128xi32>
    %c64_i32 = arith.constant 64 : i32
    %172 = vector.broadcast %c64_i32 : i32 to vector<128x128xi32>
    %173 = arith.cmpi slt, %169, %172 : vector<128x128xi32>
    %174 = arith.andi %171, %173 : vector<128x128xi1>
    %175 = arith.extui %174 : vector<128x128xi1> to vector<128x128xi32>
    %176 = arith.sitofp %175 : vector<128x128xi32> to vector<128x128xf32>
    %cst_76 = arith.constant 5.100000e-03 : f32
    %177 = vector.broadcast %cst_76 : f32 to vector<128x128xf32>
    %178 = arith.mulf %177, %168 : vector<128x128xf32>
    %cst_77 = arith.constant 0.994899988 : f32
    %179 = vector.broadcast %cst_77 : f32 to vector<128x128xf32>
    %180 = arith.mulf %179, %168 : vector<128x128xf32>
    %cst_78 = arith.constant 2.000000e+00 : f32
    %181 = vector.broadcast %cst_78 : f32 to vector<128x128xf32>
    %182 = arith.mulf %181, %167 : vector<128x128xf32>
    %183 = arith.subf %180, %182 : vector<128x128xf32>
    %cst_79 = arith.constant 1.000000e+00 : f32
    %184 = vector.broadcast %cst_79 : f32 to vector<128x128xf32>
    %185 = arith.addf %183, %184 : vector<128x128xf32>
    %186 = arith.mulf %176, %185 : vector<128x128xf32>
    %187 = arith.addf %178, %186 : vector<128x128xf32>
    %cst_80 = arith.constant dense<0.000000e+00> : vector<128xf32>
    %188 = vector.multi_reduction <add>, %187, %cst_80 [1] : vector<128x128xf32> to vector<128xf32>
    %189 = vector.shape_cast %188 : vector<128xf32> to vector<128x1xf32>
    %cst_81 = arith.constant dense<0.000000e+00> : vector<1xf32>
    %190 = vector.multi_reduction <add>, %189, %cst_81 [0] : vector<128x1xf32> to vector<1xf32>
    %191 = vector.shape_cast %190 : vector<1xf32> to vector<1x1xf32>
    %c0_82 = arith.constant 0 : index
    %c0_83 = arith.constant 0 : index
    %192 = vector.load %arg11[%c0_82, %c0_83] : memref<1x1xf32, #tpu.memory_space<vmem>>, vector<1x1xf32>
    tpu.vector_store %arg11[%c0_82, %c0_83], %191 {strides = array<i32>} : memref<1x1xf32, #tpu.memory_space<vmem>>, vector<1x1xf32>,
    return
  }
}

</mosaic_0001>

<llo_original>
// kernel: barlow_twins_forward.3
$region0: #{barlow_twins_forward.3}
  #allocation0 [shape = 'u32[]', space=smem, size = 0x4, offset = 0x4, fixed_abs, tag = 'smem constant byte address 0x4 - core index']
  #allocation1 [shape = 'u32[144,128]{1,0:T(1,128)}', space=vmem, size = 0x12000, scoped, tag = 'internal scratch']
  %s0 = inlined_call_operand.vmem [shape: bf16[8,128], index: 0, kind: input, shape index: {}]
  %s1 = inlined_call_operand.vmem [shape: bf16[8,128], index: 1, kind: input, shape index: {}]
  %s2 = inlined_call_operand.vmem [shape: bf16[128,128], index: 2, kind: input, shape index: {}]
  %s3 = inlined_call_operand.vmem [shape: f32[1,128], index: 3, kind: input, shape index: {}]
  %s4 = inlined_call_operand.vmem [shape: f32[1,128], index: 4, kind: input, shape index: {}]
  %s5 = inlined_call_operand.vmem [shape: bf16[128,128], index: 5, kind: input, shape index: {}]
  %s6 = inlined_call_operand.vmem [shape: f32[1,128], index: 6, kind: input, shape index: {}]
  %s7 = inlined_call_operand.vmem [shape: f32[1,128], index: 7, kind: input, shape index: {}]
  %s8 = inlined_call_operand.vmem [shape: bf16[128,128], index: 8, kind: input, shape index: {}]
  %s9 = inlined_call_operand.hbm [shape: f32[8,128], index: 9, kind: output, shape index: {0}]
  %s10 = inlined_call_operand.hbm [shape: f32[8,128], index: 10, kind: output, shape index: {1}]
  %s11 = inlined_call_operand.hbm [shape: f32[1,1], index: 11, kind: output, shape index: {2}]
  %12 = xla_tuple %s9, %s10, %s11
  %s13 = sld [smem:[#allocation0]]
  $region62: #{barlow_twins_forward.3} parent=0
    _
  %s15 = ssub.s32 1, %s13
  %s16 = scalar_select 0, %s15, %s13
  $region1: #{barlow_twins_forward.3} parent=0
    #allocation2 [shape = 'u8[4096]{0}', space=vmem, size = 0x1000, scoped, tag = 'output window, operand 0, single buffered']
    #allocation3 [shape = 's32[1]{0}', space=sflag, size = 0x4, scoped, tag = 'scoped memory for barlow_twins_forward.3']
    #allocation4 [shape = 'u8[4096]{0}', space=vmem, size = 0x1000, scoped, tag = 'output window, operand 1, single buffered']
    #allocation5 [shape = 's32[1]{0}', space=sflag, size = 0x4, scoped, tag = 'scoped memory for barlow_twins_forward.3']
    #allocation6 [shape = 'u8[512]{0}', space=vmem, size = 0x400, scoped, tag = 'output window, operand 2, single buffered']
    %17 = vsyncpa [#allocation3], 0
    %18 = vsyncpa [#allocation5], 0
    // Predicated region
    $region2: #{barlow_twins_forward.3} parent=1 // pred_check
      _
    $region3: #{barlow_twins_forward.3} parent=1 // pred_check_branch
      %20 = sbr.rel (0) target = $region5
    $region4: #{barlow_twins_forward.3} parent=1 // pred_region
      _
    $region5: #{barlow_twins_forward.3} parent=1 // pred_fallthru
      _
    // Predicated region
    $region6: #{barlow_twins_forward.3} parent=1 // pred_check
      _
    $region7: #{barlow_twins_forward.3} parent=1 // pred_check_branch
      %22 = sbr.rel (0) target = $region9
    $region8: #{barlow_twins_forward.3} parent=1 // pred_region
      _
    $region9: #{barlow_twins_forward.3} parent=1 // pred_fallthru
      _
    // Predicated region
    $region10: #{barlow_twins_forward.3} parent=1 // pred_check
      _
    $region11: #{barlow_twins_forward.3} parent=1 // pred_check_branch
      %24 = sbr.rel (0) target = $region13
    $region12: #{barlow_twins_forward.3} parent=1 // pred_region
      _
    $region13: #{barlow_twins_forward.3} parent=1 // pred_fallthru
      _
    // Predicated region
    $region14: #{barlow_twins_forward.3} parent=1 // pred_check
      _
    $region15: #{barlow_twins_forward.3} parent=1 // pred_check_branch
      %26 = sbr.rel (0) target = $region17
    $region16: #{barlow_twins_forward.3} parent=1 // pred_region
      _
    $region17: #{barlow_twins_forward.3} parent=1 // pred_fallthru
      _
    // Predicated region
    $region18: #{barlow_twins_forward.3} parent=1 // pred_check
      _
    $region19: #{barlow_twins_forward.3} parent=1 // pred_check_branch
      %28 = sbr.rel (0) target = $region21
    $region20: #{barlow_twins_forward.3} parent=1 // pred_region
      _
    $region21: #{barlow_twins_forward.3} parent=1 // pred_fallthru
      _
    // Predicated region
    $region22: #{barlow_twins_forward.3} parent=1 // pred_check
      _
    $region23: #{barlow_twins_forward.3} parent=1 // pred_check_branch
      %30 = sbr.rel (0) target = $region25
    $region24: #{barlow_twins_forward.3} parent=1 // pred_region
      _
    $region25: #{barlow_twins_forward.3} parent=1 // pred_fallthru
      _
    // Predicated region
    $region26: #{barlow_twins_forward.3} parent=1 // pred_check
      _
    $region27: #{barlow_twins_forward.3} parent=1 // pred_check_branch
      %32 = sbr.rel (0) target = $region29
    $region28: #{barlow_twins_forward.3} parent=1 // pred_region
      _
    $region29: #{barlow_twins_forward.3} parent=1 // pred_fallthru
      _
    // Predicated region
    $region30: #{barlow_twins_forward.3} parent=1 // pred_check
      _
    $region31: #{barlow_twins_forward.3} parent=1 // pred_check_branch
      %34 = sbr.rel (0) target = $region33
    $region32: #{barlow_twins_forward.3} parent=1 // pred_region
      _
    $region33: #{barlow_twins_forward.3} parent=1 // pred_fallthru
      _
    // Predicated region
    $region34: #{barlow_twins_forward.3} parent=1 // pred_check
      _
    $region35: #{barlow_twins_forward.3} parent=1 // pred_check_branch
      %36 = sbr.rel (0) target = $region37
    $region36: #{barlow_twins_forward.3} parent=1 // pred_region
      _
    $region37: #{barlow_twins_forward.3} parent=1 // pred_fallthru
      _
    %v38 = vld [vmem:[%s0] sm:$0xf]
    %v39 = vld [vmem:[%s2] sm:$0xf]
    %v40 = vld [vmem:[%s2 + $0x4] sm:$0xf]
    %v41 = vld [vmem:[%s2 + $0x8] sm:$0xf]
    %v42 = vld [vmem:[%s2 + $0xc] sm:$0xf]
    %v43 = vld [vmem:[%s2 + $0x10] sm:$0xf]
    %v44 = vld [vmem:[%s2 + $0x14] sm:$0xf]
    %v45 = vld [vmem:[%s2 + $0x18] sm:$0xf]
    %v46 = vld [vmem:[%s2 + $0x1c] sm:$0xf]
    %v47 = vld [vmem:[%s2 + $0x20] sm:$0xf]
    %v48 = vld [vmem:[%s2 + $0x24] sm:$0xf]
    %v49 = vld [vmem:[%s2 + $0x28] sm:$0xf]
    %v50 = vld [vmem:[%s2 + $0x2c] sm:$0xf]
    %v51 = vld [vmem:[%s2 + $0x30] sm:$0xf]
    %v52 = vld [vmem:[%s2 + $0x34] sm:$0xf]
    %v53 = vld [vmem:[%s2 + $0x38] sm:$0xf]
    %v54 = vld [vmem:[%s2 + $0x3c] sm:$0xf]
    %v71 = vunpack.c.l.b16 %v39
    %v72 = vunpack.c.l.b16 %v40
    %v73 = vunpack.c.l.b16 %v41
    %v74 = vunpack.c.l.b16 %v42
    %v75 = vunpack.c.l.b16 %v43
    %v76 = vunpack.c.l.b16 %v44
    %v77 = vunpack.c.l.b16 %v45
    %v78 = vunpack.c.l.b16 %v46
    %v79 = vunpack.c.l.b16 %v47
    %v80 = vunpack.c.l.b16 %v48
    %v81 = vunpack.c.l.b16 %v49
    %v82 = vunpack.c.l.b16 %v50
    %v83 = vunpack.c.l.b16 %v51
    %v84 = vunpack.c.l.b16 %v52
    %v85 = vunpack.c.l.b16 %v53
    %v86 = vunpack.c.l.b16 %v54
    %v87 = vpack.c.b16 %v72, %v71
    %v88 = vpack.c.b16 %v74, %v73
    %v89 = vpack.c.b16 %v76, %v75
    %v90 = vpack.c.b16 %v78, %v77
    %v91 = vpack.c.b16 %v80, %v79
    %v92 = vpack.c.b16 %v82, %v81
    %v93 = vpack.c.b16 %v84, %v83
    %v94 = vpack.c.b16 %v86, %v85
    %103 = vmatprep.subr.bf16.mxu0 0
    %104 = vmatpush1.bf16.msra.mxu0 %v87
    %105 = vmatprep.subr.bf16.mxu0 0
    %106 = vmatpush1.bf16.msra.mxu0 %v88
    %107 = vmatprep.subr.bf16.mxu0 0
    %108 = vmatpush1.bf16.msra.mxu0 %v89
    %109 = vmatprep.subr.bf16.mxu0 0
    %110 = vmatpush1.bf16.msra.mxu0 %v90
    %111 = vmatprep.subr.bf16.mxu0 0
    %112 = vmatpush1.bf16.msra.mxu0 %v91
    %113 = vmatprep.subr.bf16.mxu0 0
    %114 = vmatpush1.bf16.msra.mxu0 %v92
    %115 = vmatprep.subr.bf16.mxu0 0
    %116 = vmatpush1.bf16.msra.mxu0 %v93
    %117 = vmatprep.subr.bf16.mxu0 0
    %118 = vmatpush1.bf16.msra.mxu0 %v94
    %119 = vmatprep.subr.bf16.mxu0 0
    %120 = vmatpush1.bf16.msra.mxu0 0
    %121 = vmatprep.subr.bf16.mxu0 0
    %122 = vmatpush1.bf16.msra.mxu0 0
    %123 = vmatprep.subr.bf16.mxu0 0
    %124 = vmatpush1.bf16.msra.mxu0 0
    %125 = vmatprep.subr.bf16.mxu0 0
    %126 = vmatpush1.bf16.msra.mxu0 0
    %127 = vmatprep.subr.bf16.mxu0 0
    %128 = vmatpush1.bf16.msra.mxu0 0
    %129 = vmatprep.subr.bf16.mxu0 0
    %130 = vmatpush1.bf16.msra.mxu0 0
    %131 = vmatprep.subr.bf16.mxu0 0
    %132 = vmatpush1.bf16.msra.mxu0 0
    %133 = vmatprep.subr.bf16.mxu0 0
    %134 = vmatpush1.bf16.msra.mxu0 0
    %135 = vmatprep.mubr.bf16.mxu0 0
    %136 = vmatmul.mubr.bf16.gmra.mrb[0].mxu0 %v38
    %v137 = vpop.f32.mrb[0].mxu0
    %v138 = vadd.f32 0.0, %v137
    %v139 = vpop.f32.mrb[0].mxu0
    %v140 = vpop.f32.mrb[0].mxu0
    %v141 = vpop.f32.mrb[0].mxu0
    %142 = vdwg.mxu0
    %v143 = vld [vmem:[%s3] sm:$0x1]
    %v144 = vld [vmem:[%s4] sm:$0x1]
    %v145 = vrot.slane %v138, 4
    %v146 = vadd.f32 %v138, %v145
    %v147 = vrot.slane %v146, 2
    %v148 = vadd.f32 %v146, %v147
    %v149 = vrot.slane %v148, 1
    %v150 = vadd.f32 %v148, %v149
    %v151 = vrcp.pop 8.0
    %v152 = vmul.f32 %v150, %v151
    %v153 = vsub.f32 %v138, %v152
    %v154 = vmul.f32 %v153, %v153
    %v155 = vrot.slane %v154, 4
    %v156 = vadd.f32 %v154, %v155
    %v157 = vrot.slane %v156, 2
    %v158 = vadd.f32 %v156, %v157
    %v159 = vrot.slane %v158, 1
    %v160 = vadd.f32 %v158, %v159
    %v161 = vmul.f32 %v160, %v151
    %v162 = vadd.f32 %v161, 1e-05
    %v163 = vrsqrt.pop %v162
    %v164 = vmul.f32 %v153, %v163
    %v166 = vlaneseq
    %v167 = vshrl.u32 %v166, 7
    %v168 = vsub.s32 0, %v167
    %v169 = vrot.slane %v143, %v168
    %v171 = vmul.f32 %v164, %v169
    %v173 = vlaneseq
    %v174 = vshrl.u32 %v173, 7
    %v175 = vsub.s32 0, %v174
    %v176 = vrot.slane %v144, %v175
    %v178 = vadd.f32 %v171, %v176
    %v179 = vmax.f32 %v178, 0.0
    %v180 = vpack.c.bf16 %v179, %v179
    %v181 = vld [vmem:[%s5] sm:$0xf]
    %v182 = vld [vmem:[%s5 + $0x4] sm:$0xf]
    %v183 = vld [vmem:[%s5 + $0x8] sm:$0xf]
    %v184 = vld [vmem:[%s5 + $0xc] sm:$0xf]
    %v185 = vld [vmem:[%s5 + $0x10] sm:$0xf]
    %v186 = vld [vmem:[%s5 + $0x14] sm:$0xf]
    %v187 = vld [vmem:[%s5 + $0x18] sm:$0xf]
    %v188 = vld [vmem:[%s5 + $0x1c] sm:$0xf]
    %v189 = vld [vmem:[%s5 + $0x20] sm:$0xf]
    %v190 = vld [vmem:[%s5 + $0x24] sm:$0xf]
    %v191 = vld [vmem:[%s5 + $0x28] sm:$0xf]
    %v192 = vld [vmem:[%s5 + $0x2c] sm:$0xf]
    %v193 = vld [vmem:[%s5 + $0x30] sm:$0xf]
    %v194 = vld [vmem:[%s5 + $0x34] sm:$0xf]
    %v195 = vld [vmem:[%s5 + $0x38] sm:$0xf]
    %v196 = vld [vmem:[%s5 + $0x3c] sm:$0xf]
    %v213 = vunpack.c.l.b16 %v181
    %v214 = vunpack.c.l.b16 %v182
    %v215 = vunpack.c.l.b16 %v183
    %v216 = vunpack.c.l.b16 %v184
    %v217 = vunpack.c.l.b16 %v185
    %v218 = vunpack.c.l.b16 %v186
    %v219 = vunpack.c.l.b16 %v187
    %v220 = vunpack.c.l.b16 %v188
    %v221 = vunpack.c.l.b16 %v189
    %v222 = vunpack.c.l.b16 %v190
    %v223 = vunpack.c.l.b16 %v191
    %v224 = vunpack.c.l.b16 %v192
    %v225 = vunpack.c.l.b16 %v193
    %v226 = vunpack.c.l.b16 %v194
    %v227 = vunpack.c.l.b16 %v195
    %v228 = vunpack.c.l.b16 %v196
    %v229 = vpack.c.b16 %v214, %v213
    %v230 = vpack.c.b16 %v216, %v215
    %v231 = vpack.c.b16 %v218, %v217
    %v232 = vpack.c.b16 %v220, %v219
    %v233 = vpack.c.b16 %v222, %v221
    %v234 = vpack.c.b16 %v224, %v223
    %v235 = vpack.c.b16 %v226, %v225
    %v236 = vpack.c.b16 %v228, %v227
    %245 = vmatprep.subr.bf16.mxu0 0
    %246 = vmatpush1.bf16.msra.mxu0 %v229
    %247 = vmatprep.subr.bf16.mxu0 0
    %248 = vmatpush1.bf16.msra.mxu0 %v230
    %249 = vmatprep.subr.bf16.mxu0 0
    %250 = vmatpush1.bf16.msra.mxu0 %v231
    %251 = vmatprep.subr.bf16.mxu0 0
    %252 = vmatpush1.bf16.msra.mxu0 %v232
    %253 = vmatprep.subr.bf16.mxu0 0
    %254 = vmatpush1.bf16.msra.mxu0 %v233
    %255 = vmatprep.subr.bf16.mxu0 0
    %256 = vmatpush1.bf16.msra.mxu0 %v234
    %257 = vmatprep.subr.bf16.mxu0 0
    %258 = vmatpush1.bf16.msra.mxu0 %v235
    %259 = vmatprep.subr.bf16.mxu0 0
    %260 = vmatpush1.bf16.msra.mxu0 %v236
    %261 = vmatprep.subr.bf16.mxu0 0
    %262 = vmatpush1.bf16.msra.mxu0 0
    %263 = vmatprep.subr.bf16.mxu0 0
    %264 = vmatpush1.bf16.msra.mxu0 0
    %265 = vmatprep.subr.bf16.mxu0 0
    %266 = vmatpush1.bf16.msra.mxu0 0
    %267 = vmatprep.subr.bf16.mxu0 0
    %268 = vmatpush1.bf16.msra.mxu0 0
    %269 = vmatprep.subr.bf16.mxu0 0
    %270 = vmatpush1.bf16.msra.mxu0 0
    %271 = vmatprep.subr.bf16.mxu0 0
    %272 = vmatpush1.bf16.msra.mxu0 0
    %273 = vmatprep.subr.bf16.mxu0 0
    %274 = vmatpush1.bf16.msra.mxu0 0
    %275 = vmatprep.subr.bf16.mxu0 0
    %276 = vmatpush1.bf16.msra.mxu0 0
    %277 = vmatprep.mubr.bf16.mxu0 0
    %278 = vmatmul.mubr.bf16.gmra.mrb[0].mxu0 %v180
    %v279 = vpop.f32.mrb[0].mxu0
    %v280 = vadd.f32 0.0, %v279
    %v281 = vpop.f32.mrb[0].mxu0
    %v282 = vpop.f32.mrb[0].mxu0
    %v283 = vpop.f32.mrb[0].mxu0
    %284 = vdwg.mxu0
    %v285 = vld [vmem:[%s6] sm:$0x1]
    %v286 = vld [vmem:[%s7] sm:$0x1]
    %v287 = vrot.slane %v280, 4
    %v288 = vadd.f32 %v280, %v287
    %v289 = vrot.slane %v288, 2
    %v290 = vadd.f32 %v288, %v289
    %v291 = vrot.slane %v290, 1
    %v292 = vadd.f32 %v290, %v291
    %v293 = vmul.f32 %v292, %v151
    %v294 = vsub.f32 %v280, %v293
    %v295 = vmul.f32 %v294, %v294
    %v296 = vrot.slane %v295, 4
    %v297 = vadd.f32 %v295, %v296
    %v298 = vrot.slane %v297, 2
    %v299 = vadd.f32 %v297, %v298
    %v300 = vrot.slane %v299, 1
    %v301 = vadd.f32 %v299, %v300
    %v302 = vmul.f32 %v301, %v151
    %v303 = vadd.f32 %v302, 1e-05
    %v304 = vrsqrt.pop %v303
    %v305 = vmul.f32 %v294, %v304
    %v307 = vlaneseq
    %v308 = vshrl.u32 %v307, 7
    %v309 = vsub.s32 0, %v308
    %v310 = vrot.slane %v285, %v309
    %v312 = vmul.f32 %v305, %v310
    %v314 = vlaneseq
    %v315 = vshrl.u32 %v314, 7
    %v316 = vsub.s32 0, %v315
    %v317 = vrot.slane %v286, %v316
    %v319 = vadd.f32 %v312, %v317
    %v320 = vmax.f32 %v319, 0.0
    %v321 = vpack.c.bf16 %v320, %v320
    %v322 = vld [vmem:[%s8] sm:$0xf]
    %v323 = vld [vmem:[%s8 + $0x4] sm:$0xf]
    %v324 = vld [vmem:[%s8 + $0x8] sm:$0xf]
    %v325 = vld [vmem:[%s8 + $0xc] sm:$0xf]
    %v326 = vld [vmem:[%s8 + $0x10] sm:$0xf]
    %v327 = vld [vmem:[%s8 + $0x14] sm:$0xf]
    %v328 = vld [vmem:[%s8 + $0x18] sm:$0xf]
    %v329 = vld [vmem:[%s8 + $0x1c] sm:$0xf]
    %v330 = vld [vmem:[%s8 + $0x20] sm:$0xf]
    %v331 = vld [vmem:[%s8 + $0x24] sm:$0xf]
    %v332 = vld [vmem:[%s8 + $0x28] sm:$0xf]
    %v333 = vld [vmem:[%s8 + $0x2c] sm:$0xf]
    %v334 = vld [vmem:[%s8 + $0x30] sm:$0xf]
    %v335 = vld [vmem:[%s8 + $0x34] sm:$0xf]
    %v336 = vld [vmem:[%s8 + $0x38] sm:$0xf]
    %v337 = vld [vmem:[%s8 + $0x3c] sm:$0xf]
    %v354 = vunpack.c.l.b16 %v322
    %v355 = vunpack.c.l.b16 %v323
    %v356 = vunpack.c.l.b16 %v324
    %v357 = vunpack.c.l.b16 %v325
    %v358 = vunpack.c.l.b16 %v326
    %v359 = vunpack.c.l.b16 %v327
    %v360 = vunpack.c.l.b16 %v328
    %v361 = vunpack.c.l.b16 %v329
    %v362 = vunpack.c.l.b16 %v330
    %v363 = vunpack.c.l.b16 %v331
    %v364 = vunpack.c.l.b16 %v332
    %v365 = vunpack.c.l.b16 %v333
    %v366 = vunpack.c.l.b16 %v334
    %v367 = vunpack.c.l.b16 %v335
    %v368 = vunpack.c.l.b16 %v336
    %v369 = vunpack.c.l.b16 %v337
    %v370 = vpack.c.b16 %v355, %v354
    %v371 = vpack.c.b16 %v357, %v356
    %v372 = vpack.c.b16 %v359, %v358
    %v373 = vpack.c.b16 %v361, %v360
    %v374 = vpack.c.b16 %v363, %v362
    %v375 = vpack.c.b16 %v365, %v364
    %v376 = vpack.c.b16 %v367, %v366
    %v377 = vpack.c.b16 %v369, %v368
    %386 = vmatprep.subr.bf16.mxu0 0
    %387 = vmatpush1.bf16.msra.mxu0 %v370
    %388 = vmatprep.subr.bf16.mxu0 0
    %389 = vmatpush1.bf16.msra.mxu0 %v371
    %390 = vmatprep.subr.bf16.mxu0 0
    %391 = vmatpush1.bf16.msra.mxu0 %v372
    %392 = vmatprep.subr.bf16.mxu0 0
    %393 = vmatpush1.bf16.msra.mxu0 %v373
    %394 = vmatprep.subr.bf16.mxu0 0
    %395 = vmatpush1.bf16.msra.mxu0 %v374
    %396 = vmatprep.subr.bf16.mxu0 0
    %397 = vmatpush1.bf16.msra.mxu0 %v375
    %398 = vmatprep.subr.bf16.mxu0 0
    %399 = vmatpush1.bf16.msra.mxu0 %v376
    %400 = vmatprep.subr.bf16.mxu0 0
    %401 = vmatpush1.bf16.msra.mxu0 %v377
    %402 = vmatprep.subr.bf16.mxu0 0
    %403 = vmatpush1.bf16.msra.mxu0 0
    %404 = vmatprep.subr.bf16.mxu0 0
    %405 = vmatpush1.bf16.msra.mxu0 0
    %406 = vmatprep.subr.bf16.mxu0 0
    %407 = vmatpush1.bf16.msra.mxu0 0
    %408 = vmatprep.subr.bf16.mxu0 0
    %409 = vmatpush1.bf16.msra.mxu0 0
    %410 = vmatprep.subr.bf16.mxu0 0
    %411 = vmatpush1.bf16.msra.mxu0 0
    %412 = vmatprep.subr.bf16.mxu0 0
    %413 = vmatpush1.bf16.msra.mxu0 0
    %414 = vmatprep.subr.bf16.mxu0 0
    %415 = vmatpush1.bf16.msra.mxu0 0
    %416 = vmatprep.subr.bf16.mxu0 0
    %417 = vmatpush1.bf16.msra.mxu0 0
    %418 = vmatprep.mubr.bf16.mxu0 0
    %419 = vmatmul.mubr.bf16.gmra.mrb[0].mxu0 %v321
    %v420 = vpop.f32.mrb[0].mxu0
    %v421 = vadd.f32 0.0, %v420
    %v422 = vpop.f32.mrb[0].mxu0
    %v423 = vpop.f32.mrb[0].mxu0
    %v424 = vpop.f32.mrb[0].mxu0
    %425 = vdwg.mxu0
    %v426 = vld [vmem:[%s1] sm:$0xf]
    %427 = vmatprep.subr.bf16.mxu0 0
    %428 = vmatpush1.bf16.msra.mxu0 %v87
    %429 = vmatprep.subr.bf16.mxu0 0
    %430 = vmatpush1.bf16.msra.mxu0 %v88
    %431 = vmatprep.subr.bf16.mxu0 0
    %432 = vmatpush1.bf16.msra.mxu0 %v89
    %433 = vmatprep.subr.bf16.mxu0 0
    %434 = vmatpush1.bf16.msra.mxu0 %v90
    %435 = vmatprep.subr.bf16.mxu0 0
    %436 = vmatpush1.bf16.msra.mxu0 %v91
    %437 = vmatprep.subr.bf16.mxu0 0
    %438 = vmatpush1.bf16.msra.mxu0 %v92
    %439 = vmatprep.subr.bf16.mxu0 0
    %440 = vmatpush1.bf16.msra.mxu0 %v93
    %441 = vmatprep.subr.bf16.mxu0 0
    %442 = vmatpush1.bf16.msra.mxu0 %v94
    %443 = vmatprep.subr.bf16.mxu0 0
    %444 = vmatpush1.bf16.msra.mxu0 0
    %445 = vmatprep.subr.bf16.mxu0 0
    %446 = vmatpush1.bf16.msra.mxu0 0
    %447 = vmatprep.subr.bf16.mxu0 0
    %448 = vmatpush1.bf16.msra.mxu0 0
    %449 = vmatprep.subr.bf16.mxu0 0
    %450 = vmatpush1.bf16.msra.mxu0 0
    %451 = vmatprep.subr.bf16.mxu0 0
    %452 = vmatpush1.bf16.msra.mxu0 0
    %453 = vmatprep.subr.bf16.mxu0 0
    %454 = vmatpush1.bf16.msra.mxu0 0
    %455 = vmatprep.subr.bf16.mxu0 0
    %456 = vmatpush1.bf16.msra.mxu0 0
    %457 = vmatprep.subr.bf16.mxu0 0
    %458 = vmatpush1.bf16.msra.mxu0 0
    %459 = vmatprep.mubr.bf16.mxu0 0
    %460 = vmatmul.mubr.bf16.gmra.mrb[0].mxu0 %v426
    %v461 = vpop.f32.mrb[0].mxu0
    %v462 = vadd.f32 0.0, %v461
    %v463 = vpop.f32.mrb[0].mxu0
    %v464 = vpop.f32.mrb[0].mxu0
    %v465 = vpop.f32.mrb[0].mxu0
    %466 = vdwg.mxu0
    %v467 = vrot.slane %v462, 4
    %v468 = vadd.f32 %v462, %v467
    %v469 = vrot.slane %v468, 2
    %v470 = vadd.f32 %v468, %v469
    %v471 = vrot.slane %v470, 1
    %v472 = vadd.f32 %v470, %v471
    %v473 = vmul.f32 %v472, %v151
    %v474 = vsub.f32 %v462, %v473
    %v475 = vmul.f32 %v474, %v474
    %v476 = vrot.slane %v475, 4
    %v477 = vadd.f32 %v475, %v476
    %v478 = vrot.slane %v477, 2
    %v479 = vadd.f32 %v477, %v478
    %v480 = vrot.slane %v479, 1
    %v481 = vadd.f32 %v479, %v480
    %v482 = vmul.f32 %v481, %v151
    %v483 = vadd.f32 %v482, 1e-05
    %v484 = vrsqrt.pop %v483
    %v485 = vmul.f32 %v474, %v484
    %v486 = vmul.f32 %v485, %v169
    %v487 = vadd.f32 %v486, %v176
    %v488 = vmax.f32 %v487, 0.0
    %v489 = vpack.c.bf16 %v488, %v488
    %490 = vmatprep.subr.bf16.mxu0 0
    %491 = vmatpush1.bf16.msra.mxu0 %v229
    %492 = vmatprep.subr.bf16.mxu0 0
    %493 = vmatpush1.bf16.msra.mxu0 %v230
    %494 = vmatprep.subr.bf16.mxu0 0
    %495 = vmatpush1.bf16.msra.mxu0 %v231
    %496 = vmatprep.subr.bf16.mxu0 0
    %497 = vmatpush1.bf16.msra.mxu0 %v232
    %498 = vmatprep.subr.bf16.mxu0 0
    %499 = vmatpush1.bf16.msra.mxu0 %v233
    %500 = vmatprep.subr.bf16.mxu0 0
    %501 = vmatpush1.bf16.msra.mxu0 %v234
    %502 = vmatprep.subr.bf16.mxu0 0
    %503 = vmatpush1.bf16.msra.mxu0 %v235
    %504 = vmatprep.subr.bf16.mxu0 0
    %505 = vmatpush1.bf16.msra.mxu0 %v236
    %506 = vmatprep.subr.bf16.mxu0 0
    %507 = vmatpush1.bf16.msra.mxu0 0
    %508 = vmatprep.subr.bf16.mxu0 0
    %509 = vmatpush1.bf16.msra.mxu0 0
    %510 = vmatprep.subr.bf16.mxu0 0
    %511 = vmatpush1.bf16.msra.mxu0 0
    %512 = vmatprep.subr.bf16.mxu0 0
    %513 = vmatpush1.bf16.msra.mxu0 0
    %514 = vmatprep.subr.bf16.mxu0 0
    %515 = vmatpush1.bf16.msra.mxu0 0
    %516 = vmatprep.subr.bf16.mxu0 0
    %517 = vmatpush1.bf16.msra.mxu0 0
    %518 = vmatprep.subr.bf16.mxu0 0
    %519 = vmatpush1.bf16.msra.mxu0 0
    %520 = vmatprep.subr.bf16.mxu0 0
    %521 = vmatpush1.bf16.msra.mxu0 0
    %522 = vmatprep.mubr.bf16.mxu0 0
    %523 = vmatmul.mubr.bf16.gmra.mrb[0].mxu0 %v489
    %v524 = vpop.f32.mrb[0].mxu0
    %v525 = vadd.f32 0.0, %v524
    %v526 = vpop.f32.mrb[0].mxu0
    %v527 = vpop.f32.mrb[0].mxu0
    %v528 = vpop.f32.mrb[0].mxu0
    %529 = vdwg.mxu0
    %v530 = vrot.slane %v525, 4
    %v531 = vadd.f32 %v525, %v530
    %v532 = vrot.slane %v531, 2
    %v533 = vadd.f32 %v531, %v532
    %v534 = vrot.slane %v533, 1
    %v535 = vadd.f32 %v533, %v534
    %v536 = vmul.f32 %v535, %v151
    %v537 = vsub.f32 %v525, %v536
    %v538 = vmul.f32 %v537, %v537
    %v539 = vrot.slane %v538, 4
    %v540 = vadd.f32 %v538, %v539
    %v541 = vrot.slane %v540, 2
    %v542 = vadd.f32 %v540, %v541
    %v543 = vrot.slane %v542, 1
    %v544 = vadd.f32 %v542, %v543
    %v545 = vmul.f32 %v544, %v151
    %v546 = vadd.f32 %v545, 1e-05
    %v547 = vrsqrt.pop %v546
    %v548 = vmul.f32 %v537, %v547
    %v549 = vmul.f32 %v548, %v310
    %v550 = vadd.f32 %v549, %v317
    %v551 = vmax.f32 %v550, 0.0
    %v552 = vpack.c.bf16 %v551, %v551
    %553 = vmatprep.subr.bf16.mxu0 0
    %554 = vmatpush1.bf16.msra.mxu0 %v370
    %555 = vmatprep.subr.bf16.mxu0 0
    %556 = vmatpush1.bf16.msra.mxu0 %v371
    %557 = vmatprep.subr.bf16.mxu0 0
    %558 = vmatpush1.bf16.msra.mxu0 %v372
    %559 = vmatprep.subr.bf16.mxu0 0
    %560 = vmatpush1.bf16.msra.mxu0 %v373
    %561 = vmatprep.subr.bf16.mxu0 0
    %562 = vmatpush1.bf16.msra.mxu0 %v374
    %563 = vmatprep.subr.bf16.mxu0 0
    %564 = vmatpush1.bf16.msra.mxu0 %v375
    %565 = vmatprep.subr.bf16.mxu0 0
    %566 = vmatpush1.bf16.msra.mxu0 %v376
    %567 = vmatprep.subr.bf16.mxu0 0
    %568 = vmatpush1.bf16.msra.mxu0 %v377
    %569 = vmatprep.subr.bf16.mxu0 0
    %570 = vmatpush1.bf16.msra.mxu0 0
    %571 = vmatprep.subr.bf16.mxu0 0
    %572 = vmatpush1.bf16.msra.mxu0 0
    %573 = vmatprep.subr.bf16.mxu0 0
    %574 = vmatpush1.bf16.msra.mxu0 0
    %575 = vmatprep.subr.bf16.mxu0 0
    %576 = vmatpush1.bf16.msra.mxu0 0
    %577 = vmatprep.subr.bf16.mxu0 0
    %578 = vmatpush1.bf16.msra.mxu0 0
    %579 = vmatprep.subr.bf16.mxu0 0
    %580 = vmatpush1.bf16.msra.mxu0 0
    %581 = vmatprep.subr.bf16.mxu0 0
    %582 = vmatpush1.bf16.msra.mxu0 0
    %583 = vmatprep.subr.bf16.mxu0 0
    %584 = vmatpush1.bf16.msra.mxu0 0
    %585 = vmatprep.mubr.bf16.mxu0 0
    %586 = vmatmul.mubr.bf16.gmra.mrb[0].mxu0 %v552
    %v587 = vpop.f32.mrb[0].mxu0
    %v588 = vadd.f32 0.0, %v587
    %v589 = vpop.f32.mrb[0].mxu0
    %v590 = vpop.f32.mrb[0].mxu0
    %v591 = vpop.f32.mrb[0].mxu0
    %592 = vdwg.mxu0
    %593 = vst [vmem:[#allocation2] sm:$0xff] %v421
    %594 = vst [vmem:[#allocation4] sm:$0xff] %v588
    %v595 = vrot.slane %v421, 4
    %v596 = vadd.f32 %v421, %v595
    %v597 = vrot.slane %v596, 2
    %v598 = vadd.f32 %v596, %v597
    %v599 = vrot.slane %v598, 1
    %v600 = vadd.f32 %v598, %v599
    %v601 = vmul.f32 %v600, %v151
    %v602 = vrot.slane %v588, 4
    %v603 = vadd.f32 %v588, %v602
    %v604 = vrot.slane %v603, 2
    %v605 = vadd.f32 %v603, %v604
    %v606 = vrot.slane %v605, 1
    %v607 = vadd.f32 %v605, %v606
    %v608 = vmul.f32 %v607, %v151
    %v609 = vsub.f32 %v421, %v601
    %v610 = vmul.f32 %v609, %v609
    %v611 = vrot.slane %v610, 4
    %v612 = vadd.f32 %v610, %v611
    %v613 = vrot.slane %v612, 2
    %v614 = vadd.f32 %v612, %v613
    %v615 = vrot.slane %v614, 1
    %v616 = vadd.f32 %v614, %v615
    %v617 = vmul.f32 %v616, %v151
    %v618 = vadd.f32 %v617, 1e-05
    %v619 = vrsqrt.pop %v618
    %v620 = vsub.f32 %v588, %v608
    %v621 = vmul.f32 %v620, %v620
    %v622 = vrot.slane %v621, 4
    %v623 = vadd.f32 %v621, %v622
    %v624 = vrot.slane %v623, 2
    %v625 = vadd.f32 %v623, %v624
    %v626 = vrot.slane %v625, 1
    %v627 = vadd.f32 %v625, %v626
    %v628 = vmul.f32 %v627, %v151
    %v629 = vadd.f32 %v628, 1e-05
    %v630 = vrsqrt.pop %v629
    %v631 = vpack.c.bf16 %v421, %v421
    %632 = vxpose.xlu0.c.b16.start [1/8] %v631, 128
    %633 = vxpose.xlu0.c.b16.cont [2/8] 0, 128
    %634 = vxpose.xlu0.c.b16.cont [3/8] 0, 128
    %635 = vxpose.xlu0.c.b16.cont [4/8] 0, 128
    %636 = vxpose.xlu0.c.b16.cont [5/8] 0, 128
    %637 = vxpose.xlu0.c.b16.cont [6/8] 0, 128
    %638 = vxpose.xlu0.c.b16.cont [7/8] 0, 128
    %639 = vxpose.xlu0.c.b16.end [8/8] 0, 128
    %v640 = vpop.trf.xlu0
    %v641 = vpop.trf.xlu0
    %v642 = vpop.trf.xlu0
    %v643 = vpop.trf.xlu0
    %v644 = vpop.trf.xlu0
    %v645 = vpop.trf.xlu0
    %v646 = vpop.trf.xlu0
    %v647 = vpop.trf.xlu0
    %v648 = vpack.c.bf16 %v588, %v588
    %vm649 = vcmask 64512
    %v651 = vsel %vm649, %v640, 0
    %v654 = vsel %vm649, %v641, 0
    %v657 = vsel %vm649, %v642, 0
    %v660 = vsel %vm649, %v643, 0
    %v663 = vsel %vm649, %v644, 0
    %v666 = vsel %vm649, %v645, 0
    %v669 = vsel %vm649, %v646, 0
    %v672 = vsel %vm649, %v647, 0
    %vm674 = vcmask 1043456
    %v676 = vsel %vm674, %v648, 0
    %678 = vmatprep.subr.bf16.mxu0 0
    %679 = vmatpush1.bf16.msra.mxu0 %v676
    %680 = vmatprep.subr.bf16.mxu0 0
    %681 = vmatpush1.bf16.msra.mxu0 0
    %682 = vmatprep.subr.bf16.mxu0 0
    %683 = vmatpush1.bf16.msra.mxu0 0
    %684 = vmatprep.subr.bf16.mxu0 0
    %685 = vmatpush1.bf16.msra.mxu0 0
    %686 = vmatprep.subr.bf16.mxu0 0
    %687 = vmatpush1.bf16.msra.mxu0 0
    %688 = vmatprep.subr.bf16.mxu0 0
    %689 = vmatpush1.bf16.msra.mxu0 0
    %690 = vmatprep.subr.bf16.mxu0 0
    %691 = vmatpush1.bf16.msra.mxu0 0
    %692 = vmatprep.subr.bf16.mxu0 0
    %693 = vmatpush1.bf16.msra.mxu0 0
    %694 = vmatprep.subr.bf16.mxu0 0
    %695 = vmatpush1.bf16.msra.mxu0 0
    %696 = vmatprep.subr.bf16.mxu0 0
    %697 = vmatpush1.bf16.msra.mxu0 0
    %698 = vmatprep.subr.bf16.mxu0 0
    %699 = vmatpush1.bf16.msra.mxu0 0
    %700 = vmatprep.subr.bf16.mxu0 0
    %701 = vmatpush1.bf16.msra.mxu0 0
    %702 = vmatprep.subr.bf16.mxu0 0
    %703 = vmatpush1.bf16.msra.mxu0 0
    %704 = vmatprep.subr.bf16.mxu0 0
    %705 = vmatpush1.bf16.msra.mxu0 0
    %706 = vmatprep.subr.bf16.mxu0 0
    %707 = vmatpush1.bf16.msra.mxu0 0
    %708 = vmatprep.subr.bf16.mxu0 0
    %709 = vmatpush1.bf16.msra.mxu0 0
    %710 = vmatprep.mubr.bf16.mxu0 0
    %711 = vmatmul.mubr.bf16.gmra.mrb[0].mxu0 %v651
    %v712 = vpop.f32.mrb[0].mxu0
    %v713 = vadd.f32 0.0, %v712
    %v714 = vpop.f32.mrb[0].mxu0
    %v715 = vpop.f32.mrb[0].mxu0
    %v716 = vadd.f32 0.0, %v715
    %v717 = vpop.f32.mrb[0].mxu0
    %718 = vmatprep.mubr.bf16.mxu0 0
    %719 = vmatmul.mubr.bf16.gmra.mrb[0].mxu0 %v654
    %v720 = vpop.f32.mrb[0].mxu0
    %v721 = vadd.f32 0.0, %v720
    %v722 = vpop.f32.mrb[0].mxu0
    %v723 = vpop.f32.mrb[0].mxu0
    %v724 = vadd.f32 0.0, %v723
    %v725 = vpop.f32.mrb[0].mxu0
    %726 = vmatprep.mubr.bf16.mxu0 0
    %727 = vmatmul.mubr.bf16.gmra.mrb[0].mxu0 %v657
    %v728 = vpop.f32.mrb[0].mxu0
    %v729 = vadd.f32 0.0, %v728
    %v730 = vpop.f32.mrb[0].mxu0
    %v731 = vpop.f32.mrb[0].mxu0
    %v732 = vadd.f32 0.0, %v731
    %v733 = vpop.f32.mrb[0].mxu0
    %734 = vmatprep.mubr.bf16.mxu0 0
    %735 = vmatmul.mubr.bf16.gmra.mrb[0].mxu0 %v660
    %v736 = vpop.f32.mrb[0].mxu0
    %v737 = vadd.f32 0.0, %v736
    %v738 = vpop.f32.mrb[0].mxu0
    %v739 = vpop.f32.mrb[0].mxu0
    %v740 = vadd.f32 0.0, %v739
    %v741 = vpop.f32.mrb[0].mxu0
    %742 = vmatprep.mubr.bf16.mxu0 0
    %743 = vmatmul.mubr.bf16.gmra.mrb[0].mxu0 %v663
    %v744 = vpop.f32.mrb[0].mxu0
    %v745 = vadd.f32 0.0, %v744
    %v746 = vpop.f32.mrb[0].mxu0
    %v747 = vpop.f32.mrb[0].mxu0
    %v748 = vadd.f32 0.0, %v747
    %v749 = vpop.f32.mrb[0].mxu0
    %750 = vmatprep.mubr.bf16.mxu0 0
    %751 = vmatmul.mubr.bf16.gmra.mrb[0].mxu0 %v666
    %v752 = vpop.f32.mrb[0].mxu0
    %v753 = vadd.f32 0.0, %v752
    %v754 = vpop.f32.mrb[0].mxu0
    %v755 = vpop.f32.mrb[0].mxu0
    %v756 = vadd.f32 0.0, %v755
    %v757 = vpop.f32.mrb[0].mxu0
    %758 = vmatprep.mubr.bf16.mxu0 0
    %759 = vmatmul.mubr.bf16.gmra.mrb[0].mxu0 %v669
    %v760 = vpop.f32.mrb[0].mxu0
    %v761 = vadd.f32 0.0, %v760
    %v762 = vpop.f32.mrb[0].mxu0
    %v763 = vpop.f32.mrb[0].mxu0
    %v764 = vadd.f32 0.0, %v763
    %v765 = vpop.f32.mrb[0].mxu0
    %766 = vmatprep.mubr.bf16.mxu0 0
    %767 = vmatmul.mubr.bf16.gmra.mrb[0].mxu0 %v672
    %v768 = vpop.f32.mrb[0].mxu0
    %v769 = vadd.f32 0.0, %v768
    %v770 = vpop.f32.mrb[0].mxu0
    %v771 = vpop.f32.mrb[0].mxu0
    %v772 = vadd.f32 0.0, %v771
    %v773 = vpop.f32.mrb[0].mxu0
    %774 = vdwg.mxu0
    %v775 = vmul.f32 %v713, 0.125
    %v776 = vmul.f32 %v716, 0.125
    %v777 = vmul.f32 %v721, 0.125
    %v778 = vmul.f32 %v724, 0.125
    %v779 = vmul.f32 %v729, 0.125
    %v780 = vmul.f32 %v732, 0.125
    %v781 = vmul.f32 %v737, 0.125
    %v782 = vmul.f32 %v740, 0.125
    %v783 = vmul.f32 %v745, 0.125
    %v784 = vmul.f32 %v748, 0.125
    %v785 = vmul.f32 %v753, 0.125
    %v786 = vmul.f32 %v756, 0.125
    %v787 = vmul.f32 %v761, 0.125
    %v788 = vmul.f32 %v764, 0.125
    %v789 = vmul.f32 %v769, 0.125
    %v790 = vmul.f32 %v772, 0.125
    %791 = vxpose.xlu0.b32.start [1/16] %v601, 128
    %792 = vxpose.xlu0.b32.cont [2/16] 0.0, 128
    %793 = vxpose.xlu0.b32.cont [3/16] 0.0, 128
    %794 = vxpose.xlu0.b32.cont [4/16] 0.0, 128
    %795 = vxpose.xlu0.b32.cont [5/16] 0.0, 128
    %796 = vxpose.xlu0.b32.cont [6/16] 0.0, 128
    %797 = vxpose.xlu0.b32.cont [7/16] 0.0, 128
    %798 = vxpose.xlu0.b32.cont [8/16] 0.0, 128
    %799 = vxpose.xlu0.b32.cont [9/16] 0.0, 128
    %800 = vxpose.xlu0.b32.cont [10/16] 0.0, 128
    %801 = vxpose.xlu0.b32.cont [11/16] 0.0, 128
    %802 = vxpose.xlu0.b32.cont [12/16] 0.0, 128
    %803 = vxpose.xlu0.b32.cont [13/16] 0.0, 128
    %804 = vxpose.xlu0.b32.cont [14/16] 0.0, 128
    %805 = vxpose.xlu0.b32.cont [15/16] 0.0, 128
    %806 = vxpose.xlu0.b32.end [16/16] 0.0, 128
    %v807 = vpop.trf.xlu0
    %v808 = vpop.trf.xlu0
    %v809 = vpop.trf.xlu0
    %v810 = vpop.trf.xlu0
    %v811 = vpop.trf.xlu0
    %v812 = vpop.trf.xlu0
    %v813 = vpop.trf.xlu0
    %v814 = vpop.trf.xlu0
    %v815 = vpop.trf.xlu0
    %v816 = vpop.trf.xlu0
    %v817 = vpop.trf.xlu0
    %v818 = vpop.trf.xlu0
    %v819 = vpop.trf.xlu0
    %v820 = vpop.trf.xlu0
    %v821 = vpop.trf.xlu0
    %v822 = vpop.trf.xlu0
    %824 = vset.pattern.permute.xlu0 0
    %825 = vperm.xlu0 %824, %v807
    %v826 = vpop.permute.xlu0 %825
    %829 = vset.pattern.permute.xlu0 0
    %830 = vperm.xlu0 %829, %v808
    %v831 = vpop.permute.xlu0 %830
    %834 = vset.pattern.permute.xlu0 0
    %835 = vperm.xlu0 %834, %v809
    %v836 = vpop.permute.xlu0 %835
    %839 = vset.pattern.permute.xlu0 0
    %840 = vperm.xlu0 %839, %v810
    %v841 = vpop.permute.xlu0 %840
    %844 = vset.pattern.permute.xlu0 0
    %845 = vperm.xlu0 %844, %v811
    %v846 = vpop.permute.xlu0 %845
    %849 = vset.pattern.permute.xlu0 0
    %850 = vperm.xlu0 %849, %v812
    %v851 = vpop.permute.xlu0 %850
    %854 = vset.pattern.permute.xlu0 0
    %855 = vperm.xlu0 %854, %v813
    %v856 = vpop.permute.xlu0 %855
    %859 = vset.pattern.permute.xlu0 0
    %860 = vperm.xlu0 %859, %v814
    %v861 = vpop.permute.xlu0 %860
    %864 = vset.pattern.permute.xlu0 0
    %865 = vperm.xlu0 %864, %v815
    %v866 = vpop.permute.xlu0 %865
    %869 = vset.pattern.permute.xlu0 0
    %870 = vperm.xlu0 %869, %v816
    %v871 = vpop.permute.xlu0 %870
    %874 = vset.pattern.permute.xlu0 0
    %875 = vperm.xlu0 %874, %v817
    %v876 = vpop.permute.xlu0 %875
    %879 = vset.pattern.permute.xlu0 0
    %880 = vperm.xlu0 %879, %v818
    %v881 = vpop.permute.xlu0 %880
    %884 = vset.pattern.permute.xlu0 0
    %885 = vperm.xlu0 %884, %v819
    %v886 = vpop.permute.xlu0 %885
    %889 = vset.pattern.permute.xlu0 0
    %890 = vperm.xlu0 %889, %v820
    %v891 = vpop.permute.xlu0 %890
    %894 = vset.pattern.permute.xlu0 0
    %895 = vperm.xlu0 %894, %v821
    %v896 = vpop.permute.xlu0 %895
    %899 = vset.pattern.permute.xlu0 0
    %900 = vperm.xlu0 %899, %v822
    %v901 = vpop.permute.xlu0 %900
    %v903 = vmul.f32 %v826, %v608
    %v904 = vmul.f32 %v831, %v608
    %v905 = vmul.f32 %v836, %v608
    %v906 = vmul.f32 %v841, %v608
    %v907 = vmul.f32 %v846, %v608
    %v908 = vmul.f32 %v851, %v608
    %v909 = vmul.f32 %v856, %v608
    %v910 = vmul.f32 %v861, %v608
    %v911 = vmul.f32 %v866, %v608
    %v912 = vmul.f32 %v871, %v608
    %v913 = vmul.f32 %v876, %v608
    %v914 = vmul.f32 %v881, %v608
    %v915 = vmul.f32 %v886, %v608
    %v916 = vmul.f32 %v891, %v608
    %v917 = vmul.f32 %v896, %v608
    %v918 = vmul.f32 %v901, %v608
    %v919 = vsub.f32 %v775, %v903
    %v920 = vsub.f32 %v776, %v904
    %v921 = vsub.f32 %v777, %v905
    %v922 = vsub.f32 %v778, %v906
    %v923 = vsub.f32 %v779, %v907
    %v924 = vsub.f32 %v780, %v908
    %v925 = vsub.f32 %v781, %v909
    %v926 = vsub.f32 %v782, %v910
    %v927 = vsub.f32 %v783, %v911
    %v928 = vsub.f32 %v784, %v912
    %v929 = vsub.f32 %v785, %v913
    %v930 = vsub.f32 %v786, %v914
    %v931 = vsub.f32 %v787, %v915
    %v932 = vsub.f32 %v788, %v916
    %v933 = vsub.f32 %v789, %v917
    %v934 = vsub.f32 %v790, %v918
    %935 = vxpose.xlu0.b32.start [1/16] %v619, 128
    %936 = vxpose.xlu0.b32.cont [2/16] 0.0, 128
    %937 = vxpose.xlu0.b32.cont [3/16] 0.0, 128
    %938 = vxpose.xlu0.b32.cont [4/16] 0.0, 128
    %939 = vxpose.xlu0.b32.cont [5/16] 0.0, 128
    %940 = vxpose.xlu0.b32.cont [6/16] 0.0, 128
    %941 = vxpose.xlu0.b32.cont [7/16] 0.0, 128
    %942 = vxpose.xlu0.b32.cont [8/16] 0.0, 128
    %943 = vxpose.xlu0.b32.cont [9/16] 0.0, 128
    %944 = vxpose.xlu0.b32.cont [10/16] 0.0, 128
    %945 = vxpose.xlu0.b32.cont [11/16] 0.0, 128
    %946 = vxpose.xlu0.b32.cont [12/16] 0.0, 128
    %947 = vxpose.xlu0.b32.cont [13/16] 0.0, 128
    %948 = vxpose.xlu0.b32.cont [14/16] 0.0, 128
    %949 = vxpose.xlu0.b32.cont [15/16] 0.0, 128
    %950 = vxpose.xlu0.b32.end [16/16] 0.0, 128
    %v951 = vpop.trf.xlu0
    %v952 = vpop.trf.xlu0
    %v953 = vpop.trf.xlu0
    %v954 = vpop.trf.xlu0
    %v955 = vpop.trf.xlu0
    %v956 = vpop.trf.xlu0
    %v957 = vpop.trf.xlu0
    %v958 = vpop.trf.xlu0
    %v959 = vpop.trf.xlu0
    %v960 = vpop.trf.xlu0
    %v961 = vpop.trf.xlu0
    %v962 = vpop.trf.xlu0
    %v963 = vpop.trf.xlu0
    %v964 = vpop.trf.xlu0
    %v965 = vpop.trf.xlu0
    %v966 = vpop.trf.xlu0
    %968 = vset.pattern.permute.xlu0 0
    %969 = vperm.xlu0 %968, %v951
    %v970 = vpop.permute.xlu0 %969
    %973 = vset.pattern.permute.xlu0 0
    %974 = vperm.xlu0 %973, %v952
    %v975 = vpop.permute.xlu0 %974
    %978 = vset.pattern.permute.xlu0 0
    %979 = vperm.xlu0 %978, %v953
    %v980 = vpop.permute.xlu0 %979
    %983 = vset.pattern.permute.xlu0 0
    %984 = vperm.xlu0 %983, %v954
    %v985 = vpop.permute.xlu0 %984
    %988 = vset.pattern.permute.xlu0 0
    %989 = vperm.xlu0 %988, %v955
    %v990 = vpop.permute.xlu0 %989
    %993 = vset.pattern.permute.xlu0 0
    %994 = vperm.xlu0 %993, %v956
    %v995 = vpop.permute.xlu0 %994
    %998 = vset.pattern.permute.xlu0 0
    %999 = vperm.xlu0 %998, %v957
    %v1000 = vpop.permute.xlu0 %999
    %1003 = vset.pattern.permute.xlu0 0
    %1004 = vperm.xlu0 %1003, %v958
    %v1005 = vpop.permute.xlu0 %1004
    %1008 = vset.pattern.permute.xlu0 0
    %1009 = vperm.xlu0 %1008, %v959
    %v1010 = vpop.permute.xlu0 %1009
    %1013 = vset.pattern.permute.xlu0 0
    %1014 = vperm.xlu0 %1013, %v960
    %v1015 = vpop.permute.xlu0 %1014
    %1018 = vset.pattern.permute.xlu0 0
    %1019 = vperm.xlu0 %1018, %v961
    %v1020 = vpop.permute.xlu0 %1019
    %1023 = vset.pattern.permute.xlu0 0
    %1024 = vperm.xlu0 %1023, %v962
    %v1025 = vpop.permute.xlu0 %1024
    %1028 = vset.pattern.permute.xlu0 0
    %1029 = vperm.xlu0 %1028, %v963
    %v1030 = vpop.permute.xlu0 %1029
    %1033 = vset.pattern.permute.xlu0 0
    %1034 = vperm.xlu0 %1033, %v964
    %v1035 = vpop.permute.xlu0 %1034
    %1038 = vset.pattern.permute.xlu0 0
    %1039 = vperm.xlu0 %1038, %v965
    %v1040 = vpop.permute.xlu0 %1039
    %1043 = vset.pattern.permute.xlu0 0
    %1044 = vperm.xlu0 %1043, %v966
    %v1045 = vpop.permute.xlu0 %1044
    %v1047 = vmul.f32 %v970, %v630
    %v1048 = vmul.f32 %v975, %v630
    %v1049 = vmul.f32 %v980, %v630
    %v1050 = vmul.f32 %v985, %v630
    %v1051 = vmul.f32 %v990, %v630
    %v1052 = vmul.f32 %v995, %v630
    %v1053 = vmul.f32 %v1000, %v630
    %v1054 = vmul.f32 %v1005, %v630
    %v1055 = vmul.f32 %v1010, %v630
    %v1056 = vmul.f32 %v1015, %v630
    %v1057 = vmul.f32 %v1020, %v630
    %v1058 = vmul.f32 %v1025, %v630
    %v1059 = vmul.f32 %v1030, %v630
    %v1060 = vmul.f32 %v1035, %v630
    %v1061 = vmul.f32 %v1040, %v630
    %v1062 = vmul.f32 %v1045, %v630
    %v1063 = vmul.f32 %v919, %v1047
    %v1064 = vmul.f32 %v920, %v1048
    %v1065 = vmul.f32 %v921, %v1049
    %v1066 = vmul.f32 %v922, %v1050
    %v1067 = vmul.f32 %v923, %v1051
    %v1068 = vmul.f32 %v924, %v1052
    %v1069 = vmul.f32 %v925, %v1053
    %v1070 = vmul.f32 %v926, %v1054
    %v1071 = vmul.f32 %v927, %v1055
    %v1072 = vmul.f32 %v928, %v1056
    %v1073 = vmul.f32 %v929, %v1057
    %v1074 = vmul.f32 %v930, %v1058
    %v1075 = vmul.f32 %v931, %v1059
    %v1076 = vmul.f32 %v932, %v1060
    %v1077 = vmul.f32 %v933, %v1061
    %v1078 = vmul.f32 %v934, %v1062
    %v1079 = vmul.f32 %v1063, %v1063
    %v1080 = vmul.f32 %v1064, %v1064
    %v1081 = vmul.f32 %v1065, %v1065
    %v1082 = vmul.f32 %v1066, %v1066
    %v1083 = vmul.f32 %v1067, %v1067
    %v1084 = vmul.f32 %v1068, %v1068
    %v1085 = vmul.f32 %v1069, %v1069
    %v1086 = vmul.f32 %v1070, %v1070
    %v1087 = vmul.f32 %v1071, %v1071
    %v1088 = vmul.f32 %v1072, %v1072
    %v1089 = vmul.f32 %v1073, %v1073
    %v1090 = vmul.f32 %v1074, %v1074
    %v1091 = vmul.f32 %v1075, %v1075
    %v1092 = vmul.f32 %v1076, %v1076
    %v1093 = vmul.f32 %v1077, %v1077
    %v1094 = vmul.f32 %v1078, %v1078
    %v1095 = vlaneseq
    %v1096 = vshrl.u32 %v1095, 7
    %v1097 = vadd.s32 %v1096, 8
    %v1098 = vadd.s32 %v1096, 16
    %v1099 = vadd.s32 %v1096, 24
    %v1100 = vadd.s32 %v1096, 32
    %v1101 = vadd.s32 %v1096, 40
    %v1102 = vadd.s32 %v1096, 48
    %v1103 = vadd.s32 %v1096, 56
    %v1104 = vadd.s32 %v1096, 64
    %v1105 = vadd.s32 %v1096, 72
    %v1106 = vadd.s32 %v1096, 80
    %v1107 = vadd.s32 %v1096, 88
    %v1108 = vadd.s32 %v1096, 96
    %v1109 = vadd.s32 %v1096, 104
    %v1110 = vadd.s32 %v1096, 112
    %v1111 = vadd.s32 %v1096, 120
    %v1112 = vlaneseq
    %v1113 = vand.u32 %v1112, 127
    %vm1114 = vcmp.eq.s32.totalorder %v1096, %v1113
    %vm1115 = vcmp.eq.s32.totalorder %v1097, %v1113
    %vm1116 = vcmp.eq.s32.totalorder %v1098, %v1113
    %vm1117 = vcmp.eq.s32.totalorder %v1099, %v1113
    %vm1118 = vcmp.eq.s32.totalorder %v1100, %v1113
    %vm1119 = vcmp.eq.s32.totalorder %v1101, %v1113
    %vm1120 = vcmp.eq.s32.totalorder %v1102, %v1113
    %vm1121 = vcmp.eq.s32.totalorder %v1103, %v1113
    %vm1122 = vcmp.eq.s32.totalorder %v1104, %v1113
    %vm1123 = vcmp.eq.s32.totalorder %v1105, %v1113
    %vm1124 = vcmp.eq.s32.totalorder %v1106, %v1113
    %vm1125 = vcmp.eq.s32.totalorder %v1107, %v1113
    %vm1126 = vcmp.eq.s32.totalorder %v1108, %v1113
    %vm1127 = vcmp.eq.s32.totalorder %v1109, %v1113
    %vm1128 = vcmp.eq.s32.totalorder %v1110, %v1113
    %vm1129 = vcmp.eq.s32.totalorder %v1111, %v1113
    %vm1130 = vcmp.lt.s32.totalorder %v1096, 64
    %vm1131 = vcmp.lt.s32.totalorder %v1097, 64
    %vm1132 = vcmp.lt.s32.totalorder %v1098, 64
    %vm1133 = vcmp.lt.s32.totalorder %v1099, 64
    %vm1134 = vcmp.lt.s32.totalorder %v1100, 64
    %vm1135 = vcmp.lt.s32.totalorder %v1101, 64
    %vm1136 = vcmp.lt.s32.totalorder %v1102, 64
    %vm1137 = vcmp.lt.s32.totalorder %v1103, 64
    %vm1138 = vcmp.lt.s32.totalorder %v1104, 64
    %vm1139 = vcmp.lt.s32.totalorder %v1105, 64
    %vm1140 = vcmp.lt.s32.totalorder %v1106, 64
    %vm1141 = vcmp.lt.s32.totalorder %v1107, 64
    %vm1142 = vcmp.lt.s32.totalorder %v1108, 64
    %vm1143 = vcmp.lt.s32.totalorder %v1109, 64
    %vm1144 = vcmp.lt.s32.totalorder %v1110, 64
    %vm1145 = vcmp.lt.s32.totalorder %v1111, 64
    %vm1146 = vmand %vm1114, %vm1130
    %vm1147 = vmand %vm1115, %vm1131
    %vm1148 = vmand %vm1116, %vm1132
    %vm1149 = vmand %vm1117, %vm1133
    %vm1150 = vmand %vm1118, %vm1134
    %vm1151 = vmand %vm1119, %vm1135
    %vm1152 = vmand %vm1120, %vm1136
    %vm1153 = vmand %vm1121, %vm1137
    %vm1154 = vmand %vm1122, %vm1138
    %vm1155 = vmand %vm1123, %vm1139
    %vm1156 = vmand %vm1124, %vm1140
    %vm1157 = vmand %vm1125, %vm1141
    %vm1158 = vmand %vm1126, %vm1142
    %vm1159 = vmand %vm1127, %vm1143
    %vm1160 = vmand %vm1128, %vm1144
    %vm1161 = vmand %vm1129, %vm1145
    %v1162 = vsel %vm1146, 1, 0
    %v1163 = vsel %vm1147, 1, 0
    %v1164 = vsel %vm1148, 1, 0
    %v1165 = vsel %vm1149, 1, 0
    %v1166 = vsel %vm1150, 1, 0
    %v1167 = vsel %vm1151, 1, 0
    %v1168 = vsel %vm1152, 1, 0
    %v1169 = vsel %vm1153, 1, 0
    %v1170 = vsel %vm1154, 1, 0
    %v1171 = vsel %vm1155, 1, 0
    %v1172 = vsel %vm1156, 1, 0
    %v1173 = vsel %vm1157, 1, 0
    %v1174 = vsel %vm1158, 1, 0
    %v1175 = vsel %vm1159, 1, 0
    %v1176 = vsel %vm1160, 1, 0
    %v1177 = vsel %vm1161, 1, 0
    %v1178 = vcvt.s32.f32 %v1162
    %v1179 = vcvt.s32.f32 %v1163
    %v1180 = vcvt.s32.f32 %v1164
    %v1181 = vcvt.s32.f32 %v1165
    %v1182 = vcvt.s32.f32 %v1166
    %v1183 = vcvt.s32.f32 %v1167
    %v1184 = vcvt.s32.f32 %v1168
    %v1185 = vcvt.s32.f32 %v1169
    %v1186 = vcvt.s32.f32 %v1170
    %v1187 = vcvt.s32.f32 %v1171
    %v1188 = vcvt.s32.f32 %v1172
    %v1189 = vcvt.s32.f32 %v1173
    %v1190 = vcvt.s32.f32 %v1174
    %v1191 = vcvt.s32.f32 %v1175
    %v1192 = vcvt.s32.f32 %v1176
    %v1193 = vcvt.s32.f32 %v1177
    %v1194 = vmul.f32 %v1079, 0.0051
    %v1195 = vmul.f32 %v1080, 0.0051
    %v1196 = vmul.f32 %v1081, 0.0051
    %v1197 = vmul.f32 %v1082, 0.0051
    %v1198 = vmul.f32 %v1083, 0.0051
    %v1199 = vmul.f32 %v1084, 0.0051
    %v1200 = vmul.f32 %v1085, 0.0051
    %v1201 = vmul.f32 %v1086, 0.0051
    %v1202 = vmul.f32 %v1087, 0.0051
    %v1203 = vmul.f32 %v1088, 0.0051
    %v1204 = vmul.f32 %v1089, 0.0051
    %v1205 = vmul.f32 %v1090, 0.0051
    %v1206 = vmul.f32 %v1091, 0.0051
    %v1207 = vmul.f32 %v1092, 0.0051
    %v1208 = vmul.f32 %v1093, 0.0051
    %v1209 = vmul.f32 %v1094, 0.0051
    %v1210 = vmul.f32 %v1079, 0.9949
    %v1211 = vmul.f32 %v1080, 0.9949
    %v1212 = vmul.f32 %v1081, 0.9949
    %v1213 = vmul.f32 %v1082, 0.9949
    %v1214 = vmul.f32 %v1083, 0.9949
    %v1215 = vmul.f32 %v1084, 0.9949
    %v1216 = vmul.f32 %v1085, 0.9949
    %v1217 = vmul.f32 %v1086, 0.9949
    %v1218 = vmul.f32 %v1087, 0.9949
    %v1219 = vmul.f32 %v1088, 0.9949
    %v1220 = vmul.f32 %v1089, 0.9949
    %v1221 = vmul.f32 %v1090, 0.9949
    %v1222 = vmul.f32 %v1091, 0.9949
    %v1223 = vmul.f32 %v1092, 0.9949
    %v1224 = vmul.f32 %v1093, 0.9949
    %v1225 = vmul.f32 %v1094, 0.9949
    %v1226 = vmul.f32 %v1063, 2.0
    %v1227 = vmul.f32 %v1064, 2.0
    %v1228 = vmul.f32 %v1065, 2.0
    %v1229 = vmul.f32 %v1066, 2.0
    %v1230 = vmul.f32 %v1067, 2.0
    %v1231 = vmul.f32 %v1068, 2.0
    %v1232 = vmul.f32 %v1069, 2.0
    %v1233 = vmul.f32 %v1070, 2.0
    %v1234 = vmul.f32 %v1071, 2.0
    %v1235 = vmul.f32 %v1072, 2.0
    %v1236 = vmul.f32 %v1073, 2.0
    %v1237 = vmul.f32 %v1074, 2.0
    %v1238 = vmul.f32 %v1075, 2.0
    %v1239 = vmul.f32 %v1076, 2.0
    %v1240 = vmul.f32 %v1077, 2.0
    %v1241 = vmul.f32 %v1078, 2.0
    %v1242 = vsub.f32 %v1210, %v1226
    %v1243 = vsub.f32 %v1211, %v1227
    %v1244 = vsub.f32 %v1212, %v1228
    %v1245 = vsub.f32 %v1213, %v1229
    %v1246 = vsub.f32 %v1214, %v1230
    %v1247 = vsub.f32 %v1215, %v1231
    %v1248 = vsub.f32 %v1216, %v1232
    %v1249 = vsub.f32 %v1217, %v1233
    %v1250 = vsub.f32 %v1218, %v1234
    %v1251 = vsub.f32 %v1219, %v1235
    %v1252 = vsub.f32 %v1220, %v1236
    %v1253 = vsub.f32 %v1221, %v1237
    %v1254 = vsub.f32 %v1222, %v1238
    %v1255 = vsub.f32 %v1223, %v1239
    %v1256 = vsub.f32 %v1224, %v1240
    %v1257 = vsub.f32 %v1225, %v1241
    %v1258 = vadd.f32 %v1242, 1.0
    %v1259 = vadd.f32 %v1243, 1.0
    %v1260 = vadd.f32 %v1244, 1.0
    %v1261 = vadd.f32 %v1245, 1.0
    %v1262 = vadd.f32 %v1246, 1.0
    %v1263 = vadd.f32 %v1247, 1.0
    %v1264 = vadd.f32 %v1248, 1.0
    %v1265 = vadd.f32 %v1249, 1.0
    %v1266 = vadd.f32 %v1250, 1.0
    %v1267 = vadd.f32 %v1251, 1.0
    %v1268 = vadd.f32 %v1252, 1.0
    %v1269 = vadd.f32 %v1253, 1.0
    %v1270 = vadd.f32 %v1254, 1.0
    %v1271 = vadd.f32 %v1255, 1.0
    %v1272 = vadd.f32 %v1256, 1.0
    %v1273 = vadd.f32 %v1257, 1.0
    %v1274 = vmul.f32 %v1178, %v1258
    %v1275 = vmul.f32 %v1179, %v1259
    %v1276 = vmul.f32 %v1180, %v1260
    %v1277 = vmul.f32 %v1181, %v1261
    %v1278 = vmul.f32 %v1182, %v1262
    %v1279 = vmul.f32 %v1183, %v1263
    %v1280 = vmul.f32 %v1184, %v1264
    %v1281 = vmul.f32 %v1185, %v1265
    %v1282 = vmul.f32 %v1186, %v1266
    %v1283 = vmul.f32 %v1187, %v1267
    %v1284 = vmul.f32 %v1188, %v1268
    %v1285 = vmul.f32 %v1189, %v1269
    %v1286 = vmul.f32 %v1190, %v1270
    %v1287 = vmul.f32 %v1191, %v1271
    %v1288 = vmul.f32 %v1192, %v1272
    %v1289 = vmul.f32 %v1193, %v1273
    %v1290 = vadd.f32 %v1194, %v1274
    %v1291 = vadd.f32 %v1195, %v1275
    %v1292 = vadd.f32 %v1196, %v1276
    %v1293 = vadd.f32 %v1197, %v1277
    %v1294 = vadd.f32 %v1198, %v1278
    %v1295 = vadd.f32 %v1199, %v1279
    %v1296 = vadd.f32 %v1200, %v1280
    %v1297 = vadd.f32 %v1201, %v1281
    %v1298 = vadd.f32 %v1202, %v1282
    %v1299 = vadd.f32 %v1203, %v1283
    %v1300 = vadd.f32 %v1204, %v1284
    %v1301 = vadd.f32 %v1205, %v1285
    %v1302 = vadd.f32 %v1206, %v1286
    %v1303 = vadd.f32 %v1207, %v1287
    %v1304 = vadd.f32 %v1208, %v1288
    %v1305 = vadd.f32 %v1209, %v1289
    %1306 = vadd.xlane.f32.xlu0 %v1290
    %v1307 = vpop.xlane.xlu0 %1306
    %1308 = vadd.xlane.f32.xlu0 %v1291
    %v1309 = vpop.xlane.xlu0 %1308
    %1310 = vadd.xlane.f32.xlu0 %v1292
    %v1311 = vpop.xlane.xlu0 %1310
    %1312 = vadd.xlane.f32.xlu0 %v1293
    %v1313 = vpop.xlane.xlu0 %1312
    %1314 = vadd.xlane.f32.xlu0 %v1294
    %v1315 = vpop.xlane.xlu0 %1314
    %1316 = vadd.xlane.f32.xlu0 %v1295
    %v1317 = vpop.xlane.xlu0 %1316
    %1318 = vadd.xlane.f32.xlu0 %v1296
    %v1319 = vpop.xlane.xlu0 %1318
    %1320 = vadd.xlane.f32.xlu0 %v1297
    %v1321 = vpop.xlane.xlu0 %1320
    %1322 = vadd.xlane.f32.xlu0 %v1298
    %v1323 = vpop.xlane.xlu0 %1322
    %1324 = vadd.xlane.f32.xlu0 %v1299
    %v1325 = vpop.xlane.xlu0 %1324
    %1326 = vadd.xlane.f32.xlu0 %v1300
    %v1327 = vpop.xlane.xlu0 %1326
    %1328 = vadd.xlane.f32.xlu0 %v1301
    %v1329 = vpop.xlane.xlu0 %1328
    %1330 = vadd.xlane.f32.xlu0 %v1302
    %v1331 = vpop.xlane.xlu0 %1330
    %1332 = vadd.xlane.f32.xlu0 %v1303
    %v1333 = vpop.xlane.xlu0 %1332
    %1334 = vadd.xlane.f32.xlu0 %v1304
    %v1335 = vpop.xlane.xlu0 %1334
    %1336 = vadd.xlane.f32.xlu0 %v1305
    %v1337 = vpop.xlane.xlu0 %1336
    %v1338 = vadd.f32 %v1307, %v1309
    %v1339 = vadd.f32 %v1338, %v1311
    %v1340 = vadd.f32 %v1339, %v1313
    %v1341 = vadd.f32 %v1340, %v1315
    %v1342 = vadd.f32 %v1341, %v1317
    %v1343 = vadd.f32 %v1342, %v1319
    %v1344 = vadd.f32 %v1343, %v1321
    %v1345 = vadd.f32 %v1344, %v1323
    %v1346 = vadd.f32 %v1345, %v1325
    %v1347 = vadd.f32 %v1346, %v1327
    %v1348 = vadd.f32 %v1347, %v1329
    %v1349 = vadd.f32 %v1348, %v1331
    %v1350 = vadd.f32 %v1349, %v1333
    %v1351 = vadd.f32 %v1350, %v1335
    %v1352 = vadd.f32 %v1351, %v1337
    %v1353 = vrot.slane %v1352, 4
    %v1354 = vadd.f32 %v1352, %v1353
    %v1355 = vrot.slane %v1354, 2
    %v1356 = vadd.f32 %v1354, %v1355
    %v1357 = vrot.slane %v1356, 1
    %v1358 = vadd.f32 %v1356, %v1357
    %vm1359 = vcmask 0
    %1360 = vst.msk [vmem:[#allocation6] sm:$0x1] %vm1359, %v1358
    // Predicated region
    $region38: #{barlow_twins_forward.3} parent=1 // pred_check
      _
    $region39: #{barlow_twins_forward.3} parent=1 // pred_check_branch
      %1362 = sbr.rel (0) target = $region41
    $region40: #{barlow_twins_forward.3} parent=1 // pred_region
      %s1364 = ssub.s32 128, 128
      %1365 = vsyncadd [#allocation3], %s1364
      %s1367 = sshll.u32 [#allocation2], 4
      %s1368 = int_to_ptr.vmem [resolvable:$true] %s1367
      %1370 = dma.vmem_to_hbm [thread:$0]  %s1368, 128, %s9, [#allocation3]
    $region41: #{barlow_twins_forward.3} parent=1 // pred_fallthru
      _
    // Predicated region
    $region42: #{barlow_twins_forward.3} parent=1 // pred_check
      _
    $region43: #{barlow_twins_forward.3} parent=1 // pred_check_branch
      %1372 = sbr.rel (0) target = $region45
    $region44: #{barlow_twins_forward.3} parent=1 // pred_region
      %s1374 = ssub.s32 128, 128
      %1375 = vsyncadd [#allocation5], %s1374
      %s1377 = sshll.u32 [#allocation4], 4
      %s1378 = int_to_ptr.vmem [resolvable:$true] %s1377
      %1380 = dma.vmem_to_hbm [thread:$0]  %s1378, 128, %s10, [#allocation5]
    $region45: #{barlow_twins_forward.3} parent=1 // pred_fallthru
      _
    // Predicated region
    $region46: #{barlow_twins_forward.3} parent=1 // pred_check
      _
    $region47: #{barlow_twins_forward.3} parent=1 // pred_check_branch
      %1382 = sbr.rel (0) target = $region49
    $region48: #{barlow_twins_forward.3} parent=1 // pred_region
      %s1384 = ssub.s32 16, 16
      %1385 = vsyncadd [#allocation5], %s1384
      %s1387 = sshll.u32 [#allocation6], 4
      %s1388 = int_to_ptr.vmem [resolvable:$true] %s1387
      %1390 = dma.vmem_to_hbm [thread:$0]  %s1388, 16, %s11, [#allocation5]
    $region49: #{barlow_twins_forward.3} parent=1 // pred_fallthru
      _
    // Predicated region
    $region50: #{barlow_twins_forward.3} parent=1 // pred_check
      _
    $region51: #{barlow_twins_forward.3} parent=1 // pred_check_branch
      %1392 = sbr.rel (0) target = $region53
    $region52: #{barlow_twins_forward.3} parent=1 // pred_region
      %1393 = dma.done [#allocation3], 128
    $region53: #{barlow_twins_forward.3} parent=1 // pred_fallthru
      _
    // Predicated region
    $region54: #{barlow_twins_forward.3} parent=1 // pred_check
      _
    $region55: #{barlow_twins_forward.3} parent=1 // pred_check_branch
      %1395 = sbr.rel (0) target = $region57
    $region56: #{barlow_twins_forward.3} parent=1 // pred_region
      %1396 = dma.done [#allocation5], 128
    $region57: #{barlow_twins_forward.3} parent=1 // pred_fallthru
      _
    // Predicated region
    $region58: #{barlow_twins_forward.3} parent=1 // pred_check
      _
    $region59: #{barlow_twins_forward.3} parent=1 // pred_check_branch
      %1398 = sbr.rel (0) target = $region61
    $region60: #{barlow_twins_forward.3} parent=1 // pred_region
      %1399 = dma.done [#allocation5], 16
    $region61: #{barlow_twins_forward.3} parent=1 // pred_fallthru
      _
    %1400 = vsyncpa [#allocation3], 1
    %1401 = vsyncpa [#allocation5], 1

// kernel: barlow_twins_forward.2
$region0: #{barlow_twins_forward.2}
  #allocation0 [shape = 'u32[]', space=smem, size = 0x4, offset = 0x4, fixed_abs, tag = 'smem constant byte address 0x4 - core index']
  #allocation1 [shape = 'u32[144,128]{1,0:T(1,128)}', space=vmem, size = 0x12000, scoped, tag = 'internal scratch']
  %s0 = inlined_call_operand.vmem [shape: bf16[16,4,324], index: 0, kind: input, shape index: {}]
  %s1 = inlined_call_operand.vmem [shape: bf16[128,36], index: 1, kind: input, shape index: {}]
  %s2 = inlined_call_operand.vmem [shape: f32[128,1], index: 2, kind: input, shape index: {}]
  %s3 = inlined_call_operand.vmem [shape: f32[1,286], index: 3, kind: input, shape index: {}]
  %s4 = inlined_call_operand.vmem [shape: bf16[16,128], index: 4, kind: output, shape index: {}]
  %s5 = sld [smem:[#allocation0]]
  $region49: #{barlow_twins_forward.2} parent=0
    _
  %s7 = ssub.s32 1, %s5
  %s8 = scalar_select 0, %s7, %s5
  loop: start=0, step=1, limit=4
  $region2: #{barlow_twins_forward.2} parent=0 // loop_pre_header
    _
  $region3: #{barlow_twins_forward.2} parent=0 // loop_header
    %s10 = sphi 0, %s14
    %p11 = scmp.ge.s32.totalorder %s10, 4
    %s20 = sphi 0, %s22
    %s23 = sphi 0, %s20
    %s24 = sphi 0, %s23
    %s40 = sphi 0, %s24
    %s44 = sphi 0, %s44
    %s46 = sphi 0, %s44
    %s47 = sphi 0, %s46
    %s61 = sphi 0, %s47
    %s65 = sphi 0, %s65
    %s67 = sphi 0, %s65
    %s68 = sphi 0, %s67
    %s82 = sphi 0, %s68
    %s86 = sphi 0, %s86
    %s88 = sphi 0, %s86
    %s89 = sphi 0, %s88
    %s103 = sphi 0, %s89
    %s109 = sphi 0, %s111
    %s112 = sphi 0, %s109
    %s113 = sphi 0, %s112
    %s129 = sphi 0, %s113
  $region4: #{barlow_twins_forward.2} parent=0 // loop_header_branch
    %13 = sbr.rel (%p11) target = $region8
  $region5: #{barlow_twins_forward.2} parent=0 // loop_body
    %s15 = ssub.s32 %s10, 1
    %s16 = ssub.s32 %s10, 2
    %s17 = sadd.s32 %s10, 1
    %s18 = ssub.s32 %s10, %s17
    %p19 = scmp.eq.s32.totalorder %s18, 0
    %s21 = sadd.s32 %s20, 1
    %s22 = scalar_select %p19, %s20, %s21
    %p25 = pneg %p19
    %p26 = scmp.eq.s32.totalorder %s10, 1
    %p27 = por %p25, %p26
    %p28 = scmp.ne.s32.totalorder %s20, %s23
    %p29 = scmp.eq.s32.totalorder %s10, 0
    %p30 = por %p28, %p29
    %p31 = scmp.ne.s32.totalorder %s20, %s23
    %p32 = scmp.eq.s32.totalorder %s15, 1
    %p33 = por %p31, %p32
    %p34 = scmp.ne.s32.totalorder %s23, %s24
    %p35 = scmp.eq.s32.totalorder %s15, 0
    %p36 = por %p34, %p35
    %p37 = scmp.ne.s32.totalorder %s23, %s24
    %p38 = scmp.eq.s32.totalorder %s16, 1
    %p39 = por %p37, %p38
    %p41 = scmp.ne.s32.totalorder %s24, %s40
    %p42 = scmp.eq.s32.totalorder %s16, 0
    %p43 = por %p41, %p42
    %s45 = sadd.s32 %s44, 1
    %p48 = scmp.eq.s32.totalorder %s10, 1
    %p49 = scmp.ne.s32.totalorder %s44, %s46
    %p50 = scmp.eq.s32.totalorder %s10, 0
    %p51 = por %p49, %p50
    %p52 = scmp.ne.s32.totalorder %s44, %s46
    %p53 = scmp.eq.s32.totalorder %s15, 1
    %p54 = por %p52, %p53
    %p55 = scmp.ne.s32.totalorder %s46, %s47
    %p56 = scmp.eq.s32.totalorder %s15, 0
    %p57 = por %p55, %p56
    %p58 = scmp.ne.s32.totalorder %s46, %s47
    %p59 = scmp.eq.s32.totalorder %s16, 1
    %p60 = por %p58, %p59
    %p62 = scmp.ne.s32.totalorder %s47, %s61
    %p63 = scmp.eq.s32.totalorder %s16, 0
    %p64 = por %p62, %p63
    %s66 = sadd.s32 %s65, 1
    %p69 = scmp.eq.s32.totalorder %s10, 1
    %p70 = scmp.ne.s32.totalorder %s65, %s67
    %p71 = scmp.eq.s32.totalorder %s10, 0
    %p72 = por %p70, %p71
    %p73 = scmp.ne.s32.totalorder %s65, %s67
    %p74 = scmp.eq.s32.totalorder %s15, 1
    %p75 = por %p73, %p74
    %p76 = scmp.ne.s32.totalorder %s67, %s68
    %p77 = scmp.eq.s32.totalorder %s15, 0
    %p78 = por %p76, %p77
    %p79 = scmp.ne.s32.totalorder %s67, %s68
    %p80 = scmp.eq.s32.totalorder %s16, 1
    %p81 = por %p79, %p80
    %p83 = scmp.ne.s32.totalorder %s68, %s82
    %p84 = scmp.eq.s32.totalorder %s16, 0
    %p85 = por %p83, %p84
    %s87 = sadd.s32 %s86, 1
    %p90 = scmp.eq.s32.totalorder %s10, 1
    %p91 = scmp.ne.s32.totalorder %s86, %s88
    %p92 = scmp.eq.s32.totalorder %s10, 0
    %p93 = por %p91, %p92
    %p94 = scmp.ne.s32.totalorder %s86, %s88
    %p95 = scmp.eq.s32.totalorder %s15, 1
    %p96 = por %p94, %p95
    %p97 = scmp.ne.s32.totalorder %s88, %s89
    %p98 = scmp.eq.s32.totalorder %s15, 0
    %p99 = por %p97, %p98
    %p100 = scmp.ne.s32.totalorder %s88, %s89
    %p101 = scmp.eq.s32.totalorder %s16, 1
    %p102 = por %p100, %p101
    %p104 = scmp.ne.s32.totalorder %s89, %s103
    %p105 = scmp.eq.s32.totalorder %s16, 0
    %p106 = por %p104, %p105
    %s107 = ssub.s32 %s10, %s17
    %p108 = scmp.eq.s32.totalorder %s107, 0
    %s110 = sadd.s32 %s109, 1
    %s111 = scalar_select %p108, %s109, %s110
    %p114 = pneg %p108
    %p115 = scmp.eq.s32.totalorder %s10, 1
    %p116 = por %p114, %p115
    %p117 = scmp.ne.s32.totalorder %s109, %s112
    %p118 = scmp.eq.s32.totalorder %s10, 0
    %p119 = por %p117, %p118
    %p120 = scmp.ne.s32.totalorder %s109, %s112
    %p121 = scmp.eq.s32.totalorder %s15, 1
    %p122 = por %p120, %p121
    %p123 = scmp.ne.s32.totalorder %s112, %s113
    %p124 = scmp.eq.s32.totalorder %s15, 0
    %p125 = por %p123, %p124
    %p126 = scmp.ne.s32.totalorder %s112, %s113
    %p127 = scmp.eq.s32.totalorder %s16, 1
    %p128 = por %p126, %p127
    %p130 = scmp.ne.s32.totalorder %s113, %s129
    %p131 = scmp.eq.s32.totalorder %s16, 0
    %p132 = por %p130, %p131
    %p133 = scmp.le.s32.totalorder 1, %s10
    %p134 = scmp.lt.s32.totalorder %s10, 3
    %p135 = pnand %p133, %p134
    %p136 = pneg %p135
    // Predicated region
    $region9: #{barlow_twins_forward.2} parent=5 // pred_check
      _
    $region10: #{barlow_twins_forward.2} parent=5 // pred_check_branch
      %138 = sbr.rel (%p135) target = $region12
    $region11: #{barlow_twins_forward.2} parent=5 // pred_region
      %s139 = ssub.s32 %s10, 1
      // Predicated region
      $region13: #{barlow_twins_forward.2} parent=11 // pred_check
        %p140 = pneg %p57
      $region14: #{barlow_twins_forward.2} parent=11 // pred_check_branch
        %142 = sbr.rel (%p140) target = $region16
      $region15: #{barlow_twins_forward.2} parent=11 // pred_region
        _
      $region16: #{barlow_twins_forward.2} parent=11 // pred_fallthru
        _
      // Predicated region
      $region17: #{barlow_twins_forward.2} parent=11 // pred_check
        %p143 = pneg %p78
      $region18: #{barlow_twins_forward.2} parent=11 // pred_check_branch
        %145 = sbr.rel (%p143) target = $region20
      $region19: #{barlow_twins_forward.2} parent=11 // pred_region
        _
      $region20: #{barlow_twins_forward.2} parent=11 // pred_fallthru
        _
      // Predicated region
      $region21: #{barlow_twins_forward.2} parent=11 // pred_check
        %p146 = pneg %p99
      $region22: #{barlow_twins_forward.2} parent=11 // pred_check_branch
        %148 = sbr.rel (%p146) target = $region24
      $region23: #{barlow_twins_forward.2} parent=11 // pred_region
        _
      $region24: #{barlow_twins_forward.2} parent=11 // pred_fallthru
        _
    $region12: #{barlow_twins_forward.2} parent=5 // pred_fallthru
      _
    %p149 = scmp.lt.s32.totalorder %s10, 2
    // Predicated region
    $region25: #{barlow_twins_forward.2} parent=5 // pred_check
      %p150 = pneg %p149
    $region26: #{barlow_twins_forward.2} parent=5 // pred_check_branch
      %152 = sbr.rel (%p150) target = $region28
    $region27: #{barlow_twins_forward.2} parent=5 // pred_region
      // Predicated region
      $region29: #{barlow_twins_forward.2} parent=27 // pred_check
        %p153 = pneg %p30
      $region30: #{barlow_twins_forward.2} parent=27 // pred_check_branch
        %155 = sbr.rel (%p153) target = $region32
      $region31: #{barlow_twins_forward.2} parent=27 // pred_region
        %s156 = smul.u32 8, %s10
        %p157 = scmp.lt.s32.totalorder %s156, 15
        %s158 = scalar_select %p157, %s156, 15
        %s159 = smul.addr %s158, 3
        %s160 = smul.addr %s159, 2
        %s161 = scalar_lea.vmem %s0, %s160
        %s162 = smul.u32 8, %s10
      $region32: #{barlow_twins_forward.2} parent=27 // pred_fallthru
        _
    $region28: #{barlow_twins_forward.2} parent=5 // pred_fallthru
      _
    %p163 = scmp.le.s32.totalorder 1, %s10
    %p164 = scmp.lt.s32.totalorder %s10, 3
    %p165 = pnand %p163, %p164
    %p166 = pneg %p165
    // Predicated region
    $region33: #{barlow_twins_forward.2} parent=5 // pred_check
      _
    $region34: #{barlow_twins_forward.2} parent=5 // pred_check_branch
      %168 = sbr.rel (%p165) target = $region36
    $region35: #{barlow_twins_forward.2} parent=5 // pred_region
      %s169 = ssub.s32 %s10, 1
      %s170 = smul.u32 8, %s15
      %p171 = scmp.lt.s32.totalorder %s170, 15
      %s172 = scalar_select %p171, %s170, 15
      %s173 = smul.addr %s172, 3
      %s174 = smul.addr %s173, 2
      %s175 = scalar_lea.vmem %s0, %s174
      %p176 = pneg %p36
      %p177 = pneg %p33
      %p178 = pneg %p57
      %p179 = pneg %p54
      %p180 = pneg %p78
      %p181 = pneg %p75
      %p182 = pneg %p99
      %p183 = pneg %p96
      %p184 = pneg %p125
      %p185 = pneg %p122
      %p186 = scmp.lt.s32.totalorder %s15, 1
      %s187 = scalar_select %p186, %s15, 1
      %s188 = smul.addr %s187, 4
      %s189 = scalar_lea.vmem %s4, %s188
      %s190 = smul.u32 8, %s15
      %p191 = scmp.lt.s32.totalorder %s190, 15
      %s192 = scalar_select %p191, %s190, 15
      %s193 = smul.addr %s192, 3
      %s194 = smul.addr %s193, 2
      %s195 = scalar_lea.vmem %s0, %s194
      %s196 = smul.u32 8, %s15
      %p197 = scmp.lt.s32.totalorder %s15, 1
      %s198 = scalar_select %p197, %s15, 1
      %s199 = smul.addr %s198, 4
      %s200 = scalar_lea.vmem %s4, %s199
      %v202 = vld [vmem:[%s3] sm:$0x7]
      %v203 = vld [vmem:[%s195] sm:$0x3f]
      %v205 = vcombine.high %v203, %v203
      %v207 = vunpack.c.l.s4 1983009808
      %v208 = vunpack.c.0.s8 %v207
      %v209 = vlaneseq
      %v210 = vshrl.u32 %v209, 7
      %v211 = vsub.s32 %v208, %v210
      %v212 = vrot.slane %v203, %v211
      %v214 = vunpack.c.l.s4 1983009808
      %v215 = vunpack.c.0.s8 %v214
      %v216 = vlaneseq
      %v217 = vshrl.u32 %v216, 7
      %v218 = vsub.s32 %v215, %v217
      %v219 = vrot.slane %v205, %v218
      %v220 = vcombine.high %v212, %v212
      %v221 = vcombine.low %v203, %v203
      %v223 = vunpack.c.l.s4 1983009808
      %v224 = vunpack.c.0.s8 %v223
      %v225 = vlaneseq
      %v226 = vshrl.u32 %v225, 7
      %v227 = vsub.s32 %v224, %v226
      %v228 = vrot.slane %v221, %v227
      %v229 = vcombine.high %v228, %v228
      %230 = vrot.lane.b32.xlu0 %v228, 127
      %v231 = vpop.permute.xlu0 %230
      %232 = vrot.lane.b32.xlu0 %v229, 127
      %v233 = vpop.permute.xlu0 %232
      %234 = vrot.lane.b32.xlu0 %v212, 127
      %v235 = vpop.permute.xlu0 %234
      %vm236 = vcmask 1039360
      %v237 = vsel %vm236, %v231, %v233
      %v238 = vsel %vm236, %v233, %v235
      %v239 = vcombine.low %v212, %v212
      %v240 = vcombine.low %v219, %v219
      %241 = vrot.lane.b32.xlu0 %v239, 126
      %v242 = vpop.permute.xlu0 %241
      %243 = vrot.lane.b32.xlu0 %v212, 126
      %v244 = vpop.permute.xlu0 %243
      %245 = vrot.lane.b32.xlu0 %v240, 126
      %v246 = vpop.permute.xlu0 %245
      %vm247 = vcmask 1031168
      %v248 = vsel %vm247, %v242, %v244
      %v249 = vsel %vm247, %v244, %v246
      %v250 = vcombine.low %v228, %v228
      %251 = vrot.lane.b32.xlu0 %v250, 110
      %v252 = vpop.permute.xlu0 %251
      %253 = vrot.lane.b32.xlu0 %v228, 110
      %v254 = vpop.permute.xlu0 %253
      %255 = vrot.lane.b32.xlu0 %v239, 110
      %v256 = vpop.permute.xlu0 %255
      %vm257 = vcmask 900096
      %v258 = vsel %vm257, %v252, %v254
      %v259 = vsel %vm257, %v254, %v256
      %260 = vrot.lane.b32.xlu0 %v212, 109
      %v261 = vpop.permute.xlu0 %260
      %262 = vrot.lane.b32.xlu0 %v220, 109
      %v263 = vpop.permute.xlu0 %262
      %264 = vrot.lane.b32.xlu0 %v219, 109
      %v265 = vpop.permute.xlu0 %264
      %vm266 = vcmask 891904
      %v267 = vsel %vm266, %v261, %v263
      %v268 = vsel %vm266, %v263, %v265
      %269 = vrot.lane.b32.xlu0 %v228, 108
      %v270 = vpop.permute.xlu0 %269
      %271 = vrot.lane.b32.xlu0 %v229, 108
      %v272 = vpop.permute.xlu0 %271
      %273 = vrot.lane.b32.xlu0 %v212, 108
      %v274 = vpop.permute.xlu0 %273
      %vm275 = vcmask 883712
      %v276 = vsel %vm275, %v270, %v272
      %v277 = vsel %vm275, %v272, %v274
      %278 = vrot.lane.b32.xlu0 %v239, 92
      %v279 = vpop.permute.xlu0 %278
      %280 = vrot.lane.b32.xlu0 %v212, 92
      %v281 = vpop.permute.xlu0 %280
      %282 = vrot.lane.b32.xlu0 %v240, 92
      %v283 = vpop.permute.xlu0 %282
      %vm284 = vcmask 752640
      %v285 = vsel %vm284, %v279, %v281
      %v286 = vsel %vm284, %v281, %v283
      %287 = vrot.lane.b32.xlu0 %v250, 91
      %v288 = vpop.permute.xlu0 %287
      %289 = vrot.lane.b32.xlu0 %v228, 91
      %v290 = vpop.permute.xlu0 %289
      %291 = vrot.lane.b32.xlu0 %v239, 91
      %v292 = vpop.permute.xlu0 %291
      %vm293 = vcmask 744448
      %v294 = vsel %vm293, %v288, %v290
      %v295 = vsel %vm293, %v290, %v292
      %296 = vrot.lane.b32.xlu0 %v212, 90
      %v297 = vpop.permute.xlu0 %296
      %298 = vrot.lane.b32.xlu0 %v220, 90
      %v299 = vpop.permute.xlu0 %298
      %300 = vrot.lane.b32.xlu0 %v219, 90
      %v301 = vpop.permute.xlu0 %300
      %vm302 = vcmask 736256
      %v303 = vsel %vm302, %v297, %v299
      %v304 = vsel %vm302, %v299, %v301
      %vm305 = vcmask 1041408
      %v308 = vsel %vm305, %v212, %v237
      %v311 = vsel %vm305, %v220, %v238
      %v314 = vsel %vm305, %v219, %v235
      %vm315 = vcmask 1043456
      %v317 = vsel %vm315, %v308, %v248
      %v319 = vsel %vm315, %v311, %v249
      %v321 = vsel %vm315, %v314, %v246
      %vm322 = vcmask 1045504
      %v324 = vsel %vm322, %v317, %v258
      %v327 = vsel %vm322, %v319, %v259
      %v330 = vsel %vm322, %v321, %v256
      %v334 = vsel %vm305, %v267, %v276
      %v337 = vsel %vm305, %v268, %v277
      %v340 = vsel %vm305, %v265, %v274
      %v342 = vsel %vm315, %v334, %v285
      %v344 = vsel %vm315, %v337, %v286
      %v346 = vsel %vm315, %v340, %v283
      %v348 = vsel %vm322, %v342, %v294
      %v351 = vsel %vm322, %v344, %v295
      %v354 = vsel %vm322, %v346, %v292
      %v356 = vld [vmem:[%s1] sm:$0xf]
      %v357 = vld [vmem:[%s1 + $0x4] sm:$0xf]
      %v358 = vld [vmem:[%s1 + $0x8] sm:$0xf]
      %v359 = vld [vmem:[%s1 + $0xc] sm:$0xf]
      %v360 = vld [vmem:[%s1 + $0x10] sm:$0xf]
      %v361 = vld [vmem:[%s1 + $0x14] sm:$0xf]
      %v362 = vld [vmem:[%s1 + $0x18] sm:$0xf]
      %v363 = vld [vmem:[%s1 + $0x1c] sm:$0xf]
      %v364 = vld [vmem:[%s1 + $0x20] sm:$0xf]
      %v365 = vld [vmem:[%s1 + $0x24] sm:$0xf]
      %v366 = vld [vmem:[%s1 + $0x28] sm:$0xf]
      %v367 = vld [vmem:[%s1 + $0x2c] sm:$0xf]
      %v368 = vld [vmem:[%s1 + $0x30] sm:$0xf]
      %v369 = vld [vmem:[%s1 + $0x34] sm:$0xf]
      %v370 = vld [vmem:[%s1 + $0x38] sm:$0xf]
      %v371 = vld [vmem:[%s1 + $0x3c] sm:$0xf]
      %v372 = vld [vmem:[%s2] sm:$0xff]
      %v373 = vld [vmem:[%s2 + $0x8] sm:$0xff]
      %v374 = vld [vmem:[%s2 + $0x10] sm:$0xff]
      %v375 = vld [vmem:[%s2 + $0x18] sm:$0xff]
      %v376 = vld [vmem:[%s2 + $0x20] sm:$0xff]
      %v377 = vld [vmem:[%s2 + $0x28] sm:$0xff]
      %v378 = vld [vmem:[%s2 + $0x30] sm:$0xff]
      %v379 = vld [vmem:[%s2 + $0x38] sm:$0xff]
      %v380 = vld [vmem:[%s2 + $0x40] sm:$0xff]
      %v381 = vld [vmem:[%s2 + $0x48] sm:$0xff]
      %v382 = vld [vmem:[%s2 + $0x50] sm:$0xff]
      %v383 = vld [vmem:[%s2 + $0x58] sm:$0xff]
      %v384 = vld [vmem:[%s2 + $0x60] sm:$0xff]
      %v385 = vld [vmem:[%s2 + $0x68] sm:$0xff]
      %v386 = vld [vmem:[%s2 + $0x70] sm:$0xff]
      %v387 = vld [vmem:[%s2 + $0x78] sm:$0xff]
      %389 = vset.pattern.permute.xlu0 0
      %390 = vperm.xlu0 %389, %v372
      %v391 = vpop.permute.xlu0 %390
      %394 = vset.pattern.permute.xlu0 0
      %395 = vperm.xlu0 %394, %v373
      %v396 = vpop.permute.xlu0 %395
      %399 = vset.pattern.permute.xlu0 0
      %400 = vperm.xlu0 %399, %v374
      %v401 = vpop.permute.xlu0 %400
      %404 = vset.pattern.permute.xlu0 0
      %405 = vperm.xlu0 %404, %v375
      %v406 = vpop.permute.xlu0 %405
      %409 = vset.pattern.permute.xlu0 0
      %410 = vperm.xlu0 %409, %v376
      %v411 = vpop.permute.xlu0 %410
      %414 = vset.pattern.permute.xlu0 0
      %415 = vperm.xlu0 %414, %v377
      %v416 = vpop.permute.xlu0 %415
      %419 = vset.pattern.permute.xlu0 0
      %420 = vperm.xlu0 %419, %v378
      %v421 = vpop.permute.xlu0 %420
      %424 = vset.pattern.permute.xlu0 0
      %425 = vperm.xlu0 %424, %v379
      %v426 = vpop.permute.xlu0 %425
      %429 = vset.pattern.permute.xlu0 0
      %430 = vperm.xlu0 %429, %v380
      %v431 = vpop.permute.xlu0 %430
      %434 = vset.pattern.permute.xlu0 0
      %435 = vperm.xlu0 %434, %v381
      %v436 = vpop.permute.xlu0 %435
      %439 = vset.pattern.permute.xlu0 0
      %440 = vperm.xlu0 %439, %v382
      %v441 = vpop.permute.xlu0 %440
      %444 = vset.pattern.permute.xlu0 0
      %445 = vperm.xlu0 %444, %v383
      %v446 = vpop.permute.xlu0 %445
      %449 = vset.pattern.permute.xlu0 0
      %450 = vperm.xlu0 %449, %v384
      %v451 = vpop.permute.xlu0 %450
      %454 = vset.pattern.permute.xlu0 0
      %455 = vperm.xlu0 %454, %v385
      %v456 = vpop.permute.xlu0 %455
      %459 = vset.pattern.permute.xlu0 0
      %460 = vperm.xlu0 %459, %v386
      %v461 = vpop.permute.xlu0 %460
      %464 = vset.pattern.permute.xlu0 0
      %465 = vperm.xlu0 %464, %v387
      %v466 = vpop.permute.xlu0 %465
      %v484 = vunpack.c.l.b16 %v356
      %v485 = vunpack.c.l.b16 %v357
      %v486 = vunpack.c.l.b16 %v358
      %v487 = vunpack.c.l.b16 %v359
      %v488 = vunpack.c.l.b16 %v360
      %v489 = vunpack.c.l.b16 %v361
      %v490 = vunpack.c.l.b16 %v362
      %v491 = vunpack.c.l.b16 %v363
      %v492 = vunpack.c.l.b16 %v364
      %v493 = vunpack.c.l.b16 %v365
      %v494 = vunpack.c.l.b16 %v366
      %v495 = vunpack.c.l.b16 %v367
      %v496 = vunpack.c.l.b16 %v368
      %v497 = vunpack.c.l.b16 %v369
      %v498 = vunpack.c.l.b16 %v370
      %v499 = vunpack.c.l.b16 %v371
      %v500 = vpack.c.b16 %v485, %v484
      %v501 = vpack.c.b16 %v487, %v486
      %v502 = vpack.c.b16 %v489, %v488
      %v503 = vpack.c.b16 %v491, %v490
      %v504 = vpack.c.b16 %v493, %v492
      %v505 = vpack.c.b16 %v495, %v494
      %v506 = vpack.c.b16 %v497, %v496
      %v507 = vpack.c.b16 %v499, %v498
      %vm508 = vcmask 293888
      %v510 = vsel %vm508, %v500, 0
      %v513 = vsel %vm508, %v501, 0
      %v516 = vsel %vm508, %v502, 0
      %v519 = vsel %vm508, %v503, 0
      %v522 = vsel %vm508, %v504, 0
      %v525 = vsel %vm508, %v505, 0
      %v528 = vsel %vm508, %v506, 0
      %v531 = vsel %vm508, %v507, 0
      %v534 = vsel %vm305, %v303, 0
      %v537 = vsel %vm305, %v304, 0
      %v540 = vsel %vm305, %v301, 0
      %542 = vmatprep.subr.bf16.mxu0 %v327
      %543 = vmatpush1.bf16.msra.mxu0 %v324
      %544 = vmatprep.subr.bf16.mxu0 %v351
      %545 = vmatpush1.bf16.msra.mxu0 %v348
      %546 = vmatprep.subr.bf16.mxu0 %v537
      %547 = vmatpush1.bf16.msra.mxu0 %v534
      %548 = vmatprep.subr.bf16.mxu0 0
      %549 = vmatpush1.bf16.msra.mxu0 0
      %550 = vmatprep.subr.bf16.mxu0 0
      %551 = vmatpush1.bf16.msra.mxu0 0
      %552 = vmatprep.subr.bf16.mxu0 0
      %553 = vmatpush1.bf16.msra.mxu0 0
      %554 = vmatprep.subr.bf16.mxu0 0
      %555 = vmatpush1.bf16.msra.mxu0 0
      %556 = vmatprep.subr.bf16.mxu0 0
      %557 = vmatpush1.bf16.msra.mxu0 0
      %558 = vmatprep.subr.bf16.mxu0 0
      %559 = vmatpush1.bf16.msra.mxu0 0
      %560 = vmatprep.subr.bf16.mxu0 0
      %561 = vmatpush1.bf16.msra.mxu0 0
      %562 = vmatprep.subr.bf16.mxu0 0
      %563 = vmatpush1.bf16.msra.mxu0 0
      %564 = vmatprep.subr.bf16.mxu0 0
      %565 = vmatpush1.bf16.msra.mxu0 0
      %566 = vmatprep.subr.bf16.mxu0 0
      %567 = vmatpush1.bf16.msra.mxu0 0
      %568 = vmatprep.subr.bf16.mxu0 0
      %569 = vmatpush1.bf16.msra.mxu0 0
      %570 = vmatprep.subr.bf16.mxu0 0
      %571 = vmatpush1.bf16.msra.mxu0 0
      %572 = vmatprep.subr.bf16.mxu0 0
      %573 = vmatpush1.bf16.msra.mxu0 0
      %574 = vmatprep.mubr.bf16.mxu0 0
      %575 = vmatmul.mubr.bf16.gmra.mrb[0].mxu0 %v510
      %v576 = vpop.f32.mrb[0].mxu0
      %v577 = vadd.f32 %v391, %v576
      %v578 = vpop.f32.mrb[0].mxu0
      %v579 = vadd.f32 %v391, %v578
      %v580 = vpop.f32.mrb[0].mxu0
      %v581 = vadd.f32 %v396, %v580
      %v582 = vpop.f32.mrb[0].mxu0
      %v583 = vadd.f32 %v396, %v582
      %584 = vmatprep.mubr.bf16.mxu0 0
      %585 = vmatmul.mubr.bf16.gmra.mrb[0].mxu0 %v513
      %v586 = vpop.f32.mrb[0].mxu0
      %v587 = vadd.f32 %v401, %v586
      %v588 = vpop.f32.mrb[0].mxu0
      %v589 = vadd.f32 %v401, %v588
      %v590 = vpop.f32.mrb[0].mxu0
      %v591 = vadd.f32 %v406, %v590
      %v592 = vpop.f32.mrb[0].mxu0
      %v593 = vadd.f32 %v406, %v592
      %594 = vmatprep.mubr.bf16.mxu0 0
      %595 = vmatmul.mubr.bf16.gmra.mrb[0].mxu0 %v516
      %v596 = vpop.f32.mrb[0].mxu0
      %v597 = vadd.f32 %v411, %v596
      %v598 = vpop.f32.mrb[0].mxu0
      %v599 = vadd.f32 %v411, %v598
      %v600 = vpop.f32.mrb[0].mxu0
      %v601 = vadd.f32 %v416, %v600
      %v602 = vpop.f32.mrb[0].mxu0
      %v603 = vadd.f32 %v416, %v602
      %604 = vmatprep.mubr.bf16.mxu0 0
      %605 = vmatmul.mubr.bf16.gmra.mrb[0].mxu0 %v519
      %v606 = vpop.f32.mrb[0].mxu0
      %v607 = vadd.f32 %v421, %v606
      %v608 = vpop.f32.mrb[0].mxu0
      %v609 = vadd.f32 %v421, %v608
      %v610 = vpop.f32.mrb[0].mxu0
      %v611 = vadd.f32 %v426, %v610
      %v612 = vpop.f32.mrb[0].mxu0
      %v613 = vadd.f32 %v426, %v612
      %614 = vmatprep.mubr.bf16.mxu0 0
      %615 = vmatmul.mubr.bf16.gmra.mrb[0].mxu0 %v522
      %v616 = vpop.f32.mrb[0].mxu0
      %v617 = vadd.f32 %v431, %v616
      %v618 = vpop.f32.mrb[0].mxu0
      %v619 = vadd.f32 %v431, %v618
      %v620 = vpop.f32.mrb[0].mxu0
      %v621 = vadd.f32 %v436, %v620
      %v622 = vpop.f32.mrb[0].mxu0
      %v623 = vadd.f32 %v436, %v622
      %624 = vmatprep.mubr.bf16.mxu0 0
      %625 = vmatmul.mubr.bf16.gmra.mrb[0].mxu0 %v525
      %v626 = vpop.f32.mrb[0].mxu0
      %v627 = vadd.f32 %v441, %v626
      %v628 = vpop.f32.mrb[0].mxu0
      %v629 = vadd.f32 %v441, %v628
      %v630 = vpop.f32.mrb[0].mxu0
      %v631 = vadd.f32 %v446, %v630
      %v632 = vpop.f32.mrb[0].mxu0
      %v633 = vadd.f32 %v446, %v632
      %634 = vmatprep.mubr.bf16.mxu0 0
      %635 = vmatmul.mubr.bf16.gmra.mrb[0].mxu0 %v528
      %v636 = vpop.f32.mrb[0].mxu0
      %v637 = vadd.f32 %v451, %v636
      %v638 = vpop.f32.mrb[0].mxu0
      %v639 = vadd.f32 %v451, %v638
      %v640 = vpop.f32.mrb[0].mxu0
      %v641 = vadd.f32 %v456, %v640
      %v642 = vpop.f32.mrb[0].mxu0
      %v643 = vadd.f32 %v456, %v642
      %644 = vmatprep.mubr.bf16.mxu0 0
      %645 = vmatmul.mubr.bf16.gmra.mrb[0].mxu0 %v531
      %v646 = vpop.f32.mrb[0].mxu0
      %v647 = vadd.f32 %v461, %v646
      %v648 = vpop.f32.mrb[0].mxu0
      %v649 = vadd.f32 %v461, %v648
      %v650 = vpop.f32.mrb[0].mxu0
      %v651 = vadd.f32 %v466, %v650
      %v652 = vpop.f32.mrb[0].mxu0
      %v653 = vadd.f32 %v466, %v652
      %654 = vdwg.mxu0
      %655 = vmatprep.subr.bf16.mxu0 0
      %656 = vmatpush1.bf16.msra.mxu0 %v330
      %657 = vmatprep.subr.bf16.mxu0 0
      %658 = vmatpush1.bf16.msra.mxu0 %v354
      %659 = vmatprep.subr.bf16.mxu0 0
      %660 = vmatpush1.bf16.msra.mxu0 %v540
      %661 = vmatprep.subr.bf16.mxu0 0
      %662 = vmatpush1.bf16.msra.mxu0 0
      %663 = vmatprep.subr.bf16.mxu0 0
      %664 = vmatpush1.bf16.msra.mxu0 0
      %665 = vmatprep.subr.bf16.mxu0 0
      %666 = vmatpush1.bf16.msra.mxu0 0
      %667 = vmatprep.subr.bf16.mxu0 0
      %668 = vmatpush1.bf16.msra.mxu0 0
      %669 = vmatprep.subr.bf16.mxu0 0
      %670 = vmatpush1.bf16.msra.mxu0 0
      %671 = vmatprep.subr.bf16.mxu0 0
      %672 = vmatpush1.bf16.msra.mxu0 0
      %673 = vmatprep.subr.bf16.mxu0 0
      %674 = vmatpush1.bf16.msra.mxu0 0
      %675 = vmatprep.subr.bf16.mxu0 0
      %676 = vmatpush1.bf16.msra.mxu0 0
      %677 = vmatprep.subr.bf16.mxu0 0
      %678 = vmatpush1.bf16.msra.mxu0 0
      %679 = vmatprep.subr.bf16.mxu0 0
      %680 = vmatpush1.bf16.msra.mxu0 0
      %681 = vmatprep.subr.bf16.mxu0 0
      %682 = vmatpush1.bf16.msra.mxu0 0
      %683 = vmatprep.subr.bf16.mxu0 0
      %684 = vmatpush1.bf16.msra.mxu0 0
      %685 = vmatprep.subr.bf16.mxu0 0
      %686 = vmatpush1.bf16.msra.mxu0 0
      %687 = vmatprep.mubr.bf16.mxu0 0
      %688 = vmatmul.mubr.bf16.gmra.mrb[0].mxu0 %v510
      %v689 = vpop.f32.mrb[0].mxu0
      %v690 = vadd.f32 %v391, %v689
      %v691 = vpop.f32.mrb[0].mxu0
      %v692 = vpop.f32.mrb[0].mxu0
      %v693 = vadd.f32 %v396, %v692
      %v694 = vpop.f32.mrb[0].mxu0
      %695 = vmatprep.mubr.bf16.mxu0 0
      %696 = vmatmul.mubr.bf16.gmra.mrb[0].mxu0 %v513
      %v697 = vpop.f32.mrb[0].mxu0
      %v698 = vadd.f32 %v401, %v697
      %v699 = vpop.f32.mrb[0].mxu0
      %v700 = vpop.f32.mrb[0].mxu0
      %v701 = vadd.f32 %v406, %v700
      %v702 = vpop.f32.mrb[0].mxu0
      %703 = vmatprep.mubr.bf16.mxu0 0
      %704 = vmatmul.mubr.bf16.gmra.mrb[0].mxu0 %v516
      %v705 = vpop.f32.mrb[0].mxu0
      %v706 = vadd.f32 %v411, %v705
      %v707 = vpop.f32.mrb[0].mxu0
      %v708 = vpop.f32.mrb[0].mxu0
      %v709 = vadd.f32 %v416, %v708
      %v710 = vpop.f32.mrb[0].mxu0
      %711 = vmatprep.mubr.bf16.mxu0 0
      %712 = vmatmul.mubr.bf16.gmra.mrb[0].mxu0 %v519
      %v713 = vpop.f32.mrb[0].mxu0
      %v714 = vadd.f32 %v421, %v713
      %v715 = vpop.f32.mrb[0].mxu0
      %v716 = vpop.f32.mrb[0].mxu0
      %v717 = vadd.f32 %v426, %v716
      %v718 = vpop.f32.mrb[0].mxu0
      %719 = vmatprep.mubr.bf16.mxu0 0
      %720 = vmatmul.mubr.bf16.gmra.mrb[0].mxu0 %v522
      %v721 = vpop.f32.mrb[0].mxu0
      %v722 = vadd.f32 %v431, %v721
      %v723 = vpop.f32.mrb[0].mxu0
      %v724 = vpop.f32.mrb[0].mxu0
      %v725 = vadd.f32 %v436, %v724
      %v726 = vpop.f32.mrb[0].mxu0
      %727 = vmatprep.mubr.bf16.mxu0 0
      %728 = vmatmul.mubr.bf16.gmra.mrb[0].mxu0 %v525
      %v729 = vpop.f32.mrb[0].mxu0
      %v730 = vadd.f32 %v441, %v729
      %v731 = vpop.f32.mrb[0].mxu0
      %v732 = vpop.f32.mrb[0].mxu0
      %v733 = vadd.f32 %v446, %v732
      %v734 = vpop.f32.mrb[0].mxu0
      %735 = vmatprep.mubr.bf16.mxu0 0
      %736 = vmatmul.mubr.bf16.gmra.mrb[0].mxu0 %v528
      %v737 = vpop.f32.mrb[0].mxu0
      %v738 = vadd.f32 %v451, %v737
      %v739 = vpop.f32.mrb[0].mxu0
      %v740 = vpop.f32.mrb[0].mxu0
      %v741 = vadd.f32 %v456, %v740
      %v742 = vpop.f32.mrb[0].mxu0
      %743 = vmatprep.mubr.bf16.mxu0 0
      %744 = vmatmul.mubr.bf16.gmra.mrb[0].mxu0 %v531
      %v745 = vpop.f32.mrb[0].mxu0
      %v746 = vadd.f32 %v461, %v745
      %v747 = vpop.f32.mrb[0].mxu0
      %v748 = vpop.f32.mrb[0].mxu0
      %v749 = vadd.f32 %v466, %v748
      %v750 = vpop.f32.mrb[0].mxu0
      %751 = vdwg.mxu0
      %v752 = vmax.f32 %v577, 0.0
      %v753 = vmax.f32 %v579, 0.0
      %v754 = vmax.f32 %v690, 0.0
      %v755 = vmax.f32 %v581, 0.0
      %v756 = vmax.f32 %v583, 0.0
      %v757 = vmax.f32 %v693, 0.0
      %v758 = vmax.f32 %v587, 0.0
      %v759 = vmax.f32 %v589, 0.0
      %v760 = vmax.f32 %v698, 0.0
      %v761 = vmax.f32 %v591, 0.0
      %v762 = vmax.f32 %v593, 0.0
      %v763 = vmax.f32 %v701, 0.0
      %v764 = vmax.f32 %v597, 0.0
      %v765 = vmax.f32 %v599, 0.0
      %v766 = vmax.f32 %v706, 0.0
      %v767 = vmax.f32 %v601, 0.0
      %v768 = vmax.f32 %v603, 0.0
      %v769 = vmax.f32 %v709, 0.0
      %v770 = vmax.f32 %v607, 0.0
      %v771 = vmax.f32 %v609, 0.0
      %v772 = vmax.f32 %v714, 0.0
      %v773 = vmax.f32 %v611, 0.0
      %v774 = vmax.f32 %v613, 0.0
      %v775 = vmax.f32 %v717, 0.0
      %v776 = vmax.f32 %v617, 0.0
      %v777 = vmax.f32 %v619, 0.0
      %v778 = vmax.f32 %v722, 0.0
      %v779 = vmax.f32 %v621, 0.0
      %v780 = vmax.f32 %v623, 0.0
      %v781 = vmax.f32 %v725, 0.0
      %v782 = vmax.f32 %v627, 0.0
      %v783 = vmax.f32 %v629, 0.0
      %v784 = vmax.f32 %v730, 0.0
      %v785 = vmax.f32 %v631, 0.0
      %v786 = vmax.f32 %v633, 0.0
      %v787 = vmax.f32 %v733, 0.0
      %v788 = vmax.f32 %v637, 0.0
      %v789 = vmax.f32 %v639, 0.0
      %v790 = vmax.f32 %v738, 0.0
      %v791 = vmax.f32 %v641, 0.0
      %v792 = vmax.f32 %v643, 0.0
      %v793 = vmax.f32 %v741, 0.0
      %v794 = vmax.f32 %v647, 0.0
      %v795 = vmax.f32 %v649, 0.0
      %v796 = vmax.f32 %v746, 0.0
      %v797 = vmax.f32 %v651, 0.0
      %v798 = vmax.f32 %v653, 0.0
      %v799 = vmax.f32 %v749, 0.0
      %v801 = vlaneseq
      %v802 = vshrl.u32 %v801, 7
      %v803 = vsub.s32 0, %v802
      %v804 = vrot.slane %v202, %v803
      %v805 = vlaneseq
      %v806 = vshrl.u32 %v805, 7
      %v807 = vsub.s32 1, %v806
      %v808 = vrot.slane %v202, %v807
      %v809 = vlaneseq
      %v810 = vshrl.u32 %v809, 7
      %v811 = vsub.s32 2, %v810
      %v812 = vrot.slane %v202, %v811
      %v816 = vmul.f32 %v752, %v804
      %v817 = vmul.f32 %v753, %v808
      %v818 = vmul.f32 %v754, %v812
      %v819 = vmul.f32 %v755, %v804
      %v820 = vmul.f32 %v756, %v808
      %v821 = vmul.f32 %v757, %v812
      %v822 = vmul.f32 %v758, %v804
      %v823 = vmul.f32 %v759, %v808
      %v824 = vmul.f32 %v760, %v812
      %v825 = vmul.f32 %v761, %v804
      %v826 = vmul.f32 %v762, %v808
      %v827 = vmul.f32 %v763, %v812
      %v828 = vmul.f32 %v764, %v804
      %v829 = vmul.f32 %v765, %v808
      %v830 = vmul.f32 %v766, %v812
      %v831 = vmul.f32 %v767, %v804
      %v832 = vmul.f32 %v768, %v808
      %v833 = vmul.f32 %v769, %v812
      %v834 = vmul.f32 %v770, %v804
      %v835 = vmul.f32 %v771, %v808
      %v836 = vmul.f32 %v772, %v812
      %v837 = vmul.f32 %v773, %v804
      %v838 = vmul.f32 %v774, %v808
      %v839 = vmul.f32 %v775, %v812
      %v840 = vmul.f32 %v776, %v804
      %v841 = vmul.f32 %v777, %v808
      %v842 = vmul.f32 %v778, %v812
      %v843 = vmul.f32 %v779, %v804
      %v844 = vmul.f32 %v780, %v808
      %v845 = vmul.f32 %v781, %v812
      %v846 = vmul.f32 %v782, %v804
      %v847 = vmul.f32 %v783, %v808
      %v848 = vmul.f32 %v784, %v812
      %v849 = vmul.f32 %v785, %v804
      %v850 = vmul.f32 %v786, %v808
      %v851 = vmul.f32 %v787, %v812
      %v852 = vmul.f32 %v788, %v804
      %v853 = vmul.f32 %v789, %v808
      %v854 = vmul.f32 %v790, %v812
      %v855 = vmul.f32 %v791, %v804
      %v856 = vmul.f32 %v792, %v808
      %v857 = vmul.f32 %v793, %v812
      %v858 = vmul.f32 %v794, %v804
      %v859 = vmul.f32 %v795, %v808
      %v860 = vmul.f32 %v796, %v812
      %v861 = vmul.f32 %v797, %v804
      %v862 = vmul.f32 %v798, %v808
      %v863 = vmul.f32 %v799, %v812
      %v864 = vadd.f32 %v816, %v817
      %vm865 = vcmask 244736
      %v866 = vsel %vm865, %v818, 0.0
      %v867 = vadd.f32 %v864, %v866
      %868 = vadd.xlane.f32.xlu0 %v867
      %v869 = vpop.xlane.xlu0 %868
      %v870 = vadd.f32 %v819, %v820
      %v871 = vsel %vm865, %v821, 0.0
      %v872 = vadd.f32 %v870, %v871
      %873 = vadd.xlane.f32.xlu0 %v872
      %v874 = vpop.xlane.xlu0 %873
      %v875 = vadd.f32 %v822, %v823
      %v876 = vsel %vm865, %v824, 0.0
      %v877 = vadd.f32 %v875, %v876
      %878 = vadd.xlane.f32.xlu0 %v877
      %v879 = vpop.xlane.xlu0 %878
      %v880 = vadd.f32 %v825, %v826
      %v881 = vsel %vm865, %v827, 0.0
      %v882 = vadd.f32 %v880, %v881
      %883 = vadd.xlane.f32.xlu0 %v882
      %v884 = vpop.xlane.xlu0 %883
      %v885 = vadd.f32 %v828, %v829
      %v886 = vsel %vm865, %v830, 0.0
      %v887 = vadd.f32 %v885, %v886
      %888 = vadd.xlane.f32.xlu0 %v887
      %v889 = vpop.xlane.xlu0 %888
      %v890 = vadd.f32 %v831, %v832
      %v891 = vsel %vm865, %v833, 0.0
      %v892 = vadd.f32 %v890, %v891
      %893 = vadd.xlane.f32.xlu0 %v892
      %v894 = vpop.xlane.xlu0 %893
      %v895 = vadd.f32 %v834, %v835
      %v896 = vsel %vm865, %v836, 0.0
      %v897 = vadd.f32 %v895, %v896
      %898 = vadd.xlane.f32.xlu0 %v897
      %v899 = vpop.xlane.xlu0 %898
      %v900 = vadd.f32 %v837, %v838
      %v901 = vsel %vm865, %v839, 0.0
      %v902 = vadd.f32 %v900, %v901
      %903 = vadd.xlane.f32.xlu0 %v902
      %v904 = vpop.xlane.xlu0 %903
      %v905 = vadd.f32 %v840, %v841
      %v906 = vsel %vm865, %v842, 0.0
      %v907 = vadd.f32 %v905, %v906
      %908 = vadd.xlane.f32.xlu0 %v907
      %v909 = vpop.xlane.xlu0 %908
      %v910 = vadd.f32 %v843, %v844
      %v911 = vsel %vm865, %v845, 0.0
      %v912 = vadd.f32 %v910, %v911
      %913 = vadd.xlane.f32.xlu0 %v912
      %v914 = vpop.xlane.xlu0 %913
      %v915 = vadd.f32 %v846, %v847
      %v916 = vsel %vm865, %v848, 0.0
      %v917 = vadd.f32 %v915, %v916
      %918 = vadd.xlane.f32.xlu0 %v917
      %v919 = vpop.xlane.xlu0 %918
      %v920 = vadd.f32 %v849, %v850
      %v921 = vsel %vm865, %v851, 0.0
      %v922 = vadd.f32 %v920, %v921
      %923 = vadd.xlane.f32.xlu0 %v922
      %v924 = vpop.xlane.xlu0 %923
      %v925 = vadd.f32 %v852, %v853
      %v926 = vsel %vm865, %v854, 0.0
      %v927 = vadd.f32 %v925, %v926
      %928 = vadd.xlane.f32.xlu0 %v927
      %v929 = vpop.xlane.xlu0 %928
      %v930 = vadd.f32 %v855, %v856
      %v931 = vsel %vm865, %v857, 0.0
      %v932 = vadd.f32 %v930, %v931
      %933 = vadd.xlane.f32.xlu0 %v932
      %v934 = vpop.xlane.xlu0 %933
      %v935 = vadd.f32 %v858, %v859
      %v936 = vsel %vm865, %v860, 0.0
      %v937 = vadd.f32 %v935, %v936
      %938 = vadd.xlane.f32.xlu0 %v937
      %v939 = vpop.xlane.xlu0 %938
      %v940 = vadd.f32 %v861, %v862
      %v941 = vsel %vm865, %v863, 0.0
      %v942 = vadd.f32 %v940, %v941
      %943 = vadd.xlane.f32.xlu0 %v942
      %v944 = vpop.xlane.xlu0 %943
      %v945 = vmul.f32 %v869, 0.00390625
      %v946 = vmul.f32 %v874, 0.00390625
      %v947 = vmul.f32 %v879, 0.00390625
      %v948 = vmul.f32 %v884, 0.00390625
      %v949 = vmul.f32 %v889, 0.00390625
      %v950 = vmul.f32 %v894, 0.00390625
      %v951 = vmul.f32 %v899, 0.00390625
      %v952 = vmul.f32 %v904, 0.00390625
      %v953 = vmul.f32 %v909, 0.00390625
      %v954 = vmul.f32 %v914, 0.00390625
      %v955 = vmul.f32 %v919, 0.00390625
      %v956 = vmul.f32 %v924, 0.00390625
      %v957 = vmul.f32 %v929, 0.00390625
      %v958 = vmul.f32 %v934, 0.00390625
      %v959 = vmul.f32 %v939, 0.00390625
      %v960 = vmul.f32 %v944, 0.00390625
      %s961 = scalar_lea.vmem %s195, 6
      %v962 = vld [vmem:[%s961] sm:$0x3f]
      %v964 = vcombine.high %v962, %v962
      %v966 = vunpack.c.l.s4 1983009808
      %v967 = vunpack.c.0.s8 %v966
      %v968 = vlaneseq
      %v969 = vshrl.u32 %v968, 7
      %v970 = vsub.s32 %v967, %v969
      %v971 = vrot.slane %v962, %v970
      %v973 = vunpack.c.l.s4 1983009808
      %v974 = vunpack.c.0.s8 %v973
      %v975 = vlaneseq
      %v976 = vshrl.u32 %v975, 7
      %v977 = vsub.s32 %v974, %v976
      %v978 = vrot.slane %v964, %v977
      %v979 = vcombine.high %v971, %v971
      %v980 = vcombine.low %v962, %v962
      %v982 = vunpack.c.l.s4 1983009808
      %v983 = vunpack.c.0.s8 %v982
      %v984 = vlaneseq
      %v985 = vshrl.u32 %v984, 7
      %v986 = vsub.s32 %v983, %v985
      %v987 = vrot.slane %v980, %v986
      %v988 = vcombine.high %v987, %v987
      %989 = vrot.lane.b32.xlu0 %v987, 127
      %v990 = vpop.permute.xlu0 %989
      %991 = vrot.lane.b32.xlu0 %v988, 127
      %v992 = vpop.permute.xlu0 %991
      %993 = vrot.lane.b32.xlu0 %v971, 127
      %v994 = vpop.permute.xlu0 %993
      %v995 = vsel %vm236, %v990, %v992
      %v996 = vsel %vm236, %v992, %v994
      %v997 = vcombine.low %v971, %v971
      %v998 = vcombine.low %v978, %v978
      %999 = vrot.lane.b32.xlu0 %v997, 126
      %v1000 = vpop.permute.xlu0 %999
      %1001 = vrot.lane.b32.xlu0 %v971, 126
      %v1002 = vpop.permute.xlu0 %1001
      %1003 = vrot.lane.b32.xlu0 %v998, 126
      %v1004 = vpop.permute.xlu0 %1003
      %v1005 = vsel %vm247, %v1000, %v1002
      %v1006 = vsel %vm247, %v1002, %v1004
      %v1007 = vcombine.low %v987, %v987
      %1008 = vrot.lane.b32.xlu0 %v1007, 110
      %v1009 = vpop.permute.xlu0 %1008
      %1010 = vrot.lane.b32.xlu0 %v987, 110
      %v1011 = vpop.permute.xlu0 %1010
      %1012 = vrot.lane.b32.xlu0 %v997, 110
      %v1013 = vpop.permute.xlu0 %1012
      %v1014 = vsel %vm257, %v1009, %v1011
      %v1015 = vsel %vm257, %v1011, %v1013
      %1016 = vrot.lane.b32.xlu0 %v971, 109
      %v1017 = vpop.permute.xlu0 %1016
      %1018 = vrot.lane.b32.xlu0 %v979, 109
      %v1019 = vpop.permute.xlu0 %1018
      %1020 = vrot.lane.b32.xlu0 %v978, 109
      %v1021 = vpop.permute.xlu0 %1020
      %v1022 = vsel %vm266, %v1017, %v1019
      %v1023 = vsel %vm266, %v1019, %v1021
      %1024 = vrot.lane.b32.xlu0 %v987, 108
      %v1025 = vpop.permute.xlu0 %1024
      %1026 = vrot.lane.b32.xlu0 %v988, 108
      %v1027 = vpop.permute.xlu0 %1026
      %1028 = vrot.lane.b32.xlu0 %v971, 108
      %v1029 = vpop.permute.xlu0 %1028
      %v1030 = vsel %vm275, %v1025, %v1027
      %v1031 = vsel %vm275, %v1027, %v1029
      %1032 = vrot.lane.b32.xlu0 %v997, 92
      %v1033 = vpop.permute.xlu0 %1032
      %1034 = vrot.lane.b32.xlu0 %v971, 92
      %v1035 = vpop.permute.xlu0 %1034
      %1036 = vrot.lane.b32.xlu0 %v998, 92
      %v1037 = vpop.permute.xlu0 %1036
      %v1038 = vsel %vm284, %v1033, %v1035
      %v1039 = vsel %vm284, %v1035, %v1037
      %1040 = vrot.lane.b32.xlu0 %v1007, 91
      %v1041 = vpop.permute.xlu0 %1040
      %1042 = vrot.lane.b32.xlu0 %v987, 91
      %v1043 = vpop.permute.xlu0 %1042
      %1044 = vrot.lane.b32.xlu0 %v997, 91
      %v1045 = vpop.permute.xlu0 %1044
      %v1046 = vsel %vm293, %v1041, %v1043
      %v1047 = vsel %vm293, %v1043, %v1045
      %1048 = vrot.lane.b32.xlu0 %v971, 90
      %v1049 = vpop.permute.xlu0 %1048
      %1050 = vrot.lane.b32.xlu0 %v979, 90
      %v1051 = vpop.permute.xlu0 %1050
      %1052 = vrot.lane.b32.xlu0 %v978, 90
      %v1053 = vpop.permute.xlu0 %1052
      %v1054 = vsel %vm302, %v1049, %v1051
      %v1055 = vsel %vm302, %v1051, %v1053
      %v1058 = vsel %vm305, %v971, %v995
      %v1061 = vsel %vm305, %v979, %v996
      %v1064 = vsel %vm305, %v978, %v994
      %v1066 = vsel %vm315, %v1058, %v1005
      %v1068 = vsel %vm315, %v1061, %v1006
      %v1070 = vsel %vm315, %v1064, %v1004
      %v1072 = vsel %vm322, %v1066, %v1014
      %v1075 = vsel %vm322, %v1068, %v1015
      %v1078 = vsel %vm322, %v1070, %v1013
      %v1082 = vsel %vm305, %v1022, %v1030
      %v1085 = vsel %vm305, %v1023, %v1031
      %v1088 = vsel %vm305, %v1021, %v1029
      %v1090 = vsel %vm315, %v1082, %v1038
      %v1092 = vsel %vm315, %v1085, %v1039
      %v1094 = vsel %vm315, %v1088, %v1037
      %v1096 = vsel %vm322, %v1090, %v1046
      %v1099 = vsel %vm322, %v1092, %v1047
      %v1102 = vsel %vm322, %v1094, %v1045
      %v1105 = vsel %vm305, %v1054, 0
      %v1108 = vsel %vm305, %v1055, 0
      %v1111 = vsel %vm305, %v1053, 0
      %1113 = vmatprep.subr.bf16.mxu0 %v1075
      %1114 = vmatpush1.bf16.msra.mxu0 %v1072
      %1115 = vmatprep.subr.bf16.mxu0 %v1099
      %1116 = vmatpush1.bf16.msra.mxu0 %v1096
      %1117 = vmatprep.subr.bf16.mxu0 %v1108
      %1118 = vmatpush1.bf16.msra.mxu0 %v1105
      %1119 = vmatprep.subr.bf16.mxu0 0
      %1120 = vmatpush1.bf16.msra.mxu0 0
      %1121 = vmatprep.subr.bf16.mxu0 0
      %1122 = vmatpush1.bf16.msra.mxu0 0
      %1123 = vmatprep.subr.bf16.mxu0 0
      %1124 = vmatpush1.bf16.msra.mxu0 0
      %1125 = vmatprep.subr.bf16.mxu0 0
      %1126 = vmatpush1.bf16.msra.mxu0 0
      %1127 = vmatprep.subr.bf16.mxu0 0
      %1128 = vmatpush1.bf16.msra.mxu0 0
      %1129 = vmatprep.subr.bf16.mxu0 0
      %1130 = vmatpush1.bf16.msra.mxu0 0
      %1131 = vmatprep.subr.bf16.mxu0 0
      %1132 = vmatpush1.bf16.msra.mxu0 0
      %1133 = vmatprep.subr.bf16.mxu0 0
      %1134 = vmatpush1.bf16.msra.mxu0 0
      %1135 = vmatprep.subr.bf16.mxu0 0
      %1136 = vmatpush1.bf16.msra.mxu0 0
      %1137 = vmatprep.subr.bf16.mxu0 0
      %1138 = vmatpush1.bf16.msra.mxu0 0
      %1139 = vmatprep.subr.bf16.mxu0 0
      %1140 = vmatpush1.bf16.msra.mxu0 0
      %1141 = vmatprep.subr.bf16.mxu0 0
      %1142 = vmatpush1.bf16.msra.mxu0 0
      %1143 = vmatprep.subr.bf16.mxu0 0
      %1144 = vmatpush1.bf16.msra.mxu0 0
      %1145 = vmatprep.mubr.bf16.mxu0 0
      %1146 = vmatmul.mubr.bf16.gmra.mrb[0].mxu0 %v510
      %v1147 = vpop.f32.mrb[0].mxu0
      %v1148 = vadd.f32 %v391, %v1147
      %v1149 = vpop.f32.mrb[0].mxu0
      %v1150 = vadd.f32 %v391, %v1149
      %v1151 = vpop.f32.mrb[0].mxu0
      %v1152 = vadd.f32 %v396, %v1151
      %v1153 = vpop.f32.mrb[0].mxu0
      %v1154 = vadd.f32 %v396, %v1153
      %1155 = vmatprep.mubr.bf16.mxu0 0
      %1156 = vmatmul.mubr.bf16.gmra.mrb[0].mxu0 %v513
      %v1157 = vpop.f32.mrb[0].mxu0
      %v1158 = vadd.f32 %v401, %v1157
      %v1159 = vpop.f32.mrb[0].mxu0
      %v1160 = vadd.f32 %v401, %v1159
      %v1161 = vpop.f32.mrb[0].mxu0
      %v1162 = vadd.f32 %v406, %v1161
      %v1163 = vpop.f32.mrb[0].mxu0
      %v1164 = vadd.f32 %v406, %v1163
      %1165 = vmatprep.mubr.bf16.mxu0 0
      %1166 = vmatmul.mubr.bf16.gmra.mrb[0].mxu0 %v516
      %v1167 = vpop.f32.mrb[0].mxu0
      %v1168 = vadd.f32 %v411, %v1167
      %v1169 = vpop.f32.mrb[0].mxu0
      %v1170 = vadd.f32 %v411, %v1169
      %v1171 = vpop.f32.mrb[0].mxu0
      %v1172 = vadd.f32 %v416, %v1171
      %v1173 = vpop.f32.mrb[0].mxu0
      %v1174 = vadd.f32 %v416, %v1173
      %1175 = vmatprep.mubr.bf16.mxu0 0
      %1176 = vmatmul.mubr.bf16.gmra.mrb[0].mxu0 %v519
      %v1177 = vpop.f32.mrb[0].mxu0
      %v1178 = vadd.f32 %v421, %v1177
      %v1179 = vpop.f32.mrb[0].mxu0
      %v1180 = vadd.f32 %v421, %v1179
      %v1181 = vpop.f32.mrb[0].mxu0
      %v1182 = vadd.f32 %v426, %v1181
      %v1183 = vpop.f32.mrb[0].mxu0
      %v1184 = vadd.f32 %v426, %v1183
      %1185 = vmatprep.mubr.bf16.mxu0 0
      %1186 = vmatmul.mubr.bf16.gmra.mrb[0].mxu0 %v522
      %v1187 = vpop.f32.mrb[0].mxu0
      %v1188 = vadd.f32 %v431, %v1187
      %v1189 = vpop.f32.mrb[0].mxu0
      %v1190 = vadd.f32 %v431, %v1189
      %v1191 = vpop.f32.mrb[0].mxu0
      %v1192 = vadd.f32 %v436, %v1191
      %v1193 = vpop.f32.mrb[0].mxu0
      %v1194 = vadd.f32 %v436, %v1193
      %1195 = vmatprep.mubr.bf16.mxu0 0
      %1196 = vmatmul.mubr.bf16.gmra.mrb[0].mxu0 %v525
      %v1197 = vpop.f32.mrb[0].mxu0
      %v1198 = vadd.f32 %v441, %v1197
      %v1199 = vpop.f32.mrb[0].mxu0
      %v1200 = vadd.f32 %v441, %v1199
      %v1201 = vpop.f32.mrb[0].mxu0
      %v1202 = vadd.f32 %v446, %v1201
      %v1203 = vpop.f32.mrb[0].mxu0
      %v1204 = vadd.f32 %v446, %v1203
      %1205 = vmatprep.mubr.bf16.mxu0 0
      %1206 = vmatmul.mubr.bf16.gmra.mrb[0].mxu0 %v528
      %v1207 = vpop.f32.mrb[0].mxu0
      %v1208 = vadd.f32 %v451, %v1207
      %v1209 = vpop.f32.mrb[0].mxu0
      %v1210 = vadd.f32 %v451, %v1209
      %v1211 = vpop.f32.mrb[0].mxu0
      %v1212 = vadd.f32 %v456, %v1211
      %v1213 = vpop.f32.mrb[0].mxu0
      %v1214 = vadd.f32 %v456, %v1213
      %1215 = vmatprep.mubr.bf16.mxu0 0
      %1216 = vmatmul.mubr.bf16.gmra.mrb[0].mxu0 %v531
      %v1217 = vpop.f32.mrb[0].mxu0
      %v1218 = vadd.f32 %v461, %v1217
      %v1219 = vpop.f32.mrb[0].mxu0
      %v1220 = vadd.f32 %v461, %v1219
      %v1221 = vpop.f32.mrb[0].mxu0
      %v1222 = vadd.f32 %v466, %v1221
      %v1223 = vpop.f32.mrb[0].mxu0
      %v1224 = vadd.f32 %v466, %v1223
      %1225 = vdwg.mxu0
      %1226 = vmatprep.subr.bf16.mxu0 0
      %1227 = vmatpush1.bf16.msra.mxu0 %v1078
      %1228 = vmatprep.subr.bf16.mxu0 0
      %1229 = vmatpush1.bf16.msra.mxu0 %v1102
      %1230 = vmatprep.subr.bf16.mxu0 0
      %1231 = vmatpush1.bf16.msra.mxu0 %v1111
      %1232 = vmatprep.subr.bf16.mxu0 0
      %1233 = vmatpush1.bf16.msra.mxu0 0
      %1234 = vmatprep.subr.bf16.mxu0 0
      %1235 = vmatpush1.bf16.msra.mxu0 0
      %1236 = vmatprep.subr.bf16.mxu0 0
      %1237 = vmatpush1.bf16.msra.mxu0 0
      %1238 = vmatprep.subr.bf16.mxu0 0
      %1239 = vmatpush1.bf16.msra.mxu0 0
      %1240 = vmatprep.subr.bf16.mxu0 0
      %1241 = vmatpush1.bf16.msra.mxu0 0
      %1242 = vmatprep.subr.bf16.mxu0 0
      %1243 = vmatpush1.bf16.msra.mxu0 0
      %1244 = vmatprep.subr.bf16.mxu0 0
      %1245 = vmatpush1.bf16.msra.mxu0 0
      %1246 = vmatprep.subr.bf16.mxu0 0
      %1247 = vmatpush1.bf16.msra.mxu0 0
      %1248 = vmatprep.subr.bf16.mxu0 0
      %1249 = vmatpush1.bf16.msra.mxu0 0
      %1250 = vmatprep.subr.bf16.mxu0 0
      %1251 = vmatpush1.bf16.msra.mxu0 0
      %1252 = vmatprep.subr.bf16.mxu0 0
      %1253 = vmatpush1.bf16.msra.mxu0 0
      %1254 = vmatprep.subr.bf16.mxu0 0
      %1255 = vmatpush1.bf16.msra.mxu0 0
      %1256 = vmatprep.subr.bf16.mxu0 0
      %1257 = vmatpush1.bf16.msra.mxu0 0
      %1258 = vmatprep.mubr.bf16.mxu0 0
      %1259 = vmatmul.mubr.bf16.gmra.mrb[0].mxu0 %v510
      %v1260 = vpop.f32.mrb[0].mxu0
      %v1261 = vadd.f32 %v391, %v1260
      %v1262 = vpop.f32.mrb[0].mxu0
      %v1263 = vpop.f32.mrb[0].mxu0
      %v1264 = vadd.f32 %v396, %v1263
      %v1265 = vpop.f32.mrb[0].mxu0
      %1266 = vmatprep.mubr.bf16.mxu0 0
      %1267 = vmatmul.mubr.bf16.gmra.mrb[0].mxu0 %v513
      %v1268 = vpop.f32.mrb[0].mxu0
      %v1269 = vadd.f32 %v401, %v1268
      %v1270 = vpop.f32.mrb[0].mxu0
      %v1271 = vpop.f32.mrb[0].mxu0
      %v1272 = vadd.f32 %v406, %v1271
      %v1273 = vpop.f32.mrb[0].mxu0
      %1274 = vmatprep.mubr.bf16.mxu0 0
      %1275 = vmatmul.mubr.bf16.gmra.mrb[0].mxu0 %v516
      %v1276 = vpop.f32.mrb[0].mxu0
      %v1277 = vadd.f32 %v411, %v1276
      %v1278 = vpop.f32.mrb[0].mxu0
      %v1279 = vpop.f32.mrb[0].mxu0
      %v1280 = vadd.f32 %v416, %v1279
      %v1281 = vpop.f32.mrb[0].mxu0
      %1282 = vmatprep.mubr.bf16.mxu0 0
      %1283 = vmatmul.mubr.bf16.gmra.mrb[0].mxu0 %v519
      %v1284 = vpop.f32.mrb[0].mxu0
      %v1285 = vadd.f32 %v421, %v1284
      %v1286 = vpop.f32.mrb[0].mxu0
      %v1287 = vpop.f32.mrb[0].mxu0
      %v1288 = vadd.f32 %v426, %v1287
      %v1289 = vpop.f32.mrb[0].mxu0
      %1290 = vmatprep.mubr.bf16.mxu0 0
      %1291 = vmatmul.mubr.bf16.gmra.mrb[0].mxu0 %v522
      %v1292 = vpop.f32.mrb[0].mxu0
      %v1293 = vadd.f32 %v431, %v1292
      %v1294 = vpop.f32.mrb[0].mxu0
      %v1295 = vpop.f32.mrb[0].mxu0
      %v1296 = vadd.f32 %v436, %v1295
      %v1297 = vpop.f32.mrb[0].mxu0
      %1298 = vmatprep.mubr.bf16.mxu0 0
      %1299 = vmatmul.mubr.bf16.gmra.mrb[0].mxu0 %v525
      %v1300 = vpop.f32.mrb[0].mxu0
      %v1301 = vadd.f32 %v441, %v1300
      %v1302 = vpop.f32.mrb[0].mxu0
      %v1303 = vpop.f32.mrb[0].mxu0
      %v1304 = vadd.f32 %v446, %v1303
      %v1305 = vpop.f32.mrb[0].mxu0
      %1306 = vmatprep.mubr.bf16.mxu0 0
      %1307 = vmatmul.mubr.bf16.gmra.mrb[0].mxu0 %v528
      %v1308 = vpop.f32.mrb[0].mxu0
      %v1309 = vadd.f32 %v451, %v1308
      %v1310 = vpop.f32.mrb[0].mxu0
      %v1311 = vpop.f32.mrb[0].mxu0
      %v1312 = vadd.f32 %v456, %v1311
      %v1313 = vpop.f32.mrb[0].mxu0
      %1314 = vmatprep.mubr.bf16.mxu0 0
      %1315 = vmatmul.mubr.bf16.gmra.mrb[0].mxu0 %v531
      %v1316 = vpop.f32.mrb[0].mxu0
      %v1317 = vadd.f32 %v461, %v1316
      %v1318 = vpop.f32.mrb[0].mxu0
      %v1319 = vpop.f32.mrb[0].mxu0
      %v1320 = vadd.f32 %v466, %v1319
      %v1321 = vpop.f32.mrb[0].mxu0
      %1322 = vdwg.mxu0
      %v1323 = vmax.f32 %v1148, 0.0
      %v1324 = vmax.f32 %v1150, 0.0
      %v1325 = vmax.f32 %v1261, 0.0
      %v1326 = vmax.f32 %v1152, 0.0
      %v1327 = vmax.f32 %v1154, 0.0
      %v1328 = vmax.f32 %v1264, 0.0
      %v1329 = vmax.f32 %v1158, 0.0
      %v1330 = vmax.f32 %v1160, 0.0
      %v1331 = vmax.f32 %v1269, 0.0
      %v1332 = vmax.f32 %v1162, 0.0
      %v1333 = vmax.f32 %v1164, 0.0
      %v1334 = vmax.f32 %v1272, 0.0
      %v1335 = vmax.f32 %v1168, 0.0
      %v1336 = vmax.f32 %v1170, 0.0
      %v1337 = vmax.f32 %v1277, 0.0
      %v1338 = vmax.f32 %v1172, 0.0
      %v1339 = vmax.f32 %v1174, 0.0
      %v1340 = vmax.f32 %v1280, 0.0
      %v1341 = vmax.f32 %v1178, 0.0
      %v1342 = vmax.f32 %v1180, 0.0
      %v1343 = vmax.f32 %v1285, 0.0
      %v1344 = vmax.f32 %v1182, 0.0
      %v1345 = vmax.f32 %v1184, 0.0
      %v1346 = vmax.f32 %v1288, 0.0
      %v1347 = vmax.f32 %v1188, 0.0
      %v1348 = vmax.f32 %v1190, 0.0
      %v1349 = vmax.f32 %v1293, 0.0
      %v1350 = vmax.f32 %v1192, 0.0
      %v1351 = vmax.f32 %v1194, 0.0
      %v1352 = vmax.f32 %v1296, 0.0
      %v1353 = vmax.f32 %v1198, 0.0
      %v1354 = vmax.f32 %v1200, 0.0
      %v1355 = vmax.f32 %v1301, 0.0
      %v1356 = vmax.f32 %v1202, 0.0
      %v1357 = vmax.f32 %v1204, 0.0
      %v1358 = vmax.f32 %v1304, 0.0
      %v1359 = vmax.f32 %v1208, 0.0
      %v1360 = vmax.f32 %v1210, 0.0
      %v1361 = vmax.f32 %v1309, 0.0
      %v1362 = vmax.f32 %v1212, 0.0
      %v1363 = vmax.f32 %v1214, 0.0
      %v1364 = vmax.f32 %v1312, 0.0
      %v1365 = vmax.f32 %v1218, 0.0
      %v1366 = vmax.f32 %v1220, 0.0
      %v1367 = vmax.f32 %v1317, 0.0
      %v1368 = vmax.f32 %v1222, 0.0
      %v1369 = vmax.f32 %v1224, 0.0
      %v1370 = vmax.f32 %v1320, 0.0
      %v1371 = vmul.f32 %v1323, %v804
      %v1372 = vmul.f32 %v1324, %v808
      %v1373 = vmul.f32 %v1325, %v812
      %v1374 = vmul.f32 %v1326, %v804
      %v1375 = vmul.f32 %v1327, %v808
      %v1376 = vmul.f32 %v1328, %v812
      %v1377 = vmul.f32 %v1329, %v804
      %v1378 = vmul.f32 %v1330, %v808
      %v1379 = vmul.f32 %v1331, %v812
      %v1380 = vmul.f32 %v1332, %v804
      %v1381 = vmul.f32 %v1333, %v808
      %v1382 = vmul.f32 %v1334, %v812
      %v1383 = vmul.f32 %v1335, %v804
      %v1384 = vmul.f32 %v1336, %v808
      %v1385 = vmul.f32 %v1337, %v812
      %v1386 = vmul.f32 %v1338, %v804
      %v1387 = vmul.f32 %v1339, %v808
      %v1388 = vmul.f32 %v1340, %v812
      %v1389 = vmul.f32 %v1341, %v804
      %v1390 = vmul.f32 %v1342, %v808
      %v1391 = vmul.f32 %v1343, %v812
      %v1392 = vmul.f32 %v1344, %v804
      %v1393 = vmul.f32 %v1345, %v808
      %v1394 = vmul.f32 %v1346, %v812
      %v1395 = vmul.f32 %v1347, %v804
      %v1396 = vmul.f32 %v1348, %v808
      %v1397 = vmul.f32 %v1349, %v812
      %v1398 = vmul.f32 %v1350, %v804
      %v1399 = vmul.f32 %v1351, %v808
      %v1400 = vmul.f32 %v1352, %v812
      %v1401 = vmul.f32 %v1353, %v804
      %v1402 = vmul.f32 %v1354, %v808
      %v1403 = vmul.f32 %v1355, %v812
      %v1404 = vmul.f32 %v1356, %v804
      %v1405 = vmul.f32 %v1357, %v808
      %v1406 = vmul.f32 %v1358, %v812
      %v1407 = vmul.f32 %v1359, %v804
      %v1408 = vmul.f32 %v1360, %v808
      %v1409 = vmul.f32 %v1361, %v812
      %v1410 = vmul.f32 %v1362, %v804
      %v1411 = vmul.f32 %v1363, %v808
      %v1412 = vmul.f32 %v1364, %v812
      %v1413 = vmul.f32 %v1365, %v804
      %v1414 = vmul.f32 %v1366, %v808
      %v1415 = vmul.f32 %v1367, %v812
      %v1416 = vmul.f32 %v1368, %v804
      %v1417 = vmul.f32 %v1369, %v808
      %v1418 = vmul.f32 %v1370, %v812
      %v1419 = vadd.f32 %v1371, %v1372
      %v1420 = vsel %vm865, %v1373, 0.0
      %v1421 = vadd.f32 %v1419, %v1420
      %1422 = vadd.xlane.f32.xlu0 %v1421
      %v1423 = vpop.xlane.xlu0 %1422
      %v1424 = vadd.f32 %v1374, %v1375
      %v1425 = vsel %vm865, %v1376, 0.0
      %v1426 = vadd.f32 %v1424, %v1425
      %1427 = vadd.xlane.f32.xlu0 %v1426
      %v1428 = vpop.xlane.xlu0 %1427
      %v1429 = vadd.f32 %v1377, %v1378
      %v1430 = vsel %vm865, %v1379, 0.0
      %v1431 = vadd.f32 %v1429, %v1430
      %1432 = vadd.xlane.f32.xlu0 %v1431
      %v1433 = vpop.xlane.xlu0 %1432
      %v1434 = vadd.f32 %v1380, %v1381
      %v1435 = vsel %vm865, %v1382, 0.0
      %v1436 = vadd.f32 %v1434, %v1435
      %1437 = vadd.xlane.f32.xlu0 %v1436
      %v1438 = vpop.xlane.xlu0 %1437
      %v1439 = vadd.f32 %v1383, %v1384
      %v1440 = vsel %vm865, %v1385, 0.0
      %v1441 = vadd.f32 %v1439, %v1440
      %1442 = vadd.xlane.f32.xlu0 %v1441
      %v1443 = vpop.xlane.xlu0 %1442
      %v1444 = vadd.f32 %v1386, %v1387
      %v1445 = vsel %vm865, %v1388, 0.0
      %v1446 = vadd.f32 %v1444, %v1445
      %1447 = vadd.xlane.f32.xlu0 %v1446
      %v1448 = vpop.xlane.xlu0 %1447
      %v1449 = vadd.f32 %v1389, %v1390
      %v1450 = vsel %vm865, %v1391, 0.0
      %v1451 = vadd.f32 %v1449, %v1450
      %1452 = vadd.xlane.f32.xlu0 %v1451
      %v1453 = vpop.xlane.xlu0 %1452
      %v1454 = vadd.f32 %v1392, %v1393
      %v1455 = vsel %vm865, %v1394, 0.0
      %v1456 = vadd.f32 %v1454, %v1455
      %1457 = vadd.xlane.f32.xlu0 %v1456
      %v1458 = vpop.xlane.xlu0 %1457
      %v1459 = vadd.f32 %v1395, %v1396
      %v1460 = vsel %vm865, %v1397, 0.0
      %v1461 = vadd.f32 %v1459, %v1460
      %1462 = vadd.xlane.f32.xlu0 %v1461
      %v1463 = vpop.xlane.xlu0 %1462
      %v1464 = vadd.f32 %v1398, %v1399
      %v1465 = vsel %vm865, %v1400, 0.0
      %v1466 = vadd.f32 %v1464, %v1465
      %1467 = vadd.xlane.f32.xlu0 %v1466
      %v1468 = vpop.xlane.xlu0 %1467
      %v1469 = vadd.f32 %v1401, %v1402
      %v1470 = vsel %vm865, %v1403, 0.0
      %v1471 = vadd.f32 %v1469, %v1470
      %1472 = vadd.xlane.f32.xlu0 %v1471
      %v1473 = vpop.xlane.xlu0 %1472
      %v1474 = vadd.f32 %v1404, %v1405
      %v1475 = vsel %vm865, %v1406, 0.0
      %v1476 = vadd.f32 %v1474, %v1475
      %1477 = vadd.xlane.f32.xlu0 %v1476
      %v1478 = vpop.xlane.xlu0 %1477
      %v1479 = vadd.f32 %v1407, %v1408
      %v1480 = vsel %vm865, %v1409, 0.0
      %v1481 = vadd.f32 %v1479, %v1480
      %1482 = vadd.xlane.f32.xlu0 %v1481
      %v1483 = vpop.xlane.xlu0 %1482
      %v1484 = vadd.f32 %v1410, %v1411
      %v1485 = vsel %vm865, %v1412, 0.0
      %v1486 = vadd.f32 %v1484, %v1485
      %1487 = vadd.xlane.f32.xlu0 %v1486
      %v1488 = vpop.xlane.xlu0 %1487
      %v1489 = vadd.f32 %v1413, %v1414
      %v1490 = vsel %vm865, %v1415, 0.0
      %v1491 = vadd.f32 %v1489, %v1490
      %1492 = vadd.xlane.f32.xlu0 %v1491
      %v1493 = vpop.xlane.xlu0 %1492
      %v1494 = vadd.f32 %v1416, %v1417
      %v1495 = vsel %vm865, %v1418, 0.0
      %v1496 = vadd.f32 %v1494, %v1495
      %1497 = vadd.xlane.f32.xlu0 %v1496
      %v1498 = vpop.xlane.xlu0 %1497
      %v1499 = vmul.f32 %v1423, 0.00390625
      %v1500 = vmul.f32 %v1428, 0.00390625
      %v1501 = vmul.f32 %v1433, 0.00390625
      %v1502 = vmul.f32 %v1438, 0.00390625
      %v1503 = vmul.f32 %v1443, 0.00390625
      %v1504 = vmul.f32 %v1448, 0.00390625
      %v1505 = vmul.f32 %v1453, 0.00390625
      %v1506 = vmul.f32 %v1458, 0.00390625
      %v1507 = vmul.f32 %v1463, 0.00390625
      %v1508 = vmul.f32 %v1468, 0.00390625
      %v1509 = vmul.f32 %v1473, 0.00390625
      %v1510 = vmul.f32 %v1478, 0.00390625
      %v1511 = vmul.f32 %v1483, 0.00390625
      %v1512 = vmul.f32 %v1488, 0.00390625
      %v1513 = vmul.f32 %v1493, 0.00390625
      %v1514 = vmul.f32 %v1498, 0.00390625
      %s1515 = scalar_lea.vmem %s195, 12
      %v1516 = vld [vmem:[%s1515] sm:$0x3f]
      %v1518 = vcombine.high %v1516, %v1516
      %v1520 = vunpack.c.l.s4 1983009808
      %v1521 = vunpack.c.0.s8 %v1520
      %v1522 = vlaneseq
      %v1523 = vshrl.u32 %v1522, 7
      %v1524 = vsub.s32 %v1521, %v1523
      %v1525 = vrot.slane %v1516, %v1524
      %v1527 = vunpack.c.l.s4 1983009808
      %v1528 = vunpack.c.0.s8 %v1527
      %v1529 = vlaneseq
      %v1530 = vshrl.u32 %v1529, 7
      %v1531 = vsub.s32 %v1528, %v1530
      %v1532 = vrot.slane %v1518, %v1531
      %v1533 = vcombine.high %v1525, %v1525
      %v1534 = vcombine.low %v1516, %v1516
      %v1536 = vunpack.c.l.s4 1983009808
      %v1537 = vunpack.c.0.s8 %v1536
      %v1538 = vlaneseq
      %v1539 = vshrl.u32 %v1538, 7
      %v1540 = vsub.s32 %v1537, %v1539
      %v1541 = vrot.slane %v1534, %v1540
      %v1542 = vcombine.high %v1541, %v1541
      %1543 = vrot.lane.b32.xlu0 %v1541, 127
      %v1544 = vpop.permute.xlu0 %1543
      %1545 = vrot.lane.b32.xlu0 %v1542, 127
      %v1546 = vpop.permute.xlu0 %1545
      %1547 = vrot.lane.b32.xlu0 %v1525, 127
      %v1548 = vpop.permute.xlu0 %1547
      %v1549 = vsel %vm236, %v1544, %v1546
      %v1550 = vsel %vm236, %v1546, %v1548
      %v1551 = vcombine.low %v1525, %v1525
      %v1552 = vcombine.low %v1532, %v1532
      %1553 = vrot.lane.b32.xlu0 %v1551, 126
      %v1554 = vpop.permute.xlu0 %1553
      %1555 = vrot.lane.b32.xlu0 %v1525, 126
      %v1556 = vpop.permute.xlu0 %1555
      %1557 = vrot.lane.b32.xlu0 %v1552, 126
      %v1558 = vpop.permute.xlu0 %1557
      %v1559 = vsel %vm247, %v1554, %v1556
      %v1560 = vsel %vm247, %v1556, %v1558
      %v1561 = vcombine.low %v1541, %v1541
      %1562 = vrot.lane.b32.xlu0 %v1561, 110
      %v1563 = vpop.permute.xlu0 %1562
      %1564 = vrot.lane.b32.xlu0 %v1541, 110
      %v1565 = vpop.permute.xlu0 %1564
      %1566 = vrot.lane.b32.xlu0 %v1551, 110
      %v1567 = vpop.permute.xlu0 %1566
      %v1568 = vsel %vm257, %v1563, %v1565
      %v1569 = vsel %vm257, %v1565, %v1567
      %1570 = vrot.lane.b32.xlu0 %v1525, 109
      %v1571 = vpop.permute.xlu0 %1570
      %1572 = vrot.lane.b32.xlu0 %v1533, 109
      %v1573 = vpop.permute.xlu0 %1572
      %1574 = vrot.lane.b32.xlu0 %v1532, 109
      %v1575 = vpop.permute.xlu0 %1574
      %v1576 = vsel %vm266, %v1571, %v1573
      %v1577 = vsel %vm266, %v1573, %v1575
      %1578 = vrot.lane.b32.xlu0 %v1541, 108
      %v1579 = vpop.permute.xlu0 %1578
      %1580 = vrot.lane.b32.xlu0 %v1542, 108
      %v1581 = vpop.permute.xlu0 %1580
      %1582 = vrot.lane.b32.xlu0 %v1525, 108
      %v1583 = vpop.permute.xlu0 %1582
      %v1584 = vsel %vm275, %v1579, %v1581
      %v1585 = vsel %vm275, %v1581, %v1583
      %1586 = vrot.lane.b32.xlu0 %v1551, 92
      %v1587 = vpop.permute.xlu0 %1586
      %1588 = vrot.lane.b32.xlu0 %v1525, 92
      %v1589 = vpop.permute.xlu0 %1588
      %1590 = vrot.lane.b32.xlu0 %v1552, 92
      %v1591 = vpop.permute.xlu0 %1590
      %v1592 = vsel %vm284, %v1587, %v1589
      %v1593 = vsel %vm284, %v1589, %v1591
      %1594 = vrot.lane.b32.xlu0 %v1561, 91
      %v1595 = vpop.permute.xlu0 %1594
      %1596 = vrot.lane.b32.xlu0 %v1541, 91
      %v1597 = vpop.permute.xlu0 %1596
      %1598 = vrot.lane.b32.xlu0 %v1551, 91
      %v1599 = vpop.permute.xlu0 %1598
      %v1600 = vsel %vm293, %v1595, %v1597
      %v1601 = vsel %vm293, %v1597, %v1599
      %1602 = vrot.lane.b32.xlu0 %v1525, 90
      %v1603 = vpop.permute.xlu0 %1602
      %1604 = vrot.lane.b32.xlu0 %v1533, 90
      %v1605 = vpop.permute.xlu0 %1604
      %1606 = vrot.lane.b32.xlu0 %v1532, 90
      %v1607 = vpop.permute.xlu0 %1606
      %v1608 = vsel %vm302, %v1603, %v1605
      %v1609 = vsel %vm302, %v1605, %v1607
      %v1612 = vsel %vm305, %v1525, %v1549
      %v1615 = vsel %vm305, %v1533, %v1550
      %v1618 = vsel %vm305, %v1532, %v1548
      %v1620 = vsel %vm315, %v1612, %v1559
      %v1622 = vsel %vm315, %v1615, %v1560
      %v1624 = vsel %vm315, %v1618, %v1558
      %v1626 = vsel %vm322, %v1620, %v1568
      %v1629 = vsel %vm322, %v1622, %v1569
      %v1632 = vsel %vm322, %v1624, %v1567
      %v1636 = vsel %vm305, %v1576, %v1584
      %v1639 = vsel %vm305, %v1577, %v1585
      %v1642 = vsel %vm305, %v1575, %v1583
      %v1644 = vsel %vm315, %v1636, %v1592
      %v1646 = vsel %vm315, %v1639, %v1593
      %v1648 = vsel %vm315, %v1642, %v1591
      %v1650 = vsel %vm322, %v1644, %v1600
      %v1653 = vsel %vm322, %v1646, %v1601
      %v1656 = vsel %vm322, %v1648, %v1599
      %v1659 = vsel %vm305, %v1608, 0
      %v1662 = vsel %vm305, %v1609, 0
      %v1665 = vsel %vm305, %v1607, 0
      %1667 = vmatprep.subr.bf16.mxu0 %v1629
      %1668 = vmatpush1.bf16.msra.mxu0 %v1626
      %1669 = vmatprep.subr.bf16.mxu0 %v1653
      %1670 = vmatpush1.bf16.msra.mxu0 %v1650
      %1671 = vmatprep.subr.bf16.mxu0 %v1662
      %1672 = vmatpush1.bf16.msra.mxu0 %v1659
      %1673 = vmatprep.subr.bf16.mxu0 0
      %1674 = vmatpush1.bf16.msra.mxu0 0
      %1675 = vmatprep.subr.bf16.mxu0 0
      %1676 = vmatpush1.bf16.msra.mxu0 0
      %1677 = vmatprep.subr.bf16.mxu0 0
      %1678 = vmatpush1.bf16.msra.mxu0 0
      %1679 = vmatprep.subr.bf16.mxu0 0
      %1680 = vmatpush1.bf16.msra.mxu0 0
      %1681 = vmatprep.subr.bf16.mxu0 0
      %1682 = vmatpush1.bf16.msra.mxu0 0
      %1683 = vmatprep.subr.bf16.mxu0 0
      %1684 = vmatpush1.bf16.msra.mxu0 0
      %1685 = vmatprep.subr.bf16.mxu0 0
      %1686 = vmatpush1.bf16.msra.mxu0 0
      %1687 = vmatprep.subr.bf16.mxu0 0
      %1688 = vmatpush1.bf16.msra.mxu0 0
      %1689 = vmatprep.subr.bf16.mxu0 0
      %1690 = vmatpush1.bf16.msra.mxu0 0
      %1691 = vmatprep.subr.bf16.mxu0 0
      %1692 = vmatpush1.bf16.msra.mxu0 0
      %1693 = vmatprep.subr.bf16.mxu0 0
      %1694 = vmatpush1.bf16.msra.mxu0 0
      %1695 = vmatprep.subr.bf16.mxu0 0
      %1696 = vmatpush1.bf16.msra.mxu0 0
      %1697 = vmatprep.subr.bf16.mxu0 0
      %1698 = vmatpush1.bf16.msra.mxu0 0
      %1699 = vmatprep.mubr.bf16.mxu0 0
      %1700 = vmatmul.mubr.bf16.gmra.mrb[0].mxu0 %v510
      %v1701 = vpop.f32.mrb[0].mxu0
      %v1702 = vadd.f32 %v391, %v1701
      %v1703 = vpop.f32.mrb[0].mxu0
      %v1704 = vadd.f32 %v391, %v1703
      %v1705 = vpop.f32.mrb[0].mxu0
      %v1706 = vadd.f32 %v396, %v1705
      %v1707 = vpop.f32.mrb[0].mxu0
      %v1708 = vadd.f32 %v396, %v1707
      %1709 = vmatprep.mubr.bf16.mxu0 0
      %1710 = vmatmul.mubr.bf16.gmra.mrb[0].mxu0 %v513
      %v1711 = vpop.f32.mrb[0].mxu0
      %v1712 = vadd.f32 %v401, %v1711
      %v1713 = vpop.f32.mrb[0].mxu0
      %v1714 = vadd.f32 %v401, %v1713
      %v1715 = vpop.f32.mrb[0].mxu0
      %v1716 = vadd.f32 %v406, %v1715
      %v1717 = vpop.f32.mrb[0].mxu0
      %v1718 = vadd.f32 %v406, %v1717
      %1719 = vmatprep.mubr.bf16.mxu0 0
      %1720 = vmatmul.mubr.bf16.gmra.mrb[0].mxu0 %v516
      %v1721 = vpop.f32.mrb[0].mxu0
      %v1722 = vadd.f32 %v411, %v1721
      %v1723 = vpop.f32.mrb[0].mxu0
      %v1724 = vadd.f32 %v411, %v1723
      %v1725 = vpop.f32.mrb[0].mxu0
      %v1726 = vadd.f32 %v416, %v1725
      %v1727 = vpop.f32.mrb[0].mxu0
      %v1728 = vadd.f32 %v416, %v1727
      %1729 = vmatprep.mubr.bf16.mxu0 0
      %1730 = vmatmul.mubr.bf16.gmra.mrb[0].mxu0 %v519
      %v1731 = vpop.f32.mrb[0].mxu0
      %v1732 = vadd.f32 %v421, %v1731
      %v1733 = vpop.f32.mrb[0].mxu0
      %v1734 = vadd.f32 %v421, %v1733
      %v1735 = vpop.f32.mrb[0].mxu0
      %v1736 = vadd.f32 %v426, %v1735
      %v1737 = vpop.f32.mrb[0].mxu0
      %v1738 = vadd.f32 %v426, %v1737
      %1739 = vmatprep.mubr.bf16.mxu0 0
      %1740 = vmatmul.mubr.bf16.gmra.mrb[0].mxu0 %v522
      %v1741 = vpop.f32.mrb[0].mxu0
      %v1742 = vadd.f32 %v431, %v1741
      %v1743 = vpop.f32.mrb[0].mxu0
      %v1744 = vadd.f32 %v431, %v1743
      %v1745 = vpop.f32.mrb[0].mxu0
      %v1746 = vadd.f32 %v436, %v1745
      %v1747 = vpop.f32.mrb[0].mxu0
      %v1748 = vadd.f32 %v436, %v1747
      %1749 = vmatprep.mubr.bf16.mxu0 0
      %1750 = vmatmul.mubr.bf16.gmra.mrb[0].mxu0 %v525
      %v1751 = vpop.f32.mrb[0].mxu0
      %v1752 = vadd.f32 %v441, %v1751
      %v1753 = vpop.f32.mrb[0].mxu0
      %v1754 = vadd.f32 %v441, %v1753
      %v1755 = vpop.f32.mrb[0].mxu0
      %v1756 = vadd.f32 %v446, %v1755
      %v1757 = vpop.f32.mrb[0].mxu0
      %v1758 = vadd.f32 %v446, %v1757
      %1759 = vmatprep.mubr.bf16.mxu0 0
      %1760 = vmatmul.mubr.bf16.gmra.mrb[0].mxu0 %v528
      %v1761 = vpop.f32.mrb[0].mxu0
      %v1762 = vadd.f32 %v451, %v1761
      %v1763 = vpop.f32.mrb[0].mxu0
      %v1764 = vadd.f32 %v451, %v1763
      %v1765 = vpop.f32.mrb[0].mxu0
      %v1766 = vadd.f32 %v456, %v1765
      %v1767 = vpop.f32.mrb[0].mxu0
      %v1768 = vadd.f32 %v456, %v1767
      %1769 = vmatprep.mubr.bf16.mxu0 0
      %1770 = vmatmul.mubr.bf16.gmra.mrb[0].mxu0 %v531
      %v1771 = vpop.f32.mrb[0].mxu0
      %v1772 = vadd.f32 %v461, %v1771
      %v1773 = vpop.f32.mrb[0].mxu0
      %v1774 = vadd.f32 %v461, %v1773
      %v1775 = vpop.f32.mrb[0].mxu0
      %v1776 = vadd.f32 %v466, %v1775
      %v1777 = vpop.f32.mrb[0].mxu0
      %v1778 = vadd.f32 %v466, %v1777
      %1779 = vdwg.mxu0
      %1780 = vmatprep.subr.bf16.mxu0 0
      %1781 = vmatpush1.bf16.msra.mxu0 %v1632
      %1782 = vmatprep.subr.bf16.mxu0 0
      %1783 = vmatpush1.bf16.msra.mxu0 %v1656
      %1784 = vmatprep.subr.bf16.mxu0 0
      %1785 = vmatpush1.bf16.msra.mxu0 %v1665
      %1786 = vmatprep.subr.bf16.mxu0 0
      %1787 = vmatpush1.bf16.msra.mxu0 0
      %1788 = vmatprep.subr.bf16.mxu0 0
      %1789 = vmatpush1.bf16.msra.mxu0 0
      %1790 = vmatprep.subr.bf16.mxu0 0
      %1791 = vmatpush1.bf16.msra.mxu0 0
      %1792 = vmatprep.subr.bf16.mxu0 0
      %1793 = vmatpush1.bf16.msra.mxu0 0
      %1794 = vmatprep.subr.bf16.mxu0 0
      %1795 = vmatpush1.bf16.msra.mxu0 0
      %1796 = vmatprep.subr.bf16.mxu0 0
      %1797 = vmatpush1.bf16.msra.mxu0 0
      %1798 = vmatprep.subr.bf16.mxu0 0
      %1799 = vmatpush1.bf16.msra.mxu0 0
      %1800 = vmatprep.subr.bf16.mxu0 0
      %1801 = vmatpush1.bf16.msra.mxu0 0
      %1802 = vmatprep.subr.bf16.mxu0 0
      %1803 = vmatpush1.bf16.msra.mxu0 0
      %1804 = vmatprep.subr.bf16.mxu0 0
      %1805 = vmatpush1.bf16.msra.mxu0 0
      %1806 = vmatprep.subr.bf16.mxu0 0
      %1807 = vmatpush1.bf16.msra.mxu0 0
      %1808 = vmatprep.subr.bf16.mxu0 0
      %1809 = vmatpush1.bf16.msra.mxu0 0
      %1810 = vmatprep.subr.bf16.mxu0 0
      %1811 = vmatpush1.bf16.msra.mxu0 0
      %1812 = vmatprep.mubr.bf16.mxu0 0
      %1813 = vmatmul.mubr.bf16.gmra.mrb[0].mxu0 %v510
      %v1814 = vpop.f32.mrb[0].mxu0
      %v1815 = vadd.f32 %v391, %v1814
      %v1816 = vpop.f32.mrb[0].mxu0
      %v1817 = vpop.f32.mrb[0].mxu0
      %v1818 = vadd.f32 %v396, %v1817
      %v1819 = vpop.f32.mrb[0].mxu0
      %1820 = vmatprep.mubr.bf16.mxu0 0
      %1821 = vmatmul.mubr.bf16.gmra.mrb[0].mxu0 %v513
      %v1822 = vpop.f32.mrb[0].mxu0
      %v1823 = vadd.f32 %v401, %v1822
      %v1824 = vpop.f32.mrb[0].mxu0
      %v1825 = vpop.f32.mrb[0].mxu0
      %v1826 = vadd.f32 %v406, %v1825
      %v1827 = vpop.f32.mrb[0].mxu0
      %1828 = vmatprep.mubr.bf16.mxu0 0
      %1829 = vmatmul.mubr.bf16.gmra.mrb[0].mxu0 %v516
      %v1830 = vpop.f32.mrb[0].mxu0
      %v1831 = vadd.f32 %v411, %v1830
      %v1832 = vpop.f32.mrb[0].mxu0
      %v1833 = vpop.f32.mrb[0].mxu0
      %v1834 = vadd.f32 %v416, %v1833
      %v1835 = vpop.f32.mrb[0].mxu0
      %1836 = vmatprep.mubr.bf16.mxu0 0
      %1837 = vmatmul.mubr.bf16.gmra.mrb[0].mxu0 %v519
      %v1838 = vpop.f32.mrb[0].mxu0
      %v1839 = vadd.f32 %v421, %v1838
      %v1840 = vpop.f32.mrb[0].mxu0
      %v1841 = vpop.f32.mrb[0].mxu0
      %v1842 = vadd.f32 %v426, %v1841
      %v1843 = vpop.f32.mrb[0].mxu0
      %1844 = vmatprep.mubr.bf16.mxu0 0
      %1845 = vmatmul.mubr.bf16.gmra.mrb[0].mxu0 %v522
      %v1846 = vpop.f32.mrb[0].mxu0
      %v1847 = vadd.f32 %v431, %v1846
      %v1848 = vpop.f32.mrb[0].mxu0
      %v1849 = vpop.f32.mrb[0].mxu0
      %v1850 = vadd.f32 %v436, %v1849
      %v1851 = vpop.f32.mrb[0].mxu0
      %1852 = vmatprep.mubr.bf16.mxu0 0
      %1853 = vmatmul.mubr.bf16.gmra.mrb[0].mxu0 %v525
      %v1854 = vpop.f32.mrb[0].mxu0
      %v1855 = vadd.f32 %v441, %v1854
      %v1856 = vpop.f32.mrb[0].mxu0
      %v1857 = vpop.f32.mrb[0].mxu0
      %v1858 = vadd.f32 %v446, %v1857
      %v1859 = vpop.f32.mrb[0].mxu0
      %1860 = vmatprep.mubr.bf16.mxu0 0
      %1861 = vmatmul.mubr.bf16.gmra.mrb[0].mxu0 %v528
      %v1862 = vpop.f32.mrb[0].mxu0
      %v1863 = vadd.f32 %v451, %v1862
      %v1864 = vpop.f32.mrb[0].mxu0
      %v1865 = vpop.f32.mrb[0].mxu0
      %v1866 = vadd.f32 %v456, %v1865
      %v1867 = vpop.f32.mrb[0].mxu0
      %1868 = vmatprep.mubr.bf16.mxu0 0
      %1869 = vmatmul.mubr.bf16.gmra.mrb[0].mxu0 %v531
      %v1870 = vpop.f32.mrb[0].mxu0
      %v1871 = vadd.f32 %v461, %v1870
      %v1872 = vpop.f32.mrb[0].mxu0
      %v1873 = vpop.f32.mrb[0].mxu0
      %v1874 = vadd.f32 %v466, %v1873
      %v1875 = vpop.f32.mrb[0].mxu0
      %1876 = vdwg.mxu0
      %v1877 = vmax.f32 %v1702, 0.0
      %v1878 = vmax.f32 %v1704, 0.0
      %v1879 = vmax.f32 %v1815, 0.0
      %v1880 = vmax.f32 %v1706, 0.0
      %v1881 = vmax.f32 %v1708, 0.0
      %v1882 = vmax.f32 %v1818, 0.0
      %v1883 = vmax.f32 %v1712, 0.0
      %v1884 = vmax.f32 %v1714, 0.0
      %v1885 = vmax.f32 %v1823, 0.0
      %v1886 = vmax.f32 %v1716, 0.0
      %v1887 = vmax.f32 %v1718, 0.0
      %v1888 = vmax.f32 %v1826, 0.0
      %v1889 = vmax.f32 %v1722, 0.0
      %v1890 = vmax.f32 %v1724, 0.0
      %v1891 = vmax.f32 %v1831, 0.0
      %v1892 = vmax.f32 %v1726, 0.0
      %v1893 = vmax.f32 %v1728, 0.0
      %v1894 = vmax.f32 %v1834, 0.0
      %v1895 = vmax.f32 %v1732, 0.0
      %v1896 = vmax.f32 %v1734, 0.0
      %v1897 = vmax.f32 %v1839, 0.0
      %v1898 = vmax.f32 %v1736, 0.0
      %v1899 = vmax.f32 %v1738, 0.0
      %v1900 = vmax.f32 %v1842, 0.0
      %v1901 = vmax.f32 %v1742, 0.0
      %v1902 = vmax.f32 %v1744, 0.0
      %v1903 = vmax.f32 %v1847, 0.0
      %v1904 = vmax.f32 %v1746, 0.0
      %v1905 = vmax.f32 %v1748, 0.0
      %v1906 = vmax.f32 %v1850, 0.0
      %v1907 = vmax.f32 %v1752, 0.0
      %v1908 = vmax.f32 %v1754, 0.0
      %v1909 = vmax.f32 %v1855, 0.0
      %v1910 = vmax.f32 %v1756, 0.0
      %v1911 = vmax.f32 %v1758, 0.0
      %v1912 = vmax.f32 %v1858, 0.0
      %v1913 = vmax.f32 %v1762, 0.0
      %v1914 = vmax.f32 %v1764, 0.0
      %v1915 = vmax.f32 %v1863, 0.0
      %v1916 = vmax.f32 %v1766, 0.0
      %v1917 = vmax.f32 %v1768, 0.0
      %v1918 = vmax.f32 %v1866, 0.0
      %v1919 = vmax.f32 %v1772, 0.0
      %v1920 = vmax.f32 %v1774, 0.0
      %v1921 = vmax.f32 %v1871, 0.0
      %v1922 = vmax.f32 %v1776, 0.0
      %v1923 = vmax.f32 %v1778, 0.0
      %v1924 = vmax.f32 %v1874, 0.0
      %v1925 = vmul.f32 %v1877, %v804
      %v1926 = vmul.f32 %v1878, %v808
      %v1927 = vmul.f32 %v1879, %v812
      %v1928 = vmul.f32 %v1880, %v804
      %v1929 = vmul.f32 %v1881, %v808
      %v1930 = vmul.f32 %v1882, %v812
      %v1931 = vmul.f32 %v1883, %v804
      %v1932 = vmul.f32 %v1884, %v808
      %v1933 = vmul.f32 %v1885, %v812
      %v1934 = vmul.f32 %v1886, %v804
      %v1935 = vmul.f32 %v1887, %v808
      %v1936 = vmul.f32 %v1888, %v812
      %v1937 = vmul.f32 %v1889, %v804
      %v1938 = vmul.f32 %v1890, %v808
      %v1939 = vmul.f32 %v1891, %v812
      %v1940 = vmul.f32 %v1892, %v804
      %v1941 = vmul.f32 %v1893, %v808
      %v1942 = vmul.f32 %v1894, %v812
      %v1943 = vmul.f32 %v1895, %v804
      %v1944 = vmul.f32 %v1896, %v808
      %v1945 = vmul.f32 %v1897, %v812
      %v1946 = vmul.f32 %v1898, %v804
      %v1947 = vmul.f32 %v1899, %v808
      %v1948 = vmul.f32 %v1900, %v812
      %v1949 = vmul.f32 %v1901, %v804
      %v1950 = vmul.f32 %v1902, %v808
      %v1951 = vmul.f32 %v1903, %v812
      %v1952 = vmul.f32 %v1904, %v804
      %v1953 = vmul.f32 %v1905, %v808
      %v1954 = vmul.f32 %v1906, %v812
      %v1955 = vmul.f32 %v1907, %v804
      %v1956 = vmul.f32 %v1908, %v808
      %v1957 = vmul.f32 %v1909, %v812
      %v1958 = vmul.f32 %v1910, %v804
      %v1959 = vmul.f32 %v1911, %v808
      %v1960 = vmul.f32 %v1912, %v812
      %v1961 = vmul.f32 %v1913, %v804
      %v1962 = vmul.f32 %v1914, %v808
      %v1963 = vmul.f32 %v1915, %v812
      %v1964 = vmul.f32 %v1916, %v804
      %v1965 = vmul.f32 %v1917, %v808
      %v1966 = vmul.f32 %v1918, %v812
      %v1967 = vmul.f32 %v1919, %v804
      %v1968 = vmul.f32 %v1920, %v808
      %v1969 = vmul.f32 %v1921, %v812
      %v1970 = vmul.f32 %v1922, %v804
      %v1971 = vmul.f32 %v1923, %v808
      %v1972 = vmul.f32 %v1924, %v812
      %v1973 = vadd.f32 %v1925, %v1926
      %v1974 = vsel %vm865, %v1927, 0.0
      %v1975 = vadd.f32 %v1973, %v1974
      %1976 = vadd.xlane.f32.xlu0 %v1975
      %v1977 = vpop.xlane.xlu0 %1976
      %v1978 = vadd.f32 %v1928, %v1929
      %v1979 = vsel %vm865, %v1930, 0.0
      %v1980 = vadd.f32 %v1978, %v1979
      %1981 = vadd.xlane.f32.xlu0 %v1980
      %v1982 = vpop.xlane.xlu0 %1981
      %v1983 = vadd.f32 %v1931, %v1932
      %v1984 = vsel %vm865, %v1933, 0.0
      %v1985 = vadd.f32 %v1983, %v1984
      %1986 = vadd.xlane.f32.xlu0 %v1985
      %v1987 = vpop.xlane.xlu0 %1986
      %v1988 = vadd.f32 %v1934, %v1935
      %v1989 = vsel %vm865, %v1936, 0.0
      %v1990 = vadd.f32 %v1988, %v1989
      %1991 = vadd.xlane.f32.xlu0 %v1990
      %v1992 = vpop.xlane.xlu0 %1991
      %v1993 = vadd.f32 %v1937, %v1938
      %v1994 = vsel %vm865, %v1939, 0.0
      %v1995 = vadd.f32 %v1993, %v1994
      %1996 = vadd.xlane.f32.xlu0 %v1995
      %v1997 = vpop.xlane.xlu0 %1996
      %v1998 = vadd.f32 %v1940, %v1941
      %v1999 = vsel %vm865, %v1942, 0.0
      %v2000 = vadd.f32 %v1998, %v1999
      %2001 = vadd.xlane.f32.xlu0 %v2000
      %v2002 = vpop.xlane.xlu0 %2001
      %v2003 = vadd.f32 %v1943, %v1944
      %v2004 = vsel %vm865, %v1945, 0.0
      %v2005 = vadd.f32 %v2003, %v2004
      %2006 = vadd.xlane.f32.xlu0 %v2005
      %v2007 = vpop.xlane.xlu0 %2006
      %v2008 = vadd.f32 %v1946, %v1947
      %v2009 = vsel %vm865, %v1948, 0.0
      %v2010 = vadd.f32 %v2008, %v2009
      %2011 = vadd.xlane.f32.xlu0 %v2010
      %v2012 = vpop.xlane.xlu0 %2011
      %v2013 = vadd.f32 %v1949, %v1950
      %v2014 = vsel %vm865, %v1951, 0.0
      %v2015 = vadd.f32 %v2013, %v2014
      %2016 = vadd.xlane.f32.xlu0 %v2015
      %v2017 = vpop.xlane.xlu0 %2016
      %v2018 = vadd.f32 %v1952, %v1953
      %v2019 = vsel %vm865, %v1954, 0.0
      %v2020 = vadd.f32 %v2018, %v2019
      %2021 = vadd.xlane.f32.xlu0 %v2020
      %v2022 = vpop.xlane.xlu0 %2021
      %v2023 = vadd.f32 %v1955, %v1956
      %v2024 = vsel %vm865, %v1957, 0.0
      %v2025 = vadd.f32 %v2023, %v2024
      %2026 = vadd.xlane.f32.xlu0 %v2025
      %v2027 = vpop.xlane.xlu0 %2026
      %v2028 = vadd.f32 %v1958, %v1959
      %v2029 = vsel %vm865, %v1960, 0.0
      %v2030 = vadd.f32 %v2028, %v2029
      %2031 = vadd.xlane.f32.xlu0 %v2030
      %v2032 = vpop.xlane.xlu0 %2031
      %v2033 = vadd.f32 %v1961, %v1962
      %v2034 = vsel %vm865, %v1963, 0.0
      %v2035 = vadd.f32 %v2033, %v2034
      %2036 = vadd.xlane.f32.xlu0 %v2035
      %v2037 = vpop.xlane.xlu0 %2036
      %v2038 = vadd.f32 %v1964, %v1965
      %v2039 = vsel %vm865, %v1966, 0.0
      %v2040 = vadd.f32 %v2038, %v2039
      %2041 = vadd.xlane.f32.xlu0 %v2040
      %v2042 = vpop.xlane.xlu0 %2041
      %v2043 = vadd.f32 %v1967, %v1968
      %v2044 = vsel %vm865, %v1969, 0.0
      %v2045 = vadd.f32 %v2043, %v2044
      %2046 = vadd.xlane.f32.xlu0 %v2045
      %v2047 = vpop.xlane.xlu0 %2046
      %v2048 = vadd.f32 %v1970, %v1971
      %v2049 = vsel %vm865, %v1972, 0.0
      %v2050 = vadd.f32 %v2048, %v2049
      %2051 = vadd.xlane.f32.xlu0 %v2050
      %v2052 = vpop.xlane.xlu0 %2051
      %v2053 = vmul.f32 %v1977, 0.00390625
      %v2054 = vmul.f32 %v1982, 0.00390625
      %v2055 = vmul.f32 %v1987, 0.00390625
      %v2056 = vmul.f32 %v1992, 0.00390625
      %v2057 = vmul.f32 %v1997, 0.00390625
      %v2058 = vmul.f32 %v2002, 0.00390625
      %v2059 = vmul.f32 %v2007, 0.00390625
      %v2060 = vmul.f32 %v2012, 0.00390625
      %v2061 = vmul.f32 %v2017, 0.00390625
      %v2062 = vmul.f32 %v2022, 0.00390625
      %v2063 = vmul.f32 %v2027, 0.00390625
      %v2064 = vmul.f32 %v2032, 0.00390625
      %v2065 = vmul.f32 %v2037, 0.00390625
      %v2066 = vmul.f32 %v2042, 0.00390625
      %v2067 = vmul.f32 %v2047, 0.00390625
      %v2068 = vmul.f32 %v2052, 0.00390625
      %s2069 = scalar_lea.vmem %s195, 18
      %v2070 = vld [vmem:[%s2069] sm:$0x3f]
      %v2072 = vcombine.high %v2070, %v2070
      %v2074 = vunpack.c.l.s4 1983009808
      %v2075 = vunpack.c.0.s8 %v2074
      %v2076 = vlaneseq
      %v2077 = vshrl.u32 %v2076, 7
      %v2078 = vsub.s32 %v2075, %v2077
      %v2079 = vrot.slane %v2070, %v2078
      %v2081 = vunpack.c.l.s4 1983009808
      %v2082 = vunpack.c.0.s8 %v2081
      %v2083 = vlaneseq
      %v2084 = vshrl.u32 %v2083, 7
      %v2085 = vsub.s32 %v2082, %v2084
      %v2086 = vrot.slane %v2072, %v2085
      %v2087 = vcombine.high %v2079, %v2079
      %v2088 = vcombine.low %v2070, %v2070
      %v2090 = vunpack.c.l.s4 1983009808
      %v2091 = vunpack.c.0.s8 %v2090
      %v2092 = vlaneseq
      %v2093 = vshrl.u32 %v2092, 7
      %v2094 = vsub.s32 %v2091, %v2093
      %v2095 = vrot.slane %v2088, %v2094
      %v2096 = vcombine.high %v2095, %v2095
      %2097 = vrot.lane.b32.xlu0 %v2095, 127
      %v2098 = vpop.permute.xlu0 %2097
      %2099 = vrot.lane.b32.xlu0 %v2096, 127
      %v2100 = vpop.permute.xlu0 %2099
      %2101 = vrot.lane.b32.xlu0 %v2079, 127
      %v2102 = vpop.permute.xlu0 %2101
      %v2103 = vsel %vm236, %v2098, %v2100
      %v2104 = vsel %vm236, %v2100, %v2102
      %v2105 = vcombine.low %v2079, %v2079
      %v2106 = vcombine.low %v2086, %v2086
      %2107 = vrot.lane.b32.xlu0 %v2105, 126
      %v2108 = vpop.permute.xlu0 %2107
      %2109 = vrot.lane.b32.xlu0 %v2079, 126
      %v2110 = vpop.permute.xlu0 %2109
      %2111 = vrot.lane.b32.xlu0 %v2106, 126
      %v2112 = vpop.permute.xlu0 %2111
      %v2113 = vsel %vm247, %v2108, %v2110
      %v2114 = vsel %vm247, %v2110, %v2112
      %v2115 = vcombine.low %v2095, %v2095
      %2116 = vrot.lane.b32.xlu0 %v2115, 110
      %v2117 = vpop.permute.xlu0 %2116
      %2118 = vrot.lane.b32.xlu0 %v2095, 110
      %v2119 = vpop.permute.xlu0 %2118
      %2120 = vrot.lane.b32.xlu0 %v2105, 110
      %v2121 = vpop.permute.xlu0 %2120
      %v2122 = vsel %vm257, %v2117, %v2119
      %v2123 = vsel %vm257, %v2119, %v2121
      %2124 = vrot.lane.b32.xlu0 %v2079, 109
      %v2125 = vpop.permute.xlu0 %2124
      %2126 = vrot.lane.b32.xlu0 %v2087, 109
      %v2127 = vpop.permute.xlu0 %2126
      %2128 = vrot.lane.b32.xlu0 %v2086, 109
      %v2129 = vpop.permute.xlu0 %2128
      %v2130 = vsel %vm266, %v2125, %v2127
      %v2131 = vsel %vm266, %v2127, %v2129
      %2132 = vrot.lane.b32.xlu0 %v2095, 108
      %v2133 = vpop.permute.xlu0 %2132
      %2134 = vrot.lane.b32.xlu0 %v2096, 108
      %v2135 = vpop.permute.xlu0 %2134
      %2136 = vrot.lane.b32.xlu0 %v2079, 108
      %v2137 = vpop.permute.xlu0 %2136
      %v2138 = vsel %vm275, %v2133, %v2135
      %v2139 = vsel %vm275, %v2135, %v2137
      %2140 = vrot.lane.b32.xlu0 %v2105, 92
      %v2141 = vpop.permute.xlu0 %2140
      %2142 = vrot.lane.b32.xlu0 %v2079, 92
      %v2143 = vpop.permute.xlu0 %2142
      %2144 = vrot.lane.b32.xlu0 %v2106, 92
      %v2145 = vpop.permute.xlu0 %2144
      %v2146 = vsel %vm284, %v2141, %v2143
      %v2147 = vsel %vm284, %v2143, %v2145
      %2148 = vrot.lane.b32.xlu0 %v2115, 91
      %v2149 = vpop.permute.xlu0 %2148
      %2150 = vrot.lane.b32.xlu0 %v2095, 91
      %v2151 = vpop.permute.xlu0 %2150
      %2152 = vrot.lane.b32.xlu0 %v2105, 91
      %v2153 = vpop.permute.xlu0 %2152
      %v2154 = vsel %vm293, %v2149, %v2151
      %v2155 = vsel %vm293, %v2151, %v2153
      %2156 = vrot.lane.b32.xlu0 %v2079, 90
      %v2157 = vpop.permute.xlu0 %2156
      %2158 = vrot.lane.b32.xlu0 %v2087, 90
      %v2159 = vpop.permute.xlu0 %2158
      %2160 = vrot.lane.b32.xlu0 %v2086, 90
      %v2161 = vpop.permute.xlu0 %2160
      %v2162 = vsel %vm302, %v2157, %v2159
      %v2163 = vsel %vm302, %v2159, %v2161
      %v2166 = vsel %vm305, %v2079, %v2103
      %v2169 = vsel %vm305, %v2087, %v2104
      %v2172 = vsel %vm305, %v2086, %v2102
      %v2174 = vsel %vm315, %v2166, %v2113
      %v2176 = vsel %vm315, %v2169, %v2114
      %v2178 = vsel %vm315, %v2172, %v2112
      %v2180 = vsel %vm322, %v2174, %v2122
      %v2183 = vsel %vm322, %v2176, %v2123
      %v2186 = vsel %vm322, %v2178, %v2121
      %v2190 = vsel %vm305, %v2130, %v2138
      %v2193 = vsel %vm305, %v2131, %v2139
      %v2196 = vsel %vm305, %v2129, %v2137
      %v2198 = vsel %vm315, %v2190, %v2146
      %v2200 = vsel %vm315, %v2193, %v2147
      %v2202 = vsel %vm315, %v2196, %v2145
      %v2204 = vsel %vm322, %v2198, %v2154
      %v2207 = vsel %vm322, %v2200, %v2155
      %v2210 = vsel %vm322, %v2202, %v2153
      %v2213 = vsel %vm305, %v2162, 0
      %v2216 = vsel %vm305, %v2163, 0
      %v2219 = vsel %vm305, %v2161, 0
      %2221 = vmatprep.subr.bf16.mxu0 %v2183
      %2222 = vmatpush1.bf16.msra.mxu0 %v2180
      %2223 = vmatprep.subr.bf16.mxu0 %v2207
      %2224 = vmatpush1.bf16.msra.mxu0 %v2204
      %2225 = vmatprep.subr.bf16.mxu0 %v2216
      %2226 = vmatpush1.bf16.msra.mxu0 %v2213
      %2227 = vmatprep.subr.bf16.mxu0 0
      %2228 = vmatpush1.bf16.msra.mxu0 0
      %2229 = vmatprep.subr.bf16.mxu0 0
      %2230 = vmatpush1.bf16.msra.mxu0 0
      %2231 = vmatprep.subr.bf16.mxu0 0
      %2232 = vmatpush1.bf16.msra.mxu0 0
      %2233 = vmatprep.subr.bf16.mxu0 0
      %2234 = vmatpush1.bf16.msra.mxu0 0
      %2235 = vmatprep.subr.bf16.mxu0 0
      %2236 = vmatpush1.bf16.msra.mxu0 0
      %2237 = vmatprep.subr.bf16.mxu0 0
      %2238 = vmatpush1.bf16.msra.mxu0 0
      %2239 = vmatprep.subr.bf16.mxu0 0
      %2240 = vmatpush1.bf16.msra.mxu0 0
      %2241 = vmatprep.subr.bf16.mxu0 0
      %2242 = vmatpush1.bf16.msra.mxu0 0
      %2243 = vmatprep.subr.bf16.mxu0 0
      %2244 = vmatpush1.bf16.msra.mxu0 0
      %2245 = vmatprep.subr.bf16.mxu0 0
      %2246 = vmatpush1.bf16.msra.mxu0 0
      %2247 = vmatprep.subr.bf16.mxu0 0
      %2248 = vmatpush1.bf16.msra.mxu0 0
      %2249 = vmatprep.subr.bf16.mxu0 0
      %2250 = vmatpush1.bf16.msra.mxu0 0
      %2251 = vmatprep.subr.bf16.mxu0 0
      %2252 = vmatpush1.bf16.msra.mxu0 0
      %2253 = vmatprep.mubr.bf16.mxu0 0
      %2254 = vmatmul.mubr.bf16.gmra.mrb[0].mxu0 %v510
      %v2255 = vpop.f32.mrb[0].mxu0
      %v2256 = vadd.f32 %v391, %v2255
      %v2257 = vpop.f32.mrb[0].mxu0
      %v2258 = vadd.f32 %v391, %v2257
      %v2259 = vpop.f32.mrb[0].mxu0
      %v2260 = vadd.f32 %v396, %v2259
      %v2261 = vpop.f32.mrb[0].mxu0
      %v2262 = vadd.f32 %v396, %v2261
      %2263 = vmatprep.mubr.bf16.mxu0 0
      %2264 = vmatmul.mubr.bf16.gmra.mrb[0].mxu0 %v513
      %v2265 = vpop.f32.mrb[0].mxu0
      %v2266 = vadd.f32 %v401, %v2265
      %v2267 = vpop.f32.mrb[0].mxu0
      %v2268 = vadd.f32 %v401, %v2267
      %v2269 = vpop.f32.mrb[0].mxu0
      %v2270 = vadd.f32 %v406, %v2269
      %v2271 = vpop.f32.mrb[0].mxu0
      %v2272 = vadd.f32 %v406, %v2271
      %2273 = vmatprep.mubr.bf16.mxu0 0
      %2274 = vmatmul.mubr.bf16.gmra.mrb[0].mxu0 %v516
      %v2275 = vpop.f32.mrb[0].mxu0
      %v2276 = vadd.f32 %v411, %v2275
      %v2277 = vpop.f32.mrb[0].mxu0
      %v2278 = vadd.f32 %v411, %v2277
      %v2279 = vpop.f32.mrb[0].mxu0
      %v2280 = vadd.f32 %v416, %v2279
      %v2281 = vpop.f32.mrb[0].mxu0
      %v2282 = vadd.f32 %v416, %v2281
      %2283 = vmatprep.mubr.bf16.mxu0 0
      %2284 = vmatmul.mubr.bf16.gmra.mrb[0].mxu0 %v519
      %v2285 = vpop.f32.mrb[0].mxu0
      %v2286 = vadd.f32 %v421, %v2285
      %v2287 = vpop.f32.mrb[0].mxu0
      %v2288 = vadd.f32 %v421, %v2287
      %v2289 = vpop.f32.mrb[0].mxu0
      %v2290 = vadd.f32 %v426, %v2289
      %v2291 = vpop.f32.mrb[0].mxu0
      %v2292 = vadd.f32 %v426, %v2291
      %2293 = vmatprep.mubr.bf16.mxu0 0
      %2294 = vmatmul.mubr.bf16.gmra.mrb[0].mxu0 %v522
      %v2295 = vpop.f32.mrb[0].mxu0
      %v2296 = vadd.f32 %v431, %v2295
      %v2297 = vpop.f32.mrb[0].mxu0
      %v2298 = vadd.f32 %v431, %v2297
      %v2299 = vpop.f32.mrb[0].mxu0
      %v2300 = vadd.f32 %v436, %v2299
      %v2301 = vpop.f32.mrb[0].mxu0
      %v2302 = vadd.f32 %v436, %v2301
      %2303 = vmatprep.mubr.bf16.mxu0 0
      %2304 = vmatmul.mubr.bf16.gmra.mrb[0].mxu0 %v525
      %v2305 = vpop.f32.mrb[0].mxu0
      %v2306 = vadd.f32 %v441, %v2305
      %v2307 = vpop.f32.mrb[0].mxu0
      %v2308 = vadd.f32 %v441, %v2307
      %v2309 = vpop.f32.mrb[0].mxu0
      %v2310 = vadd.f32 %v446, %v2309
      %v2311 = vpop.f32.mrb[0].mxu0
      %v2312 = vadd.f32 %v446, %v2311
      %2313 = vmatprep.mubr.bf16.mxu0 0
      %2314 = vmatmul.mubr.bf16.gmra.mrb[0].mxu0 %v528
      %v2315 = vpop.f32.mrb[0].mxu0
      %v2316 = vadd.f32 %v451, %v2315
      %v2317 = vpop.f32.mrb[0].mxu0
      %v2318 = vadd.f32 %v451, %v2317
      %v2319 = vpop.f32.mrb[0].mxu0
      %v2320 = vadd.f32 %v456, %v2319
      %v2321 = vpop.f32.mrb[0].mxu0
      %v2322 = vadd.f32 %v456, %v2321
      %2323 = vmatprep.mubr.bf16.mxu0 0
      %2324 = vmatmul.mubr.bf16.gmra.mrb[0].mxu0 %v531
      %v2325 = vpop.f32.mrb[0].mxu0
      %v2326 = vadd.f32 %v461, %v2325
      %v2327 = vpop.f32.mrb[0].mxu0
      %v2328 = vadd.f32 %v461, %v2327
      %v2329 = vpop.f32.mrb[0].mxu0
      %v2330 = vadd.f32 %v466, %v2329
      %v2331 = vpop.f32.mrb[0].mxu0
      %v2332 = vadd.f32 %v466, %v2331
      %2333 = vdwg.mxu0
      %2334 = vmatprep.subr.bf16.mxu0 0
      %2335 = vmatpush1.bf16.msra.mxu0 %v2186
      %2336 = vmatprep.subr.bf16.mxu0 0
      %2337 = vmatpush1.bf16.msra.mxu0 %v2210
      %2338 = vmatprep.subr.bf16.mxu0 0
      %2339 = vmatpush1.bf16.msra.mxu0 %v2219
      %2340 = vmatprep.subr.bf16.mxu0 0
      %2341 = vmatpush1.bf16.msra.mxu0 0
      %2342 = vmatprep.subr.bf16.mxu0 0
      %2343 = vmatpush1.bf16.msra.mxu0 0
      %2344 = vmatprep.subr.bf16.mxu0 0
      %2345 = vmatpush1.bf16.msra.mxu0 0
      %2346 = vmatprep.subr.bf16.mxu0 0
      %2347 = vmatpush1.bf16.msra.mxu0 0
      %2348 = vmatprep.subr.bf16.mxu0 0
      %2349 = vmatpush1.bf16.msra.mxu0 0
      %2350 = vmatprep.subr.bf16.mxu0 0
      %2351 = vmatpush1.bf16.msra.mxu0 0
      %2352 = vmatprep.subr.bf16.mxu0 0
      %2353 = vmatpush1.bf16.msra.mxu0 0
      %2354 = vmatprep.subr.bf16.mxu0 0
      %2355 = vmatpush1.bf16.msra.mxu0 0
      %2356 = vmatprep.subr.bf16.mxu0 0
      %2357 = vmatpush1.bf16.msra.mxu0 0
      %2358 = vmatprep.subr.bf16.mxu0 0
      %2359 = vmatpush1.bf16.msra.mxu0 0
      %2360 = vmatprep.subr.bf16.mxu0 0
      %2361 = vmatpush1.bf16.msra.mxu0 0
      %2362 = vmatprep.subr.bf16.mxu0 0
      %2363 = vmatpush1.bf16.msra.mxu0 0
      %2364 = vmatprep.subr.bf16.mxu0 0
      %2365 = vmatpush1.bf16.msra.mxu0 0
      %2366 = vmatprep.mubr.bf16.mxu0 0
      %2367 = vmatmul.mubr.bf16.gmra.mrb[0].mxu0 %v510
      %v2368 = vpop.f32.mrb[0].mxu0
      %v2369 = vadd.f32 %v391, %v2368
      %v2370 = vpop.f32.mrb[0].mxu0
      %v2371 = vpop.f32.mrb[0].mxu0
      %v2372 = vadd.f32 %v396, %v2371
      %v2373 = vpop.f32.mrb[0].mxu0
      %2374 = vmatprep.mubr.bf16.mxu0 0
      %2375 = vmatmul.mubr.bf16.gmra.mrb[0].mxu0 %v513
      %v2376 = vpop.f32.mrb[0].mxu0
      %v2377 = vadd.f32 %v401, %v2376
      %v2378 = vpop.f32.mrb[0].mxu0
      %v2379 = vpop.f32.mrb[0].mxu0
      %v2380 = vadd.f32 %v406, %v2379
      %v2381 = vpop.f32.mrb[0].mxu0
      %2382 = vmatprep.mubr.bf16.mxu0 0
      %2383 = vmatmul.mubr.bf16.gmra.mrb[0].mxu0 %v516
      %v2384 = vpop.f32.mrb[0].mxu0
      %v2385 = vadd.f32 %v411, %v2384
      %v2386 = vpop.f32.mrb[0].mxu0
      %v2387 = vpop.f32.mrb[0].mxu0
      %v2388 = vadd.f32 %v416, %v2387
      %v2389 = vpop.f32.mrb[0].mxu0
      %2390 = vmatprep.mubr.bf16.mxu0 0
      %2391 = vmatmul.mubr.bf16.gmra.mrb[0].mxu0 %v519
      %v2392 = vpop.f32.mrb[0].mxu0
      %v2393 = vadd.f32 %v421, %v2392
      %v2394 = vpop.f32.mrb[0].mxu0
      %v2395 = vpop.f32.mrb[0].mxu0
      %v2396 = vadd.f32 %v426, %v2395
      %v2397 = vpop.f32.mrb[0].mxu0
      %2398 = vmatprep.mubr.bf16.mxu0 0
      %2399 = vmatmul.mubr.bf16.gmra.mrb[0].mxu0 %v522
      %v2400 = vpop.f32.mrb[0].mxu0
      %v2401 = vadd.f32 %v431, %v2400
      %v2402 = vpop.f32.mrb[0].mxu0
      %v2403 = vpop.f32.mrb[0].mxu0
      %v2404 = vadd.f32 %v436, %v2403
      %v2405 = vpop.f32.mrb[0].mxu0
      %2406 = vmatprep.mubr.bf16.mxu0 0
      %2407 = vmatmul.mubr.bf16.gmra.mrb[0].mxu0 %v525
      %v2408 = vpop.f32.mrb[0].mxu0
      %v2409 = vadd.f32 %v441, %v2408
      %v2410 = vpop.f32.mrb[0].mxu0
      %v2411 = vpop.f32.mrb[0].mxu0
      %v2412 = vadd.f32 %v446, %v2411
      %v2413 = vpop.f32.mrb[0].mxu0
      %2414 = vmatprep.mubr.bf16.mxu0 0
      %2415 = vmatmul.mubr.bf16.gmra.mrb[0].mxu0 %v528
      %v2416 = vpop.f32.mrb[0].mxu0
      %v2417 = vadd.f32 %v451, %v2416
      %v2418 = vpop.f32.mrb[0].mxu0
      %v2419 = vpop.f32.mrb[0].mxu0
      %v2420 = vadd.f32 %v456, %v2419
      %v2421 = vpop.f32.mrb[0].mxu0
      %2422 = vmatprep.mubr.bf16.mxu0 0
      %2423 = vmatmul.mubr.bf16.gmra.mrb[0].mxu0 %v531
      %v2424 = vpop.f32.mrb[0].mxu0
      %v2425 = vadd.f32 %v461, %v2424
      %v2426 = vpop.f32.mrb[0].mxu0
      %v2427 = vpop.f32.mrb[0].mxu0
      %v2428 = vadd.f32 %v466, %v2427
      %v2429 = vpop.f32.mrb[0].mxu0
      %2430 = vdwg.mxu0
      %v2431 = vmax.f32 %v2256, 0.0
      %v2432 = vmax.f32 %v2258, 0.0
      %v2433 = vmax.f32 %v2369, 0.0
      %v2434 = vmax.f32 %v2260, 0.0
      %v2435 = vmax.f32 %v2262, 0.0
      %v2436 = vmax.f32 %v2372, 0.0
      %v2437 = vmax.f32 %v2266, 0.0
      %v2438 = vmax.f32 %v2268, 0.0
      %v2439 = vmax.f32 %v2377, 0.0
      %v2440 = vmax.f32 %v2270, 0.0
      %v2441 = vmax.f32 %v2272, 0.0
      %v2442 = vmax.f32 %v2380, 0.0
      %v2443 = vmax.f32 %v2276, 0.0
      %v2444 = vmax.f32 %v2278, 0.0
      %v2445 = vmax.f32 %v2385, 0.0
      %v2446 = vmax.f32 %v2280, 0.0
      %v2447 = vmax.f32 %v2282, 0.0
      %v2448 = vmax.f32 %v2388, 0.0
      %v2449 = vmax.f32 %v2286, 0.0
      %v2450 = vmax.f32 %v2288, 0.0
      %v2451 = vmax.f32 %v2393, 0.0
      %v2452 = vmax.f32 %v2290, 0.0
      %v2453 = vmax.f32 %v2292, 0.0
      %v2454 = vmax.f32 %v2396, 0.0
      %v2455 = vmax.f32 %v2296, 0.0
      %v2456 = vmax.f32 %v2298, 0.0
      %v2457 = vmax.f32 %v2401, 0.0
      %v2458 = vmax.f32 %v2300, 0.0
      %v2459 = vmax.f32 %v2302, 0.0
      %v2460 = vmax.f32 %v2404, 0.0
      %v2461 = vmax.f32 %v2306, 0.0
      %v2462 = vmax.f32 %v2308, 0.0
      %v2463 = vmax.f32 %v2409, 0.0
      %v2464 = vmax.f32 %v2310, 0.0
      %v2465 = vmax.f32 %v2312, 0.0
      %v2466 = vmax.f32 %v2412, 0.0
      %v2467 = vmax.f32 %v2316, 0.0
      %v2468 = vmax.f32 %v2318, 0.0
      %v2469 = vmax.f32 %v2417, 0.0
      %v2470 = vmax.f32 %v2320, 0.0
      %v2471 = vmax.f32 %v2322, 0.0
      %v2472 = vmax.f32 %v2420, 0.0
      %v2473 = vmax.f32 %v2326, 0.0
      %v2474 = vmax.f32 %v2328, 0.0
      %v2475 = vmax.f32 %v2425, 0.0
      %v2476 = vmax.f32 %v2330, 0.0
      %v2477 = vmax.f32 %v2332, 0.0
      %v2478 = vmax.f32 %v2428, 0.0
      %v2479 = vmul.f32 %v2431, %v804
      %v2480 = vmul.f32 %v2432, %v808
      %v2481 = vmul.f32 %v2433, %v812
      %v2482 = vmul.f32 %v2434, %v804
      %v2483 = vmul.f32 %v2435, %v808
      %v2484 = vmul.f32 %v2436, %v812
      %v2485 = vmul.f32 %v2437, %v804
      %v2486 = vmul.f32 %v2438, %v808
      %v2487 = vmul.f32 %v2439, %v812
      %v2488 = vmul.f32 %v2440, %v804
      %v2489 = vmul.f32 %v2441, %v808
      %v2490 = vmul.f32 %v2442, %v812
      %v2491 = vmul.f32 %v2443, %v804
      %v2492 = vmul.f32 %v2444, %v808
      %v2493 = vmul.f32 %v2445, %v812
      %v2494 = vmul.f32 %v2446, %v804
      %v2495 = vmul.f32 %v2447, %v808
      %v2496 = vmul.f32 %v2448, %v812
      %v2497 = vmul.f32 %v2449, %v804
      %v2498 = vmul.f32 %v2450, %v808
      %v2499 = vmul.f32 %v2451, %v812
      %v2500 = vmul.f32 %v2452, %v804
      %v2501 = vmul.f32 %v2453, %v808
      %v2502 = vmul.f32 %v2454, %v812
      %v2503 = vmul.f32 %v2455, %v804
      %v2504 = vmul.f32 %v2456, %v808
      %v2505 = vmul.f32 %v2457, %v812
      %v2506 = vmul.f32 %v2458, %v804
      %v2507 = vmul.f32 %v2459, %v808
      %v2508 = vmul.f32 %v2460, %v812
      %v2509 = vmul.f32 %v2461, %v804
      %v2510 = vmul.f32 %v2462, %v808
      %v2511 = vmul.f32 %v2463, %v812
      %v2512 = vmul.f32 %v2464, %v804
      %v2513 = vmul.f32 %v2465, %v808
      %v2514 = vmul.f32 %v2466, %v812
      %v2515 = vmul.f32 %v2467, %v804
      %v2516 = vmul.f32 %v2468, %v808
      %v2517 = vmul.f32 %v2469, %v812
      %v2518 = vmul.f32 %v2470, %v804
      %v2519 = vmul.f32 %v2471, %v808
      %v2520 = vmul.f32 %v2472, %v812
      %v2521 = vmul.f32 %v2473, %v804
      %v2522 = vmul.f32 %v2474, %v808
      %v2523 = vmul.f32 %v2475, %v812
      %v2524 = vmul.f32 %v2476, %v804
      %v2525 = vmul.f32 %v2477, %v808
      %v2526 = vmul.f32 %v2478, %v812
      %v2527 = vadd.f32 %v2479, %v2480
      %v2528 = vsel %vm865, %v2481, 0.0
      %v2529 = vadd.f32 %v2527, %v2528
      %2530 = vadd.xlane.f32.xlu0 %v2529
      %v2531 = vpop.xlane.xlu0 %2530
      %v2532 = vadd.f32 %v2482, %v2483
      %v2533 = vsel %vm865, %v2484, 0.0
      %v2534 = vadd.f32 %v2532, %v2533
      %2535 = vadd.xlane.f32.xlu0 %v2534
      %v2536 = vpop.xlane.xlu0 %2535
      %v2537 = vadd.f32 %v2485, %v2486
      %v2538 = vsel %vm865, %v2487, 0.0
      %v2539 = vadd.f32 %v2537, %v2538
      %2540 = vadd.xlane.f32.xlu0 %v2539
      %v2541 = vpop.xlane.xlu0 %2540
      %v2542 = vadd.f32 %v2488, %v2489
      %v2543 = vsel %vm865, %v2490, 0.0
      %v2544 = vadd.f32 %v2542, %v2543
      %2545 = vadd.xlane.f32.xlu0 %v2544
      %v2546 = vpop.xlane.xlu0 %2545
      %v2547 = vadd.f32 %v2491, %v2492
      %v2548 = vsel %vm865, %v2493, 0.0
      %v2549 = vadd.f32 %v2547, %v2548
      %2550 = vadd.xlane.f32.xlu0 %v2549
      %v2551 = vpop.xlane.xlu0 %2550
      %v2552 = vadd.f32 %v2494, %v2495
      %v2553 = vsel %vm865, %v2496, 0.0
      %v2554 = vadd.f32 %v2552, %v2553
      %2555 = vadd.xlane.f32.xlu0 %v2554
      %v2556 = vpop.xlane.xlu0 %2555
      %v2557 = vadd.f32 %v2497, %v2498
      %v2558 = vsel %vm865, %v2499, 0.0
      %v2559 = vadd.f32 %v2557, %v2558
      %2560 = vadd.xlane.f32.xlu0 %v2559
      %v2561 = vpop.xlane.xlu0 %2560
      %v2562 = vadd.f32 %v2500, %v2501
      %v2563 = vsel %vm865, %v2502, 0.0
      %v2564 = vadd.f32 %v2562, %v2563
      %2565 = vadd.xlane.f32.xlu0 %v2564
      %v2566 = vpop.xlane.xlu0 %2565
      %v2567 = vadd.f32 %v2503, %v2504
      %v2568 = vsel %vm865, %v2505, 0.0
      %v2569 = vadd.f32 %v2567, %v2568
      %2570 = vadd.xlane.f32.xlu0 %v2569
      %v2571 = vpop.xlane.xlu0 %2570
      %v2572 = vadd.f32 %v2506, %v2507
      %v2573 = vsel %vm865, %v2508, 0.0
      %v2574 = vadd.f32 %v2572, %v2573
      %2575 = vadd.xlane.f32.xlu0 %v2574
      %v2576 = vpop.xlane.xlu0 %2575
      %v2577 = vadd.f32 %v2509, %v2510
      %v2578 = vsel %vm865, %v2511, 0.0
      %v2579 = vadd.f32 %v2577, %v2578
      %2580 = vadd.xlane.f32.xlu0 %v2579
      %v2581 = vpop.xlane.xlu0 %2580
      %v2582 = vadd.f32 %v2512, %v2513
      %v2583 = vsel %vm865, %v2514, 0.0
      %v2584 = vadd.f32 %v2582, %v2583
      %2585 = vadd.xlane.f32.xlu0 %v2584
      %v2586 = vpop.xlane.xlu0 %2585
      %v2587 = vadd.f32 %v2515, %v2516
      %v2588 = vsel %vm865, %v2517, 0.0
      %v2589 = vadd.f32 %v2587, %v2588
      %2590 = vadd.xlane.f32.xlu0 %v2589
      %v2591 = vpop.xlane.xlu0 %2590
      %v2592 = vadd.f32 %v2518, %v2519
      %v2593 = vsel %vm865, %v2520, 0.0
      %v2594 = vadd.f32 %v2592, %v2593
      %2595 = vadd.xlane.f32.xlu0 %v2594
      %v2596 = vpop.xlane.xlu0 %2595
      %v2597 = vadd.f32 %v2521, %v2522
      %v2598 = vsel %vm865, %v2523, 0.0
      %v2599 = vadd.f32 %v2597, %v2598
      %2600 = vadd.xlane.f32.xlu0 %v2599
      %v2601 = vpop.xlane.xlu0 %2600
      %v2602 = vadd.f32 %v2524, %v2525
      %v2603 = vsel %vm865, %v2526, 0.0
      %v2604 = vadd.f32 %v2602, %v2603
      %2605 = vadd.xlane.f32.xlu0 %v2604
      %v2606 = vpop.xlane.xlu0 %2605
      %v2607 = vmul.f32 %v2531, 0.00390625
      %v2608 = vmul.f32 %v2536, 0.00390625
      %v2609 = vmul.f32 %v2541, 0.00390625
      %v2610 = vmul.f32 %v2546, 0.00390625
      %v2611 = vmul.f32 %v2551, 0.00390625
      %v2612 = vmul.f32 %v2556, 0.00390625
      %v2613 = vmul.f32 %v2561, 0.00390625
      %v2614 = vmul.f32 %v2566, 0.00390625
      %v2615 = vmul.f32 %v2571, 0.00390625
      %v2616 = vmul.f32 %v2576, 0.00390625
      %v2617 = vmul.f32 %v2581, 0.00390625
      %v2618 = vmul.f32 %v2586, 0.00390625
      %v2619 = vmul.f32 %v2591, 0.00390625
      %v2620 = vmul.f32 %v2596, 0.00390625
      %v2621 = vmul.f32 %v2601, 0.00390625
      %v2622 = vmul.f32 %v2606, 0.00390625
      %s2623 = scalar_lea.vmem %s195, 24
      %v2624 = vld [vmem:[%s2623] sm:$0x3f]
      %v2626 = vcombine.high %v2624, %v2624
      %v2628 = vunpack.c.l.s4 1983009808
      %v2629 = vunpack.c.0.s8 %v2628
      %v2630 = vlaneseq
      %v2631 = vshrl.u32 %v2630, 7
      %v2632 = vsub.s32 %v2629, %v2631
      %v2633 = vrot.slane %v2624, %v2632
      %v2635 = vunpack.c.l.s4 1983009808
      %v2636 = vunpack.c.0.s8 %v2635
      %v2637 = vlaneseq
      %v2638 = vshrl.u32 %v2637, 7
      %v2639 = vsub.s32 %v2636, %v2638
      %v2640 = vrot.slane %v2626, %v2639
      %v2641 = vcombine.high %v2633, %v2633
      %v2642 = vcombine.low %v2624, %v2624
      %v2644 = vunpack.c.l.s4 1983009808
      %v2645 = vunpack.c.0.s8 %v2644
      %v2646 = vlaneseq
      %v2647 = vshrl.u32 %v2646, 7
      %v2648 = vsub.s32 %v2645, %v2647
      %v2649 = vrot.slane %v2642, %v2648
      %v2650 = vcombine.high %v2649, %v2649
      %2651 = vrot.lane.b32.xlu0 %v2649, 127
      %v2652 = vpop.permute.xlu0 %2651
      %2653 = vrot.lane.b32.xlu0 %v2650, 127
      %v2654 = vpop.permute.xlu0 %2653
      %2655 = vrot.lane.b32.xlu0 %v2633, 127
      %v2656 = vpop.permute.xlu0 %2655
      %v2657 = vsel %vm236, %v2652, %v2654
      %v2658 = vsel %vm236, %v2654, %v2656
      %v2659 = vcombine.low %v2633, %v2633
      %v2660 = vcombine.low %v2640, %v2640
      %2661 = vrot.lane.b32.xlu0 %v2659, 126
      %v2662 = vpop.permute.xlu0 %2661
      %2663 = vrot.lane.b32.xlu0 %v2633, 126
      %v2664 = vpop.permute.xlu0 %2663
      %2665 = vrot.lane.b32.xlu0 %v2660, 126
      %v2666 = vpop.permute.xlu0 %2665
      %v2667 = vsel %vm247, %v2662, %v2664
      %v2668 = vsel %vm247, %v2664, %v2666
      %v2669 = vcombine.low %v2649, %v2649
      %2670 = vrot.lane.b32.xlu0 %v2669, 110
      %v2671 = vpop.permute.xlu0 %2670
      %2672 = vrot.lane.b32.xlu0 %v2649, 110
      %v2673 = vpop.permute.xlu0 %2672
      %2674 = vrot.lane.b32.xlu0 %v2659, 110
      %v2675 = vpop.permute.xlu0 %2674
      %v2676 = vsel %vm257, %v2671, %v2673
      %v2677 = vsel %vm257, %v2673, %v2675
      %2678 = vrot.lane.b32.xlu0 %v2633, 109
      %v2679 = vpop.permute.xlu0 %2678
      %2680 = vrot.lane.b32.xlu0 %v2641, 109
      %v2681 = vpop.permute.xlu0 %2680
      %2682 = vrot.lane.b32.xlu0 %v2640, 109
      %v2683 = vpop.permute.xlu0 %2682
      %v2684 = vsel %vm266, %v2679, %v2681
      %v2685 = vsel %vm266, %v2681, %v2683
      %2686 = vrot.lane.b32.xlu0 %v2649, 108
      %v2687 = vpop.permute.xlu0 %2686
      %2688 = vrot.lane.b32.xlu0 %v2650, 108
      %v2689 = vpop.permute.xlu0 %2688
      %2690 = vrot.lane.b32.xlu0 %v2633, 108
      %v2691 = vpop.permute.xlu0 %2690
      %v2692 = vsel %vm275, %v2687, %v2689
      %v2693 = vsel %vm275, %v2689, %v2691
      %2694 = vrot.lane.b32.xlu0 %v2659, 92
      %v2695 = vpop.permute.xlu0 %2694
      %2696 = vrot.lane.b32.xlu0 %v2633, 92
      %v2697 = vpop.permute.xlu0 %2696
      %2698 = vrot.lane.b32.xlu0 %v2660, 92
      %v2699 = vpop.permute.xlu0 %2698
      %v2700 = vsel %vm284, %v2695, %v2697
      %v2701 = vsel %vm284, %v2697, %v2699
      %2702 = vrot.lane.b32.xlu0 %v2669, 91
      %v2703 = vpop.permute.xlu0 %2702
      %2704 = vrot.lane.b32.xlu0 %v2649, 91
      %v2705 = vpop.permute.xlu0 %2704
      %2706 = vrot.lane.b32.xlu0 %v2659, 91
      %v2707 = vpop.permute.xlu0 %2706
      %v2708 = vsel %vm293, %v2703, %v2705
      %v2709 = vsel %vm293, %v2705, %v2707
      %2710 = vrot.lane.b32.xlu0 %v2633, 90
      %v2711 = vpop.permute.xlu0 %2710
      %2712 = vrot.lane.b32.xlu0 %v2641, 90
      %v2713 = vpop.permute.xlu0 %2712
      %2714 = vrot.lane.b32.xlu0 %v2640, 90
      %v2715 = vpop.permute.xlu0 %2714
      %v2716 = vsel %vm302, %v2711, %v2713
      %v2717 = vsel %vm302, %v2713, %v2715
      %v2720 = vsel %vm305, %v2633, %v2657
      %v2723 = vsel %vm305, %v2641, %v2658
      %v2726 = vsel %vm305, %v2640, %v2656
      %v2728 = vsel %vm315, %v2720, %v2667
      %v2730 = vsel %vm315, %v2723, %v2668
      %v2732 = vsel %vm315, %v2726, %v2666
      %v2734 = vsel %vm322, %v2728, %v2676
      %v2737 = vsel %vm322, %v2730, %v2677
      %v2740 = vsel %vm322, %v2732, %v2675
      %v2744 = vsel %vm305, %v2684, %v2692
      %v2747 = vsel %vm305, %v2685, %v2693
      %v2750 = vsel %vm305, %v2683, %v2691
      %v2752 = vsel %vm315, %v2744, %v2700
      %v2754 = vsel %vm315, %v2747, %v2701
      %v2756 = vsel %vm315, %v2750, %v2699
      %v2758 = vsel %vm322, %v2752, %v2708
      %v2761 = vsel %vm322, %v2754, %v2709
      %v2764 = vsel %vm322, %v2756, %v2707
      %v2767 = vsel %vm305, %v2716, 0
      %v2770 = vsel %vm305, %v2717, 0
      %v2773 = vsel %vm305, %v2715, 0
      %2775 = vmatprep.subr.bf16.mxu0 %v2737
      %2776 = vmatpush1.bf16.msra.mxu0 %v2734
      %2777 = vmatprep.subr.bf16.mxu0 %v2761
      %2778 = vmatpush1.bf16.msra.mxu0 %v2758
      %2779 = vmatprep.subr.bf16.mxu0 %v2770
      %2780 = vmatpush1.bf16.msra.mxu0 %v2767
      %2781 = vmatprep.subr.bf16.mxu0 0
      %2782 = vmatpush1.bf16.msra.mxu0 0
      %2783 = vmatprep.subr.bf16.mxu0 0
      %2784 = vmatpush1.bf16.msra.mxu0 0
      %2785 = vmatprep.subr.bf16.mxu0 0
      %2786 = vmatpush1.bf16.msra.mxu0 0
      %2787 = vmatprep.subr.bf16.mxu0 0
      %2788 = vmatpush1.bf16.msra.mxu0 0
      %2789 = vmatprep.subr.bf16.mxu0 0
      %2790 = vmatpush1.bf16.msra.mxu0 0
      %2791 = vmatprep.subr.bf16.mxu0 0
      %2792 = vmatpush1.bf16.msra.mxu0 0
      %2793 = vmatprep.subr.bf16.mxu0 0
      %2794 = vmatpush1.bf16.msra.mxu0 0
      %2795 = vmatprep.subr.bf16.mxu0 0
      %2796 = vmatpush1.bf16.msra.mxu0 0
      %2797 = vmatprep.subr.bf16.mxu0 0
      %2798 = vmatpush1.bf16.msra.mxu0 0
      %2799 = vmatprep.subr.bf16.mxu0 0
      %2800 = vmatpush1.bf16.msra.mxu0 0
      %2801 = vmatprep.subr.bf16.mxu0 0
      %2802 = vmatpush1.bf16.msra.mxu0 0
      %2803 = vmatprep.subr.bf16.mxu0 0
      %2804 = vmatpush1.bf16.msra.mxu0 0
      %2805 = vmatprep.subr.bf16.mxu0 0
      %2806 = vmatpush1.bf16.msra.mxu0 0
      %2807 = vmatprep.mubr.bf16.mxu0 0
      %2808 = vmatmul.mubr.bf16.gmra.mrb[0].mxu0 %v510
      %v2809 = vpop.f32.mrb[0].mxu0
      %v2810 = vadd.f32 %v391, %v2809
      %v2811 = vpop.f32.mrb[0].mxu0
      %v2812 = vadd.f32 %v391, %v2811
      %v2813 = vpop.f32.mrb[0].mxu0
      %v2814 = vadd.f32 %v396, %v2813
      %v2815 = vpop.f32.mrb[0].mxu0
      %v2816 = vadd.f32 %v396, %v2815
      %2817 = vmatprep.mubr.bf16.mxu0 0
      %2818 = vmatmul.mubr.bf16.gmra.mrb[0].mxu0 %v513
      %v2819 = vpop.f32.mrb[0].mxu0
      %v2820 = vadd.f32 %v401, %v2819
      %v2821 = vpop.f32.mrb[0].mxu0
      %v2822 = vadd.f32 %v401, %v2821
      %v2823 = vpop.f32.mrb[0].mxu0
      %v2824 = vadd.f32 %v406, %v2823
      %v2825 = vpop.f32.mrb[0].mxu0
      %v2826 = vadd.f32 %v406, %v2825
      %2827 = vmatprep.mubr.bf16.mxu0 0
      %2828 = vmatmul.mubr.bf16.gmra.mrb[0].mxu0 %v516
      %v2829 = vpop.f32.mrb[0].mxu0
      %v2830 = vadd.f32 %v411, %v2829
      %v2831 = vpop.f32.mrb[0].mxu0
      %v2832 = vadd.f32 %v411, %v2831
      %v2833 = vpop.f32.mrb[0].mxu0
      %v2834 = vadd.f32 %v416, %v2833
      %v2835 = vpop.f32.mrb[0].mxu0
      %v2836 = vadd.f32 %v416, %v2835
      %2837 = vmatprep.mubr.bf16.mxu0 0
      %2838 = vmatmul.mubr.bf16.gmra.mrb[0].mxu0 %v519
      %v2839 = vpop.f32.mrb[0].mxu0
      %v2840 = vadd.f32 %v421, %v2839
      %v2841 = vpop.f32.mrb[0].mxu0
      %v2842 = vadd.f32 %v421, %v2841
      %v2843 = vpop.f32.mrb[0].mxu0
      %v2844 = vadd.f32 %v426, %v2843
      %v2845 = vpop.f32.mrb[0].mxu0
      %v2846 = vadd.f32 %v426, %v2845
      %2847 = vmatprep.mubr.bf16.mxu0 0
      %2848 = vmatmul.mubr.bf16.gmra.mrb[0].mxu0 %v522
      %v2849 = vpop.f32.mrb[0].mxu0
      %v2850 = vadd.f32 %v431, %v2849
      %v2851 = vpop.f32.mrb[0].mxu0
      %v2852 = vadd.f32 %v431, %v2851
      %v2853 = vpop.f32.mrb[0].mxu0
      %v2854 = vadd.f32 %v436, %v2853
      %v2855 = vpop.f32.mrb[0].mxu0
      %v2856 = vadd.f32 %v436, %v2855
      %2857 = vmatprep.mubr.bf16.mxu0 0
      %2858 = vmatmul.mubr.bf16.gmra.mrb[0].mxu0 %v525
      %v2859 = vpop.f32.mrb[0].mxu0
      %v2860 = vadd.f32 %v441, %v2859
      %v2861 = vpop.f32.mrb[0].mxu0
      %v2862 = vadd.f32 %v441, %v2861
      %v2863 = vpop.f32.mrb[0].mxu0
      %v2864 = vadd.f32 %v446, %v2863
      %v2865 = vpop.f32.mrb[0].mxu0
      %v2866 = vadd.f32 %v446, %v2865
      %2867 = vmatprep.mubr.bf16.mxu0 0
      %2868 = vmatmul.mubr.bf16.gmra.mrb[0].mxu0 %v528
      %v2869 = vpop.f32.mrb[0].mxu0
      %v2870 = vadd.f32 %v451, %v2869
      %v2871 = vpop.f32.mrb[0].mxu0
      %v2872 = vadd.f32 %v451, %v2871
      %v2873 = vpop.f32.mrb[0].mxu0
      %v2874 = vadd.f32 %v456, %v2873
      %v2875 = vpop.f32.mrb[0].mxu0
      %v2876 = vadd.f32 %v456, %v2875
      %2877 = vmatprep.mubr.bf16.mxu0 0
      %2878 = vmatmul.mubr.bf16.gmra.mrb[0].mxu0 %v531
      %v2879 = vpop.f32.mrb[0].mxu0
      %v2880 = vadd.f32 %v461, %v2879
      %v2881 = vpop.f32.mrb[0].mxu0
      %v2882 = vadd.f32 %v461, %v2881
      %v2883 = vpop.f32.mrb[0].mxu0
      %v2884 = vadd.f32 %v466, %v2883
      %v2885 = vpop.f32.mrb[0].mxu0
      %v2886 = vadd.f32 %v466, %v2885
      %2887 = vdwg.mxu0
      %2888 = vmatprep.subr.bf16.mxu0 0
      %2889 = vmatpush1.bf16.msra.mxu0 %v2740
      %2890 = vmatprep.subr.bf16.mxu0 0
      %2891 = vmatpush1.bf16.msra.mxu0 %v2764
      %2892 = vmatprep.subr.bf16.mxu0 0
      %2893 = vmatpush1.bf16.msra.mxu0 %v2773
      %2894 = vmatprep.subr.bf16.mxu0 0
      %2895 = vmatpush1.bf16.msra.mxu0 0
      %2896 = vmatprep.subr.bf16.mxu0 0
      %2897 = vmatpush1.bf16.msra.mxu0 0
      %2898 = vmatprep.subr.bf16.mxu0 0
      %2899 = vmatpush1.bf16.msra.mxu0 0
      %2900 = vmatprep.subr.bf16.mxu0 0
      %2901 = vmatpush1.bf16.msra.mxu0 0
      %2902 = vmatprep.subr.bf16.mxu0 0
      %2903 = vmatpush1.bf16.msra.mxu0 0
      %2904 = vmatprep.subr.bf16.mxu0 0
      %2905 = vmatpush1.bf16.msra.mxu0 0
      %2906 = vmatprep.subr.bf16.mxu0 0
      %2907 = vmatpush1.bf16.msra.mxu0 0
      %2908 = vmatprep.subr.bf16.mxu0 0
      %2909 = vmatpush1.bf16.msra.mxu0 0
      %2910 = vmatprep.subr.bf16.mxu0 0
      %2911 = vmatpush1.bf16.msra.mxu0 0
      %2912 = vmatprep.subr.bf16.mxu0 0
      %2913 = vmatpush1.bf16.msra.mxu0 0
      %2914 = vmatprep.subr.bf16.mxu0 0
      %2915 = vmatpush1.bf16.msra.mxu0 0
      %2916 = vmatprep.subr.bf16.mxu0 0
      %2917 = vmatpush1.bf16.msra.mxu0 0
      %2918 = vmatprep.subr.bf16.mxu0 0
      %2919 = vmatpush1.bf16.msra.mxu0 0
      %2920 = vmatprep.mubr.bf16.mxu0 0
      %2921 = vmatmul.mubr.bf16.gmra.mrb[0].mxu0 %v510
      %v2922 = vpop.f32.mrb[0].mxu0
      %v2923 = vadd.f32 %v391, %v2922
      %v2924 = vpop.f32.mrb[0].mxu0
      %v2925 = vpop.f32.mrb[0].mxu0
      %v2926 = vadd.f32 %v396, %v2925
      %v2927 = vpop.f32.mrb[0].mxu0
      %2928 = vmatprep.mubr.bf16.mxu0 0
      %2929 = vmatmul.mubr.bf16.gmra.mrb[0].mxu0 %v513
      %v2930 = vpop.f32.mrb[0].mxu0
      %v2931 = vadd.f32 %v401, %v2930
      %v2932 = vpop.f32.mrb[0].mxu0
      %v2933 = vpop.f32.mrb[0].mxu0
      %v2934 = vadd.f32 %v406, %v2933
      %v2935 = vpop.f32.mrb[0].mxu0
      %2936 = vmatprep.mubr.bf16.mxu0 0
      %2937 = vmatmul.mubr.bf16.gmra.mrb[0].mxu0 %v516
      %v2938 = vpop.f32.mrb[0].mxu0
      %v2939 = vadd.f32 %v411, %v2938
      %v2940 = vpop.f32.mrb[0].mxu0
      %v2941 = vpop.f32.mrb[0].mxu0
      %v2942 = vadd.f32 %v416, %v2941
      %v2943 = vpop.f32.mrb[0].mxu0
      %2944 = vmatprep.mubr.bf16.mxu0 0
      %2945 = vmatmul.mubr.bf16.gmra.mrb[0].mxu0 %v519
      %v2946 = vpop.f32.mrb[0].mxu0
      %v2947 = vadd.f32 %v421, %v2946
      %v2948 = vpop.f32.mrb[0].mxu0
      %v2949 = vpop.f32.mrb[0].mxu0
      %v2950 = vadd.f32 %v426, %v2949
      %v2951 = vpop.f32.mrb[0].mxu0
      %2952 = vmatprep.mubr.bf16.mxu0 0
      %2953 = vmatmul.mubr.bf16.gmra.mrb[0].mxu0 %v522
      %v2954 = vpop.f32.mrb[0].mxu0
      %v2955 = vadd.f32 %v431, %v2954
      %v2956 = vpop.f32.mrb[0].mxu0
      %v2957 = vpop.f32.mrb[0].mxu0
      %v2958 = vadd.f32 %v436, %v2957
      %v2959 = vpop.f32.mrb[0].mxu0
      %2960 = vmatprep.mubr.bf16.mxu0 0
      %2961 = vmatmul.mubr.bf16.gmra.mrb[0].mxu0 %v525
      %v2962 = vpop.f32.mrb[0].mxu0
      %v2963 = vadd.f32 %v441, %v2962
      %v2964 = vpop.f32.mrb[0].mxu0
      %v2965 = vpop.f32.mrb[0].mxu0
      %v2966 = vadd.f32 %v446, %v2965
      %v2967 = vpop.f32.mrb[0].mxu0
      %2968 = vmatprep.mubr.bf16.mxu0 0
      %2969 = vmatmul.mubr.bf16.gmra.mrb[0].mxu0 %v528
      %v2970 = vpop.f32.mrb[0].mxu0
      %v2971 = vadd.f32 %v451, %v2970
      %v2972 = vpop.f32.mrb[0].mxu0
      %v2973 = vpop.f32.mrb[0].mxu0
      %v2974 = vadd.f32 %v456, %v2973
      %v2975 = vpop.f32.mrb[0].mxu0
      %2976 = vmatprep.mubr.bf16.mxu0 0
      %2977 = vmatmul.mubr.bf16.gmra.mrb[0].mxu0 %v531
      %v2978 = vpop.f32.mrb[0].mxu0
      %v2979 = vadd.f32 %v461, %v2978
      %v2980 = vpop.f32.mrb[0].mxu0
      %v2981 = vpop.f32.mrb[0].mxu0
      %v2982 = vadd.f32 %v466, %v2981
      %v2983 = vpop.f32.mrb[0].mxu0
      %2984 = vdwg.mxu0
      %v2985 = vmax.f32 %v2810, 0.0
      %v2986 = vmax.f32 %v2812, 0.0
      %v2987 = vmax.f32 %v2923, 0.0
      %v2988 = vmax.f32 %v2814, 0.0
      %v2989 = vmax.f32 %v2816, 0.0
      %v2990 = vmax.f32 %v2926, 0.0
      %v2991 = vmax.f32 %v2820, 0.0
      %v2992 = vmax.f32 %v2822, 0.0
      %v2993 = vmax.f32 %v2931, 0.0
      %v2994 = vmax.f32 %v2824, 0.0
      %v2995 = vmax.f32 %v2826, 0.0
      %v2996 = vmax.f32 %v2934, 0.0
      %v2997 = vmax.f32 %v2830, 0.0
      %v2998 = vmax.f32 %v2832, 0.0
      %v2999 = vmax.f32 %v2939, 0.0
      %v3000 = vmax.f32 %v2834, 0.0
      %v3001 = vmax.f32 %v2836, 0.0
      %v3002 = vmax.f32 %v2942, 0.0
      %v3003 = vmax.f32 %v2840, 0.0
      %v3004 = vmax.f32 %v2842, 0.0
      %v3005 = vmax.f32 %v2947, 0.0
      %v3006 = vmax.f32 %v2844, 0.0
      %v3007 = vmax.f32 %v2846, 0.0
      %v3008 = vmax.f32 %v2950, 0.0
      %v3009 = vmax.f32 %v2850, 0.0
      %v3010 = vmax.f32 %v2852, 0.0
      %v3011 = vmax.f32 %v2955, 0.0
      %v3012 = vmax.f32 %v2854, 0.0
      %v3013 = vmax.f32 %v2856, 0.0
      %v3014 = vmax.f32 %v2958, 0.0
      %v3015 = vmax.f32 %v2860, 0.0
      %v3016 = vmax.f32 %v2862, 0.0
      %v3017 = vmax.f32 %v2963, 0.0
      %v3018 = vmax.f32 %v2864, 0.0
      %v3019 = vmax.f32 %v2866, 0.0
      %v3020 = vmax.f32 %v2966, 0.0
      %v3021 = vmax.f32 %v2870, 0.0
      %v3022 = vmax.f32 %v2872, 0.0
      %v3023 = vmax.f32 %v2971, 0.0
      %v3024 = vmax.f32 %v2874, 0.0
      %v3025 = vmax.f32 %v2876, 0.0
      %v3026 = vmax.f32 %v2974, 0.0
      %v3027 = vmax.f32 %v2880, 0.0
      %v3028 = vmax.f32 %v2882, 0.0
      %v3029 = vmax.f32 %v2979, 0.0
      %v3030 = vmax.f32 %v2884, 0.0
      %v3031 = vmax.f32 %v2886, 0.0
      %v3032 = vmax.f32 %v2982, 0.0
      %v3033 = vmul.f32 %v2985, %v804
      %v3034 = vmul.f32 %v2986, %v808
      %v3035 = vmul.f32 %v2987, %v812
      %v3036 = vmul.f32 %v2988, %v804
      %v3037 = vmul.f32 %v2989, %v808
      %v3038 = vmul.f32 %v2990, %v812
      %v3039 = vmul.f32 %v2991, %v804
      %v3040 = vmul.f32 %v2992, %v808
      %v3041 = vmul.f32 %v2993, %v812
      %v3042 = vmul.f32 %v2994, %v804
      %v3043 = vmul.f32 %v2995, %v808
      %v3044 = vmul.f32 %v2996, %v812
      %v3045 = vmul.f32 %v2997, %v804
      %v3046 = vmul.f32 %v2998, %v808
      %v3047 = vmul.f32 %v2999, %v812
      %v3048 = vmul.f32 %v3000, %v804
      %v3049 = vmul.f32 %v3001, %v808
      %v3050 = vmul.f32 %v3002, %v812
      %v3051 = vmul.f32 %v3003, %v804
      %v3052 = vmul.f32 %v3004, %v808
      %v3053 = vmul.f32 %v3005, %v812
      %v3054 = vmul.f32 %v3006, %v804
      %v3055 = vmul.f32 %v3007, %v808
      %v3056 = vmul.f32 %v3008, %v812
      %v3057 = vmul.f32 %v3009, %v804
      %v3058 = vmul.f32 %v3010, %v808
      %v3059 = vmul.f32 %v3011, %v812
      %v3060 = vmul.f32 %v3012, %v804
      %v3061 = vmul.f32 %v3013, %v808
      %v3062 = vmul.f32 %v3014, %v812
      %v3063 = vmul.f32 %v3015, %v804
      %v3064 = vmul.f32 %v3016, %v808
      %v3065 = vmul.f32 %v3017, %v812
      %v3066 = vmul.f32 %v3018, %v804
      %v3067 = vmul.f32 %v3019, %v808
      %v3068 = vmul.f32 %v3020, %v812
      %v3069 = vmul.f32 %v3021, %v804
      %v3070 = vmul.f32 %v3022, %v808
      %v3071 = vmul.f32 %v3023, %v812
      %v3072 = vmul.f32 %v3024, %v804
      %v3073 = vmul.f32 %v3025, %v808
      %v3074 = vmul.f32 %v3026, %v812
      %v3075 = vmul.f32 %v3027, %v804
      %v3076 = vmul.f32 %v3028, %v808
      %v3077 = vmul.f32 %v3029, %v812
      %v3078 = vmul.f32 %v3030, %v804
      %v3079 = vmul.f32 %v3031, %v808
      %v3080 = vmul.f32 %v3032, %v812
      %v3081 = vadd.f32 %v3033, %v3034
      %v3082 = vsel %vm865, %v3035, 0.0
      %v3083 = vadd.f32 %v3081, %v3082
      %3084 = vadd.xlane.f32.xlu0 %v3083
      %v3085 = vpop.xlane.xlu0 %3084
      %v3086 = vadd.f32 %v3036, %v3037
      %v3087 = vsel %vm865, %v3038, 0.0
      %v3088 = vadd.f32 %v3086, %v3087
      %3089 = vadd.xlane.f32.xlu0 %v3088
      %v3090 = vpop.xlane.xlu0 %3089
      %v3091 = vadd.f32 %v3039, %v3040
      %v3092 = vsel %vm865, %v3041, 0.0
      %v3093 = vadd.f32 %v3091, %v3092
      %3094 = vadd.xlane.f32.xlu0 %v3093
      %v3095 = vpop.xlane.xlu0 %3094
      %v3096 = vadd.f32 %v3042, %v3043
      %v3097 = vsel %vm865, %v3044, 0.0
      %v3098 = vadd.f32 %v3096, %v3097
      %3099 = vadd.xlane.f32.xlu0 %v3098
      %v3100 = vpop.xlane.xlu0 %3099
      %v3101 = vadd.f32 %v3045, %v3046
      %v3102 = vsel %vm865, %v3047, 0.0
      %v3103 = vadd.f32 %v3101, %v3102
      %3104 = vadd.xlane.f32.xlu0 %v3103
      %v3105 = vpop.xlane.xlu0 %3104
      %v3106 = vadd.f32 %v3048, %v3049
      %v3107 = vsel %vm865, %v3050, 0.0
      %v3108 = vadd.f32 %v3106, %v3107
      %3109 = vadd.xlane.f32.xlu0 %v3108
      %v3110 = vpop.xlane.xlu0 %3109
      %v3111 = vadd.f32 %v3051, %v3052
      %v3112 = vsel %vm865, %v3053, 0.0
      %v3113 = vadd.f32 %v3111, %v3112
      %3114 = vadd.xlane.f32.xlu0 %v3113
      %v3115 = vpop.xlane.xlu0 %3114
      %v3116 = vadd.f32 %v3054, %v3055
      %v3117 = vsel %vm865, %v3056, 0.0
      %v3118 = vadd.f32 %v3116, %v3117
      %3119 = vadd.xlane.f32.xlu0 %v3118
      %v3120 = vpop.xlane.xlu0 %3119
      %v3121 = vadd.f32 %v3057, %v3058
      %v3122 = vsel %vm865, %v3059, 0.0
      %v3123 = vadd.f32 %v3121, %v3122
      %3124 = vadd.xlane.f32.xlu0 %v3123
      %v3125 = vpop.xlane.xlu0 %3124
      %v3126 = vadd.f32 %v3060, %v3061
      %v3127 = vsel %vm865, %v3062, 0.0
      %v3128 = vadd.f32 %v3126, %v3127
      %3129 = vadd.xlane.f32.xlu0 %v3128
      %v3130 = vpop.xlane.xlu0 %3129
      %v3131 = vadd.f32 %v3063, %v3064
      %v3132 = vsel %vm865, %v3065, 0.0
      %v3133 = vadd.f32 %v3131, %v3132
      %3134 = vadd.xlane.f32.xlu0 %v3133
      %v3135 = vpop.xlane.xlu0 %3134
      %v3136 = vadd.f32 %v3066, %v3067
      %v3137 = vsel %vm865, %v3068, 0.0
      %v3138 = vadd.f32 %v3136, %v3137
      %3139 = vadd.xlane.f32.xlu0 %v3138
      %v3140 = vpop.xlane.xlu0 %3139
      %v3141 = vadd.f32 %v3069, %v3070
      %v3142 = vsel %vm865, %v3071, 0.0
      %v3143 = vadd.f32 %v3141, %v3142
      %3144 = vadd.xlane.f32.xlu0 %v3143
      %v3145 = vpop.xlane.xlu0 %3144
      %v3146 = vadd.f32 %v3072, %v3073
      %v3147 = vsel %vm865, %v3074, 0.0
      %v3148 = vadd.f32 %v3146, %v3147
      %3149 = vadd.xlane.f32.xlu0 %v3148
      %v3150 = vpop.xlane.xlu0 %3149
      %v3151 = vadd.f32 %v3075, %v3076
      %v3152 = vsel %vm865, %v3077, 0.0
      %v3153 = vadd.f32 %v3151, %v3152
      %3154 = vadd.xlane.f32.xlu0 %v3153
      %v3155 = vpop.xlane.xlu0 %3154
      %v3156 = vadd.f32 %v3078, %v3079
      %v3157 = vsel %vm865, %v3080, 0.0
      %v3158 = vadd.f32 %v3156, %v3157
      %3159 = vadd.xlane.f32.xlu0 %v3158
      %v3160 = vpop.xlane.xlu0 %3159
      %v3161 = vmul.f32 %v3085, 0.00390625
      %v3162 = vmul.f32 %v3090, 0.00390625
      %v3163 = vmul.f32 %v3095, 0.00390625
      %v3164 = vmul.f32 %v3100, 0.00390625
      %v3165 = vmul.f32 %v3105, 0.00390625
      %v3166 = vmul.f32 %v3110, 0.00390625
      %v3167 = vmul.f32 %v3115, 0.00390625
      %v3168 = vmul.f32 %v3120, 0.00390625
      %v3169 = vmul.f32 %v3125, 0.00390625
      %v3170 = vmul.f32 %v3130, 0.00390625
      %v3171 = vmul.f32 %v3135, 0.00390625
      %v3172 = vmul.f32 %v3140, 0.00390625
      %v3173 = vmul.f32 %v3145, 0.00390625
      %v3174 = vmul.f32 %v3150, 0.00390625
      %v3175 = vmul.f32 %v3155, 0.00390625
      %v3176 = vmul.f32 %v3160, 0.00390625
      %s3177 = scalar_lea.vmem %s195, 30
      %v3178 = vld [vmem:[%s3177] sm:$0x3f]
      %v3180 = vcombine.high %v3178, %v3178
      %v3182 = vunpack.c.l.s4 1983009808
      %v3183 = vunpack.c.0.s8 %v3182
      %v3184 = vlaneseq
      %v3185 = vshrl.u32 %v3184, 7
      %v3186 = vsub.s32 %v3183, %v3185
      %v3187 = vrot.slane %v3178, %v3186
      %v3189 = vunpack.c.l.s4 1983009808
      %v3190 = vunpack.c.0.s8 %v3189
      %v3191 = vlaneseq
      %v3192 = vshrl.u32 %v3191, 7
      %v3193 = vsub.s32 %v3190, %v3192
      %v3194 = vrot.slane %v3180, %v3193
      %v3195 = vcombine.high %v3187, %v3187
      %v3196 = vcombine.low %v3178, %v3178
      %v3198 = vunpack.c.l.s4 1983009808
      %v3199 = vunpack.c.0.s8 %v3198
      %v3200 = vlaneseq
      %v3201 = vshrl.u32 %v3200, 7
      %v3202 = vsub.s32 %v3199, %v3201
      %v3203 = vrot.slane %v3196, %v3202
      %v3204 = vcombine.high %v3203, %v3203
      %3205 = vrot.lane.b32.xlu0 %v3203, 127
      %v3206 = vpop.permute.xlu0 %3205
      %3207 = vrot.lane.b32.xlu0 %v3204, 127
      %v3208 = vpop.permute.xlu0 %3207
      %3209 = vrot.lane.b32.xlu0 %v3187, 127
      %v3210 = vpop.permute.xlu0 %3209
      %v3211 = vsel %vm236, %v3206, %v3208
      %v3212 = vsel %vm236, %v3208, %v3210
      %v3213 = vcombine.low %v3187, %v3187
      %v3214 = vcombine.low %v3194, %v3194
      %3215 = vrot.lane.b32.xlu0 %v3213, 126
      %v3216 = vpop.permute.xlu0 %3215
      %3217 = vrot.lane.b32.xlu0 %v3187, 126
      %v3218 = vpop.permute.xlu0 %3217
      %3219 = vrot.lane.b32.xlu0 %v3214, 126
      %v3220 = vpop.permute.xlu0 %3219
      %v3221 = vsel %vm247, %v3216, %v3218
      %v3222 = vsel %vm247, %v3218, %v3220
      %v3223 = vcombine.low %v3203, %v3203
      %3224 = vrot.lane.b32.xlu0 %v3223, 110
      %v3225 = vpop.permute.xlu0 %3224
      %3226 = vrot.lane.b32.xlu0 %v3203, 110
      %v3227 = vpop.permute.xlu0 %3226
      %3228 = vrot.lane.b32.xlu0 %v3213, 110
      %v3229 = vpop.permute.xlu0 %3228
      %v3230 = vsel %vm257, %v3225, %v3227
      %v3231 = vsel %vm257, %v3227, %v3229
      %3232 = vrot.lane.b32.xlu0 %v3187, 109
      %v3233 = vpop.permute.xlu0 %3232
      %3234 = vrot.lane.b32.xlu0 %v3195, 109
      %v3235 = vpop.permute.xlu0 %3234
      %3236 = vrot.lane.b32.xlu0 %v3194, 109
      %v3237 = vpop.permute.xlu0 %3236
      %v3238 = vsel %vm266, %v3233, %v3235
      %v3239 = vsel %vm266, %v3235, %v3237
      %3240 = vrot.lane.b32.xlu0 %v3203, 108
      %v3241 = vpop.permute.xlu0 %3240
      %3242 = vrot.lane.b32.xlu0 %v3204, 108
      %v3243 = vpop.permute.xlu0 %3242
      %3244 = vrot.lane.b32.xlu0 %v3187, 108
      %v3245 = vpop.permute.xlu0 %3244
      %v3246 = vsel %vm275, %v3241, %v3243
      %v3247 = vsel %vm275, %v3243, %v3245
      %3248 = vrot.lane.b32.xlu0 %v3213, 92
      %v3249 = vpop.permute.xlu0 %3248
      %3250 = vrot.lane.b32.xlu0 %v3187, 92
      %v3251 = vpop.permute.xlu0 %3250
      %3252 = vrot.lane.b32.xlu0 %v3214, 92
      %v3253 = vpop.permute.xlu0 %3252
      %v3254 = vsel %vm284, %v3249, %v3251
      %v3255 = vsel %vm284, %v3251, %v3253
      %3256 = vrot.lane.b32.xlu0 %v3223, 91
      %v3257 = vpop.permute.xlu0 %3256
      %3258 = vrot.lane.b32.xlu0 %v3203, 91
      %v3259 = vpop.permute.xlu0 %3258
      %3260 = vrot.lane.b32.xlu0 %v3213, 91
      %v3261 = vpop.permute.xlu0 %3260
      %v3262 = vsel %vm293, %v3257, %v3259
      %v3263 = vsel %vm293, %v3259, %v3261
      %3264 = vrot.lane.b32.xlu0 %v3187, 90
      %v3265 = vpop.permute.xlu0 %3264
      %3266 = vrot.lane.b32.xlu0 %v3195, 90
      %v3267 = vpop.permute.xlu0 %3266
      %3268 = vrot.lane.b32.xlu0 %v3194, 90
      %v3269 = vpop.permute.xlu0 %3268
      %v3270 = vsel %vm302, %v3265, %v3267
      %v3271 = vsel %vm302, %v3267, %v3269
      %v3274 = vsel %vm305, %v3187, %v3211
      %v3277 = vsel %vm305, %v3195, %v3212
      %v3280 = vsel %vm305, %v3194, %v3210
      %v3282 = vsel %vm315, %v3274, %v3221
      %v3284 = vsel %vm315, %v3277, %v3222
      %v3286 = vsel %vm315, %v3280, %v3220
      %v3288 = vsel %vm322, %v3282, %v3230
      %v3291 = vsel %vm322, %v3284, %v3231
      %v3294 = vsel %vm322, %v3286, %v3229
      %v3298 = vsel %vm305, %v3238, %v3246
      %v3301 = vsel %vm305, %v3239, %v3247
      %v3304 = vsel %vm305, %v3237, %v3245
      %v3306 = vsel %vm315, %v3298, %v3254
      %v3308 = vsel %vm315, %v3301, %v3255
      %v3310 = vsel %vm315, %v3304, %v3253
      %v3312 = vsel %vm322, %v3306, %v3262
      %v3315 = vsel %vm322, %v3308, %v3263
      %v3318 = vsel %vm322, %v3310, %v3261
      %v3321 = vsel %vm305, %v3270, 0
      %v3324 = vsel %vm305, %v3271, 0
      %v3327 = vsel %vm305, %v3269, 0
      %3329 = vmatprep.subr.bf16.mxu0 %v3291
      %3330 = vmatpush1.bf16.msra.mxu0 %v3288
      %3331 = vmatprep.subr.bf16.mxu0 %v3315
      %3332 = vmatpush1.bf16.msra.mxu0 %v3312
      %3333 = vmatprep.subr.bf16.mxu0 %v3324
      %3334 = vmatpush1.bf16.msra.mxu0 %v3321
      %3335 = vmatprep.subr.bf16.mxu0 0
      %3336 = vmatpush1.bf16.msra.mxu0 0
      %3337 = vmatprep.subr.bf16.mxu0 0
      %3338 = vmatpush1.bf16.msra.mxu0 0
      %3339 = vmatprep.subr.bf16.mxu0 0
      %3340 = vmatpush1.bf16.msra.mxu0 0
      %3341 = vmatprep.subr.bf16.mxu0 0
      %3342 = vmatpush1.bf16.msra.mxu0 0
      %3343 = vmatprep.subr.bf16.mxu0 0
      %3344 = vmatpush1.bf16.msra.mxu0 0
      %3345 = vmatprep.subr.bf16.mxu0 0
      %3346 = vmatpush1.bf16.msra.mxu0 0
      %3347 = vmatprep.subr.bf16.mxu0 0
      %3348 = vmatpush1.bf16.msra.mxu0 0
      %3349 = vmatprep.subr.bf16.mxu0 0
      %3350 = vmatpush1.bf16.msra.mxu0 0
      %3351 = vmatprep.subr.bf16.mxu0 0
      %3352 = vmatpush1.bf16.msra.mxu0 0
      %3353 = vmatprep.subr.bf16.mxu0 0
      %3354 = vmatpush1.bf16.msra.mxu0 0
      %3355 = vmatprep.subr.bf16.mxu0 0
      %3356 = vmatpush1.bf16.msra.mxu0 0
      %3357 = vmatprep.subr.bf16.mxu0 0
      %3358 = vmatpush1.bf16.msra.mxu0 0
      %3359 = vmatprep.subr.bf16.mxu0 0
      %3360 = vmatpush1.bf16.msra.mxu0 0
      %3361 = vmatprep.mubr.bf16.mxu0 0
      %3362 = vmatmul.mubr.bf16.gmra.mrb[0].mxu0 %v510
      %v3363 = vpop.f32.mrb[0].mxu0
      %v3364 = vadd.f32 %v391, %v3363
      %v3365 = vpop.f32.mrb[0].mxu0
      %v3366 = vadd.f32 %v391, %v3365
      %v3367 = vpop.f32.mrb[0].mxu0
      %v3368 = vadd.f32 %v396, %v3367
      %v3369 = vpop.f32.mrb[0].mxu0
      %v3370 = vadd.f32 %v396, %v3369
      %3371 = vmatprep.mubr.bf16.mxu0 0
      %3372 = vmatmul.mubr.bf16.gmra.mrb[0].mxu0 %v513
      %v3373 = vpop.f32.mrb[0].mxu0
      %v3374 = vadd.f32 %v401, %v3373
      %v3375 = vpop.f32.mrb[0].mxu0
      %v3376 = vadd.f32 %v401, %v3375
      %v3377 = vpop.f32.mrb[0].mxu0
      %v3378 = vadd.f32 %v406, %v3377
      %v3379 = vpop.f32.mrb[0].mxu0
      %v3380 = vadd.f32 %v406, %v3379
      %3381 = vmatprep.mubr.bf16.mxu0 0
      %3382 = vmatmul.mubr.bf16.gmra.mrb[0].mxu0 %v516
      %v3383 = vpop.f32.mrb[0].mxu0
      %v3384 = vadd.f32 %v411, %v3383
      %v3385 = vpop.f32.mrb[0].mxu0
      %v3386 = vadd.f32 %v411, %v3385
      %v3387 = vpop.f32.mrb[0].mxu0
      %v3388 = vadd.f32 %v416, %v3387
      %v3389 = vpop.f32.mrb[0].mxu0
      %v3390 = vadd.f32 %v416, %v3389
      %3391 = vmatprep.mubr.bf16.mxu0 0
      %3392 = vmatmul.mubr.bf16.gmra.mrb[0].mxu0 %v519
      %v3393 = vpop.f32.mrb[0].mxu0
      %v3394 = vadd.f32 %v421, %v3393
      %v3395 = vpop.f32.mrb[0].mxu0
      %v3396 = vadd.f32 %v421, %v3395
      %v3397 = vpop.f32.mrb[0].mxu0
      %v3398 = vadd.f32 %v426, %v3397
      %v3399 = vpop.f32.mrb[0].mxu0
      %v3400 = vadd.f32 %v426, %v3399
      %3401 = vmatprep.mubr.bf16.mxu0 0
      %3402 = vmatmul.mubr.bf16.gmra.mrb[0].mxu0 %v522
      %v3403 = vpop.f32.mrb[0].mxu0
      %v3404 = vadd.f32 %v431, %v3403
      %v3405 = vpop.f32.mrb[0].mxu0
      %v3406 = vadd.f32 %v431, %v3405
      %v3407 = vpop.f32.mrb[0].mxu0
      %v3408 = vadd.f32 %v436, %v3407
      %v3409 = vpop.f32.mrb[0].mxu0
      %v3410 = vadd.f32 %v436, %v3409
      %3411 = vmatprep.mubr.bf16.mxu0 0
      %3412 = vmatmul.mubr.bf16.gmra.mrb[0].mxu0 %v525
      %v3413 = vpop.f32.mrb[0].mxu0
      %v3414 = vadd.f32 %v441, %v3413
      %v3415 = vpop.f32.mrb[0].mxu0
      %v3416 = vadd.f32 %v441, %v3415
      %v3417 = vpop.f32.mrb[0].mxu0
      %v3418 = vadd.f32 %v446, %v3417
      %v3419 = vpop.f32.mrb[0].mxu0
      %v3420 = vadd.f32 %v446, %v3419
      %3421 = vmatprep.mubr.bf16.mxu0 0
      %3422 = vmatmul.mubr.bf16.gmra.mrb[0].mxu0 %v528
      %v3423 = vpop.f32.mrb[0].mxu0
      %v3424 = vadd.f32 %v451, %v3423
      %v3425 = vpop.f32.mrb[0].mxu0
      %v3426 = vadd.f32 %v451, %v3425
      %v3427 = vpop.f32.mrb[0].mxu0
      %v3428 = vadd.f32 %v456, %v3427
      %v3429 = vpop.f32.mrb[0].mxu0
      %v3430 = vadd.f32 %v456, %v3429
      %3431 = vmatprep.mubr.bf16.mxu0 0
      %3432 = vmatmul.mubr.bf16.gmra.mrb[0].mxu0 %v531
      %v3433 = vpop.f32.mrb[0].mxu0
      %v3434 = vadd.f32 %v461, %v3433
      %v3435 = vpop.f32.mrb[0].mxu0
      %v3436 = vadd.f32 %v461, %v3435
      %v3437 = vpop.f32.mrb[0].mxu0
      %v3438 = vadd.f32 %v466, %v3437
      %v3439 = vpop.f32.mrb[0].mxu0
      %v3440 = vadd.f32 %v466, %v3439
      %3441 = vdwg.mxu0
      %3442 = vmatprep.subr.bf16.mxu0 0
      %3443 = vmatpush1.bf16.msra.mxu0 %v3294
      %3444 = vmatprep.subr.bf16.mxu0 0
      %3445 = vmatpush1.bf16.msra.mxu0 %v3318
      %3446 = vmatprep.subr.bf16.mxu0 0
      %3447 = vmatpush1.bf16.msra.mxu0 %v3327
      %3448 = vmatprep.subr.bf16.mxu0 0
      %3449 = vmatpush1.bf16.msra.mxu0 0
      %3450 = vmatprep.subr.bf16.mxu0 0
      %3451 = vmatpush1.bf16.msra.mxu0 0
      %3452 = vmatprep.subr.bf16.mxu0 0
      %3453 = vmatpush1.bf16.msra.mxu0 0
      %3454 = vmatprep.subr.bf16.mxu0 0
      %3455 = vmatpush1.bf16.msra.mxu0 0
      %3456 = vmatprep.subr.bf16.mxu0 0
      %3457 = vmatpush1.bf16.msra.mxu0 0
      %3458 = vmatprep.subr.bf16.mxu0 0
      %3459 = vmatpush1.bf16.msra.mxu0 0
      %3460 = vmatprep.subr.bf16.mxu0 0
      %3461 = vmatpush1.bf16.msra.mxu0 0
      %3462 = vmatprep.subr.bf16.mxu0 0
      %3463 = vmatpush1.bf16.msra.mxu0 0
      %3464 = vmatprep.subr.bf16.mxu0 0
      %3465 = vmatpush1.bf16.msra.mxu0 0
      %3466 = vmatprep.subr.bf16.mxu0 0
      %3467 = vmatpush1.bf16.msra.mxu0 0
      %3468 = vmatprep.subr.bf16.mxu0 0
      %3469 = vmatpush1.bf16.msra.mxu0 0
      %3470 = vmatprep.subr.bf16.mxu0 0
      %3471 = vmatpush1.bf16.msra.mxu0 0
      %3472 = vmatprep.subr.bf16.mxu0 0
      %3473 = vmatpush1.bf16.msra.mxu0 0
      %3474 = vmatprep.mubr.bf16.mxu0 0
      %3475 = vmatmul.mubr.bf16.gmra.mrb[0].mxu0 %v510
      %v3476 = vpop.f32.mrb[0].mxu0
      %v3477 = vadd.f32 %v391, %v3476
      %v3478 = vpop.f32.mrb[0].mxu0
      %v3479 = vpop.f32.mrb[0].mxu0
      %v3480 = vadd.f32 %v396, %v3479
      %v3481 = vpop.f32.mrb[0].mxu0
      %3482 = vmatprep.mubr.bf16.mxu0 0
      %3483 = vmatmul.mubr.bf16.gmra.mrb[0].mxu0 %v513
      %v3484 = vpop.f32.mrb[0].mxu0
      %v3485 = vadd.f32 %v401, %v3484
      %v3486 = vpop.f32.mrb[0].mxu0
      %v3487 = vpop.f32.mrb[0].mxu0
      %v3488 = vadd.f32 %v406, %v3487
      %v3489 = vpop.f32.mrb[0].mxu0
      %3490 = vmatprep.mubr.bf16.mxu0 0
      %3491 = vmatmul.mubr.bf16.gmra.mrb[0].mxu0 %v516
      %v3492 = vpop.f32.mrb[0].mxu0
      %v3493 = vadd.f32 %v411, %v3492
      %v3494 = vpop.f32.mrb[0].mxu0
      %v3495 = vpop.f32.mrb[0].mxu0
      %v3496 = vadd.f32 %v416, %v3495
      %v3497 = vpop.f32.mrb[0].mxu0
      %3498 = vmatprep.mubr.bf16.mxu0 0
      %3499 = vmatmul.mubr.bf16.gmra.mrb[0].mxu0 %v519
      %v3500 = vpop.f32.mrb[0].mxu0
      %v3501 = vadd.f32 %v421, %v3500
      %v3502 = vpop.f32.mrb[0].mxu0
      %v3503 = vpop.f32.mrb[0].mxu0
      %v3504 = vadd.f32 %v426, %v3503
      %v3505 = vpop.f32.mrb[0].mxu0
      %3506 = vmatprep.mubr.bf16.mxu0 0
      %3507 = vmatmul.mubr.bf16.gmra.mrb[0].mxu0 %v522
      %v3508 = vpop.f32.mrb[0].mxu0
      %v3509 = vadd.f32 %v431, %v3508
      %v3510 = vpop.f32.mrb[0].mxu0
      %v3511 = vpop.f32.mrb[0].mxu0
      %v3512 = vadd.f32 %v436, %v3511
      %v3513 = vpop.f32.mrb[0].mxu0
      %3514 = vmatprep.mubr.bf16.mxu0 0
      %3515 = vmatmul.mubr.bf16.gmra.mrb[0].mxu0 %v525
      %v3516 = vpop.f32.mrb[0].mxu0
      %v3517 = vadd.f32 %v441, %v3516
      %v3518 = vpop.f32.mrb[0].mxu0
      %v3519 = vpop.f32.mrb[0].mxu0
      %v3520 = vadd.f32 %v446, %v3519
      %v3521 = vpop.f32.mrb[0].mxu0
      %3522 = vmatprep.mubr.bf16.mxu0 0
      %3523 = vmatmul.mubr.bf16.gmra.mrb[0].mxu0 %v528
      %v3524 = vpop.f32.mrb[0].mxu0
      %v3525 = vadd.f32 %v451, %v3524
      %v3526 = vpop.f32.mrb[0].mxu0
      %v3527 = vpop.f32.mrb[0].mxu0
      %v3528 = vadd.f32 %v456, %v3527
      %v3529 = vpop.f32.mrb[0].mxu0
      %3530 = vmatprep.mubr.bf16.mxu0 0
      %3531 = vmatmul.mubr.bf16.gmra.mrb[0].mxu0 %v531
      %v3532 = vpop.f32.mrb[0].mxu0
      %v3533 = vadd.f32 %v461, %v3532
      %v3534 = vpop.f32.mrb[0].mxu0
      %v3535 = vpop.f32.mrb[0].mxu0
      %v3536 = vadd.f32 %v466, %v3535
      %v3537 = vpop.f32.mrb[0].mxu0
      %3538 = vdwg.mxu0
      %v3539 = vmax.f32 %v3364, 0.0
      %v3540 = vmax.f32 %v3366, 0.0
      %v3541 = vmax.f32 %v3477, 0.0
      %v3542 = vmax.f32 %v3368, 0.0
      %v3543 = vmax.f32 %v3370, 0.0
      %v3544 = vmax.f32 %v3480, 0.0
      %v3545 = vmax.f32 %v3374, 0.0
      %v3546 = vmax.f32 %v3376, 0.0
      %v3547 = vmax.f32 %v3485, 0.0
      %v3548 = vmax.f32 %v3378, 0.0
      %v3549 = vmax.f32 %v3380, 0.0
      %v3550 = vmax.f32 %v3488, 0.0
      %v3551 = vmax.f32 %v3384, 0.0
      %v3552 = vmax.f32 %v3386, 0.0
      %v3553 = vmax.f32 %v3493, 0.0
      %v3554 = vmax.f32 %v3388, 0.0
      %v3555 = vmax.f32 %v3390, 0.0
      %v3556 = vmax.f32 %v3496, 0.0
      %v3557 = vmax.f32 %v3394, 0.0
      %v3558 = vmax.f32 %v3396, 0.0
      %v3559 = vmax.f32 %v3501, 0.0
      %v3560 = vmax.f32 %v3398, 0.0
      %v3561 = vmax.f32 %v3400, 0.0
      %v3562 = vmax.f32 %v3504, 0.0
      %v3563 = vmax.f32 %v3404, 0.0
      %v3564 = vmax.f32 %v3406, 0.0
      %v3565 = vmax.f32 %v3509, 0.0
      %v3566 = vmax.f32 %v3408, 0.0
      %v3567 = vmax.f32 %v3410, 0.0
      %v3568 = vmax.f32 %v3512, 0.0
      %v3569 = vmax.f32 %v3414, 0.0
      %v3570 = vmax.f32 %v3416, 0.0
      %v3571 = vmax.f32 %v3517, 0.0
      %v3572 = vmax.f32 %v3418, 0.0
      %v3573 = vmax.f32 %v3420, 0.0
      %v3574 = vmax.f32 %v3520, 0.0
      %v3575 = vmax.f32 %v3424, 0.0
      %v3576 = vmax.f32 %v3426, 0.0
      %v3577 = vmax.f32 %v3525, 0.0
      %v3578 = vmax.f32 %v3428, 0.0
      %v3579 = vmax.f32 %v3430, 0.0
      %v3580 = vmax.f32 %v3528, 0.0
      %v3581 = vmax.f32 %v3434, 0.0
      %v3582 = vmax.f32 %v3436, 0.0
      %v3583 = vmax.f32 %v3533, 0.0
      %v3584 = vmax.f32 %v3438, 0.0
      %v3585 = vmax.f32 %v3440, 0.0
      %v3586 = vmax.f32 %v3536, 0.0
      %v3587 = vmul.f32 %v3539, %v804
      %v3588 = vmul.f32 %v3540, %v808
      %v3589 = vmul.f32 %v3541, %v812
      %v3590 = vmul.f32 %v3542, %v804
      %v3591 = vmul.f32 %v3543, %v808
      %v3592 = vmul.f32 %v3544, %v812
      %v3593 = vmul.f32 %v3545, %v804
      %v3594 = vmul.f32 %v3546, %v808
      %v3595 = vmul.f32 %v3547, %v812
      %v3596 = vmul.f32 %v3548, %v804
      %v3597 = vmul.f32 %v3549, %v808
      %v3598 = vmul.f32 %v3550, %v812
      %v3599 = vmul.f32 %v3551, %v804
      %v3600 = vmul.f32 %v3552, %v808
      %v3601 = vmul.f32 %v3553, %v812
      %v3602 = vmul.f32 %v3554, %v804
      %v3603 = vmul.f32 %v3555, %v808
      %v3604 = vmul.f32 %v3556, %v812
      %v3605 = vmul.f32 %v3557, %v804
      %v3606 = vmul.f32 %v3558, %v808
      %v3607 = vmul.f32 %v3559, %v812
      %v3608 = vmul.f32 %v3560, %v804
      %v3609 = vmul.f32 %v3561, %v808
      %v3610 = vmul.f32 %v3562, %v812
      %v3611 = vmul.f32 %v3563, %v804
      %v3612 = vmul.f32 %v3564, %v808
      %v3613 = vmul.f32 %v3565, %v812
      %v3614 = vmul.f32 %v3566, %v804
      %v3615 = vmul.f32 %v3567, %v808
      %v3616 = vmul.f32 %v3568, %v812
      %v3617 = vmul.f32 %v3569, %v804
      %v3618 = vmul.f32 %v3570, %v808
      %v3619 = vmul.f32 %v3571, %v812
      %v3620 = vmul.f32 %v3572, %v804
      %v3621 = vmul.f32 %v3573, %v808
      %v3622 = vmul.f32 %v3574, %v812
      %v3623 = vmul.f32 %v3575, %v804
      %v3624 = vmul.f32 %v3576, %v808
      %v3625 = vmul.f32 %v3577, %v812
      %v3626 = vmul.f32 %v3578, %v804
      %v3627 = vmul.f32 %v3579, %v808
      %v3628 = vmul.f32 %v3580, %v812
      %v3629 = vmul.f32 %v3581, %v804
      %v3630 = vmul.f32 %v3582, %v808
      %v3631 = vmul.f32 %v3583, %v812
      %v3632 = vmul.f32 %v3584, %v804
      %v3633 = vmul.f32 %v3585, %v808
      %v3634 = vmul.f32 %v3586, %v812
      %v3635 = vadd.f32 %v3587, %v3588
      %v3636 = vsel %vm865, %v3589, 0.0
      %v3637 = vadd.f32 %v3635, %v3636
      %3638 = vadd.xlane.f32.xlu0 %v3637
      %v3639 = vpop.xlane.xlu0 %3638
      %v3640 = vadd.f32 %v3590, %v3591
      %v3641 = vsel %vm865, %v3592, 0.0
      %v3642 = vadd.f32 %v3640, %v3641
      %3643 = vadd.xlane.f32.xlu0 %v3642
      %v3644 = vpop.xlane.xlu0 %3643
      %v3645 = vadd.f32 %v3593, %v3594
      %v3646 = vsel %vm865, %v3595, 0.0
      %v3647 = vadd.f32 %v3645, %v3646
      %3648 = vadd.xlane.f32.xlu0 %v3647
      %v3649 = vpop.xlane.xlu0 %3648
      %v3650 = vadd.f32 %v3596, %v3597
      %v3651 = vsel %vm865, %v3598, 0.0
      %v3652 = vadd.f32 %v3650, %v3651
      %3653 = vadd.xlane.f32.xlu0 %v3652
      %v3654 = vpop.xlane.xlu0 %3653
      %v3655 = vadd.f32 %v3599, %v3600
      %v3656 = vsel %vm865, %v3601, 0.0
      %v3657 = vadd.f32 %v3655, %v3656
      %3658 = vadd.xlane.f32.xlu0 %v3657
      %v3659 = vpop.xlane.xlu0 %3658
      %v3660 = vadd.f32 %v3602, %v3603
      %v3661 = vsel %vm865, %v3604, 0.0
      %v3662 = vadd.f32 %v3660, %v3661
      %3663 = vadd.xlane.f32.xlu0 %v3662
      %v3664 = vpop.xlane.xlu0 %3663
      %v3665 = vadd.f32 %v3605, %v3606
      %v3666 = vsel %vm865, %v3607, 0.0
      %v3667 = vadd.f32 %v3665, %v3666
      %3668 = vadd.xlane.f32.xlu0 %v3667
      %v3669 = vpop.xlane.xlu0 %3668
      %v3670 = vadd.f32 %v3608, %v3609
      %v3671 = vsel %vm865, %v3610, 0.0
      %v3672 = vadd.f32 %v3670, %v3671
      %3673 = vadd.xlane.f32.xlu0 %v3672
      %v3674 = vpop.xlane.xlu0 %3673
      %v3675 = vadd.f32 %v3611, %v3612
      %v3676 = vsel %vm865, %v3613, 0.0
      %v3677 = vadd.f32 %v3675, %v3676
      %3678 = vadd.xlane.f32.xlu0 %v3677
      %v3679 = vpop.xlane.xlu0 %3678
      %v3680 = vadd.f32 %v3614, %v3615
      %v3681 = vsel %vm865, %v3616, 0.0
      %v3682 = vadd.f32 %v3680, %v3681
      %3683 = vadd.xlane.f32.xlu0 %v3682
      %v3684 = vpop.xlane.xlu0 %3683
      %v3685 = vadd.f32 %v3617, %v3618
      %v3686 = vsel %vm865, %v3619, 0.0
      %v3687 = vadd.f32 %v3685, %v3686
      %3688 = vadd.xlane.f32.xlu0 %v3687
      %v3689 = vpop.xlane.xlu0 %3688
      %v3690 = vadd.f32 %v3620, %v3621
      %v3691 = vsel %vm865, %v3622, 0.0
      %v3692 = vadd.f32 %v3690, %v3691
      %3693 = vadd.xlane.f32.xlu0 %v3692
      %v3694 = vpop.xlane.xlu0 %3693
      %v3695 = vadd.f32 %v3623, %v3624
      %v3696 = vsel %vm865, %v3625, 0.0
      %v3697 = vadd.f32 %v3695, %v3696
      %3698 = vadd.xlane.f32.xlu0 %v3697
      %v3699 = vpop.xlane.xlu0 %3698
      %v3700 = vadd.f32 %v3626, %v3627
      %v3701 = vsel %vm865, %v3628, 0.0
      %v3702 = vadd.f32 %v3700, %v3701
      %3703 = vadd.xlane.f32.xlu0 %v3702
      %v3704 = vpop.xlane.xlu0 %3703
      %v3705 = vadd.f32 %v3629, %v3630
      %v3706 = vsel %vm865, %v3631, 0.0
      %v3707 = vadd.f32 %v3705, %v3706
      %3708 = vadd.xlane.f32.xlu0 %v3707
      %v3709 = vpop.xlane.xlu0 %3708
      %v3710 = vadd.f32 %v3632, %v3633
      %v3711 = vsel %vm865, %v3634, 0.0
      %v3712 = vadd.f32 %v3710, %v3711
      %3713 = vadd.xlane.f32.xlu0 %v3712
      %v3714 = vpop.xlane.xlu0 %3713
      %v3715 = vmul.f32 %v3639, 0.00390625
      %v3716 = vmul.f32 %v3644, 0.00390625
      %v3717 = vmul.f32 %v3649, 0.00390625
      %v3718 = vmul.f32 %v3654, 0.00390625
      %v3719 = vmul.f32 %v3659, 0.00390625
      %v3720 = vmul.f32 %v3664, 0.00390625
      %v3721 = vmul.f32 %v3669, 0.00390625
      %v3722 = vmul.f32 %v3674, 0.00390625
      %v3723 = vmul.f32 %v3679, 0.00390625
      %v3724 = vmul.f32 %v3684, 0.00390625
      %v3725 = vmul.f32 %v3689, 0.00390625
      %v3726 = vmul.f32 %v3694, 0.00390625
      %v3727 = vmul.f32 %v3699, 0.00390625
      %v3728 = vmul.f32 %v3704, 0.00390625
      %v3729 = vmul.f32 %v3709, 0.00390625
      %v3730 = vmul.f32 %v3714, 0.00390625
      %s3731 = scalar_lea.vmem %s195, 36
      %v3732 = vld [vmem:[%s3731] sm:$0x3f]
      %v3734 = vcombine.high %v3732, %v3732
      %v3736 = vunpack.c.l.s4 1983009808
      %v3737 = vunpack.c.0.s8 %v3736
      %v3738 = vlaneseq
      %v3739 = vshrl.u32 %v3738, 7
      %v3740 = vsub.s32 %v3737, %v3739
      %v3741 = vrot.slane %v3732, %v3740
      %v3743 = vunpack.c.l.s4 1983009808
      %v3744 = vunpack.c.0.s8 %v3743
      %v3745 = vlaneseq
      %v3746 = vshrl.u32 %v3745, 7
      %v3747 = vsub.s32 %v3744, %v3746
      %v3748 = vrot.slane %v3734, %v3747
      %v3749 = vcombine.high %v3741, %v3741
      %v3750 = vcombine.low %v3732, %v3732
      %v3752 = vunpack.c.l.s4 1983009808
      %v3753 = vunpack.c.0.s8 %v3752
      %v3754 = vlaneseq
      %v3755 = vshrl.u32 %v3754, 7
      %v3756 = vsub.s32 %v3753, %v3755
      %v3757 = vrot.slane %v3750, %v3756
      %v3758 = vcombine.high %v3757, %v3757
      %3759 = vrot.lane.b32.xlu0 %v3757, 127
      %v3760 = vpop.permute.xlu0 %3759
      %3761 = vrot.lane.b32.xlu0 %v3758, 127
      %v3762 = vpop.permute.xlu0 %3761
      %3763 = vrot.lane.b32.xlu0 %v3741, 127
      %v3764 = vpop.permute.xlu0 %3763
      %v3765 = vsel %vm236, %v3760, %v3762
      %v3766 = vsel %vm236, %v3762, %v3764
      %v3767 = vcombine.low %v3741, %v3741
      %v3768 = vcombine.low %v3748, %v3748
      %3769 = vrot.lane.b32.xlu0 %v3767, 126
      %v3770 = vpop.permute.xlu0 %3769
      %3771 = vrot.lane.b32.xlu0 %v3741, 126
      %v3772 = vpop.permute.xlu0 %3771
      %3773 = vrot.lane.b32.xlu0 %v3768, 126
      %v3774 = vpop.permute.xlu0 %3773
      %v3775 = vsel %vm247, %v3770, %v3772
      %v3776 = vsel %vm247, %v3772, %v3774
      %v3777 = vcombine.low %v3757, %v3757
      %3778 = vrot.lane.b32.xlu0 %v3777, 110
      %v3779 = vpop.permute.xlu0 %3778
      %3780 = vrot.lane.b32.xlu0 %v3757, 110
      %v3781 = vpop.permute.xlu0 %3780
      %3782 = vrot.lane.b32.xlu0 %v3767, 110
      %v3783 = vpop.permute.xlu0 %3782
      %v3784 = vsel %vm257, %v3779, %v3781
      %v3785 = vsel %vm257, %v3781, %v3783
      %3786 = vrot.lane.b32.xlu0 %v3741, 109
      %v3787 = vpop.permute.xlu0 %3786
      %3788 = vrot.lane.b32.xlu0 %v3749, 109
      %v3789 = vpop.permute.xlu0 %3788
      %3790 = vrot.lane.b32.xlu0 %v3748, 109
      %v3791 = vpop.permute.xlu0 %3790
      %v3792 = vsel %vm266, %v3787, %v3789
      %v3793 = vsel %vm266, %v3789, %v3791
      %3794 = vrot.lane.b32.xlu0 %v3757, 108
      %v3795 = vpop.permute.xlu0 %3794
      %3796 = vrot.lane.b32.xlu0 %v3758, 108
      %v3797 = vpop.permute.xlu0 %3796
      %3798 = vrot.lane.b32.xlu0 %v3741, 108
      %v3799 = vpop.permute.xlu0 %3798
      %v3800 = vsel %vm275, %v3795, %v3797
      %v3801 = vsel %vm275, %v3797, %v3799
      %3802 = vrot.lane.b32.xlu0 %v3767, 92
      %v3803 = vpop.permute.xlu0 %3802
      %3804 = vrot.lane.b32.xlu0 %v3741, 92
      %v3805 = vpop.permute.xlu0 %3804
      %3806 = vrot.lane.b32.xlu0 %v3768, 92
      %v3807 = vpop.permute.xlu0 %3806
      %v3808 = vsel %vm284, %v3803, %v3805
      %v3809 = vsel %vm284, %v3805, %v3807
      %3810 = vrot.lane.b32.xlu0 %v3777, 91
      %v3811 = vpop.permute.xlu0 %3810
      %3812 = vrot.lane.b32.xlu0 %v3757, 91
      %v3813 = vpop.permute.xlu0 %3812
      %3814 = vrot.lane.b32.xlu0 %v3767, 91
      %v3815 = vpop.permute.xlu0 %3814
      %v3816 = vsel %vm293, %v3811, %v3813
      %v3817 = vsel %vm293, %v3813, %v3815
      %3818 = vrot.lane.b32.xlu0 %v3741, 90
      %v3819 = vpop.permute.xlu0 %3818
      %3820 = vrot.lane.b32.xlu0 %v3749, 90
      %v3821 = vpop.permute.xlu0 %3820
      %3822 = vrot.lane.b32.xlu0 %v3748, 90
      %v3823 = vpop.permute.xlu0 %3822
      %v3824 = vsel %vm302, %v3819, %v3821
      %v3825 = vsel %vm302, %v3821, %v3823
      %v3828 = vsel %vm305, %v3741, %v3765
      %v3831 = vsel %vm305, %v3749, %v3766
      %v3834 = vsel %vm305, %v3748, %v3764
      %v3836 = vsel %vm315, %v3828, %v3775
      %v3838 = vsel %vm315, %v3831, %v3776
      %v3840 = vsel %vm315, %v3834, %v3774
      %v3842 = vsel %vm322, %v3836, %v3784
      %v3845 = vsel %vm322, %v3838, %v3785
      %v3848 = vsel %vm322, %v3840, %v3783
      %v3852 = vsel %vm305, %v3792, %v3800
      %v3855 = vsel %vm305, %v3793, %v3801
      %v3858 = vsel %vm305, %v3791, %v3799
      %v3860 = vsel %vm315, %v3852, %v3808
      %v3862 = vsel %vm315, %v3855, %v3809
      %v3864 = vsel %vm315, %v3858, %v3807
      %v3866 = vsel %vm322, %v3860, %v3816
      %v3869 = vsel %vm322, %v3862, %v3817
      %v3872 = vsel %vm322, %v3864, %v3815
      %v3875 = vsel %vm305, %v3824, 0
      %v3878 = vsel %vm305, %v3825, 0
      %v3881 = vsel %vm305, %v3823, 0
      %3883 = vmatprep.subr.bf16.mxu0 %v3845
      %3884 = vmatpush1.bf16.msra.mxu0 %v3842
      %3885 = vmatprep.subr.bf16.mxu0 %v3869
      %3886 = vmatpush1.bf16.msra.mxu0 %v3866
      %3887 = vmatprep.subr.bf16.mxu0 %v3878
      %3888 = vmatpush1.bf16.msra.mxu0 %v3875
      %3889 = vmatprep.subr.bf16.mxu0 0
      %3890 = vmatpush1.bf16.msra.mxu0 0
      %3891 = vmatprep.subr.bf16.mxu0 0
      %3892 = vmatpush1.bf16.msra.mxu0 0
      %3893 = vmatprep.subr.bf16.mxu0 0
      %3894 = vmatpush1.bf16.msra.mxu0 0
      %3895 = vmatprep.subr.bf16.mxu0 0
      %3896 = vmatpush1.bf16.msra.mxu0 0
      %3897 = vmatprep.subr.bf16.mxu0 0
      %3898 = vmatpush1.bf16.msra.mxu0 0
      %3899 = vmatprep.subr.bf16.mxu0 0
      %3900 = vmatpush1.bf16.msra.mxu0 0
      %3901 = vmatprep.subr.bf16.mxu0 0
      %3902 = vmatpush1.bf16.msra.mxu0 0
      %3903 = vmatprep.subr.bf16.mxu0 0
      %3904 = vmatpush1.bf16.msra.mxu0 0
      %3905 = vmatprep.subr.bf16.mxu0 0
      %3906 = vmatpush1.bf16.msra.mxu0 0
      %3907 = vmatprep.subr.bf16.mxu0 0
      %3908 = vmatpush1.bf16.msra.mxu0 0
      %3909 = vmatprep.subr.bf16.mxu0 0
      %3910 = vmatpush1.bf16.msra.mxu0 0
      %3911 = vmatprep.subr.bf16.mxu0 0
      %3912 = vmatpush1.bf16.msra.mxu0 0
      %3913 = vmatprep.subr.bf16.mxu0 0
      %3914 = vmatpush1.bf16.msra.mxu0 0
      %3915 = vmatprep.mubr.bf16.mxu0 0
      %3916 = vmatmul.mubr.bf16.gmra.mrb[0].mxu0 %v510
      %v3917 = vpop.f32.mrb[0].mxu0
      %v3918 = vadd.f32 %v391, %v3917
      %v3919 = vpop.f32.mrb[0].mxu0
      %v3920 = vadd.f32 %v391, %v3919
      %v3921 = vpop.f32.mrb[0].mxu0
      %v3922 = vadd.f32 %v396, %v3921
      %v3923 = vpop.f32.mrb[0].mxu0
      %v3924 = vadd.f32 %v396, %v3923
      %3925 = vmatprep.mubr.bf16.mxu0 0
      %3926 = vmatmul.mubr.bf16.gmra.mrb[0].mxu0 %v513
      %v3927 = vpop.f32.mrb[0].mxu0
      %v3928 = vadd.f32 %v401, %v3927
      %v3929 = vpop.f32.mrb[0].mxu0
      %v3930 = vadd.f32 %v401, %v3929
      %v3931 = vpop.f32.mrb[0].mxu0
      %v3932 = vadd.f32 %v406, %v3931
      %v3933 = vpop.f32.mrb[0].mxu0
      %v3934 = vadd.f32 %v406, %v3933
      %3935 = vmatprep.mubr.bf16.mxu0 0
      %3936 = vmatmul.mubr.bf16.gmra.mrb[0].mxu0 %v516
      %v3937 = vpop.f32.mrb[0].mxu0
      %v3938 = vadd.f32 %v411, %v3937
      %v3939 = vpop.f32.mrb[0].mxu0
      %v3940 = vadd.f32 %v411, %v3939
      %v3941 = vpop.f32.mrb[0].mxu0
      %v3942 = vadd.f32 %v416, %v3941
      %v3943 = vpop.f32.mrb[0].mxu0
      %v3944 = vadd.f32 %v416, %v3943
      %3945 = vmatprep.mubr.bf16.mxu0 0
      %3946 = vmatmul.mubr.bf16.gmra.mrb[0].mxu0 %v519
      %v3947 = vpop.f32.mrb[0].mxu0
      %v3948 = vadd.f32 %v421, %v3947
      %v3949 = vpop.f32.mrb[0].mxu0
      %v3950 = vadd.f32 %v421, %v3949
      %v3951 = vpop.f32.mrb[0].mxu0
      %v3952 = vadd.f32 %v426, %v3951
      %v3953 = vpop.f32.mrb[0].mxu0
      %v3954 = vadd.f32 %v426, %v3953
      %3955 = vmatprep.mubr.bf16.mxu0 0
      %3956 = vmatmul.mubr.bf16.gmra.mrb[0].mxu0 %v522
      %v3957 = vpop.f32.mrb[0].mxu0
      %v3958 = vadd.f32 %v431, %v3957
      %v3959 = vpop.f32.mrb[0].mxu0
      %v3960 = vadd.f32 %v431, %v3959
      %v3961 = vpop.f32.mrb[0].mxu0
      %v3962 = vadd.f32 %v436, %v3961
      %v3963 = vpop.f32.mrb[0].mxu0
      %v3964 = vadd.f32 %v436, %v3963
      %3965 = vmatprep.mubr.bf16.mxu0 0
      %3966 = vmatmul.mubr.bf16.gmra.mrb[0].mxu0 %v525
      %v3967 = vpop.f32.mrb[0].mxu0
      %v3968 = vadd.f32 %v441, %v3967
      %v3969 = vpop.f32.mrb[0].mxu0
      %v3970 = vadd.f32 %v441, %v3969
      %v3971 = vpop.f32.mrb[0].mxu0
      %v3972 = vadd.f32 %v446, %v3971
      %v3973 = vpop.f32.mrb[0].mxu0
      %v3974 = vadd.f32 %v446, %v3973
      %3975 = vmatprep.mubr.bf16.mxu0 0
      %3976 = vmatmul.mubr.bf16.gmra.mrb[0].mxu0 %v528
      %v3977 = vpop.f32.mrb[0].mxu0
      %v3978 = vadd.f32 %v451, %v3977
      %v3979 = vpop.f32.mrb[0].mxu0
      %v3980 = vadd.f32 %v451, %v3979
      %v3981 = vpop.f32.mrb[0].mxu0
      %v3982 = vadd.f32 %v456, %v3981
      %v3983 = vpop.f32.mrb[0].mxu0
      %v3984 = vadd.f32 %v456, %v3983
      %3985 = vmatprep.mubr.bf16.mxu0 0
      %3986 = vmatmul.mubr.bf16.gmra.mrb[0].mxu0 %v531
      %v3987 = vpop.f32.mrb[0].mxu0
      %v3988 = vadd.f32 %v461, %v3987
      %v3989 = vpop.f32.mrb[0].mxu0
      %v3990 = vadd.f32 %v461, %v3989
      %v3991 = vpop.f32.mrb[0].mxu0
      %v3992 = vadd.f32 %v466, %v3991
      %v3993 = vpop.f32.mrb[0].mxu0
      %v3994 = vadd.f32 %v466, %v3993
      %3995 = vdwg.mxu0
      %3996 = vmatprep.subr.bf16.mxu0 0
      %3997 = vmatpush1.bf16.msra.mxu0 %v3848
      %3998 = vmatprep.subr.bf16.mxu0 0
      %3999 = vmatpush1.bf16.msra.mxu0 %v3872
      %4000 = vmatprep.subr.bf16.mxu0 0
      %4001 = vmatpush1.bf16.msra.mxu0 %v3881
      %4002 = vmatprep.subr.bf16.mxu0 0
      %4003 = vmatpush1.bf16.msra.mxu0 0
      %4004 = vmatprep.subr.bf16.mxu0 0
      %4005 = vmatpush1.bf16.msra.mxu0 0
      %4006 = vmatprep.subr.bf16.mxu0 0
      %4007 = vmatpush1.bf16.msra.mxu0 0
      %4008 = vmatprep.subr.bf16.mxu0 0
      %4009 = vmatpush1.bf16.msra.mxu0 0
      %4010 = vmatprep.subr.bf16.mxu0 0
      %4011 = vmatpush1.bf16.msra.mxu0 0
      %4012 = vmatprep.subr.bf16.mxu0 0
      %4013 = vmatpush1.bf16.msra.mxu0 0
      %4014 = vmatprep.subr.bf16.mxu0 0
      %4015 = vmatpush1.bf16.msra.mxu0 0
      %4016 = vmatprep.subr.bf16.mxu0 0
      %4017 = vmatpush1.bf16.msra.mxu0 0
      %4018 = vmatprep.subr.bf16.mxu0 0
      %4019 = vmatpush1.bf16.msra.mxu0 0
      %4020 = vmatprep.subr.bf16.mxu0 0
      %4021 = vmatpush1.bf16.msra.mxu0 0
      %4022 = vmatprep.subr.bf16.mxu0 0
      %4023 = vmatpush1.bf16.msra.mxu0 0
      %4024 = vmatprep.subr.bf16.mxu0 0
      %4025 = vmatpush1.bf16.msra.mxu0 0
      %4026 = vmatprep.subr.bf16.mxu0 0
      %4027 = vmatpush1.bf16.msra.mxu0 0
      %4028 = vmatprep.mubr.bf16.mxu0 0
      %4029 = vmatmul.mubr.bf16.gmra.mrb[0].mxu0 %v510
      %v4030 = vpop.f32.mrb[0].mxu0
      %v4031 = vadd.f32 %v391, %v4030
      %v4032 = vpop.f32.mrb[0].mxu0
      %v4033 = vpop.f32.mrb[0].mxu0
      %v4034 = vadd.f32 %v396, %v4033
      %v4035 = vpop.f32.mrb[0].mxu0
      %4036 = vmatprep.mubr.bf16.mxu0 0
      %4037 = vmatmul.mubr.bf16.gmra.mrb[0].mxu0 %v513
      %v4038 = vpop.f32.mrb[0].mxu0
      %v4039 = vadd.f32 %v401, %v4038
      %v4040 = vpop.f32.mrb[0].mxu0
      %v4041 = vpop.f32.mrb[0].mxu0
      %v4042 = vadd.f32 %v406, %v4041
      %v4043 = vpop.f32.mrb[0].mxu0
      %4044 = vmatprep.mubr.bf16.mxu0 0
      %4045 = vmatmul.mubr.bf16.gmra.mrb[0].mxu0 %v516
      %v4046 = vpop.f32.mrb[0].mxu0
      %v4047 = vadd.f32 %v411, %v4046
      %v4048 = vpop.f32.mrb[0].mxu0
      %v4049 = vpop.f32.mrb[0].mxu0
      %v4050 = vadd.f32 %v416, %v4049
      %v4051 = vpop.f32.mrb[0].mxu0
      %4052 = vmatprep.mubr.bf16.mxu0 0
      %4053 = vmatmul.mubr.bf16.gmra.mrb[0].mxu0 %v519
      %v4054 = vpop.f32.mrb[0].mxu0
      %v4055 = vadd.f32 %v421, %v4054
      %v4056 = vpop.f32.mrb[0].mxu0
      %v4057 = vpop.f32.mrb[0].mxu0
      %v4058 = vadd.f32 %v426, %v4057
      %v4059 = vpop.f32.mrb[0].mxu0
      %4060 = vmatprep.mubr.bf16.mxu0 0
      %4061 = vmatmul.mubr.bf16.gmra.mrb[0].mxu0 %v522
      %v4062 = vpop.f32.mrb[0].mxu0
      %v4063 = vadd.f32 %v431, %v4062
      %v4064 = vpop.f32.mrb[0].mxu0
      %v4065 = vpop.f32.mrb[0].mxu0
      %v4066 = vadd.f32 %v436, %v4065
      %v4067 = vpop.f32.mrb[0].mxu0
      %4068 = vmatprep.mubr.bf16.mxu0 0
      %4069 = vmatmul.mubr.bf16.gmra.mrb[0].mxu0 %v525
      %v4070 = vpop.f32.mrb[0].mxu0
      %v4071 = vadd.f32 %v441, %v4070
      %v4072 = vpop.f32.mrb[0].mxu0
      %v4073 = vpop.f32.mrb[0].mxu0
      %v4074 = vadd.f32 %v446, %v4073
      %v4075 = vpop.f32.mrb[0].mxu0
      %4076 = vmatprep.mubr.bf16.mxu0 0
      %4077 = vmatmul.mubr.bf16.gmra.mrb[0].mxu0 %v528
      %v4078 = vpop.f32.mrb[0].mxu0
      %v4079 = vadd.f32 %v451, %v4078
      %v4080 = vpop.f32.mrb[0].mxu0
      %v4081 = vpop.f32.mrb[0].mxu0
      %v4082 = vadd.f32 %v456, %v4081
      %v4083 = vpop.f32.mrb[0].mxu0
      %4084 = vmatprep.mubr.bf16.mxu0 0
      %4085 = vmatmul.mubr.bf16.gmra.mrb[0].mxu0 %v531
      %v4086 = vpop.f32.mrb[0].mxu0
      %v4087 = vadd.f32 %v461, %v4086
      %v4088 = vpop.f32.mrb[0].mxu0
      %v4089 = vpop.f32.mrb[0].mxu0
      %v4090 = vadd.f32 %v466, %v4089
      %v4091 = vpop.f32.mrb[0].mxu0
      %4092 = vdwg.mxu0
      %v4093 = vmax.f32 %v3918, 0.0
      %v4094 = vmax.f32 %v3920, 0.0
      %v4095 = vmax.f32 %v4031, 0.0
      %v4096 = vmax.f32 %v3922, 0.0
      %v4097 = vmax.f32 %v3924, 0.0
      %v4098 = vmax.f32 %v4034, 0.0
      %v4099 = vmax.f32 %v3928, 0.0
      %v4100 = vmax.f32 %v3930, 0.0
      %v4101 = vmax.f32 %v4039, 0.0
      %v4102 = vmax.f32 %v3932, 0.0
      %v4103 = vmax.f32 %v3934, 0.0
      %v4104 = vmax.f32 %v4042, 0.0
      %v4105 = vmax.f32 %v3938, 0.0
      %v4106 = vmax.f32 %v3940, 0.0
      %v4107 = vmax.f32 %v4047, 0.0
      %v4108 = vmax.f32 %v3942, 0.0
      %v4109 = vmax.f32 %v3944, 0.0
      %v4110 = vmax.f32 %v4050, 0.0
      %v4111 = vmax.f32 %v3948, 0.0
      %v4112 = vmax.f32 %v3950, 0.0
      %v4113 = vmax.f32 %v4055, 0.0
      %v4114 = vmax.f32 %v3952, 0.0
      %v4115 = vmax.f32 %v3954, 0.0
      %v4116 = vmax.f32 %v4058, 0.0
      %v4117 = vmax.f32 %v3958, 0.0
      %v4118 = vmax.f32 %v3960, 0.0
      %v4119 = vmax.f32 %v4063, 0.0
      %v4120 = vmax.f32 %v3962, 0.0
      %v4121 = vmax.f32 %v3964, 0.0
      %v4122 = vmax.f32 %v4066, 0.0
      %v4123 = vmax.f32 %v3968, 0.0
      %v4124 = vmax.f32 %v3970, 0.0
      %v4125 = vmax.f32 %v4071, 0.0
      %v4126 = vmax.f32 %v3972, 0.0
      %v4127 = vmax.f32 %v3974, 0.0
      %v4128 = vmax.f32 %v4074, 0.0
      %v4129 = vmax.f32 %v3978, 0.0
      %v4130 = vmax.f32 %v3980, 0.0
      %v4131 = vmax.f32 %v4079, 0.0
      %v4132 = vmax.f32 %v3982, 0.0
      %v4133 = vmax.f32 %v3984, 0.0
      %v4134 = vmax.f32 %v4082, 0.0
      %v4135 = vmax.f32 %v3988, 0.0
      %v4136 = vmax.f32 %v3990, 0.0
      %v4137 = vmax.f32 %v4087, 0.0
      %v4138 = vmax.f32 %v3992, 0.0
      %v4139 = vmax.f32 %v3994, 0.0
      %v4140 = vmax.f32 %v4090, 0.0
      %v4141 = vmul.f32 %v4093, %v804
      %v4142 = vmul.f32 %v4094, %v808
      %v4143 = vmul.f32 %v4095, %v812
      %v4144 = vmul.f32 %v4096, %v804
      %v4145 = vmul.f32 %v4097, %v808
      %v4146 = vmul.f32 %v4098, %v812
      %v4147 = vmul.f32 %v4099, %v804
      %v4148 = vmul.f32 %v4100, %v808
      %v4149 = vmul.f32 %v4101, %v812
      %v4150 = vmul.f32 %v4102, %v804
      %v4151 = vmul.f32 %v4103, %v808
      %v4152 = vmul.f32 %v4104, %v812
      %v4153 = vmul.f32 %v4105, %v804
      %v4154 = vmul.f32 %v4106, %v808
      %v4155 = vmul.f32 %v4107, %v812
      %v4156 = vmul.f32 %v4108, %v804
      %v4157 = vmul.f32 %v4109, %v808
      %v4158 = vmul.f32 %v4110, %v812
      %v4159 = vmul.f32 %v4111, %v804
      %v4160 = vmul.f32 %v4112, %v808
      %v4161 = vmul.f32 %v4113, %v812
      %v4162 = vmul.f32 %v4114, %v804
      %v4163 = vmul.f32 %v4115, %v808
      %v4164 = vmul.f32 %v4116, %v812
      %v4165 = vmul.f32 %v4117, %v804
      %v4166 = vmul.f32 %v4118, %v808
      %v4167 = vmul.f32 %v4119, %v812
      %v4168 = vmul.f32 %v4120, %v804
      %v4169 = vmul.f32 %v4121, %v808
      %v4170 = vmul.f32 %v4122, %v812
      %v4171 = vmul.f32 %v4123, %v804
      %v4172 = vmul.f32 %v4124, %v808
      %v4173 = vmul.f32 %v4125, %v812
      %v4174 = vmul.f32 %v4126, %v804
      %v4175 = vmul.f32 %v4127, %v808
      %v4176 = vmul.f32 %v4128, %v812
      %v4177 = vmul.f32 %v4129, %v804
      %v4178 = vmul.f32 %v4130, %v808
      %v4179 = vmul.f32 %v4131, %v812
      %v4180 = vmul.f32 %v4132, %v804
      %v4181 = vmul.f32 %v4133, %v808
      %v4182 = vmul.f32 %v4134, %v812
      %v4183 = vmul.f32 %v4135, %v804
      %v4184 = vmul.f32 %v4136, %v808
      %v4185 = vmul.f32 %v4137, %v812
      %v4186 = vmul.f32 %v4138, %v804
      %v4187 = vmul.f32 %v4139, %v808
      %v4188 = vmul.f32 %v4140, %v812
      %v4189 = vadd.f32 %v4141, %v4142
      %v4190 = vsel %vm865, %v4143, 0.0
      %v4191 = vadd.f32 %v4189, %v4190
      %4192 = vadd.xlane.f32.xlu0 %v4191
      %v4193 = vpop.xlane.xlu0 %4192
      %v4194 = vadd.f32 %v4144, %v4145
      %v4195 = vsel %vm865, %v4146, 0.0
      %v4196 = vadd.f32 %v4194, %v4195
      %4197 = vadd.xlane.f32.xlu0 %v4196
      %v4198 = vpop.xlane.xlu0 %4197
      %v4199 = vadd.f32 %v4147, %v4148
      %v4200 = vsel %vm865, %v4149, 0.0
      %v4201 = vadd.f32 %v4199, %v4200
      %4202 = vadd.xlane.f32.xlu0 %v4201
      %v4203 = vpop.xlane.xlu0 %4202
      %v4204 = vadd.f32 %v4150, %v4151
      %v4205 = vsel %vm865, %v4152, 0.0
      %v4206 = vadd.f32 %v4204, %v4205
      %4207 = vadd.xlane.f32.xlu0 %v4206
      %v4208 = vpop.xlane.xlu0 %4207
      %v4209 = vadd.f32 %v4153, %v4154
      %v4210 = vsel %vm865, %v4155, 0.0
      %v4211 = vadd.f32 %v4209, %v4210
      %4212 = vadd.xlane.f32.xlu0 %v4211
      %v4213 = vpop.xlane.xlu0 %4212
      %v4214 = vadd.f32 %v4156, %v4157
      %v4215 = vsel %vm865, %v4158, 0.0
      %v4216 = vadd.f32 %v4214, %v4215
      %4217 = vadd.xlane.f32.xlu0 %v4216
      %v4218 = vpop.xlane.xlu0 %4217
      %v4219 = vadd.f32 %v4159, %v4160
      %v4220 = vsel %vm865, %v4161, 0.0
      %v4221 = vadd.f32 %v4219, %v4220
      %4222 = vadd.xlane.f32.xlu0 %v4221
      %v4223 = vpop.xlane.xlu0 %4222
      %v4224 = vadd.f32 %v4162, %v4163
      %v4225 = vsel %vm865, %v4164, 0.0
      %v4226 = vadd.f32 %v4224, %v4225
      %4227 = vadd.xlane.f32.xlu0 %v4226
      %v4228 = vpop.xlane.xlu0 %4227
      %v4229 = vadd.f32 %v4165, %v4166
      %v4230 = vsel %vm865, %v4167, 0.0
      %v4231 = vadd.f32 %v4229, %v4230
      %4232 = vadd.xlane.f32.xlu0 %v4231
      %v4233 = vpop.xlane.xlu0 %4232
      %v4234 = vadd.f32 %v4168, %v4169
      %v4235 = vsel %vm865, %v4170, 0.0
      %v4236 = vadd.f32 %v4234, %v4235
      %4237 = vadd.xlane.f32.xlu0 %v4236
      %v4238 = vpop.xlane.xlu0 %4237
      %v4239 = vadd.f32 %v4171, %v4172
      %v4240 = vsel %vm865, %v4173, 0.0
      %v4241 = vadd.f32 %v4239, %v4240
      %4242 = vadd.xlane.f32.xlu0 %v4241
      %v4243 = vpop.xlane.xlu0 %4242
      %v4244 = vadd.f32 %v4174, %v4175
      %v4245 = vsel %vm865, %v4176, 0.0
      %v4246 = vadd.f32 %v4244, %v4245
      %4247 = vadd.xlane.f32.xlu0 %v4246
      %v4248 = vpop.xlane.xlu0 %4247
      %v4249 = vadd.f32 %v4177, %v4178
      %v4250 = vsel %vm865, %v4179, 0.0
      %v4251 = vadd.f32 %v4249, %v4250
      %4252 = vadd.xlane.f32.xlu0 %v4251
      %v4253 = vpop.xlane.xlu0 %4252
      %v4254 = vadd.f32 %v4180, %v4181
      %v4255 = vsel %vm865, %v4182, 0.0
      %v4256 = vadd.f32 %v4254, %v4255
      %4257 = vadd.xlane.f32.xlu0 %v4256
      %v4258 = vpop.xlane.xlu0 %4257
      %v4259 = vadd.f32 %v4183, %v4184
      %v4260 = vsel %vm865, %v4185, 0.0
      %v4261 = vadd.f32 %v4259, %v4260
      %4262 = vadd.xlane.f32.xlu0 %v4261
      %v4263 = vpop.xlane.xlu0 %4262
      %v4264 = vadd.f32 %v4186, %v4187
      %v4265 = vsel %vm865, %v4188, 0.0
      %v4266 = vadd.f32 %v4264, %v4265
      %4267 = vadd.xlane.f32.xlu0 %v4266
      %v4268 = vpop.xlane.xlu0 %4267
      %v4269 = vmul.f32 %v4193, 0.00390625
      %v4270 = vmul.f32 %v4198, 0.00390625
      %v4271 = vmul.f32 %v4203, 0.00390625
      %v4272 = vmul.f32 %v4208, 0.00390625
      %v4273 = vmul.f32 %v4213, 0.00390625
      %v4274 = vmul.f32 %v4218, 0.00390625
      %v4275 = vmul.f32 %v4223, 0.00390625
      %v4276 = vmul.f32 %v4228, 0.00390625
      %v4277 = vmul.f32 %v4233, 0.00390625
      %v4278 = vmul.f32 %v4238, 0.00390625
      %v4279 = vmul.f32 %v4243, 0.00390625
      %v4280 = vmul.f32 %v4248, 0.00390625
      %v4281 = vmul.f32 %v4253, 0.00390625
      %v4282 = vmul.f32 %v4258, 0.00390625
      %v4283 = vmul.f32 %v4263, 0.00390625
      %v4284 = vmul.f32 %v4268, 0.00390625
      %s4285 = scalar_lea.vmem %s195, 42
      %v4286 = vld [vmem:[%s4285] sm:$0x3f]
      %v4288 = vcombine.high %v4286, %v4286
      %v4290 = vunpack.c.l.s4 1983009808
      %v4291 = vunpack.c.0.s8 %v4290
      %v4292 = vlaneseq
      %v4293 = vshrl.u32 %v4292, 7
      %v4294 = vsub.s32 %v4291, %v4293
      %v4295 = vrot.slane %v4286, %v4294
      %v4297 = vunpack.c.l.s4 1983009808
      %v4298 = vunpack.c.0.s8 %v4297
      %v4299 = vlaneseq
      %v4300 = vshrl.u32 %v4299, 7
      %v4301 = vsub.s32 %v4298, %v4300
      %v4302 = vrot.slane %v4288, %v4301
      %v4303 = vcombine.high %v4295, %v4295
      %v4304 = vcombine.low %v4286, %v4286
      %v4306 = vunpack.c.l.s4 1983009808
      %v4307 = vunpack.c.0.s8 %v4306
      %v4308 = vlaneseq
      %v4309 = vshrl.u32 %v4308, 7
      %v4310 = vsub.s32 %v4307, %v4309
      %v4311 = vrot.slane %v4304, %v4310
      %v4312 = vcombine.high %v4311, %v4311
      %4313 = vrot.lane.b32.xlu0 %v4311, 127
      %v4314 = vpop.permute.xlu0 %4313
      %4315 = vrot.lane.b32.xlu0 %v4312, 127
      %v4316 = vpop.permute.xlu0 %4315
      %4317 = vrot.lane.b32.xlu0 %v4295, 127
      %v4318 = vpop.permute.xlu0 %4317
      %v4319 = vsel %vm236, %v4314, %v4316
      %v4320 = vsel %vm236, %v4316, %v4318
      %v4321 = vcombine.low %v4295, %v4295
      %v4322 = vcombine.low %v4302, %v4302
      %4323 = vrot.lane.b32.xlu0 %v4321, 126
      %v4324 = vpop.permute.xlu0 %4323
      %4325 = vrot.lane.b32.xlu0 %v4295, 126
      %v4326 = vpop.permute.xlu0 %4325
      %4327 = vrot.lane.b32.xlu0 %v4322, 126
      %v4328 = vpop.permute.xlu0 %4327
      %v4329 = vsel %vm247, %v4324, %v4326
      %v4330 = vsel %vm247, %v4326, %v4328
      %v4331 = vcombine.low %v4311, %v4311
      %4332 = vrot.lane.b32.xlu0 %v4331, 110
      %v4333 = vpop.permute.xlu0 %4332
      %4334 = vrot.lane.b32.xlu0 %v4311, 110
      %v4335 = vpop.permute.xlu0 %4334
      %4336 = vrot.lane.b32.xlu0 %v4321, 110
      %v4337 = vpop.permute.xlu0 %4336
      %v4338 = vsel %vm257, %v4333, %v4335
      %v4339 = vsel %vm257, %v4335, %v4337
      %4340 = vrot.lane.b32.xlu0 %v4295, 109
      %v4341 = vpop.permute.xlu0 %4340
      %4342 = vrot.lane.b32.xlu0 %v4303, 109
      %v4343 = vpop.permute.xlu0 %4342
      %4344 = vrot.lane.b32.xlu0 %v4302, 109
      %v4345 = vpop.permute.xlu0 %4344
      %v4346 = vsel %vm266, %v4341, %v4343
      %v4347 = vsel %vm266, %v4343, %v4345
      %4348 = vrot.lane.b32.xlu0 %v4311, 108
      %v4349 = vpop.permute.xlu0 %4348
      %4350 = vrot.lane.b32.xlu0 %v4312, 108
      %v4351 = vpop.permute.xlu0 %4350
      %4352 = vrot.lane.b32.xlu0 %v4295, 108
      %v4353 = vpop.permute.xlu0 %4352
      %v4354 = vsel %vm275, %v4349, %v4351
      %v4355 = vsel %vm275, %v4351, %v4353
      %4356 = vrot.lane.b32.xlu0 %v4321, 92
      %v4357 = vpop.permute.xlu0 %4356
      %4358 = vrot.lane.b32.xlu0 %v4295, 92
      %v4359 = vpop.permute.xlu0 %4358
      %4360 = vrot.lane.b32.xlu0 %v4322, 92
      %v4361 = vpop.permute.xlu0 %4360
      %v4362 = vsel %vm284, %v4357, %v4359
      %v4363 = vsel %vm284, %v4359, %v4361
      %4364 = vrot.lane.b32.xlu0 %v4331, 91
      %v4365 = vpop.permute.xlu0 %4364
      %4366 = vrot.lane.b32.xlu0 %v4311, 91
      %v4367 = vpop.permute.xlu0 %4366
      %4368 = vrot.lane.b32.xlu0 %v4321, 91
      %v4369 = vpop.permute.xlu0 %4368
      %v4370 = vsel %vm293, %v4365, %v4367
      %v4371 = vsel %vm293, %v4367, %v4369
      %4372 = vrot.lane.b32.xlu0 %v4295, 90
      %v4373 = vpop.permute.xlu0 %4372
      %4374 = vrot.lane.b32.xlu0 %v4303, 90
      %v4375 = vpop.permute.xlu0 %4374
      %4376 = vrot.lane.b32.xlu0 %v4302, 90
      %v4377 = vpop.permute.xlu0 %4376
      %v4378 = vsel %vm302, %v4373, %v4375
      %v4379 = vsel %vm302, %v4375, %v4377
      %v4382 = vsel %vm305, %v4295, %v4319
      %v4385 = vsel %vm305, %v4303, %v4320
      %v4388 = vsel %vm305, %v4302, %v4318
      %v4390 = vsel %vm315, %v4382, %v4329
      %v4392 = vsel %vm315, %v4385, %v4330
      %v4394 = vsel %vm315, %v4388, %v4328
      %v4396 = vsel %vm322, %v4390, %v4338
      %v4399 = vsel %vm322, %v4392, %v4339
      %v4402 = vsel %vm322, %v4394, %v4337
      %v4406 = vsel %vm305, %v4346, %v4354
      %v4409 = vsel %vm305, %v4347, %v4355
      %v4412 = vsel %vm305, %v4345, %v4353
      %v4414 = vsel %vm315, %v4406, %v4362
      %v4416 = vsel %vm315, %v4409, %v4363
      %v4418 = vsel %vm315, %v4412, %v4361
      %v4420 = vsel %vm322, %v4414, %v4370
      %v4423 = vsel %vm322, %v4416, %v4371
      %v4426 = vsel %vm322, %v4418, %v4369
      %v4429 = vsel %vm305, %v4378, 0
      %v4432 = vsel %vm305, %v4379, 0
      %v4435 = vsel %vm305, %v4377, 0
      %4437 = vmatprep.subr.bf16.mxu0 %v4399
      %4438 = vmatpush1.bf16.msra.mxu0 %v4396
      %4439 = vmatprep.subr.bf16.mxu0 %v4423
      %4440 = vmatpush1.bf16.msra.mxu0 %v4420
      %4441 = vmatprep.subr.bf16.mxu0 %v4432
      %4442 = vmatpush1.bf16.msra.mxu0 %v4429
      %4443 = vmatprep.subr.bf16.mxu0 0
      %4444 = vmatpush1.bf16.msra.mxu0 0
      %4445 = vmatprep.subr.bf16.mxu0 0
      %4446 = vmatpush1.bf16.msra.mxu0 0
      %4447 = vmatprep.subr.bf16.mxu0 0
      %4448 = vmatpush1.bf16.msra.mxu0 0
      %4449 = vmatprep.subr.bf16.mxu0 0
      %4450 = vmatpush1.bf16.msra.mxu0 0
      %4451 = vmatprep.subr.bf16.mxu0 0
      %4452 = vmatpush1.bf16.msra.mxu0 0
      %4453 = vmatprep.subr.bf16.mxu0 0
      %4454 = vmatpush1.bf16.msra.mxu0 0
      %4455 = vmatprep.subr.bf16.mxu0 0
      %4456 = vmatpush1.bf16.msra.mxu0 0
      %4457 = vmatprep.subr.bf16.mxu0 0
      %4458 = vmatpush1.bf16.msra.mxu0 0
      %4459 = vmatprep.subr.bf16.mxu0 0
      %4460 = vmatpush1.bf16.msra.mxu0 0
      %4461 = vmatprep.subr.bf16.mxu0 0
      %4462 = vmatpush1.bf16.msra.mxu0 0
      %4463 = vmatprep.subr.bf16.mxu0 0
      %4464 = vmatpush1.bf16.msra.mxu0 0
      %4465 = vmatprep.subr.bf16.mxu0 0
      %4466 = vmatpush1.bf16.msra.mxu0 0
      %4467 = vmatprep.subr.bf16.mxu0 0
      %4468 = vmatpush1.bf16.msra.mxu0 0
      %4469 = vmatprep.mubr.bf16.mxu0 0
      %4470 = vmatmul.mubr.bf16.gmra.mrb[0].mxu0 %v510
      %v4471 = vpop.f32.mrb[0].mxu0
      %v4472 = vadd.f32 %v391, %v4471
      %v4473 = vpop.f32.mrb[0].mxu0
      %v4474 = vadd.f32 %v391, %v4473
      %v4475 = vpop.f32.mrb[0].mxu0
      %v4476 = vadd.f32 %v396, %v4475
      %v4477 = vpop.f32.mrb[0].mxu0
      %v4478 = vadd.f32 %v396, %v4477
      %4479 = vmatprep.mubr.bf16.mxu0 0
      %4480 = vmatmul.mubr.bf16.gmra.mrb[0].mxu0 %v513
      %v4481 = vpop.f32.mrb[0].mxu0
      %v4482 = vadd.f32 %v401, %v4481
      %v4483 = vpop.f32.mrb[0].mxu0
      %v4484 = vadd.f32 %v401, %v4483
      %v4485 = vpop.f32.mrb[0].mxu0
      %v4486 = vadd.f32 %v406, %v4485
      %v4487 = vpop.f32.mrb[0].mxu0
      %v4488 = vadd.f32 %v406, %v4487
      %4489 = vmatprep.mubr.bf16.mxu0 0
      %4490 = vmatmul.mubr.bf16.gmra.mrb[0].mxu0 %v516
      %v4491 = vpop.f32.mrb[0].mxu0
      %v4492 = vadd.f32 %v411, %v4491
      %v4493 = vpop.f32.mrb[0].mxu0
      %v4494 = vadd.f32 %v411, %v4493
      %v4495 = vpop.f32.mrb[0].mxu0
      %v4496 = vadd.f32 %v416, %v4495
      %v4497 = vpop.f32.mrb[0].mxu0
      %v4498 = vadd.f32 %v416, %v4497
      %4499 = vmatprep.mubr.bf16.mxu0 0
      %4500 = vmatmul.mubr.bf16.gmra.mrb[0].mxu0 %v519
      %v4501 = vpop.f32.mrb[0].mxu0
      %v4502 = vadd.f32 %v421, %v4501
      %v4503 = vpop.f32.mrb[0].mxu0
      %v4504 = vadd.f32 %v421, %v4503
      %v4505 = vpop.f32.mrb[0].mxu0
      %v4506 = vadd.f32 %v426, %v4505
      %v4507 = vpop.f32.mrb[0].mxu0
      %v4508 = vadd.f32 %v426, %v4507
      %4509 = vmatprep.mubr.bf16.mxu0 0
      %4510 = vmatmul.mubr.bf16.gmra.mrb[0].mxu0 %v522
      %v4511 = vpop.f32.mrb[0].mxu0
      %v4512 = vadd.f32 %v431, %v4511
      %v4513 = vpop.f32.mrb[0].mxu0
      %v4514 = vadd.f32 %v431, %v4513
      %v4515 = vpop.f32.mrb[0].mxu0
      %v4516 = vadd.f32 %v436, %v4515
      %v4517 = vpop.f32.mrb[0].mxu0
      %v4518 = vadd.f32 %v436, %v4517
      %4519 = vmatprep.mubr.bf16.mxu0 0
      %4520 = vmatmul.mubr.bf16.gmra.mrb[0].mxu0 %v525
      %v4521 = vpop.f32.mrb[0].mxu0
      %v4522 = vadd.f32 %v441, %v4521
      %v4523 = vpop.f32.mrb[0].mxu0
      %v4524 = vadd.f32 %v441, %v4523
      %v4525 = vpop.f32.mrb[0].mxu0
      %v4526 = vadd.f32 %v446, %v4525
      %v4527 = vpop.f32.mrb[0].mxu0
      %v4528 = vadd.f32 %v446, %v4527
      %4529 = vmatprep.mubr.bf16.mxu0 0
      %4530 = vmatmul.mubr.bf16.gmra.mrb[0].mxu0 %v528
      %v4531 = vpop.f32.mrb[0].mxu0
      %v4532 = vadd.f32 %v451, %v4531
      %v4533 = vpop.f32.mrb[0].mxu0
      %v4534 = vadd.f32 %v451, %v4533
      %v4535 = vpop.f32.mrb[0].mxu0
      %v4536 = vadd.f32 %v456, %v4535
      %v4537 = vpop.f32.mrb[0].mxu0
      %v4538 = vadd.f32 %v456, %v4537
      %4539 = vmatprep.mubr.bf16.mxu0 0
      %4540 = vmatmul.mubr.bf16.gmra.mrb[0].mxu0 %v531
      %v4541 = vpop.f32.mrb[0].mxu0
      %v4542 = vadd.f32 %v461, %v4541
      %v4543 = vpop.f32.mrb[0].mxu0
      %v4544 = vadd.f32 %v461, %v4543
      %v4545 = vpop.f32.mrb[0].mxu0
      %v4546 = vadd.f32 %v466, %v4545
      %v4547 = vpop.f32.mrb[0].mxu0
      %v4548 = vadd.f32 %v466, %v4547
      %4549 = vdwg.mxu0
      %4550 = vmatprep.subr.bf16.mxu0 0
      %4551 = vmatpush1.bf16.msra.mxu0 %v4402
      %4552 = vmatprep.subr.bf16.mxu0 0
      %4553 = vmatpush1.bf16.msra.mxu0 %v4426
      %4554 = vmatprep.subr.bf16.mxu0 0
      %4555 = vmatpush1.bf16.msra.mxu0 %v4435
      %4556 = vmatprep.subr.bf16.mxu0 0
      %4557 = vmatpush1.bf16.msra.mxu0 0
      %4558 = vmatprep.subr.bf16.mxu0 0
      %4559 = vmatpush1.bf16.msra.mxu0 0
      %4560 = vmatprep.subr.bf16.mxu0 0
      %4561 = vmatpush1.bf16.msra.mxu0 0
      %4562 = vmatprep.subr.bf16.mxu0 0
      %4563 = vmatpush1.bf16.msra.mxu0 0
      %4564 = vmatprep.subr.bf16.mxu0 0
      %4565 = vmatpush1.bf16.msra.mxu0 0
      %4566 = vmatprep.subr.bf16.mxu0 0
      %4567 = vmatpush1.bf16.msra.mxu0 0
      %4568 = vmatprep.subr.bf16.mxu0 0
      %4569 = vmatpush1.bf16.msra.mxu0 0
      %4570 = vmatprep.subr.bf16.mxu0 0
      %4571 = vmatpush1.bf16.msra.mxu0 0
      %4572 = vmatprep.subr.bf16.mxu0 0
      %4573 = vmatpush1.bf16.msra.mxu0 0
      %4574 = vmatprep.subr.bf16.mxu0 0
      %4575 = vmatpush1.bf16.msra.mxu0 0
      %4576 = vmatprep.subr.bf16.mxu0 0
      %4577 = vmatpush1.bf16.msra.mxu0 0
      %4578 = vmatprep.subr.bf16.mxu0 0
      %4579 = vmatpush1.bf16.msra.mxu0 0
      %4580 = vmatprep.subr.bf16.mxu0 0
      %4581 = vmatpush1.bf16.msra.mxu0 0
      %4582 = vmatprep.mubr.bf16.mxu0 0
      %4583 = vmatmul.mubr.bf16.gmra.mrb[0].mxu0 %v510
      %v4584 = vpop.f32.mrb[0].mxu0
      %v4585 = vadd.f32 %v391, %v4584
      %v4586 = vpop.f32.mrb[0].mxu0
      %v4587 = vpop.f32.mrb[0].mxu0
      %v4588 = vadd.f32 %v396, %v4587
      %v4589 = vpop.f32.mrb[0].mxu0
      %4590 = vmatprep.mubr.bf16.mxu0 0
      %4591 = vmatmul.mubr.bf16.gmra.mrb[0].mxu0 %v513
      %v4592 = vpop.f32.mrb[0].mxu0
      %v4593 = vadd.f32 %v401, %v4592
      %v4594 = vpop.f32.mrb[0].mxu0
      %v4595 = vpop.f32.mrb[0].mxu0
      %v4596 = vadd.f32 %v406, %v4595
      %v4597 = vpop.f32.mrb[0].mxu0
      %4598 = vmatprep.mubr.bf16.mxu0 0
      %4599 = vmatmul.mubr.bf16.gmra.mrb[0].mxu0 %v516
      %v4600 = vpop.f32.mrb[0].mxu0
      %v4601 = vadd.f32 %v411, %v4600
      %v4602 = vpop.f32.mrb[0].mxu0
      %v4603 = vpop.f32.mrb[0].mxu0
      %v4604 = vadd.f32 %v416, %v4603
      %v4605 = vpop.f32.mrb[0].mxu0
      %4606 = vmatprep.mubr.bf16.mxu0 0
      %4607 = vmatmul.mubr.bf16.gmra.mrb[0].mxu0 %v519
      %v4608 = vpop.f32.mrb[0].mxu0
      %v4609 = vadd.f32 %v421, %v4608
      %v4610 = vpop.f32.mrb[0].mxu0
      %v4611 = vpop.f32.mrb[0].mxu0
      %v4612 = vadd.f32 %v426, %v4611
      %v4613 = vpop.f32.mrb[0].mxu0
      %4614 = vmatprep.mubr.bf16.mxu0 0
      %4615 = vmatmul.mubr.bf16.gmra.mrb[0].mxu0 %v522
      %v4616 = vpop.f32.mrb[0].mxu0
      %v4617 = vadd.f32 %v431, %v4616
      %v4618 = vpop.f32.mrb[0].mxu0
      %v4619 = vpop.f32.mrb[0].mxu0
      %v4620 = vadd.f32 %v436, %v4619
      %v4621 = vpop.f32.mrb[0].mxu0
      %4622 = vmatprep.mubr.bf16.mxu0 0
      %4623 = vmatmul.mubr.bf16.gmra.mrb[0].mxu0 %v525
      %v4624 = vpop.f32.mrb[0].mxu0
      %v4625 = vadd.f32 %v441, %v4624
      %v4626 = vpop.f32.mrb[0].mxu0
      %v4627 = vpop.f32.mrb[0].mxu0
      %v4628 = vadd.f32 %v446, %v4627
      %v4629 = vpop.f32.mrb[0].mxu0
      %4630 = vmatprep.mubr.bf16.mxu0 0
      %4631 = vmatmul.mubr.bf16.gmra.mrb[0].mxu0 %v528
      %v4632 = vpop.f32.mrb[0].mxu0
      %v4633 = vadd.f32 %v451, %v4632
      %v4634 = vpop.f32.mrb[0].mxu0
      %v4635 = vpop.f32.mrb[0].mxu0
      %v4636 = vadd.f32 %v456, %v4635
      %v4637 = vpop.f32.mrb[0].mxu0
      %4638 = vmatprep.mubr.bf16.mxu0 0
      %4639 = vmatmul.mubr.bf16.gmra.mrb[0].mxu0 %v531
      %v4640 = vpop.f32.mrb[0].mxu0
      %v4641 = vadd.f32 %v461, %v4640
      %v4642 = vpop.f32.mrb[0].mxu0
      %v4643 = vpop.f32.mrb[0].mxu0
      %v4644 = vadd.f32 %v466, %v4643
      %v4645 = vpop.f32.mrb[0].mxu0
      %4646 = vdwg.mxu0
      %v4647 = vmax.f32 %v4472, 0.0
      %v4648 = vmax.f32 %v4474, 0.0
      %v4649 = vmax.f32 %v4585, 0.0
      %v4650 = vmax.f32 %v4476, 0.0
      %v4651 = vmax.f32 %v4478, 0.0
      %v4652 = vmax.f32 %v4588, 0.0
      %v4653 = vmax.f32 %v4482, 0.0
      %v4654 = vmax.f32 %v4484, 0.0
      %v4655 = vmax.f32 %v4593, 0.0
      %v4656 = vmax.f32 %v4486, 0.0
      %v4657 = vmax.f32 %v4488, 0.0
      %v4658 = vmax.f32 %v4596, 0.0
      %v4659 = vmax.f32 %v4492, 0.0
      %v4660 = vmax.f32 %v4494, 0.0
      %v4661 = vmax.f32 %v4601, 0.0
      %v4662 = vmax.f32 %v4496, 0.0
      %v4663 = vmax.f32 %v4498, 0.0
      %v4664 = vmax.f32 %v4604, 0.0
      %v4665 = vmax.f32 %v4502, 0.0
      %v4666 = vmax.f32 %v4504, 0.0
      %v4667 = vmax.f32 %v4609, 0.0
      %v4668 = vmax.f32 %v4506, 0.0
      %v4669 = vmax.f32 %v4508, 0.0
      %v4670 = vmax.f32 %v4612, 0.0
      %v4671 = vmax.f32 %v4512, 0.0
      %v4672 = vmax.f32 %v4514, 0.0
      %v4673 = vmax.f32 %v4617, 0.0
      %v4674 = vmax.f32 %v4516, 0.0
      %v4675 = vmax.f32 %v4518, 0.0
      %v4676 = vmax.f32 %v4620, 0.0
      %v4677 = vmax.f32 %v4522, 0.0
      %v4678 = vmax.f32 %v4524, 0.0
      %v4679 = vmax.f32 %v4625, 0.0
      %v4680 = vmax.f32 %v4526, 0.0
      %v4681 = vmax.f32 %v4528, 0.0
      %v4682 = vmax.f32 %v4628, 0.0
      %v4683 = vmax.f32 %v4532, 0.0
      %v4684 = vmax.f32 %v4534, 0.0
      %v4685 = vmax.f32 %v4633, 0.0
      %v4686 = vmax.f32 %v4536, 0.0
      %v4687 = vmax.f32 %v4538, 0.0
      %v4688 = vmax.f32 %v4636, 0.0
      %v4689 = vmax.f32 %v4542, 0.0
      %v4690 = vmax.f32 %v4544, 0.0
      %v4691 = vmax.f32 %v4641, 0.0
      %v4692 = vmax.f32 %v4546, 0.0
      %v4693 = vmax.f32 %v4548, 0.0
      %v4694 = vmax.f32 %v4644, 0.0
      %v4695 = vmul.f32 %v4647, %v804
      %v4696 = vmul.f32 %v4648, %v808
      %v4697 = vmul.f32 %v4649, %v812
      %v4698 = vmul.f32 %v4650, %v804
      %v4699 = vmul.f32 %v4651, %v808
      %v4700 = vmul.f32 %v4652, %v812
      %v4701 = vmul.f32 %v4653, %v804
      %v4702 = vmul.f32 %v4654, %v808
      %v4703 = vmul.f32 %v4655, %v812
      %v4704 = vmul.f32 %v4656, %v804
      %v4705 = vmul.f32 %v4657, %v808
      %v4706 = vmul.f32 %v4658, %v812
      %v4707 = vmul.f32 %v4659, %v804
      %v4708 = vmul.f32 %v4660, %v808
      %v4709 = vmul.f32 %v4661, %v812
      %v4710 = vmul.f32 %v4662, %v804
      %v4711 = vmul.f32 %v4663, %v808
      %v4712 = vmul.f32 %v4664, %v812
      %v4713 = vmul.f32 %v4665, %v804
      %v4714 = vmul.f32 %v4666, %v808
      %v4715 = vmul.f32 %v4667, %v812
      %v4716 = vmul.f32 %v4668, %v804
      %v4717 = vmul.f32 %v4669, %v808
      %v4718 = vmul.f32 %v4670, %v812
      %v4719 = vmul.f32 %v4671, %v804
      %v4720 = vmul.f32 %v4672, %v808
      %v4721 = vmul.f32 %v4673, %v812
      %v4722 = vmul.f32 %v4674, %v804
      %v4723 = vmul.f32 %v4675, %v808
      %v4724 = vmul.f32 %v4676, %v812
      %v4725 = vmul.f32 %v4677, %v804
      %v4726 = vmul.f32 %v4678, %v808
      %v4727 = vmul.f32 %v4679, %v812
      %v4728 = vmul.f32 %v4680, %v804
      %v4729 = vmul.f32 %v4681, %v808
      %v4730 = vmul.f32 %v4682, %v812
      %v4731 = vmul.f32 %v4683, %v804
      %v4732 = vmul.f32 %v4684, %v808
      %v4733 = vmul.f32 %v4685, %v812
      %v4734 = vmul.f32 %v4686, %v804
      %v4735 = vmul.f32 %v4687, %v808
      %v4736 = vmul.f32 %v4688, %v812
      %v4737 = vmul.f32 %v4689, %v804
      %v4738 = vmul.f32 %v4690, %v808
      %v4739 = vmul.f32 %v4691, %v812
      %v4740 = vmul.f32 %v4692, %v804
      %v4741 = vmul.f32 %v4693, %v808
      %v4742 = vmul.f32 %v4694, %v812
      %v4743 = vadd.f32 %v4695, %v4696
      %v4744 = vsel %vm865, %v4697, 0.0
      %v4745 = vadd.f32 %v4743, %v4744
      %4746 = vadd.xlane.f32.xlu0 %v4745
      %v4747 = vpop.xlane.xlu0 %4746
      %v4748 = vadd.f32 %v4698, %v4699
      %v4749 = vsel %vm865, %v4700, 0.0
      %v4750 = vadd.f32 %v4748, %v4749
      %4751 = vadd.xlane.f32.xlu0 %v4750
      %v4752 = vpop.xlane.xlu0 %4751
      %v4753 = vadd.f32 %v4701, %v4702
      %v4754 = vsel %vm865, %v4703, 0.0
      %v4755 = vadd.f32 %v4753, %v4754
      %4756 = vadd.xlane.f32.xlu0 %v4755
      %v4757 = vpop.xlane.xlu0 %4756
      %v4758 = vadd.f32 %v4704, %v4705
      %v4759 = vsel %vm865, %v4706, 0.0
      %v4760 = vadd.f32 %v4758, %v4759
      %4761 = vadd.xlane.f32.xlu0 %v4760
      %v4762 = vpop.xlane.xlu0 %4761
      %v4763 = vadd.f32 %v4707, %v4708
      %v4764 = vsel %vm865, %v4709, 0.0
      %v4765 = vadd.f32 %v4763, %v4764
      %4766 = vadd.xlane.f32.xlu0 %v4765
      %v4767 = vpop.xlane.xlu0 %4766
      %v4768 = vadd.f32 %v4710, %v4711
      %v4769 = vsel %vm865, %v4712, 0.0
      %v4770 = vadd.f32 %v4768, %v4769
      %4771 = vadd.xlane.f32.xlu0 %v4770
      %v4772 = vpop.xlane.xlu0 %4771
      %v4773 = vadd.f32 %v4713, %v4714
      %v4774 = vsel %vm865, %v4715, 0.0
      %v4775 = vadd.f32 %v4773, %v4774
      %4776 = vadd.xlane.f32.xlu0 %v4775
      %v4777 = vpop.xlane.xlu0 %4776
      %v4778 = vadd.f32 %v4716, %v4717
      %v4779 = vsel %vm865, %v4718, 0.0
      %v4780 = vadd.f32 %v4778, %v4779
      %4781 = vadd.xlane.f32.xlu0 %v4780
      %v4782 = vpop.xlane.xlu0 %4781
      %v4783 = vadd.f32 %v4719, %v4720
      %v4784 = vsel %vm865, %v4721, 0.0
      %v4785 = vadd.f32 %v4783, %v4784
      %4786 = vadd.xlane.f32.xlu0 %v4785
      %v4787 = vpop.xlane.xlu0 %4786
      %v4788 = vadd.f32 %v4722, %v4723
      %v4789 = vsel %vm865, %v4724, 0.0
      %v4790 = vadd.f32 %v4788, %v4789
      %4791 = vadd.xlane.f32.xlu0 %v4790
      %v4792 = vpop.xlane.xlu0 %4791
      %v4793 = vadd.f32 %v4725, %v4726
      %v4794 = vsel %vm865, %v4727, 0.0
      %v4795 = vadd.f32 %v4793, %v4794
      %4796 = vadd.xlane.f32.xlu0 %v4795
      %v4797 = vpop.xlane.xlu0 %4796
      %v4798 = vadd.f32 %v4728, %v4729
      %v4799 = vsel %vm865, %v4730, 0.0
      %v4800 = vadd.f32 %v4798, %v4799
      %4801 = vadd.xlane.f32.xlu0 %v4800
      %v4802 = vpop.xlane.xlu0 %4801
      %v4803 = vadd.f32 %v4731, %v4732
      %v4804 = vsel %vm865, %v4733, 0.0
      %v4805 = vadd.f32 %v4803, %v4804
      %4806 = vadd.xlane.f32.xlu0 %v4805
      %v4807 = vpop.xlane.xlu0 %4806
      %v4808 = vadd.f32 %v4734, %v4735
      %v4809 = vsel %vm865, %v4736, 0.0
      %v4810 = vadd.f32 %v4808, %v4809
      %4811 = vadd.xlane.f32.xlu0 %v4810
      %v4812 = vpop.xlane.xlu0 %4811
      %v4813 = vadd.f32 %v4737, %v4738
      %v4814 = vsel %vm865, %v4739, 0.0
      %v4815 = vadd.f32 %v4813, %v4814
      %4816 = vadd.xlane.f32.xlu0 %v4815
      %v4817 = vpop.xlane.xlu0 %4816
      %v4818 = vadd.f32 %v4740, %v4741
      %v4819 = vsel %vm865, %v4742, 0.0
      %v4820 = vadd.f32 %v4818, %v4819
      %4821 = vadd.xlane.f32.xlu0 %v4820
      %v4822 = vpop.xlane.xlu0 %4821
      %v4823 = vmul.f32 %v4747, 0.00390625
      %v4824 = vmul.f32 %v4752, 0.00390625
      %v4825 = vmul.f32 %v4757, 0.00390625
      %v4826 = vmul.f32 %v4762, 0.00390625
      %v4827 = vmul.f32 %v4767, 0.00390625
      %v4828 = vmul.f32 %v4772, 0.00390625
      %v4829 = vmul.f32 %v4777, 0.00390625
      %v4830 = vmul.f32 %v4782, 0.00390625
      %v4831 = vmul.f32 %v4787, 0.00390625
      %v4832 = vmul.f32 %v4792, 0.00390625
      %v4833 = vmul.f32 %v4797, 0.00390625
      %v4834 = vmul.f32 %v4802, 0.00390625
      %v4835 = vmul.f32 %v4807, 0.00390625
      %v4836 = vmul.f32 %v4812, 0.00390625
      %v4837 = vmul.f32 %v4817, 0.00390625
      %v4838 = vmul.f32 %v4822, 0.00390625
      %vm4839 = vcmask 7168
      %v4840 = vsel %vm4839, %v945, %v1499
      %v4841 = vsel %vm4839, %v946, %v1500
      %v4842 = vsel %vm4839, %v947, %v1501
      %v4843 = vsel %vm4839, %v948, %v1502
      %v4844 = vsel %vm4839, %v949, %v1503
      %v4845 = vsel %vm4839, %v950, %v1504
      %v4846 = vsel %vm4839, %v951, %v1505
      %v4847 = vsel %vm4839, %v952, %v1506
      %v4848 = vsel %vm4839, %v953, %v1507
      %v4849 = vsel %vm4839, %v954, %v1508
      %v4850 = vsel %vm4839, %v955, %v1509
      %v4851 = vsel %vm4839, %v956, %v1510
      %v4852 = vsel %vm4839, %v957, %v1511
      %v4853 = vsel %vm4839, %v958, %v1512
      %v4854 = vsel %vm4839, %v959, %v1513
      %v4855 = vsel %vm4839, %v960, %v1514
      %vm4856 = vcmask 15360
      %v4857 = vsel %vm4856, %v4840, %v2053
      %v4858 = vsel %vm4856, %v4841, %v2054
      %v4859 = vsel %vm4856, %v4842, %v2055
      %v4860 = vsel %vm4856, %v4843, %v2056
      %v4861 = vsel %vm4856, %v4844, %v2057
      %v4862 = vsel %vm4856, %v4845, %v2058
      %v4863 = vsel %vm4856, %v4846, %v2059
      %v4864 = vsel %vm4856, %v4847, %v2060
      %v4865 = vsel %vm4856, %v4848, %v2061
      %v4866 = vsel %vm4856, %v4849, %v2062
      %v4867 = vsel %vm4856, %v4850, %v2063
      %v4868 = vsel %vm4856, %v4851, %v2064
      %v4869 = vsel %vm4856, %v4852, %v2065
      %v4870 = vsel %vm4856, %v4853, %v2066
      %v4871 = vsel %vm4856, %v4854, %v2067
      %v4872 = vsel %vm4856, %v4855, %v2068
      %vm4873 = vcmask 23552
      %v4874 = vsel %vm4873, %v4857, %v2607
      %v4875 = vsel %vm4873, %v4858, %v2608
      %v4876 = vsel %vm4873, %v4859, %v2609
      %v4877 = vsel %vm4873, %v4860, %v2610
      %v4878 = vsel %vm4873, %v4861, %v2611
      %v4879 = vsel %vm4873, %v4862, %v2612
      %v4880 = vsel %vm4873, %v4863, %v2613
      %v4881 = vsel %vm4873, %v4864, %v2614
      %v4882 = vsel %vm4873, %v4865, %v2615
      %v4883 = vsel %vm4873, %v4866, %v2616
      %v4884 = vsel %vm4873, %v4867, %v2617
      %v4885 = vsel %vm4873, %v4868, %v2618
      %v4886 = vsel %vm4873, %v4869, %v2619
      %v4887 = vsel %vm4873, %v4870, %v2620
      %v4888 = vsel %vm4873, %v4871, %v2621
      %v4889 = vsel %vm4873, %v4872, %v2622
      %vm4890 = vcmask 31744
      %v4891 = vsel %vm4890, %v4874, %v3161
      %v4892 = vsel %vm4890, %v4875, %v3162
      %v4893 = vsel %vm4890, %v4876, %v3163
      %v4894 = vsel %vm4890, %v4877, %v3164
      %v4895 = vsel %vm4890, %v4878, %v3165
      %v4896 = vsel %vm4890, %v4879, %v3166
      %v4897 = vsel %vm4890, %v4880, %v3167
      %v4898 = vsel %vm4890, %v4881, %v3168
      %v4899 = vsel %vm4890, %v4882, %v3169
      %v4900 = vsel %vm4890, %v4883, %v3170
      %v4901 = vsel %vm4890, %v4884, %v3171
      %v4902 = vsel %vm4890, %v4885, %v3172
      %v4903 = vsel %vm4890, %v4886, %v3173
      %v4904 = vsel %vm4890, %v4887, %v3174
      %v4905 = vsel %vm4890, %v4888, %v3175
      %v4906 = vsel %vm4890, %v4889, %v3176
      %vm4907 = vcmask 39936
      %v4908 = vsel %vm4907, %v4891, %v3715
      %v4909 = vsel %vm4907, %v4892, %v3716
      %v4910 = vsel %vm4907, %v4893, %v3717
      %v4911 = vsel %vm4907, %v4894, %v3718
      %v4912 = vsel %vm4907, %v4895, %v3719
      %v4913 = vsel %vm4907, %v4896, %v3720
      %v4914 = vsel %vm4907, %v4897, %v3721
      %v4915 = vsel %vm4907, %v4898, %v3722
      %v4916 = vsel %vm4907, %v4899, %v3723
      %v4917 = vsel %vm4907, %v4900, %v3724
      %v4918 = vsel %vm4907, %v4901, %v3725
      %v4919 = vsel %vm4907, %v4902, %v3726
      %v4920 = vsel %vm4907, %v4903, %v3727
      %v4921 = vsel %vm4907, %v4904, %v3728
      %v4922 = vsel %vm4907, %v4905, %v3729
      %v4923 = vsel %vm4907, %v4906, %v3730
      %vm4924 = vcmask 48128
      %v4925 = vsel %vm4924, %v4908, %v4269
      %v4926 = vsel %vm4924, %v4909, %v4270
      %v4927 = vsel %vm4924, %v4910, %v4271
      %v4928 = vsel %vm4924, %v4911, %v4272
      %v4929 = vsel %vm4924, %v4912, %v4273
      %v4930 = vsel %vm4924, %v4913, %v4274
      %v4931 = vsel %vm4924, %v4914, %v4275
      %v4932 = vsel %vm4924, %v4915, %v4276
      %v4933 = vsel %vm4924, %v4916, %v4277
      %v4934 = vsel %vm4924, %v4917, %v4278
      %v4935 = vsel %vm4924, %v4918, %v4279
      %v4936 = vsel %vm4924, %v4919, %v4280
      %v4937 = vsel %vm4924, %v4920, %v4281
      %v4938 = vsel %vm4924, %v4921, %v4282
      %v4939 = vsel %vm4924, %v4922, %v4283
      %v4940 = vsel %vm4924, %v4923, %v4284
      %vm4941 = vcmask 56320
      %v4942 = vsel %vm4941, %v4925, %v4823
      %v4943 = vsel %vm4941, %v4926, %v4824
      %v4944 = vsel %vm4941, %v4927, %v4825
      %v4945 = vsel %vm4941, %v4928, %v4826
      %v4946 = vsel %vm4941, %v4929, %v4827
      %v4947 = vsel %vm4941, %v4930, %v4828
      %v4948 = vsel %vm4941, %v4931, %v4829
      %v4949 = vsel %vm4941, %v4932, %v4830
      %v4950 = vsel %vm4941, %v4933, %v4831
      %v4951 = vsel %vm4941, %v4934, %v4832
      %v4952 = vsel %vm4941, %v4935, %v4833
      %v4953 = vsel %vm4941, %v4936, %v4834
      %v4954 = vsel %vm4941, %v4937, %v4835
      %v4955 = vsel %vm4941, %v4938, %v4836
      %v4956 = vsel %vm4941, %v4939, %v4837
      %v4957 = vsel %vm4941, %v4940, %v4838
      %4958 = vxpose.xlu0.b32.start [1/16] %v4942, 128
      %4959 = vxpose.xlu0.b32.cont [2/16] %v4943, 128
      %4960 = vxpose.xlu0.b32.cont [3/16] %v4944, 128
      %4961 = vxpose.xlu0.b32.cont [4/16] %v4945, 128
      %4962 = vxpose.xlu0.b32.cont [5/16] %v4946, 128
      %4963 = vxpose.xlu0.b32.cont [6/16] %v4947, 128
      %4964 = vxpose.xlu0.b32.cont [7/16] %v4948, 128
      %4965 = vxpose.xlu0.b32.cont [8/16] %v4949, 128
      %4966 = vxpose.xlu0.b32.cont [9/16] %v4950, 128
      %4967 = vxpose.xlu0.b32.cont [10/16] %v4951, 128
      %4968 = vxpose.xlu0.b32.cont [11/16] %v4952, 128
      %4969 = vxpose.xlu0.b32.cont [12/16] %v4953, 128
      %4970 = vxpose.xlu0.b32.cont [13/16] %v4954, 128
      %4971 = vxpose.xlu0.b32.cont [14/16] %v4955, 128
      %4972 = vxpose.xlu0.b32.cont [15/16] %v4956, 128
      %4973 = vxpose.xlu0.b32.end [16/16] %v4957, 128
      %v4974 = vpop.trf.xlu0
      %v4975 = vpop.trf.xlu0
      %v4976 = vpop.trf.xlu0
      %v4977 = vpop.trf.xlu0
      %v4978 = vpop.trf.xlu0
      %v4979 = vpop.trf.xlu0
      %v4980 = vpop.trf.xlu0
      %v4981 = vpop.trf.xlu0
      %v4982 = vpop.trf.xlu0
      %v4983 = vpop.trf.xlu0
      %v4984 = vpop.trf.xlu0
      %v4985 = vpop.trf.xlu0
      %v4986 = vpop.trf.xlu0
      %v4987 = vpop.trf.xlu0
      %v4988 = vpop.trf.xlu0
      %v4989 = vpop.trf.xlu0
      %v4990 = vpack.c.bf16 %v4974, %v4974
      %4991 = vst [vmem:[%s200] sm:$0xf] %v4990
      %p4992 = scmp.lt.s32.totalorder %s15, 1
      %s4993 = scalar_select %p4992, %s15, 1
      %s4994 = smul.addr %s4993, 4
      %s4995 = scalar_lea.vmem %s4, %s4994
      // Predicated region
      $region37: #{barlow_twins_forward.2} parent=35 // pred_check
        %p4996 = pneg %p122
      $region38: #{barlow_twins_forward.2} parent=35 // pred_check_branch
        %4998 = sbr.rel (%p4996) target = $region40
      $region39: #{barlow_twins_forward.2} parent=35 // pred_region
        _
      $region40: #{barlow_twins_forward.2} parent=35 // pred_fallthru
        _
    $region36: #{barlow_twins_forward.2} parent=5 // pred_fallthru
      _
    %p4999 = scmp.le.s32.totalorder 2, %s10
    // Predicated region
    $region41: #{barlow_twins_forward.2} parent=5 // pred_check
      %p5000 = pneg %p4999
    $region42: #{barlow_twins_forward.2} parent=5 // pred_check_branch
      %5002 = sbr.rel (%p5000) target = $region44
    $region43: #{barlow_twins_forward.2} parent=5 // pred_region
      %s5003 = ssub.s32 %s10, 2
      // Predicated region
      $region45: #{barlow_twins_forward.2} parent=43 // pred_check
        %p5004 = pneg %p128
      $region46: #{barlow_twins_forward.2} parent=43 // pred_check_branch
        %5006 = sbr.rel (%p5004) target = $region48
      $region47: #{barlow_twins_forward.2} parent=43 // pred_region
        %p5007 = scmp.lt.s32.totalorder %s16, 1
        %s5008 = scalar_select %p5007, %s16, 1
        %s5009 = smul.addr %s5008, 4
        %s5010 = scalar_lea.vmem %s4, %s5009
      $region48: #{barlow_twins_forward.2} parent=43 // pred_fallthru
        _
    $region44: #{barlow_twins_forward.2} parent=5 // pred_fallthru
      _
  $region6: #{barlow_twins_forward.2} parent=0 // loop_footer
    %s14 = sadd.s32 1, %s10
  $region7: #{barlow_twins_forward.2} parent=0 // loop_footer_branch
    %9 = sbr.rel target = $region3
  $region8: #{barlow_twins_forward.2} parent=0 // loop_exit
    _

</llo_original>
